<compile_context>
chip_gen: v7x
topology: tpu7x:2x2x1
jax: 0.10.0
libtpu: 0.0.40
codegen_flags: <defaults>
</compile_context>

<pallas_src>
import functools
import math

import jax
import jax.numpy as jnp
from jax.experimental import pallas as pl
from jax.experimental.pallas import tpu as pltpu


def _vmem():
    return pl.BlockSpec(memory_space=pltpu.MemorySpace.VMEM)


# --------------------------- fully fused encoder -----------------------------
def _encoder_kernel(patches_ref, pool_ref, wc_ref, wf_ref, bf_ref,
                    wih_ref, whh_ref, bih_ref, bhh_ref,
                    win_ref, bin_ref, wo_ref, bo_ref, o_ref,
                    *, batch, t_steps, nh, inv_hw):
    f32 = jnp.float32
    bf16 = jnp.bfloat16
    hdim = whh_ref.shape[0]
    hd = hdim // nh

    # ---- CNN stand-in: ONE big (N*P, KC) x (KC, Cf) matmul + ReLU -----------
    feat = jnp.maximum(
        jnp.dot(patches_ref[...], wc_ref[...], preferred_element_type=f32), 0.0)

    # ---- per-frame spatial mean: (N, N*P) 0/1 pooling block on the MXU ------
    pooled = jnp.dot(pool_ref[...], feat.astype(bf16),
                     preferred_element_type=f32) * inv_hw          # (N, Cf)

    # ---- cnn_fc batched over all frames: (N, Cf) x (Cf, E) ------------------
    emb = jnp.dot(pooled.astype(bf16), wf_ref[...],
                  preferred_element_type=f32) + bf_ref[...]        # (N, E)

    # ---- GRU input projection hoisted: ONE (N, E) x (E, 3H) matmul ----------
    # Rows are time-major (row = t*B + b), so each step below is contiguous.
    gi_all = jnp.dot(emb.astype(bf16), wih_ref[...],
                     preferred_element_type=f32) + bih_ref[...]    # (N, 3H)

    # ---- GRU recurrence, PyTorch gate order [r, z, n]; unrolled, no scratch -
    h = jnp.zeros((batch, hdim), f32)
    h_seq = []
    for t in range(t_steps):
        gi = gi_all[t * batch:(t + 1) * batch, :]                  # (B, 3H)
        gh = jnp.dot(h.astype(bf16), whh_ref[...],
                     preferred_element_type=f32) + bhh_ref[...]
        r = jax.nn.sigmoid(gi[:, :hdim] + gh[:, :hdim])
        z = jax.nn.sigmoid(gi[:, hdim:2 * hdim] + gh[:, hdim:2 * hdim])
        n = jnp.tanh(gi[:, 2 * hdim:] + r * gh[:, 2 * hdim:])
        h = (1.0 - z) * n + z * h
        h_seq.append(h)

    # ---- MHA: single QKV projection for all (b, t) rows ---------------------
    rows = [h_seq[t][b:b + 1, :] for b in range(batch) for t in range(t_steps)]
    rnn_flat = jnp.concatenate(rows, axis=0)                       # (B*T, H)
    # 1/sqrt(hd) is pre-folded into the q block of win/bin on the host.
    qkv = jnp.dot(rnn_flat.astype(bf16), win_ref[...],
                  preferred_element_type=f32) + bin_ref[...]       # (B*T, 3H)

    for b in range(batch):                                         # static loop
        qkv_b = qkv[b * t_steps:(b + 1) * t_steps, :]              # (T, 3H)
        q = qkv_b[:, :hdim].astype(bf16)
        k = qkv_b[:, hdim:2 * hdim].astype(bf16)
        v = qkv_b[:, 2 * hdim:].astype(bf16)
        acc = jnp.zeros((t_steps, hdim), f32)
        for hh in range(nh):                                       # static heads
            sl = slice(hh * hd, (hh + 1) * hd)
            s = jax.lax.dot_general(q[:, sl], k[:, sl],
                                    (((1,), (1,)), ((), ())),
                                    preferred_element_type=f32)    # (T, T)
            m = s.max(axis=-1, keepdims=True)
            e = jnp.exp(s - m)
            p = e * pl.reciprocal(e.sum(axis=-1, keepdims=True), approx=True)
            ctx = jnp.dot(p.astype(bf16), v[:, sl],
                          preferred_element_type=f32)              # (T, hd)
            # accumulate the output projection per head -> no lane concat
            acc = acc + jnp.dot(ctx.astype(bf16), wo_ref[sl, :],
                                preferred_element_type=f32)        # (T, H)
        o_ref[b] = (acc + bo_ref[...]).astype(o_ref.dtype)


# ----------------------------------- glue ------------------------------------
def _im2col(x_nhwc, kh, kw, pad_to):
    # TODO(synk): patch extraction kept in XLA glue; at realistic resolutions
    # this should move in-kernel (shifted window loads) to avoid 9x HBM traffic.
    n, h, w, c = x_nhwc.shape
    ho, wo = h - kh + 1, w - kw + 1
    cols = [x_nhwc[:, ky:ky + ho, kx:kx + wo, :]
            for ky in range(kh) for kx in range(kw)]
    p = jnp.concatenate(cols, axis=-1).reshape(n, ho * wo, kh * kw * c)
    if p.shape[-1] < pad_to:                      # pad contraction dim to 32
        p = jnp.pad(p, ((0, 0), (0, 0), (0, pad_to - p.shape[-1])))
    return p


def encoder_forward(frames, params, num_heads):
    b, t, c, h, w = frames.shape
    n = b * t
    hidden = params['w_hh'].shape[0]
    hd = hidden // num_heads

    # bf16 BEFORE im2col; time-major frame order so the GRU reads contiguous rows.
    x = frames.astype(jnp.bfloat16).transpose(1, 0, 3, 4, 2).reshape(n, h, w, c)
    kc_pad = params['w_conv'].shape[0]
    patches = _im2col(x, 3, 3, kc_pad)                     # (N, P, KC) bf16
    p = patches.shape[1]
    patches_flat = patches.reshape(n * p, kc_pad)          # (N*P, KC)

    # 0/1 per-frame pooling block (scaled by 1/P in-kernel, in f32).
    pool = jnp.repeat(jnp.eye(n, dtype=jnp.bfloat16), p, axis=1)   # (N, N*P)

    # Fold the 1/sqrt(head_dim) softmax scale into the q block of the
    # attention in-projection (done once on the host, free at runtime).
    scale = 1.0 / math.sqrt(hd)
    w_in, b_in = params['w_in'], params['b_in']
    w_in_s = jnp.concatenate([w_in[:, :hidden] * scale, w_in[:, hidden:]], axis=1)
    b_in_s = jnp.concatenate([b_in[:, :hidden] * scale, b_in[:, hidden:]], axis=1)

    kernel = functools.partial(_encoder_kernel, batch=b, t_steps=t,
                               nh=num_heads, inv_hw=1.0 / p)
    return pl.pallas_call(
        kernel,
        out_shape=jax.ShapeDtypeStruct((b, t, hidden), jnp.float32),
        in_specs=[_vmem()] * 13,
        out_specs=_vmem(),
        compiler_params=pltpu.CompilerParams(
            vmem_limit_bytes=32 * 1024 * 1024),
    )(patches_flat, pool,
      params['w_conv'].astype(jnp.bfloat16), params['w_fc'].astype(jnp.bfloat16),
      params['b_fc'].astype(jnp.float32),
      params['w_ih'].astype(jnp.bfloat16), params['w_hh'].astype(jnp.bfloat16),
      params['b_ih'].astype(jnp.float32), params['b_hh'].astype(jnp.float32),
      w_in_s.astype(jnp.bfloat16), b_in_s.astype(jnp.float32),
      params['w_out'].astype(jnp.bfloat16), params['b_out'].astype(jnp.float32))


def init_params(key, c, cnn_ch, embed, hidden, num_heads):
    del num_heads  # head split is implicit in the fused (H, 3H) projection
    kdim = 3 * 3 * c
    kdim_p = ((kdim + 31) // 32) * 32             # pad 9*C -> 32 lanes
    keys = jax.random.split(key, 11)
    f32 = jnp.float32
    s = 0.1
    return {
        'w_conv': s * jax.random.normal(keys[0], (kdim_p, cnn_ch), f32),
        'w_fc':   s * jax.random.normal(keys[1], (cnn_ch, embed), f32),
        'b_fc':   s * jax.random.normal(keys[2], (1, embed), f32),
        # GRU: fused gate weights, PyTorch gate order [r, z, n]
        'w_ih':   s * jax.random.normal(keys[3], (embed, 3 * hidden), f32),
        'w_hh':   s * jax.random.normal(keys[4], (hidden, 3 * hidden), f32),
        'b_ih':   s * jax.random.normal(keys[5], (1, 3 * hidden), f32),
        'b_hh':   s * jax.random.normal(keys[6], (1, 3 * hidden), f32),
        # MHA: fused qkv in-projection + out-projection
        'w_in':   s * jax.random.normal(keys[7], (hidden, 3 * hidden), f32),
        'b_in':   s * jax.random.normal(keys[8], (1, 3 * hidden), f32),
        'w_out':  s * jax.random.normal(keys[9], (hidden, hidden), f32),
        'b_out':  s * jax.random.normal(keys[10], (1, hidden), f32),
    }


if __name__ == "__main__":
    B, T, C, H, W = 2, 4, 3, 16, 16       # batch, num_frames, channels, spatial
    EMBED, HIDDEN, HEADS, CNN_CH = 128, 128, 8, 128   # lane-dense feature dims
    key = jax.random.PRNGKey(0)
    k_frames, k_params = jax.random.split(key)
    frames = jax.random.normal(k_frames, (B, T, C, H, W), jnp.float32)
    params = init_params(k_params, c=C, cnn_ch=CNN_CH, embed=EMBED,
                         hidden=HIDDEN, num_heads=HEADS)
    fwd = jax.jit(functools.partial(encoder_forward, num_heads=HEADS))
    out = fwd(frames, params)
    jax.block_until_ready(out)
    assert out.shape == (B, T, HIDDEN), out.shape
    print("KERNEL_OK")
</pallas_src>

<mosaic_0001>
module attributes {stable_mosaic.version = 11 : i64} {
  func.func @_encoder_kernel(%arg0: memref<1568x32xbf16, #tpu.memory_space<vmem>>, %arg1: memref<8x1568xbf16, #tpu.memory_space<vmem>>, %arg2: memref<32x128xbf16, #tpu.memory_space<vmem>>, %arg3: memref<128x128xbf16, #tpu.memory_space<vmem>>, %arg4: memref<1x128xf32, #tpu.memory_space<vmem>>, %arg5: memref<128x384xbf16, #tpu.memory_space<vmem>>, %arg6: memref<128x384xbf16, #tpu.memory_space<vmem>>, %arg7: memref<1x384xf32, #tpu.memory_space<vmem>>, %arg8: memref<1x384xf32, #tpu.memory_space<vmem>>, %arg9: memref<128x384xbf16, #tpu.memory_space<vmem>>, %arg10: memref<1x384xf32, #tpu.memory_space<vmem>>, %arg11: memref<128x128xbf16, #tpu.memory_space<vmem>>, %arg12: memref<1x128xf32, #tpu.memory_space<vmem>>, %arg13: memref<2x4x128xf32, #tpu.memory_space<vmem>>) attributes {dimension_semantics = [], scalar_prefetch = 0 : i64, scratch_operands = 0 : i64, tpu.core_type = #tpu.core_type<tc>} {
    %c0 = arith.constant 0 : index
    %c0_0 = arith.constant 0 : index
    %0 = vector.load %arg0[%c0, %c0_0] : memref<1568x32xbf16, #tpu.memory_space<vmem>>, vector<1568x32xbf16>
    %c0_1 = arith.constant 0 : index
    %c0_2 = arith.constant 0 : index
    %1 = vector.load %arg2[%c0_1, %c0_2] : memref<32x128xbf16, #tpu.memory_space<vmem>>, vector<32x128xbf16>
    %cst = arith.constant dense<0.000000e+00> : vector<1568x128xf32>
    %2 = tpu.matmul %0, %1, %cst {dimension_numbers = #tpu.dot_dimension_numbers<[1], [0], [0], [1], [0, 0, 1, 1], [], []>} : vector<1568x32xbf16>, vector<32x128xbf16>, vector<1568x128xf32> -> vector<1568x128xf32>
    %cst_3 = arith.constant 0.000000e+00 : f32
    %3 = vector.broadcast %cst_3 : f32 to vector<1568x128xf32>
    %4 = arith.maximumf %2, %3 : vector<1568x128xf32>
    %c0_4 = arith.constant 0 : index
    %c0_5 = arith.constant 0 : index
    %5 = vector.load %arg1[%c0_4, %c0_5] : memref<8x1568xbf16, #tpu.memory_space<vmem>>, vector<8x1568xbf16>
    %6 = arith.truncf %4 : vector<1568x128xf32> to vector<1568x128xbf16>
    %cst_6 = arith.constant dense<0.000000e+00> : vector<8x128xf32>
    %7 = tpu.matmul %5, %6, %cst_6 {dimension_numbers = #tpu.dot_dimension_numbers<[1], [0], [0], [1], [0, 0, 1, 1], [], []>} : vector<8x1568xbf16>, vector<1568x128xbf16>, vector<8x128xf32> -> vector<8x128xf32>
    %cst_7 = arith.constant 0.00510204071 : f32
    %8 = vector.broadcast %cst_7 : f32 to vector<8x128xf32>
    %9 = arith.mulf %7, %8 : vector<8x128xf32>
    %10 = arith.truncf %9 : vector<8x128xf32> to vector<8x128xbf16>
    %c0_8 = arith.constant 0 : index
    %c0_9 = arith.constant 0 : index
    %11 = vector.load %arg3[%c0_8, %c0_9] : memref<128x128xbf16, #tpu.memory_space<vmem>>, vector<128x128xbf16>
    %cst_10 = arith.constant dense<0.000000e+00> : vector<8x128xf32>
    %12 = tpu.matmul %10, %11, %cst_10 {dimension_numbers = #tpu.dot_dimension_numbers<[1], [0], [0], [1], [0, 0, 1, 1], [], []>} : vector<8x128xbf16>, vector<128x128xbf16>, vector<8x128xf32> -> vector<8x128xf32>
    %c0_11 = arith.constant 0 : index
    %c0_12 = arith.constant 0 : index
    %13 = vector.load %arg4[%c0_11, %c0_12] : memref<1x128xf32, #tpu.memory_space<vmem>>, vector<1x128xf32>
    %14 = vector.broadcast %13 : vector<1x128xf32> to vector<8x128xf32>
    %15 = arith.addf %12, %14 : vector<8x128xf32>
    %16 = arith.truncf %15 : vector<8x128xf32> to vector<8x128xbf16>
    %c0_13 = arith.constant 0 : index
    %c0_14 = arith.constant 0 : index
    %17 = vector.load %arg5[%c0_13, %c0_14] : memref<128x384xbf16, #tpu.memory_space<vmem>>, vector<128x384xbf16>
    %cst_15 = arith.constant dense<0.000000e+00> : vector<8x384xf32>
    %18 = tpu.matmul %16, %17, %cst_15 {dimension_numbers = #tpu.dot_dimension_numbers<[1], [0], [0], [1], [0, 0, 1, 1], [], []>} : vector<8x128xbf16>, vector<128x384xbf16>, vector<8x384xf32> -> vector<8x384xf32>
    %c0_16 = arith.constant 0 : index
    %c0_17 = arith.constant 0 : index
    %19 = vector.load %arg7[%c0_16, %c0_17] : memref<1x384xf32, #tpu.memory_space<vmem>>, vector<1x384xf32>
    %20 = vector.broadcast %19 : vector<1x384xf32> to vector<8x384xf32>
    %21 = arith.addf %18, %20 : vector<8x384xf32>
    %cst_18 = arith.constant 0.000000e+00 : f32
    %22 = vector.broadcast %cst_18 : f32 to vector<2x128xf32>
    %23 = vector.extract_strided_slice %21 {offsets = [0, 0], sizes = [2, 384], strides = [1, 1]} : vector<8x384xf32> to vector<2x384xf32>
    %24 = arith.truncf %22 : vector<2x128xf32> to vector<2x128xbf16>
    %c0_19 = arith.constant 0 : index
    %c0_20 = arith.constant 0 : index
    %25 = vector.load %arg6[%c0_19, %c0_20] : memref<128x384xbf16, #tpu.memory_space<vmem>>, vector<128x384xbf16>
    %cst_21 = arith.constant dense<0.000000e+00> : vector<2x384xf32>
    %26 = tpu.matmul %24, %25, %cst_21 {dimension_numbers = #tpu.dot_dimension_numbers<[1], [0], [0], [1], [0, 0, 1, 1], [], []>} : vector<2x128xbf16>, vector<128x384xbf16>, vector<2x384xf32> -> vector<2x384xf32>
    %c0_22 = arith.constant 0 : index
    %c0_23 = arith.constant 0 : index
    %27 = vector.load %arg8[%c0_22, %c0_23] : memref<1x384xf32, #tpu.memory_space<vmem>>, vector<1x384xf32>
    %28 = vector.broadcast %27 : vector<1x384xf32> to vector<2x384xf32>
    %29 = arith.addf %26, %28 : vector<2x384xf32>
    %30 = vector.extract_strided_slice %23 {offsets = [0, 0], sizes = [2, 128], strides = [1, 1]} : vector<2x384xf32> to vector<2x128xf32>
    %31 = vector.extract_strided_slice %29 {offsets = [0, 0], sizes = [2, 128], strides = [1, 1]} : vector<2x384xf32> to vector<2x128xf32>
    %32 = arith.addf %30, %31 : vector<2x128xf32>
    %33 = arith.negf %32 : vector<2x128xf32>
    %34 = math.exp %33 : vector<2x128xf32>
    %cst_24 = arith.constant 1.000000e+00 : f32
    %35 = vector.broadcast %cst_24 : f32 to vector<2x128xf32>
    %36 = arith.addf %35, %34 : vector<2x128xf32>
    %37 = arith.divf %35, %36 : vector<2x128xf32>
    %38 = vector.extract_strided_slice %23 {offsets = [0, 128], sizes = [2, 128], strides = [1, 1]} : vector<2x384xf32> to vector<2x128xf32>
    %39 = vector.extract_strided_slice %29 {offsets = [0, 128], sizes = [2, 128], strides = [1, 1]} : vector<2x384xf32> to vector<2x128xf32>
    %40 = arith.addf %38, %39 : vector<2x128xf32>
    %41 = arith.negf %40 : vector<2x128xf32>
    %42 = math.exp %41 : vector<2x128xf32>
    %cst_25 = arith.constant 1.000000e+00 : f32
    %43 = vector.broadcast %cst_25 : f32 to vector<2x128xf32>
    %44 = arith.addf %43, %42 : vector<2x128xf32>
    %45 = arith.divf %43, %44 : vector<2x128xf32>
    %46 = vector.extract_strided_slice %23 {offsets = [0, 256], sizes = [2, 128], strides = [1, 1]} : vector<2x384xf32> to vector<2x128xf32>
    %47 = vector.extract_strided_slice %29 {offsets = [0, 256], sizes = [2, 128], strides = [1, 1]} : vector<2x384xf32> to vector<2x128xf32>
    %48 = arith.mulf %37, %47 : vector<2x128xf32>
    %49 = arith.addf %46, %48 : vector<2x128xf32>
    %50 = math.tanh %49 : vector<2x128xf32>
    %cst_26 = arith.constant 1.000000e+00 : f32
    %51 = vector.broadcast %cst_26 : f32 to vector<2x128xf32>
    %52 = arith.subf %51, %45 : vector<2x128xf32>
    %53 = arith.mulf %52, %50 : vector<2x128xf32>
    %54 = arith.mulf %45, %22 : vector<2x128xf32>
    %55 = arith.addf %53, %54 : vector<2x128xf32>
    %56 = vector.extract_strided_slice %21 {offsets = [2, 0], sizes = [2, 384], strides = [1, 1]} : vector<8x384xf32> to vector<2x384xf32>
    %57 = arith.truncf %55 : vector<2x128xf32> to vector<2x128xbf16>
    %c0_27 = arith.constant 0 : index
    %c0_28 = arith.constant 0 : index
    %58 = vector.load %arg6[%c0_27, %c0_28] : memref<128x384xbf16, #tpu.memory_space<vmem>>, vector<128x384xbf16>
    %cst_29 = arith.constant dense<0.000000e+00> : vector<2x384xf32>
    %59 = tpu.matmul %57, %58, %cst_29 {dimension_numbers = #tpu.dot_dimension_numbers<[1], [0], [0], [1], [0, 0, 1, 1], [], []>} : vector<2x128xbf16>, vector<128x384xbf16>, vector<2x384xf32> -> vector<2x384xf32>
    %c0_30 = arith.constant 0 : index
    %c0_31 = arith.constant 0 : index
    %60 = vector.load %arg8[%c0_30, %c0_31] : memref<1x384xf32, #tpu.memory_space<vmem>>, vector<1x384xf32>
    %61 = vector.broadcast %60 : vector<1x384xf32> to vector<2x384xf32>
    %62 = arith.addf %59, %61 : vector<2x384xf32>
    %63 = vector.extract_strided_slice %56 {offsets = [0, 0], sizes = [2, 128], strides = [1, 1]} : vector<2x384xf32> to vector<2x128xf32>
    %64 = vector.extract_strided_slice %62 {offsets = [0, 0], sizes = [2, 128], strides = [1, 1]} : vector<2x384xf32> to vector<2x128xf32>
    %65 = arith.addf %63, %64 : vector<2x128xf32>
    %66 = arith.negf %65 : vector<2x128xf32>
    %67 = math.exp %66 : vector<2x128xf32>
    %cst_32 = arith.constant 1.000000e+00 : f32
    %68 = vector.broadcast %cst_32 : f32 to vector<2x128xf32>
    %69 = arith.addf %68, %67 : vector<2x128xf32>
    %70 = arith.divf %68, %69 : vector<2x128xf32>
    %71 = vector.extract_strided_slice %56 {offsets = [0, 128], sizes = [2, 128], strides = [1, 1]} : vector<2x384xf32> to vector<2x128xf32>
    %72 = vector.extract_strided_slice %62 {offsets = [0, 128], sizes = [2, 128], strides = [1, 1]} : vector<2x384xf32> to vector<2x128xf32>
    %73 = arith.addf %71, %72 : vector<2x128xf32>
    %74 = arith.negf %73 : vector<2x128xf32>
    %75 = math.exp %74 : vector<2x128xf32>
    %cst_33 = arith.constant 1.000000e+00 : f32
    %76 = vector.broadcast %cst_33 : f32 to vector<2x128xf32>
    %77 = arith.addf %76, %75 : vector<2x128xf32>
    %78 = arith.divf %76, %77 : vector<2x128xf32>
    %79 = vector.extract_strided_slice %56 {offsets = [0, 256], sizes = [2, 128], strides = [1, 1]} : vector<2x384xf32> to vector<2x128xf32>
    %80 = vector.extract_strided_slice %62 {offsets = [0, 256], sizes = [2, 128], strides = [1, 1]} : vector<2x384xf32> to vector<2x128xf32>
    %81 = arith.mulf %70, %80 : vector<2x128xf32>
    %82 = arith.addf %79, %81 : vector<2x128xf32>
    %83 = math.tanh %82 : vector<2x128xf32>
    %cst_34 = arith.constant 1.000000e+00 : f32
    %84 = vector.broadcast %cst_34 : f32 to vector<2x128xf32>
    %85 = arith.subf %84, %78 : vector<2x128xf32>
    %86 = arith.mulf %85, %83 : vector<2x128xf32>
    %87 = arith.mulf %78, %55 : vector<2x128xf32>
    %88 = arith.addf %86, %87 : vector<2x128xf32>
    %89 = vector.extract_strided_slice %21 {offsets = [4, 0], sizes = [2, 384], strides = [1, 1]} : vector<8x384xf32> to vector<2x384xf32>
    %90 = arith.truncf %88 : vector<2x128xf32> to vector<2x128xbf16>
    %c0_35 = arith.constant 0 : index
    %c0_36 = arith.constant 0 : index
    %91 = vector.load %arg6[%c0_35, %c0_36] : memref<128x384xbf16, #tpu.memory_space<vmem>>, vector<128x384xbf16>
    %cst_37 = arith.constant dense<0.000000e+00> : vector<2x384xf32>
    %92 = tpu.matmul %90, %91, %cst_37 {dimension_numbers = #tpu.dot_dimension_numbers<[1], [0], [0], [1], [0, 0, 1, 1], [], []>} : vector<2x128xbf16>, vector<128x384xbf16>, vector<2x384xf32> -> vector<2x384xf32>
    %c0_38 = arith.constant 0 : index
    %c0_39 = arith.constant 0 : index
    %93 = vector.load %arg8[%c0_38, %c0_39] : memref<1x384xf32, #tpu.memory_space<vmem>>, vector<1x384xf32>
    %94 = vector.broadcast %93 : vector<1x384xf32> to vector<2x384xf32>
    %95 = arith.addf %92, %94 : vector<2x384xf32>
    %96 = vector.extract_strided_slice %89 {offsets = [0, 0], sizes = [2, 128], strides = [1, 1]} : vector<2x384xf32> to vector<2x128xf32>
    %97 = vector.extract_strided_slice %95 {offsets = [0, 0], sizes = [2, 128], strides = [1, 1]} : vector<2x384xf32> to vector<2x128xf32>
    %98 = arith.addf %96, %97 : vector<2x128xf32>
    %99 = arith.negf %98 : vector<2x128xf32>
    %100 = math.exp %99 : vector<2x128xf32>
    %cst_40 = arith.constant 1.000000e+00 : f32
    %101 = vector.broadcast %cst_40 : f32 to vector<2x128xf32>
    %102 = arith.addf %101, %100 : vector<2x128xf32>
    %103 = arith.divf %101, %102 : vector<2x128xf32>
    %104 = vector.extract_strided_slice %89 {offsets = [0, 128], sizes = [2, 128], strides = [1, 1]} : vector<2x384xf32> to vector<2x128xf32>
    %105 = vector.extract_strided_slice %95 {offsets = [0, 128], sizes = [2, 128], strides = [1, 1]} : vector<2x384xf32> to vector<2x128xf32>
    %106 = arith.addf %104, %105 : vector<2x128xf32>
    %107 = arith.negf %106 : vector<2x128xf32>
    %108 = math.exp %107 : vector<2x128xf32>
    %cst_41 = arith.constant 1.000000e+00 : f32
    %109 = vector.broadcast %cst_41 : f32 to vector<2x128xf32>
    %110 = arith.addf %109, %108 : vector<2x128xf32>
    %111 = arith.divf %109, %110 : vector<2x128xf32>
    %112 = vector.extract_strided_slice %89 {offsets = [0, 256], sizes = [2, 128], strides = [1, 1]} : vector<2x384xf32> to vector<2x128xf32>
    %113 = vector.extract_strided_slice %95 {offsets = [0, 256], sizes = [2, 128], strides = [1, 1]} : vector<2x384xf32> to vector<2x128xf32>
    %114 = arith.mulf %103, %113 : vector<2x128xf32>
    %115 = arith.addf %112, %114 : vector<2x128xf32>
    %116 = math.tanh %115 : vector<2x128xf32>
    %cst_42 = arith.constant 1.000000e+00 : f32
    %117 = vector.broadcast %cst_42 : f32 to vector<2x128xf32>
    %118 = arith.subf %117, %111 : vector<2x128xf32>
    %119 = arith.mulf %118, %116 : vector<2x128xf32>
    %120 = arith.mulf %111, %88 : vector<2x128xf32>
    %121 = arith.addf %119, %120 : vector<2x128xf32>
    %122 = vector.extract_strided_slice %21 {offsets = [6, 0], sizes = [2, 384], strides = [1, 1]} : vector<8x384xf32> to vector<2x384xf32>
    %123 = arith.truncf %121 : vector<2x128xf32> to vector<2x128xbf16>
    %c0_43 = arith.constant 0 : index
    %c0_44 = arith.constant 0 : index
    %124 = vector.load %arg6[%c0_43, %c0_44] : memref<128x384xbf16, #tpu.memory_space<vmem>>, vector<128x384xbf16>
    %cst_45 = arith.constant dense<0.000000e+00> : vector<2x384xf32>
    %125 = tpu.matmul %123, %124, %cst_45 {dimension_numbers = #tpu.dot_dimension_numbers<[1], [0], [0], [1], [0, 0, 1, 1], [], []>} : vector<2x128xbf16>, vector<128x384xbf16>, vector<2x384xf32> -> vector<2x384xf32>
    %c0_46 = arith.constant 0 : index
    %c0_47 = arith.constant 0 : index
    %126 = vector.load %arg8[%c0_46, %c0_47] : memref<1x384xf32, #tpu.memory_space<vmem>>, vector<1x384xf32>
    %127 = vector.broadcast %126 : vector<1x384xf32> to vector<2x384xf32>
    %128 = arith.addf %125, %127 : vector<2x384xf32>
    %129 = vector.extract_strided_slice %122 {offsets = [0, 0], sizes = [2, 128], strides = [1, 1]} : vector<2x384xf32> to vector<2x128xf32>
    %130 = vector.extract_strided_slice %128 {offsets = [0, 0], sizes = [2, 128], strides = [1, 1]} : vector<2x384xf32> to vector<2x128xf32>
    %131 = arith.addf %129, %130 : vector<2x128xf32>
    %132 = arith.negf %131 : vector<2x128xf32>
    %133 = math.exp %132 : vector<2x128xf32>
    %cst_48 = arith.constant 1.000000e+00 : f32
    %134 = vector.broadcast %cst_48 : f32 to vector<2x128xf32>
    %135 = arith.addf %134, %133 : vector<2x128xf32>
    %136 = arith.divf %134, %135 : vector<2x128xf32>
    %137 = vector.extract_strided_slice %122 {offsets = [0, 128], sizes = [2, 128], strides = [1, 1]} : vector<2x384xf32> to vector<2x128xf32>
    %138 = vector.extract_strided_slice %128 {offsets = [0, 128], sizes = [2, 128], strides = [1, 1]} : vector<2x384xf32> to vector<2x128xf32>
    %139 = arith.addf %137, %138 : vector<2x128xf32>
    %140 = arith.negf %139 : vector<2x128xf32>
    %141 = math.exp %140 : vector<2x128xf32>
    %cst_49 = arith.constant 1.000000e+00 : f32
    %142 = vector.broadcast %cst_49 : f32 to vector<2x128xf32>
    %143 = arith.addf %142, %141 : vector<2x128xf32>
    %144 = arith.divf %142, %143 : vector<2x128xf32>
    %145 = vector.extract_strided_slice %122 {offsets = [0, 256], sizes = [2, 128], strides = [1, 1]} : vector<2x384xf32> to vector<2x128xf32>
    %146 = vector.extract_strided_slice %128 {offsets = [0, 256], sizes = [2, 128], strides = [1, 1]} : vector<2x384xf32> to vector<2x128xf32>
    %147 = arith.mulf %136, %146 : vector<2x128xf32>
    %148 = arith.addf %145, %147 : vector<2x128xf32>
    %149 = math.tanh %148 : vector<2x128xf32>
    %cst_50 = arith.constant 1.000000e+00 : f32
    %150 = vector.broadcast %cst_50 : f32 to vector<2x128xf32>
    %151 = arith.subf %150, %144 : vector<2x128xf32>
    %152 = arith.mulf %151, %149 : vector<2x128xf32>
    %153 = arith.mulf %144, %121 : vector<2x128xf32>
    %154 = arith.addf %152, %153 : vector<2x128xf32>
    %155 = vector.extract_strided_slice %55 {offsets = [0, 0], sizes = [1, 128], strides = [1, 1]} : vector<2x128xf32> to vector<1x128xf32>
    %156 = vector.extract_strided_slice %88 {offsets = [0, 0], sizes = [1, 128], strides = [1, 1]} : vector<2x128xf32> to vector<1x128xf32>
    %157 = vector.extract_strided_slice %121 {offsets = [0, 0], sizes = [1, 128], strides = [1, 1]} : vector<2x128xf32> to vector<1x128xf32>
    %158 = vector.extract_strided_slice %154 {offsets = [0, 0], sizes = [1, 128], strides = [1, 1]} : vector<2x128xf32> to vector<1x128xf32>
    %159 = vector.extract_strided_slice %55 {offsets = [1, 0], sizes = [1, 128], strides = [1, 1]} : vector<2x128xf32> to vector<1x128xf32>
    %160 = vector.extract_strided_slice %88 {offsets = [1, 0], sizes = [1, 128], strides = [1, 1]} : vector<2x128xf32> to vector<1x128xf32>
    %161 = vector.extract_strided_slice %121 {offsets = [1, 0], sizes = [1, 128], strides = [1, 1]} : vector<2x128xf32> to vector<1x128xf32>
    %162 = vector.extract_strided_slice %154 {offsets = [1, 0], sizes = [1, 128], strides = [1, 1]} : vector<2x128xf32> to vector<1x128xf32>
    %163 = tpu.concatenate %155, %156, %157, %158, %159, %160, %161, %162 in 0 : vector<1x128xf32>, vector<1x128xf32>, vector<1x128xf32>, vector<1x128xf32>, vector<1x128xf32>, vector<1x128xf32>, vector<1x128xf32>, vector<1x128xf32> -> vector<8x128xf32>
    %164 = arith.truncf %163 : vector<8x128xf32> to vector<8x128xbf16>
    %c0_51 = arith.constant 0 : index
    %c0_52 = arith.constant 0 : index
    %165 = vector.load %arg9[%c0_51, %c0_52] : memref<128x384xbf16, #tpu.memory_space<vmem>>, vector<128x384xbf16>
    %cst_53 = arith.constant dense<0.000000e+00> : vector<8x384xf32>
    %166 = tpu.matmul %164, %165, %cst_53 {dimension_numbers = #tpu.dot_dimension_numbers<[1], [0], [0], [1], [0, 0, 1, 1], [], []>} : vector<8x128xbf16>, vector<128x384xbf16>, vector<8x384xf32> -> vector<8x384xf32>
    %c0_54 = arith.constant 0 : index
    %c0_55 = arith.constant 0 : index
    %167 = vector.load %arg10[%c0_54, %c0_55] : memref<1x384xf32, #tpu.memory_space<vmem>>, vector<1x384xf32>
    %168 = vector.broadcast %167 : vector<1x384xf32> to vector<8x384xf32>
    %169 = arith.addf %166, %168 : vector<8x384xf32>
    %170 = vector.extract_strided_slice %169 {offsets = [0, 0], sizes = [4, 384], strides = [1, 1]} : vector<8x384xf32> to vector<4x384xf32>
    %171 = vector.extract_strided_slice %170 {offsets = [0, 0], sizes = [4, 128], strides = [1, 1]} : vector<4x384xf32> to vector<4x128xf32>
    %172 = arith.truncf %171 : vector<4x128xf32> to vector<4x128xbf16>
    %173 = vector.extract_strided_slice %170 {offsets = [0, 128], sizes = [4, 128], strides = [1, 1]} : vector<4x384xf32> to vector<4x128xf32>
    %174 = arith.truncf %173 : vector<4x128xf32> to vector<4x128xbf16>
    %175 = vector.extract_strided_slice %170 {offsets = [0, 256], sizes = [4, 128], strides = [1, 1]} : vector<4x384xf32> to vector<4x128xf32>
    %176 = arith.truncf %175 : vector<4x128xf32> to vector<4x128xbf16>
    %cst_56 = arith.constant 0.000000e+00 : f32
    %177 = vector.broadcast %cst_56 : f32 to vector<4x128xf32>
    %178 = vector.extract_strided_slice %172 {offsets = [0, 0], sizes = [4, 16], strides = [1, 1]} : vector<4x128xbf16> to vector<4x16xbf16>
    %179 = vector.extract_strided_slice %174 {offsets = [0, 0], sizes = [4, 16], strides = [1, 1]} : vector<4x128xbf16> to vector<4x16xbf16>
    %cst_57 = arith.constant dense<0.000000e+00> : vector<4x4xf32>
    %180 = tpu.matmul %178, %179, %cst_57 {dimension_numbers = #tpu.dot_dimension_numbers<[1], [1], [0], [0], [0, 0, 1, 0], [], []>} : vector<4x16xbf16>, vector<4x16xbf16>, vector<4x4xf32> -> vector<4x4xf32>
    %cst_58 = arith.constant dense<0xFF800000> : vector<4xf32>
    %181 = vector.multi_reduction <maximumf>, %180, %cst_58 [1] : vector<4x4xf32> to vector<4xf32>
    %182 = vector.shape_cast %181 : vector<4xf32> to vector<4x1xf32>
    %183 = vector.broadcast %182 : vector<4x1xf32> to vector<4x4xf32>
    %184 = arith.subf %180, %183 : vector<4x4xf32>
    %185 = math.exp %184 : vector<4x4xf32>
    %cst_59 = arith.constant dense<0.000000e+00> : vector<4xf32>
    %186 = vector.multi_reduction <add>, %185, %cst_59 [1] : vector<4x4xf32> to vector<4xf32>
    %187 = vector.shape_cast %186 : vector<4xf32> to vector<4x1xf32>
    %188 = tpu.reciprocal %187 {approx = true} : vector<4x1xf32> -> vector<4x1xf32>
    %189 = vector.broadcast %188 : vector<4x1xf32> to vector<4x4xf32>
    %190 = arith.mulf %185, %189 : vector<4x4xf32>
    %191 = arith.truncf %190 : vector<4x4xf32> to vector<4x4xbf16>
    %192 = vector.extract_strided_slice %176 {offsets = [0, 0], sizes = [4, 16], strides = [1, 1]} : vector<4x128xbf16> to vector<4x16xbf16>
    %cst_60 = arith.constant dense<0.000000e+00> : vector<4x16xf32>
    %193 = tpu.matmul %191, %192, %cst_60 {dimension_numbers = #tpu.dot_dimension_numbers<[1], [0], [0], [1], [0, 0, 1, 1], [], []>} : vector<4x4xbf16>, vector<4x16xbf16>, vector<4x16xf32> -> vector<4x16xf32>
    %194 = arith.truncf %193 : vector<4x16xf32> to vector<4x16xbf16>
    %c0_61 = arith.constant 0 : index
    %c0_62 = arith.constant 0 : index
    %195 = vector.load %arg11[%c0_61, %c0_62] : memref<128x128xbf16, #tpu.memory_space<vmem>>, vector<16x128xbf16>
    %cst_63 = arith.constant dense<0.000000e+00> : vector<4x128xf32>
    %196 = tpu.matmul %194, %195, %cst_63 {dimension_numbers = #tpu.dot_dimension_numbers<[1], [0], [0], [1], [0, 0, 1, 1], [], []>} : vector<4x16xbf16>, vector<16x128xbf16>, vector<4x128xf32> -> vector<4x128xf32>
    %197 = arith.addf %177, %196 : vector<4x128xf32>
    %198 = vector.extract_strided_slice %172 {offsets = [0, 16], sizes = [4, 16], strides = [1, 1]} : vector<4x128xbf16> to vector<4x16xbf16>
    %199 = vector.extract_strided_slice %174 {offsets = [0, 16], sizes = [4, 16], strides = [1, 1]} : vector<4x128xbf16> to vector<4x16xbf16>
    %cst_64 = arith.constant dense<0.000000e+00> : vector<4x4xf32>
    %200 = tpu.matmul %198, %199, %cst_64 {dimension_numbers = #tpu.dot_dimension_numbers<[1], [1], [0], [0], [0, 0, 1, 0], [], []>} : vector<4x16xbf16>, vector<4x16xbf16>, vector<4x4xf32> -> vector<4x4xf32>
    %cst_65 = arith.constant dense<0xFF800000> : vector<4xf32>
    %201 = vector.multi_reduction <maximumf>, %200, %cst_65 [1] : vector<4x4xf32> to vector<4xf32>
    %202 = vector.shape_cast %201 : vector<4xf32> to vector<4x1xf32>
    %203 = vector.broadcast %202 : vector<4x1xf32> to vector<4x4xf32>
    %204 = arith.subf %200, %203 : vector<4x4xf32>
    %205 = math.exp %204 : vector<4x4xf32>
    %cst_66 = arith.constant dense<0.000000e+00> : vector<4xf32>
    %206 = vector.multi_reduction <add>, %205, %cst_66 [1] : vector<4x4xf32> to vector<4xf32>
    %207 = vector.shape_cast %206 : vector<4xf32> to vector<4x1xf32>
    %208 = tpu.reciprocal %207 {approx = true} : vector<4x1xf32> -> vector<4x1xf32>
    %209 = vector.broadcast %208 : vector<4x1xf32> to vector<4x4xf32>
    %210 = arith.mulf %205, %209 : vector<4x4xf32>
    %211 = arith.truncf %210 : vector<4x4xf32> to vector<4x4xbf16>
    %212 = vector.extract_strided_slice %176 {offsets = [0, 16], sizes = [4, 16], strides = [1, 1]} : vector<4x128xbf16> to vector<4x16xbf16>
    %cst_67 = arith.constant dense<0.000000e+00> : vector<4x16xf32>
    %213 = tpu.matmul %211, %212, %cst_67 {dimension_numbers = #tpu.dot_dimension_numbers<[1], [0], [0], [1], [0, 0, 1, 1], [], []>} : vector<4x4xbf16>, vector<4x16xbf16>, vector<4x16xf32> -> vector<4x16xf32>
    %214 = arith.truncf %213 : vector<4x16xf32> to vector<4x16xbf16>
    %c16 = arith.constant 16 : index
    %c0_68 = arith.constant 0 : index
    %215 = vector.load %arg11[%c16, %c0_68] : memref<128x128xbf16, #tpu.memory_space<vmem>>, vector<16x128xbf16>
    %cst_69 = arith.constant dense<0.000000e+00> : vector<4x128xf32>
    %216 = tpu.matmul %214, %215, %cst_69 {dimension_numbers = #tpu.dot_dimension_numbers<[1], [0], [0], [1], [0, 0, 1, 1], [], []>} : vector<4x16xbf16>, vector<16x128xbf16>, vector<4x128xf32> -> vector<4x128xf32>
    %217 = arith.addf %197, %216 : vector<4x128xf32>
    %218 = vector.extract_strided_slice %172 {offsets = [0, 32], sizes = [4, 16], strides = [1, 1]} : vector<4x128xbf16> to vector<4x16xbf16>
    %219 = vector.extract_strided_slice %174 {offsets = [0, 32], sizes = [4, 16], strides = [1, 1]} : vector<4x128xbf16> to vector<4x16xbf16>
    %cst_70 = arith.constant dense<0.000000e+00> : vector<4x4xf32>
    %220 = tpu.matmul %218, %219, %cst_70 {dimension_numbers = #tpu.dot_dimension_numbers<[1], [1], [0], [0], [0, 0, 1, 0], [], []>} : vector<4x16xbf16>, vector<4x16xbf16>, vector<4x4xf32> -> vector<4x4xf32>
    %cst_71 = arith.constant dense<0xFF800000> : vector<4xf32>
    %221 = vector.multi_reduction <maximumf>, %220, %cst_71 [1] : vector<4x4xf32> to vector<4xf32>
    %222 = vector.shape_cast %221 : vector<4xf32> to vector<4x1xf32>
    %223 = vector.broadcast %222 : vector<4x1xf32> to vector<4x4xf32>
    %224 = arith.subf %220, %223 : vector<4x4xf32>
    %225 = math.exp %224 : vector<4x4xf32>
    %cst_72 = arith.constant dense<0.000000e+00> : vector<4xf32>
    %226 = vector.multi_reduction <add>, %225, %cst_72 [1] : vector<4x4xf32> to vector<4xf32>
    %227 = vector.shape_cast %226 : vector<4xf32> to vector<4x1xf32>
    %228 = tpu.reciprocal %227 {approx = true} : vector<4x1xf32> -> vector<4x1xf32>
    %229 = vector.broadcast %228 : vector<4x1xf32> to vector<4x4xf32>
    %230 = arith.mulf %225, %229 : vector<4x4xf32>
    %231 = arith.truncf %230 : vector<4x4xf32> to vector<4x4xbf16>
    %232 = vector.extract_strided_slice %176 {offsets = [0, 32], sizes = [4, 16], strides = [1, 1]} : vector<4x128xbf16> to vector<4x16xbf16>
    %cst_73 = arith.constant dense<0.000000e+00> : vector<4x16xf32>
    %233 = tpu.matmul %231, %232, %cst_73 {dimension_numbers = #tpu.dot_dimension_numbers<[1], [0], [0], [1], [0, 0, 1, 1], [], []>} : vector<4x4xbf16>, vector<4x16xbf16>, vector<4x16xf32> -> vector<4x16xf32>
    %234 = arith.truncf %233 : vector<4x16xf32> to vector<4x16xbf16>
    %c32 = arith.constant 32 : index
    %c0_74 = arith.constant 0 : index
    %235 = vector.load %arg11[%c32, %c0_74] : memref<128x128xbf16, #tpu.memory_space<vmem>>, vector<16x128xbf16>
    %cst_75 = arith.constant dense<0.000000e+00> : vector<4x128xf32>
    %236 = tpu.matmul %234, %235, %cst_75 {dimension_numbers = #tpu.dot_dimension_numbers<[1], [0], [0], [1], [0, 0, 1, 1], [], []>} : vector<4x16xbf16>, vector<16x128xbf16>, vector<4x128xf32> -> vector<4x128xf32>
    %237 = arith.addf %217, %236 : vector<4x128xf32>
    %238 = vector.extract_strided_slice %172 {offsets = [0, 48], sizes = [4, 16], strides = [1, 1]} : vector<4x128xbf16> to vector<4x16xbf16>
    %239 = vector.extract_strided_slice %174 {offsets = [0, 48], sizes = [4, 16], strides = [1, 1]} : vector<4x128xbf16> to vector<4x16xbf16>
    %cst_76 = arith.constant dense<0.000000e+00> : vector<4x4xf32>
    %240 = tpu.matmul %238, %239, %cst_76 {dimension_numbers = #tpu.dot_dimension_numbers<[1], [1], [0], [0], [0, 0, 1, 0], [], []>} : vector<4x16xbf16>, vector<4x16xbf16>, vector<4x4xf32> -> vector<4x4xf32>
    %cst_77 = arith.constant dense<0xFF800000> : vector<4xf32>
    %241 = vector.multi_reduction <maximumf>, %240, %cst_77 [1] : vector<4x4xf32> to vector<4xf32>
    %242 = vector.shape_cast %241 : vector<4xf32> to vector<4x1xf32>
    %243 = vector.broadcast %242 : vector<4x1xf32> to vector<4x4xf32>
    %244 = arith.subf %240, %243 : vector<4x4xf32>
    %245 = math.exp %244 : vector<4x4xf32>
    %cst_78 = arith.constant dense<0.000000e+00> : vector<4xf32>
    %246 = vector.multi_reduction <add>, %245, %cst_78 [1] : vector<4x4xf32> to vector<4xf32>
    %247 = vector.shape_cast %246 : vector<4xf32> to vector<4x1xf32>
    %248 = tpu.reciprocal %247 {approx = true} : vector<4x1xf32> -> vector<4x1xf32>
    %249 = vector.broadcast %248 : vector<4x1xf32> to vector<4x4xf32>
    %250 = arith.mulf %245, %249 : vector<4x4xf32>
    %251 = arith.truncf %250 : vector<4x4xf32> to vector<4x4xbf16>
    %252 = vector.extract_strided_slice %176 {offsets = [0, 48], sizes = [4, 16], strides = [1, 1]} : vector<4x128xbf16> to vector<4x16xbf16>
    %cst_79 = arith.constant dense<0.000000e+00> : vector<4x16xf32>
    %253 = tpu.matmul %251, %252, %cst_79 {dimension_numbers = #tpu.dot_dimension_numbers<[1], [0], [0], [1], [0, 0, 1, 1], [], []>} : vector<4x4xbf16>, vector<4x16xbf16>, vector<4x16xf32> -> vector<4x16xf32>
    %254 = arith.truncf %253 : vector<4x16xf32> to vector<4x16xbf16>
    %c48 = arith.constant 48 : index
    %c0_80 = arith.constant 0 : index
    %255 = vector.load %arg11[%c48, %c0_80] : memref<128x128xbf16, #tpu.memory_space<vmem>>, vector<16x128xbf16>
    %cst_81 = arith.constant dense<0.000000e+00> : vector<4x128xf32>
    %256 = tpu.matmul %254, %255, %cst_81 {dimension_numbers = #tpu.dot_dimension_numbers<[1], [0], [0], [1], [0, 0, 1, 1], [], []>} : vector<4x16xbf16>, vector<16x128xbf16>, vector<4x128xf32> -> vector<4x128xf32>
    %257 = arith.addf %237, %256 : vector<4x128xf32>
    %258 = vector.extract_strided_slice %172 {offsets = [0, 64], sizes = [4, 16], strides = [1, 1]} : vector<4x128xbf16> to vector<4x16xbf16>
    %259 = vector.extract_strided_slice %174 {offsets = [0, 64], sizes = [4, 16], strides = [1, 1]} : vector<4x128xbf16> to vector<4x16xbf16>
    %cst_82 = arith.constant dense<0.000000e+00> : vector<4x4xf32>
    %260 = tpu.matmul %258, %259, %cst_82 {dimension_numbers = #tpu.dot_dimension_numbers<[1], [1], [0], [0], [0, 0, 1, 0], [], []>} : vector<4x16xbf16>, vector<4x16xbf16>, vector<4x4xf32> -> vector<4x4xf32>
    %cst_83 = arith.constant dense<0xFF800000> : vector<4xf32>
    %261 = vector.multi_reduction <maximumf>, %260, %cst_83 [1] : vector<4x4xf32> to vector<4xf32>
    %262 = vector.shape_cast %261 : vector<4xf32> to vector<4x1xf32>
    %263 = vector.broadcast %262 : vector<4x1xf32> to vector<4x4xf32>
    %264 = arith.subf %260, %263 : vector<4x4xf32>
    %265 = math.exp %264 : vector<4x4xf32>
    %cst_84 = arith.constant dense<0.000000e+00> : vector<4xf32>
    %266 = vector.multi_reduction <add>, %265, %cst_84 [1] : vector<4x4xf32> to vector<4xf32>
    %267 = vector.shape_cast %266 : vector<4xf32> to vector<4x1xf32>
    %268 = tpu.reciprocal %267 {approx = true} : vector<4x1xf32> -> vector<4x1xf32>
    %269 = vector.broadcast %268 : vector<4x1xf32> to vector<4x4xf32>
    %270 = arith.mulf %265, %269 : vector<4x4xf32>
    %271 = arith.truncf %270 : vector<4x4xf32> to vector<4x4xbf16>
    %272 = vector.extract_strided_slice %176 {offsets = [0, 64], sizes = [4, 16], strides = [1, 1]} : vector<4x128xbf16> to vector<4x16xbf16>
    %cst_85 = arith.constant dense<0.000000e+00> : vector<4x16xf32>
    %273 = tpu.matmul %271, %272, %cst_85 {dimension_numbers = #tpu.dot_dimension_numbers<[1], [0], [0], [1], [0, 0, 1, 1], [], []>} : vector<4x4xbf16>, vector<4x16xbf16>, vector<4x16xf32> -> vector<4x16xf32>
    %274 = arith.truncf %273 : vector<4x16xf32> to vector<4x16xbf16>
    %c64 = arith.constant 64 : index
    %c0_86 = arith.constant 0 : index
    %275 = vector.load %arg11[%c64, %c0_86] : memref<128x128xbf16, #tpu.memory_space<vmem>>, vector<16x128xbf16>
    %cst_87 = arith.constant dense<0.000000e+00> : vector<4x128xf32>
    %276 = tpu.matmul %274, %275, %cst_87 {dimension_numbers = #tpu.dot_dimension_numbers<[1], [0], [0], [1], [0, 0, 1, 1], [], []>} : vector<4x16xbf16>, vector<16x128xbf16>, vector<4x128xf32> -> vector<4x128xf32>
    %277 = arith.addf %257, %276 : vector<4x128xf32>
    %278 = vector.extract_strided_slice %172 {offsets = [0, 80], sizes = [4, 16], strides = [1, 1]} : vector<4x128xbf16> to vector<4x16xbf16>
    %279 = vector.extract_strided_slice %174 {offsets = [0, 80], sizes = [4, 16], strides = [1, 1]} : vector<4x128xbf16> to vector<4x16xbf16>
    %cst_88 = arith.constant dense<0.000000e+00> : vector<4x4xf32>
    %280 = tpu.matmul %278, %279, %cst_88 {dimension_numbers = #tpu.dot_dimension_numbers<[1], [1], [0], [0], [0, 0, 1, 0], [], []>} : vector<4x16xbf16>, vector<4x16xbf16>, vector<4x4xf32> -> vector<4x4xf32>
    %cst_89 = arith.constant dense<0xFF800000> : vector<4xf32>
    %281 = vector.multi_reduction <maximumf>, %280, %cst_89 [1] : vector<4x4xf32> to vector<4xf32>
    %282 = vector.shape_cast %281 : vector<4xf32> to vector<4x1xf32>
    %283 = vector.broadcast %282 : vector<4x1xf32> to vector<4x4xf32>
    %284 = arith.subf %280, %283 : vector<4x4xf32>
    %285 = math.exp %284 : vector<4x4xf32>
    %cst_90 = arith.constant dense<0.000000e+00> : vector<4xf32>
    %286 = vector.multi_reduction <add>, %285, %cst_90 [1] : vector<4x4xf32> to vector<4xf32>
    %287 = vector.shape_cast %286 : vector<4xf32> to vector<4x1xf32>
    %288 = tpu.reciprocal %287 {approx = true} : vector<4x1xf32> -> vector<4x1xf32>
    %289 = vector.broadcast %288 : vector<4x1xf32> to vector<4x4xf32>
    %290 = arith.mulf %285, %289 : vector<4x4xf32>
    %291 = arith.truncf %290 : vector<4x4xf32> to vector<4x4xbf16>
    %292 = vector.extract_strided_slice %176 {offsets = [0, 80], sizes = [4, 16], strides = [1, 1]} : vector<4x128xbf16> to vector<4x16xbf16>
    %cst_91 = arith.constant dense<0.000000e+00> : vector<4x16xf32>
    %293 = tpu.matmul %291, %292, %cst_91 {dimension_numbers = #tpu.dot_dimension_numbers<[1], [0], [0], [1], [0, 0, 1, 1], [], []>} : vector<4x4xbf16>, vector<4x16xbf16>, vector<4x16xf32> -> vector<4x16xf32>
    %294 = arith.truncf %293 : vector<4x16xf32> to vector<4x16xbf16>
    %c80 = arith.constant 80 : index
    %c0_92 = arith.constant 0 : index
    %295 = vector.load %arg11[%c80, %c0_92] : memref<128x128xbf16, #tpu.memory_space<vmem>>, vector<16x128xbf16>
    %cst_93 = arith.constant dense<0.000000e+00> : vector<4x128xf32>
    %296 = tpu.matmul %294, %295, %cst_93 {dimension_numbers = #tpu.dot_dimension_numbers<[1], [0], [0], [1], [0, 0, 1, 1], [], []>} : vector<4x16xbf16>, vector<16x128xbf16>, vector<4x128xf32> -> vector<4x128xf32>
    %297 = arith.addf %277, %296 : vector<4x128xf32>
    %298 = vector.extract_strided_slice %172 {offsets = [0, 96], sizes = [4, 16], strides = [1, 1]} : vector<4x128xbf16> to vector<4x16xbf16>
    %299 = vector.extract_strided_slice %174 {offsets = [0, 96], sizes = [4, 16], strides = [1, 1]} : vector<4x128xbf16> to vector<4x16xbf16>
    %cst_94 = arith.constant dense<0.000000e+00> : vector<4x4xf32>
    %300 = tpu.matmul %298, %299, %cst_94 {dimension_numbers = #tpu.dot_dimension_numbers<[1], [1], [0], [0], [0, 0, 1, 0], [], []>} : vector<4x16xbf16>, vector<4x16xbf16>, vector<4x4xf32> -> vector<4x4xf32>
    %cst_95 = arith.constant dense<0xFF800000> : vector<4xf32>
    %301 = vector.multi_reduction <maximumf>, %300, %cst_95 [1] : vector<4x4xf32> to vector<4xf32>
    %302 = vector.shape_cast %301 : vector<4xf32> to vector<4x1xf32>
    %303 = vector.broadcast %302 : vector<4x1xf32> to vector<4x4xf32>
    %304 = arith.subf %300, %303 : vector<4x4xf32>
    %305 = math.exp %304 : vector<4x4xf32>
    %cst_96 = arith.constant dense<0.000000e+00> : vector<4xf32>
    %306 = vector.multi_reduction <add>, %305, %cst_96 [1] : vector<4x4xf32> to vector<4xf32>
    %307 = vector.shape_cast %306 : vector<4xf32> to vector<4x1xf32>
    %308 = tpu.reciprocal %307 {approx = true} : vector<4x1xf32> -> vector<4x1xf32>
    %309 = vector.broadcast %308 : vector<4x1xf32> to vector<4x4xf32>
    %310 = arith.mulf %305, %309 : vector<4x4xf32>
    %311 = arith.truncf %310 : vector<4x4xf32> to vector<4x4xbf16>
    %312 = vector.extract_strided_slice %176 {offsets = [0, 96], sizes = [4, 16], strides = [1, 1]} : vector<4x128xbf16> to vector<4x16xbf16>
    %cst_97 = arith.constant dense<0.000000e+00> : vector<4x16xf32>
    %313 = tpu.matmul %311, %312, %cst_97 {dimension_numbers = #tpu.dot_dimension_numbers<[1], [0], [0], [1], [0, 0, 1, 1], [], []>} : vector<4x4xbf16>, vector<4x16xbf16>, vector<4x16xf32> -> vector<4x16xf32>
    %314 = arith.truncf %313 : vector<4x16xf32> to vector<4x16xbf16>
    %c96 = arith.constant 96 : index
    %c0_98 = arith.constant 0 : index
    %315 = vector.load %arg11[%c96, %c0_98] : memref<128x128xbf16, #tpu.memory_space<vmem>>, vector<16x128xbf16>
    %cst_99 = arith.constant dense<0.000000e+00> : vector<4x128xf32>
    %316 = tpu.matmul %314, %315, %cst_99 {dimension_numbers = #tpu.dot_dimension_numbers<[1], [0], [0], [1], [0, 0, 1, 1], [], []>} : vector<4x16xbf16>, vector<16x128xbf16>, vector<4x128xf32> -> vector<4x128xf32>
    %317 = arith.addf %297, %316 : vector<4x128xf32>
    %318 = vector.extract_strided_slice %172 {offsets = [0, 112], sizes = [4, 16], strides = [1, 1]} : vector<4x128xbf16> to vector<4x16xbf16>
    %319 = vector.extract_strided_slice %174 {offsets = [0, 112], sizes = [4, 16], strides = [1, 1]} : vector<4x128xbf16> to vector<4x16xbf16>
    %cst_100 = arith.constant dense<0.000000e+00> : vector<4x4xf32>
    %320 = tpu.matmul %318, %319, %cst_100 {dimension_numbers = #tpu.dot_dimension_numbers<[1], [1], [0], [0], [0, 0, 1, 0], [], []>} : vector<4x16xbf16>, vector<4x16xbf16>, vector<4x4xf32> -> vector<4x4xf32>
    %cst_101 = arith.constant dense<0xFF800000> : vector<4xf32>
    %321 = vector.multi_reduction <maximumf>, %320, %cst_101 [1] : vector<4x4xf32> to vector<4xf32>
    %322 = vector.shape_cast %321 : vector<4xf32> to vector<4x1xf32>
    %323 = vector.broadcast %322 : vector<4x1xf32> to vector<4x4xf32>
    %324 = arith.subf %320, %323 : vector<4x4xf32>
    %325 = math.exp %324 : vector<4x4xf32>
    %cst_102 = arith.constant dense<0.000000e+00> : vector<4xf32>
    %326 = vector.multi_reduction <add>, %325, %cst_102 [1] : vector<4x4xf32> to vector<4xf32>
    %327 = vector.shape_cast %326 : vector<4xf32> to vector<4x1xf32>
    %328 = tpu.reciprocal %327 {approx = true} : vector<4x1xf32> -> vector<4x1xf32>
    %329 = vector.broadcast %328 : vector<4x1xf32> to vector<4x4xf32>
    %330 = arith.mulf %325, %329 : vector<4x4xf32>
    %331 = arith.truncf %330 : vector<4x4xf32> to vector<4x4xbf16>
    %332 = vector.extract_strided_slice %176 {offsets = [0, 112], sizes = [4, 16], strides = [1, 1]} : vector<4x128xbf16> to vector<4x16xbf16>
    %cst_103 = arith.constant dense<0.000000e+00> : vector<4x16xf32>
    %333 = tpu.matmul %331, %332, %cst_103 {dimension_numbers = #tpu.dot_dimension_numbers<[1], [0], [0], [1], [0, 0, 1, 1], [], []>} : vector<4x4xbf16>, vector<4x16xbf16>, vector<4x16xf32> -> vector<4x16xf32>
    %334 = arith.truncf %333 : vector<4x16xf32> to vector<4x16xbf16>
    %c112 = arith.constant 112 : index
    %c0_104 = arith.constant 0 : index
    %335 = vector.load %arg11[%c112, %c0_104] : memref<128x128xbf16, #tpu.memory_space<vmem>>, vector<16x128xbf16>
    %cst_105 = arith.constant dense<0.000000e+00> : vector<4x128xf32>
    %336 = tpu.matmul %334, %335, %cst_105 {dimension_numbers = #tpu.dot_dimension_numbers<[1], [0], [0], [1], [0, 0, 1, 1], [], []>} : vector<4x16xbf16>, vector<16x128xbf16>, vector<4x128xf32> -> vector<4x128xf32>
    %337 = arith.addf %317, %336 : vector<4x128xf32>
    %c0_106 = arith.constant 0 : index
    %c0_107 = arith.constant 0 : index
    %338 = vector.load %arg12[%c0_106, %c0_107] : memref<1x128xf32, #tpu.memory_space<vmem>>, vector<1x128xf32>
    %339 = vector.broadcast %338 : vector<1x128xf32> to vector<4x128xf32>
    %340 = arith.addf %337, %339 : vector<4x128xf32>
    %c0_108 = arith.constant 0 : index
    %c0_109 = arith.constant 0 : index
    %c0_110 = arith.constant 0 : index
    %341 = vector.load %arg13[%c0_108, %c0_109, %c0_110] : memref<2x4x128xf32, #tpu.memory_space<vmem>>, vector<1x4x128xf32>
    %342 = vector.shape_cast %341 : vector<1x4x128xf32> to vector<4x128xf32>
    %343 = vector.shape_cast %340 : vector<4x128xf32> to vector<1x4x128xf32>
    tpu.vector_store %arg13[%c0_108, %c0_109, %c0_110], %343 {strides = array<i32>} : memref<2x4x128xf32, #tpu.memory_space<vmem>>, vector<1x4x128xf32>,
    %344 = vector.extract_strided_slice %169 {offsets = [4, 0], sizes = [4, 384], strides = [1, 1]} : vector<8x384xf32> to vector<4x384xf32>
    %345 = vector.extract_strided_slice %344 {offsets = [0, 0], sizes = [4, 128], strides = [1, 1]} : vector<4x384xf32> to vector<4x128xf32>
    %346 = arith.truncf %345 : vector<4x128xf32> to vector<4x128xbf16>
    %347 = vector.extract_strided_slice %344 {offsets = [0, 128], sizes = [4, 128], strides = [1, 1]} : vector<4x384xf32> to vector<4x128xf32>
    %348 = arith.truncf %347 : vector<4x128xf32> to vector<4x128xbf16>
    %349 = vector.extract_strided_slice %344 {offsets = [0, 256], sizes = [4, 128], strides = [1, 1]} : vector<4x384xf32> to vector<4x128xf32>
    %350 = arith.truncf %349 : vector<4x128xf32> to vector<4x128xbf16>
    %cst_111 = arith.constant 0.000000e+00 : f32
    %351 = vector.broadcast %cst_111 : f32 to vector<4x128xf32>
    %352 = vector.extract_strided_slice %346 {offsets = [0, 0], sizes = [4, 16], strides = [1, 1]} : vector<4x128xbf16> to vector<4x16xbf16>
    %353 = vector.extract_strided_slice %348 {offsets = [0, 0], sizes = [4, 16], strides = [1, 1]} : vector<4x128xbf16> to vector<4x16xbf16>
    %cst_112 = arith.constant dense<0.000000e+00> : vector<4x4xf32>
    %354 = tpu.matmul %352, %353, %cst_112 {dimension_numbers = #tpu.dot_dimension_numbers<[1], [1], [0], [0], [0, 0, 1, 0], [], []>} : vector<4x16xbf16>, vector<4x16xbf16>, vector<4x4xf32> -> vector<4x4xf32>
    %cst_113 = arith.constant dense<0xFF800000> : vector<4xf32>
    %355 = vector.multi_reduction <maximumf>, %354, %cst_113 [1] : vector<4x4xf32> to vector<4xf32>
    %356 = vector.shape_cast %355 : vector<4xf32> to vector<4x1xf32>
    %357 = vector.broadcast %356 : vector<4x1xf32> to vector<4x4xf32>
    %358 = arith.subf %354, %357 : vector<4x4xf32>
    %359 = math.exp %358 : vector<4x4xf32>
    %cst_114 = arith.constant dense<0.000000e+00> : vector<4xf32>
    %360 = vector.multi_reduction <add>, %359, %cst_114 [1] : vector<4x4xf32> to vector<4xf32>
    %361 = vector.shape_cast %360 : vector<4xf32> to vector<4x1xf32>
    %362 = tpu.reciprocal %361 {approx = true} : vector<4x1xf32> -> vector<4x1xf32>
    %363 = vector.broadcast %362 : vector<4x1xf32> to vector<4x4xf32>
    %364 = arith.mulf %359, %363 : vector<4x4xf32>
    %365 = arith.truncf %364 : vector<4x4xf32> to vector<4x4xbf16>
    %366 = vector.extract_strided_slice %350 {offsets = [0, 0], sizes = [4, 16], strides = [1, 1]} : vector<4x128xbf16> to vector<4x16xbf16>
    %cst_115 = arith.constant dense<0.000000e+00> : vector<4x16xf32>
    %367 = tpu.matmul %365, %366, %cst_115 {dimension_numbers = #tpu.dot_dimension_numbers<[1], [0], [0], [1], [0, 0, 1, 1], [], []>} : vector<4x4xbf16>, vector<4x16xbf16>, vector<4x16xf32> -> vector<4x16xf32>
    %368 = arith.truncf %367 : vector<4x16xf32> to vector<4x16xbf16>
    %c0_116 = arith.constant 0 : index
    %c0_117 = arith.constant 0 : index
    %369 = vector.load %arg11[%c0_116, %c0_117] : memref<128x128xbf16, #tpu.memory_space<vmem>>, vector<16x128xbf16>
    %cst_118 = arith.constant dense<0.000000e+00> : vector<4x128xf32>
    %370 = tpu.matmul %368, %369, %cst_118 {dimension_numbers = #tpu.dot_dimension_numbers<[1], [0], [0], [1], [0, 0, 1, 1], [], []>} : vector<4x16xbf16>, vector<16x128xbf16>, vector<4x128xf32> -> vector<4x128xf32>
    %371 = arith.addf %351, %370 : vector<4x128xf32>
    %372 = vector.extract_strided_slice %346 {offsets = [0, 16], sizes = [4, 16], strides = [1, 1]} : vector<4x128xbf16> to vector<4x16xbf16>
    %373 = vector.extract_strided_slice %348 {offsets = [0, 16], sizes = [4, 16], strides = [1, 1]} : vector<4x128xbf16> to vector<4x16xbf16>
    %cst_119 = arith.constant dense<0.000000e+00> : vector<4x4xf32>
    %374 = tpu.matmul %372, %373, %cst_119 {dimension_numbers = #tpu.dot_dimension_numbers<[1], [1], [0], [0], [0, 0, 1, 0], [], []>} : vector<4x16xbf16>, vector<4x16xbf16>, vector<4x4xf32> -> vector<4x4xf32>
    %cst_120 = arith.constant dense<0xFF800000> : vector<4xf32>
    %375 = vector.multi_reduction <maximumf>, %374, %cst_120 [1] : vector<4x4xf32> to vector<4xf32>
    %376 = vector.shape_cast %375 : vector<4xf32> to vector<4x1xf32>
    %377 = vector.broadcast %376 : vector<4x1xf32> to vector<4x4xf32>
    %378 = arith.subf %374, %377 : vector<4x4xf32>
    %379 = math.exp %378 : vector<4x4xf32>
    %cst_121 = arith.constant dense<0.000000e+00> : vector<4xf32>
    %380 = vector.multi_reduction <add>, %379, %cst_121 [1] : vector<4x4xf32> to vector<4xf32>
    %381 = vector.shape_cast %380 : vector<4xf32> to vector<4x1xf32>
    %382 = tpu.reciprocal %381 {approx = true} : vector<4x1xf32> -> vector<4x1xf32>
    %383 = vector.broadcast %382 : vector<4x1xf32> to vector<4x4xf32>
    %384 = arith.mulf %379, %383 : vector<4x4xf32>
    %385 = arith.truncf %384 : vector<4x4xf32> to vector<4x4xbf16>
    %386 = vector.extract_strided_slice %350 {offsets = [0, 16], sizes = [4, 16], strides = [1, 1]} : vector<4x128xbf16> to vector<4x16xbf16>
    %cst_122 = arith.constant dense<0.000000e+00> : vector<4x16xf32>
    %387 = tpu.matmul %385, %386, %cst_122 {dimension_numbers = #tpu.dot_dimension_numbers<[1], [0], [0], [1], [0, 0, 1, 1], [], []>} : vector<4x4xbf16>, vector<4x16xbf16>, vector<4x16xf32> -> vector<4x16xf32>
    %388 = arith.truncf %387 : vector<4x16xf32> to vector<4x16xbf16>
    %c16_123 = arith.constant 16 : index
    %c0_124 = arith.constant 0 : index
    %389 = vector.load %arg11[%c16_123, %c0_124] : memref<128x128xbf16, #tpu.memory_space<vmem>>, vector<16x128xbf16>
    %cst_125 = arith.constant dense<0.000000e+00> : vector<4x128xf32>
    %390 = tpu.matmul %388, %389, %cst_125 {dimension_numbers = #tpu.dot_dimension_numbers<[1], [0], [0], [1], [0, 0, 1, 1], [], []>} : vector<4x16xbf16>, vector<16x128xbf16>, vector<4x128xf32> -> vector<4x128xf32>
    %391 = arith.addf %371, %390 : vector<4x128xf32>
    %392 = vector.extract_strided_slice %346 {offsets = [0, 32], sizes = [4, 16], strides = [1, 1]} : vector<4x128xbf16> to vector<4x16xbf16>
    %393 = vector.extract_strided_slice %348 {offsets = [0, 32], sizes = [4, 16], strides = [1, 1]} : vector<4x128xbf16> to vector<4x16xbf16>
    %cst_126 = arith.constant dense<0.000000e+00> : vector<4x4xf32>
    %394 = tpu.matmul %392, %393, %cst_126 {dimension_numbers = #tpu.dot_dimension_numbers<[1], [1], [0], [0], [0, 0, 1, 0], [], []>} : vector<4x16xbf16>, vector<4x16xbf16>, vector<4x4xf32> -> vector<4x4xf32>
    %cst_127 = arith.constant dense<0xFF800000> : vector<4xf32>
    %395 = vector.multi_reduction <maximumf>, %394, %cst_127 [1] : vector<4x4xf32> to vector<4xf32>
    %396 = vector.shape_cast %395 : vector<4xf32> to vector<4x1xf32>
    %397 = vector.broadcast %396 : vector<4x1xf32> to vector<4x4xf32>
    %398 = arith.subf %394, %397 : vector<4x4xf32>
    %399 = math.exp %398 : vector<4x4xf32>
    %cst_128 = arith.constant dense<0.000000e+00> : vector<4xf32>
    %400 = vector.multi_reduction <add>, %399, %cst_128 [1] : vector<4x4xf32> to vector<4xf32>
    %401 = vector.shape_cast %400 : vector<4xf32> to vector<4x1xf32>
    %402 = tpu.reciprocal %401 {approx = true} : vector<4x1xf32> -> vector<4x1xf32>
    %403 = vector.broadcast %402 : vector<4x1xf32> to vector<4x4xf32>
    %404 = arith.mulf %399, %403 : vector<4x4xf32>
    %405 = arith.truncf %404 : vector<4x4xf32> to vector<4x4xbf16>
    %406 = vector.extract_strided_slice %350 {offsets = [0, 32], sizes = [4, 16], strides = [1, 1]} : vector<4x128xbf16> to vector<4x16xbf16>
    %cst_129 = arith.constant dense<0.000000e+00> : vector<4x16xf32>
    %407 = tpu.matmul %405, %406, %cst_129 {dimension_numbers = #tpu.dot_dimension_numbers<[1], [0], [0], [1], [0, 0, 1, 1], [], []>} : vector<4x4xbf16>, vector<4x16xbf16>, vector<4x16xf32> -> vector<4x16xf32>
    %408 = arith.truncf %407 : vector<4x16xf32> to vector<4x16xbf16>
    %c32_130 = arith.constant 32 : index
    %c0_131 = arith.constant 0 : index
    %409 = vector.load %arg11[%c32_130, %c0_131] : memref<128x128xbf16, #tpu.memory_space<vmem>>, vector<16x128xbf16>
    %cst_132 = arith.constant dense<0.000000e+00> : vector<4x128xf32>
    %410 = tpu.matmul %408, %409, %cst_132 {dimension_numbers = #tpu.dot_dimension_numbers<[1], [0], [0], [1], [0, 0, 1, 1], [], []>} : vector<4x16xbf16>, vector<16x128xbf16>, vector<4x128xf32> -> vector<4x128xf32>
    %411 = arith.addf %391, %410 : vector<4x128xf32>
    %412 = vector.extract_strided_slice %346 {offsets = [0, 48], sizes = [4, 16], strides = [1, 1]} : vector<4x128xbf16> to vector<4x16xbf16>
    %413 = vector.extract_strided_slice %348 {offsets = [0, 48], sizes = [4, 16], strides = [1, 1]} : vector<4x128xbf16> to vector<4x16xbf16>
    %cst_133 = arith.constant dense<0.000000e+00> : vector<4x4xf32>
    %414 = tpu.matmul %412, %413, %cst_133 {dimension_numbers = #tpu.dot_dimension_numbers<[1], [1], [0], [0], [0, 0, 1, 0], [], []>} : vector<4x16xbf16>, vector<4x16xbf16>, vector<4x4xf32> -> vector<4x4xf32>
    %cst_134 = arith.constant dense<0xFF800000> : vector<4xf32>
    %415 = vector.multi_reduction <maximumf>, %414, %cst_134 [1] : vector<4x4xf32> to vector<4xf32>
    %416 = vector.shape_cast %415 : vector<4xf32> to vector<4x1xf32>
    %417 = vector.broadcast %416 : vector<4x1xf32> to vector<4x4xf32>
    %418 = arith.subf %414, %417 : vector<4x4xf32>
    %419 = math.exp %418 : vector<4x4xf32>
    %cst_135 = arith.constant dense<0.000000e+00> : vector<4xf32>
    %420 = vector.multi_reduction <add>, %419, %cst_135 [1] : vector<4x4xf32> to vector<4xf32>
    %421 = vector.shape_cast %420 : vector<4xf32> to vector<4x1xf32>
    %422 = tpu.reciprocal %421 {approx = true} : vector<4x1xf32> -> vector<4x1xf32>
    %423 = vector.broadcast %422 : vector<4x1xf32> to vector<4x4xf32>
    %424 = arith.mulf %419, %423 : vector<4x4xf32>
    %425 = arith.truncf %424 : vector<4x4xf32> to vector<4x4xbf16>
    %426 = vector.extract_strided_slice %350 {offsets = [0, 48], sizes = [4, 16], strides = [1, 1]} : vector<4x128xbf16> to vector<4x16xbf16>
    %cst_136 = arith.constant dense<0.000000e+00> : vector<4x16xf32>
    %427 = tpu.matmul %425, %426, %cst_136 {dimension_numbers = #tpu.dot_dimension_numbers<[1], [0], [0], [1], [0, 0, 1, 1], [], []>} : vector<4x4xbf16>, vector<4x16xbf16>, vector<4x16xf32> -> vector<4x16xf32>
    %428 = arith.truncf %427 : vector<4x16xf32> to vector<4x16xbf16>
    %c48_137 = arith.constant 48 : index
    %c0_138 = arith.constant 0 : index
    %429 = vector.load %arg11[%c48_137, %c0_138] : memref<128x128xbf16, #tpu.memory_space<vmem>>, vector<16x128xbf16>
    %cst_139 = arith.constant dense<0.000000e+00> : vector<4x128xf32>
    %430 = tpu.matmul %428, %429, %cst_139 {dimension_numbers = #tpu.dot_dimension_numbers<[1], [0], [0], [1], [0, 0, 1, 1], [], []>} : vector<4x16xbf16>, vector<16x128xbf16>, vector<4x128xf32> -> vector<4x128xf32>
    %431 = arith.addf %411, %430 : vector<4x128xf32>
    %432 = vector.extract_strided_slice %346 {offsets = [0, 64], sizes = [4, 16], strides = [1, 1]} : vector<4x128xbf16> to vector<4x16xbf16>
    %433 = vector.extract_strided_slice %348 {offsets = [0, 64], sizes = [4, 16], strides = [1, 1]} : vector<4x128xbf16> to vector<4x16xbf16>
    %cst_140 = arith.constant dense<0.000000e+00> : vector<4x4xf32>
    %434 = tpu.matmul %432, %433, %cst_140 {dimension_numbers = #tpu.dot_dimension_numbers<[1], [1], [0], [0], [0, 0, 1, 0], [], []>} : vector<4x16xbf16>, vector<4x16xbf16>, vector<4x4xf32> -> vector<4x4xf32>
    %cst_141 = arith.constant dense<0xFF800000> : vector<4xf32>
    %435 = vector.multi_reduction <maximumf>, %434, %cst_141 [1] : vector<4x4xf32> to vector<4xf32>
    %436 = vector.shape_cast %435 : vector<4xf32> to vector<4x1xf32>
    %437 = vector.broadcast %436 : vector<4x1xf32> to vector<4x4xf32>
    %438 = arith.subf %434, %437 : vector<4x4xf32>
    %439 = math.exp %438 : vector<4x4xf32>
    %cst_142 = arith.constant dense<0.000000e+00> : vector<4xf32>
    %440 = vector.multi_reduction <add>, %439, %cst_142 [1] : vector<4x4xf32> to vector<4xf32>
    %441 = vector.shape_cast %440 : vector<4xf32> to vector<4x1xf32>
    %442 = tpu.reciprocal %441 {approx = true} : vector<4x1xf32> -> vector<4x1xf32>
    %443 = vector.broadcast %442 : vector<4x1xf32> to vector<4x4xf32>
    %444 = arith.mulf %439, %443 : vector<4x4xf32>
    %445 = arith.truncf %444 : vector<4x4xf32> to vector<4x4xbf16>
    %446 = vector.extract_strided_slice %350 {offsets = [0, 64], sizes = [4, 16], strides = [1, 1]} : vector<4x128xbf16> to vector<4x16xbf16>
    %cst_143 = arith.constant dense<0.000000e+00> : vector<4x16xf32>
    %447 = tpu.matmul %445, %446, %cst_143 {dimension_numbers = #tpu.dot_dimension_numbers<[1], [0], [0], [1], [0, 0, 1, 1], [], []>} : vector<4x4xbf16>, vector<4x16xbf16>, vector<4x16xf32> -> vector<4x16xf32>
    %448 = arith.truncf %447 : vector<4x16xf32> to vector<4x16xbf16>
    %c64_144 = arith.constant 64 : index
    %c0_145 = arith.constant 0 : index
    %449 = vector.load %arg11[%c64_144, %c0_145] : memref<128x128xbf16, #tpu.memory_space<vmem>>, vector<16x128xbf16>
    %cst_146 = arith.constant dense<0.000000e+00> : vector<4x128xf32>
    %450 = tpu.matmul %448, %449, %cst_146 {dimension_numbers = #tpu.dot_dimension_numbers<[1], [0], [0], [1], [0, 0, 1, 1], [], []>} : vector<4x16xbf16>, vector<16x128xbf16>, vector<4x128xf32> -> vector<4x128xf32>
    %451 = arith.addf %431, %450 : vector<4x128xf32>
    %452 = vector.extract_strided_slice %346 {offsets = [0, 80], sizes = [4, 16], strides = [1, 1]} : vector<4x128xbf16> to vector<4x16xbf16>
    %453 = vector.extract_strided_slice %348 {offsets = [0, 80], sizes = [4, 16], strides = [1, 1]} : vector<4x128xbf16> to vector<4x16xbf16>
    %cst_147 = arith.constant dense<0.000000e+00> : vector<4x4xf32>
    %454 = tpu.matmul %452, %453, %cst_147 {dimension_numbers = #tpu.dot_dimension_numbers<[1], [1], [0], [0], [0, 0, 1, 0], [], []>} : vector<4x16xbf16>, vector<4x16xbf16>, vector<4x4xf32> -> vector<4x4xf32>
    %cst_148 = arith.constant dense<0xFF800000> : vector<4xf32>
    %455 = vector.multi_reduction <maximumf>, %454, %cst_148 [1] : vector<4x4xf32> to vector<4xf32>
    %456 = vector.shape_cast %455 : vector<4xf32> to vector<4x1xf32>
    %457 = vector.broadcast %456 : vector<4x1xf32> to vector<4x4xf32>
    %458 = arith.subf %454, %457 : vector<4x4xf32>
    %459 = math.exp %458 : vector<4x4xf32>
    %cst_149 = arith.constant dense<0.000000e+00> : vector<4xf32>
    %460 = vector.multi_reduction <add>, %459, %cst_149 [1] : vector<4x4xf32> to vector<4xf32>
    %461 = vector.shape_cast %460 : vector<4xf32> to vector<4x1xf32>
    %462 = tpu.reciprocal %461 {approx = true} : vector<4x1xf32> -> vector<4x1xf32>
    %463 = vector.broadcast %462 : vector<4x1xf32> to vector<4x4xf32>
    %464 = arith.mulf %459, %463 : vector<4x4xf32>
    %465 = arith.truncf %464 : vector<4x4xf32> to vector<4x4xbf16>
    %466 = vector.extract_strided_slice %350 {offsets = [0, 80], sizes = [4, 16], strides = [1, 1]} : vector<4x128xbf16> to vector<4x16xbf16>
    %cst_150 = arith.constant dense<0.000000e+00> : vector<4x16xf32>
    %467 = tpu.matmul %465, %466, %cst_150 {dimension_numbers = #tpu.dot_dimension_numbers<[1], [0], [0], [1], [0, 0, 1, 1], [], []>} : vector<4x4xbf16>, vector<4x16xbf16>, vector<4x16xf32> -> vector<4x16xf32>
    %468 = arith.truncf %467 : vector<4x16xf32> to vector<4x16xbf16>
    %c80_151 = arith.constant 80 : index
    %c0_152 = arith.constant 0 : index
    %469 = vector.load %arg11[%c80_151, %c0_152] : memref<128x128xbf16, #tpu.memory_space<vmem>>, vector<16x128xbf16>
    %cst_153 = arith.constant dense<0.000000e+00> : vector<4x128xf32>
    %470 = tpu.matmul %468, %469, %cst_153 {dimension_numbers = #tpu.dot_dimension_numbers<[1], [0], [0], [1], [0, 0, 1, 1], [], []>} : vector<4x16xbf16>, vector<16x128xbf16>, vector<4x128xf32> -> vector<4x128xf32>
    %471 = arith.addf %451, %470 : vector<4x128xf32>
    %472 = vector.extract_strided_slice %346 {offsets = [0, 96], sizes = [4, 16], strides = [1, 1]} : vector<4x128xbf16> to vector<4x16xbf16>
    %473 = vector.extract_strided_slice %348 {offsets = [0, 96], sizes = [4, 16], strides = [1, 1]} : vector<4x128xbf16> to vector<4x16xbf16>
    %cst_154 = arith.constant dense<0.000000e+00> : vector<4x4xf32>
    %474 = tpu.matmul %472, %473, %cst_154 {dimension_numbers = #tpu.dot_dimension_numbers<[1], [1], [0], [0], [0, 0, 1, 0], [], []>} : vector<4x16xbf16>, vector<4x16xbf16>, vector<4x4xf32> -> vector<4x4xf32>
    %cst_155 = arith.constant dense<0xFF800000> : vector<4xf32>
    %475 = vector.multi_reduction <maximumf>, %474, %cst_155 [1] : vector<4x4xf32> to vector<4xf32>
    %476 = vector.shape_cast %475 : vector<4xf32> to vector<4x1xf32>
    %477 = vector.broadcast %476 : vector<4x1xf32> to vector<4x4xf32>
    %478 = arith.subf %474, %477 : vector<4x4xf32>
    %479 = math.exp %478 : vector<4x4xf32>
    %cst_156 = arith.constant dense<0.000000e+00> : vector<4xf32>
    %480 = vector.multi_reduction <add>, %479, %cst_156 [1] : vector<4x4xf32> to vector<4xf32>
    %481 = vector.shape_cast %480 : vector<4xf32> to vector<4x1xf32>
    %482 = tpu.reciprocal %481 {approx = true} : vector<4x1xf32> -> vector<4x1xf32>
    %483 = vector.broadcast %482 : vector<4x1xf32> to vector<4x4xf32>
    %484 = arith.mulf %479, %483 : vector<4x4xf32>
    %485 = arith.truncf %484 : vector<4x4xf32> to vector<4x4xbf16>
    %486 = vector.extract_strided_slice %350 {offsets = [0, 96], sizes = [4, 16], strides = [1, 1]} : vector<4x128xbf16> to vector<4x16xbf16>
    %cst_157 = arith.constant dense<0.000000e+00> : vector<4x16xf32>
    %487 = tpu.matmul %485, %486, %cst_157 {dimension_numbers = #tpu.dot_dimension_numbers<[1], [0], [0], [1], [0, 0, 1, 1], [], []>} : vector<4x4xbf16>, vector<4x16xbf16>, vector<4x16xf32> -> vector<4x16xf32>
    %488 = arith.truncf %487 : vector<4x16xf32> to vector<4x16xbf16>
    %c96_158 = arith.constant 96 : index
    %c0_159 = arith.constant 0 : index
    %489 = vector.load %arg11[%c96_158, %c0_159] : memref<128x128xbf16, #tpu.memory_space<vmem>>, vector<16x128xbf16>
    %cst_160 = arith.constant dense<0.000000e+00> : vector<4x128xf32>
    %490 = tpu.matmul %488, %489, %cst_160 {dimension_numbers = #tpu.dot_dimension_numbers<[1], [0], [0], [1], [0, 0, 1, 1], [], []>} : vector<4x16xbf16>, vector<16x128xbf16>, vector<4x128xf32> -> vector<4x128xf32>
    %491 = arith.addf %471, %490 : vector<4x128xf32>
    %492 = vector.extract_strided_slice %346 {offsets = [0, 112], sizes = [4, 16], strides = [1, 1]} : vector<4x128xbf16> to vector<4x16xbf16>
    %493 = vector.extract_strided_slice %348 {offsets = [0, 112], sizes = [4, 16], strides = [1, 1]} : vector<4x128xbf16> to vector<4x16xbf16>
    %cst_161 = arith.constant dense<0.000000e+00> : vector<4x4xf32>
    %494 = tpu.matmul %492, %493, %cst_161 {dimension_numbers = #tpu.dot_dimension_numbers<[1], [1], [0], [0], [0, 0, 1, 0], [], []>} : vector<4x16xbf16>, vector<4x16xbf16>, vector<4x4xf32> -> vector<4x4xf32>
    %cst_162 = arith.constant dense<0xFF800000> : vector<4xf32>
    %495 = vector.multi_reduction <maximumf>, %494, %cst_162 [1] : vector<4x4xf32> to vector<4xf32>
    %496 = vector.shape_cast %495 : vector<4xf32> to vector<4x1xf32>
    %497 = vector.broadcast %496 : vector<4x1xf32> to vector<4x4xf32>
    %498 = arith.subf %494, %497 : vector<4x4xf32>
    %499 = math.exp %498 : vector<4x4xf32>
    %cst_163 = arith.constant dense<0.000000e+00> : vector<4xf32>
    %500 = vector.multi_reduction <add>, %499, %cst_163 [1] : vector<4x4xf32> to vector<4xf32>
    %501 = vector.shape_cast %500 : vector<4xf32> to vector<4x1xf32>
    %502 = tpu.reciprocal %501 {approx = true} : vector<4x1xf32> -> vector<4x1xf32>
    %503 = vector.broadcast %502 : vector<4x1xf32> to vector<4x4xf32>
    %504 = arith.mulf %499, %503 : vector<4x4xf32>
    %505 = arith.truncf %504 : vector<4x4xf32> to vector<4x4xbf16>
    %506 = vector.extract_strided_slice %350 {offsets = [0, 112], sizes = [4, 16], strides = [1, 1]} : vector<4x128xbf16> to vector<4x16xbf16>
    %cst_164 = arith.constant dense<0.000000e+00> : vector<4x16xf32>
    %507 = tpu.matmul %505, %506, %cst_164 {dimension_numbers = #tpu.dot_dimension_numbers<[1], [0], [0], [1], [0, 0, 1, 1], [], []>} : vector<4x4xbf16>, vector<4x16xbf16>, vector<4x16xf32> -> vector<4x16xf32>
    %508 = arith.truncf %507 : vector<4x16xf32> to vector<4x16xbf16>
    %c112_165 = arith.constant 112 : index
    %c0_166 = arith.constant 0 : index
    %509 = vector.load %arg11[%c112_165, %c0_166] : memref<128x128xbf16, #tpu.memory_space<vmem>>, vector<16x128xbf16>
    %cst_167 = arith.constant dense<0.000000e+00> : vector<4x128xf32>
    %510 = tpu.matmul %508, %509, %cst_167 {dimension_numbers = #tpu.dot_dimension_numbers<[1], [0], [0], [1], [0, 0, 1, 1], [], []>} : vector<4x16xbf16>, vector<16x128xbf16>, vector<4x128xf32> -> vector<4x128xf32>
    %511 = arith.addf %491, %510 : vector<4x128xf32>
    %c0_168 = arith.constant 0 : index
    %c0_169 = arith.constant 0 : index
    %512 = vector.load %arg12[%c0_168, %c0_169] : memref<1x128xf32, #tpu.memory_space<vmem>>, vector<1x128xf32>
    %513 = vector.broadcast %512 : vector<1x128xf32> to vector<4x128xf32>
    %514 = arith.addf %511, %513 : vector<4x128xf32>
    %c1 = arith.constant 1 : index
    %c0_170 = arith.constant 0 : index
    %c0_171 = arith.constant 0 : index
    %515 = vector.load %arg13[%c1, %c0_170, %c0_171] : memref<2x4x128xf32, #tpu.memory_space<vmem>>, vector<1x4x128xf32>
    %516 = vector.shape_cast %515 : vector<1x4x128xf32> to vector<4x128xf32>
    %517 = vector.shape_cast %514 : vector<4x128xf32> to vector<1x4x128xf32>
    tpu.vector_store %arg13[%c1, %c0_170, %c0_171], %517 {strides = array<i32>} : memref<2x4x128xf32, #tpu.memory_space<vmem>>, vector<1x4x128xf32>,
    return
  }
}

</mosaic_0001>

<llo_original>
// kernel: encoder_forward.1
$region0: #{encoder_forward.1}
  #allocation0 [shape = 'u32[]', space=smem, size = 0x4, offset = 0x4, fixed_abs, tag = 'smem constant byte address 0x4 - core index']
  #allocation1 [shape = 'u32[144,128]{1,0:T(1,128)}', space=vmem, size = 0x12000, scoped, tag = 'internal scratch']
  %s0 = inlined_call_operand.vmem [shape: bf16[1568,32], index: 0, kind: input, shape index: {}]
  %s1 = inlined_call_operand.vmem [shape: bf16[8,1568], index: 1, kind: input, shape index: {}]
  %s2 = inlined_call_operand.vmem [shape: bf16[32,128], index: 2, kind: input, shape index: {}]
  %s3 = inlined_call_operand.vmem [shape: bf16[128,128], index: 3, kind: input, shape index: {}]
  %s4 = inlined_call_operand.vmem [shape: f32[1,128], index: 4, kind: input, shape index: {}]
  %s5 = inlined_call_operand.vmem [shape: bf16[128,384], index: 5, kind: input, shape index: {}]
  %s6 = inlined_call_operand.vmem [shape: bf16[128,384], index: 6, kind: input, shape index: {}]
  %s7 = inlined_call_operand.vmem [shape: f32[1,384], index: 7, kind: input, shape index: {}]
  %s8 = inlined_call_operand.vmem [shape: f32[1,384], index: 8, kind: input, shape index: {}]
  %s9 = inlined_call_operand.vmem [shape: bf16[128,384], index: 9, kind: input, shape index: {}]
  %s10 = inlined_call_operand.vmem [shape: f32[1,384], index: 10, kind: input, shape index: {}]
  %s11 = inlined_call_operand.vmem [shape: bf16[128,128], index: 11, kind: input, shape index: {}]
  %s12 = inlined_call_operand.vmem [shape: f32[1,128], index: 12, kind: input, shape index: {}]
  %s13 = inlined_call_operand.hbm [shape: f32[2,4,128], index: 13, kind: output, shape index: {}]
  %s14 = sld [smem:[#allocation0]]
  $region62: #{encoder_forward.1} parent=0
    _
  %s16 = ssub.s32 1, %s14
  %s17 = scalar_select 0, %s16, %s14
  $region1: #{encoder_forward.1} parent=0
    #allocation2 [shape = 'u8[4096]{0}', space=vmem, size = 0x1000, scoped, tag = 'output window, operand 0, single buffered']
    #allocation3 [shape = 's32[1]{0}', space=sflag, size = 0x4, scoped, tag = 'scoped memory for encoder_forward.1']
    %18 = vsyncpa [#allocation3], 0
    // Predicated region
    $region2: #{encoder_forward.1} parent=1 // pred_check
      _
    $region3: #{encoder_forward.1} parent=1 // pred_check_branch
      %20 = sbr.rel (0) target = $region5
    $region4: #{encoder_forward.1} parent=1 // pred_region
      _
    $region5: #{encoder_forward.1} parent=1 // pred_fallthru
      _
    // Predicated region
    $region6: #{encoder_forward.1} parent=1 // pred_check
      _
    $region7: #{encoder_forward.1} parent=1 // pred_check_branch
      %22 = sbr.rel (0) target = $region9
    $region8: #{encoder_forward.1} parent=1 // pred_region
      _
    $region9: #{encoder_forward.1} parent=1 // pred_fallthru
      _
    // Predicated region
    $region10: #{encoder_forward.1} parent=1 // pred_check
      _
    $region11: #{encoder_forward.1} parent=1 // pred_check_branch
      %24 = sbr.rel (0) target = $region13
    $region12: #{encoder_forward.1} parent=1 // pred_region
      _
    $region13: #{encoder_forward.1} parent=1 // pred_fallthru
      _
    // Predicated region
    $region14: #{encoder_forward.1} parent=1 // pred_check
      _
    $region15: #{encoder_forward.1} parent=1 // pred_check_branch
      %26 = sbr.rel (0) target = $region17
    $region16: #{encoder_forward.1} parent=1 // pred_region
      _
    $region17: #{encoder_forward.1} parent=1 // pred_fallthru
      _
    // Predicated region
    $region18: #{encoder_forward.1} parent=1 // pred_check
      _
    $region19: #{encoder_forward.1} parent=1 // pred_check_branch
      %28 = sbr.rel (0) target = $region21
    $region20: #{encoder_forward.1} parent=1 // pred_region
      _
    $region21: #{encoder_forward.1} parent=1 // pred_fallthru
      _
    // Predicated region
    $region22: #{encoder_forward.1} parent=1 // pred_check
      _
    $region23: #{encoder_forward.1} parent=1 // pred_check_branch
      %30 = sbr.rel (0) target = $region25
    $region24: #{encoder_forward.1} parent=1 // pred_region
      _
    $region25: #{encoder_forward.1} parent=1 // pred_fallthru
      _
    // Predicated region
    $region26: #{encoder_forward.1} parent=1 // pred_check
      _
    $region27: #{encoder_forward.1} parent=1 // pred_check_branch
      %32 = sbr.rel (0) target = $region29
    $region28: #{encoder_forward.1} parent=1 // pred_region
      _
    $region29: #{encoder_forward.1} parent=1 // pred_fallthru
      _
    // Predicated region
    $region30: #{encoder_forward.1} parent=1 // pred_check
      _
    $region31: #{encoder_forward.1} parent=1 // pred_check_branch
      %34 = sbr.rel (0) target = $region33
    $region32: #{encoder_forward.1} parent=1 // pred_region
      _
    $region33: #{encoder_forward.1} parent=1 // pred_fallthru
      _
    // Predicated region
    $region34: #{encoder_forward.1} parent=1 // pred_check
      _
    $region35: #{encoder_forward.1} parent=1 // pred_check_branch
      %36 = sbr.rel (0) target = $region37
    $region36: #{encoder_forward.1} parent=1 // pred_region
      _
    $region37: #{encoder_forward.1} parent=1 // pred_fallthru
      _
    // Predicated region
    $region38: #{encoder_forward.1} parent=1 // pred_check
      _
    $region39: #{encoder_forward.1} parent=1 // pred_check_branch
      %38 = sbr.rel (0) target = $region41
    $region40: #{encoder_forward.1} parent=1 // pred_region
      _
    $region41: #{encoder_forward.1} parent=1 // pred_fallthru
      _
    // Predicated region
    $region42: #{encoder_forward.1} parent=1 // pred_check
      _
    $region43: #{encoder_forward.1} parent=1 // pred_check_branch
      %40 = sbr.rel (0) target = $region45
    $region44: #{encoder_forward.1} parent=1 // pred_region
      _
    $region45: #{encoder_forward.1} parent=1 // pred_fallthru
      _
    // Predicated region
    $region46: #{encoder_forward.1} parent=1 // pred_check
      _
    $region47: #{encoder_forward.1} parent=1 // pred_check_branch
      %42 = sbr.rel (0) target = $region49
    $region48: #{encoder_forward.1} parent=1 // pred_region
      _
    $region49: #{encoder_forward.1} parent=1 // pred_fallthru
      _
    // Predicated region
    $region50: #{encoder_forward.1} parent=1 // pred_check
      _
    $region51: #{encoder_forward.1} parent=1 // pred_check_branch
      %44 = sbr.rel (0) target = $region53
    $region52: #{encoder_forward.1} parent=1 // pred_region
      _
    $region53: #{encoder_forward.1} parent=1 // pred_fallthru
      _
    %v46 = vld [vmem:[%s0] sm:$0xf]
    %v47 = vld [vmem:[%s0 + $0x4] sm:$0xf]
    %v48 = vld [vmem:[%s0 + $0x8] sm:$0xf]
    %v49 = vld [vmem:[%s0 + $0xc] sm:$0xf]
    %v50 = vld [vmem:[%s0 + $0x10] sm:$0xf]
    %v51 = vld [vmem:[%s0 + $0x14] sm:$0xf]
    %v52 = vld [vmem:[%s0 + $0x18] sm:$0xf]
    %v53 = vld [vmem:[%s0 + $0x1c] sm:$0xf]
    %v54 = vld [vmem:[%s0 + $0x20] sm:$0xf]
    %v55 = vld [vmem:[%s0 + $0x24] sm:$0xf]
    %v56 = vld [vmem:[%s0 + $0x28] sm:$0xf]
    %v57 = vld [vmem:[%s0 + $0x2c] sm:$0xf]
    %v58 = vld [vmem:[%s0 + $0x30] sm:$0xf]
    %v59 = vld [vmem:[%s0 + $0x34] sm:$0xf]
    %v60 = vld [vmem:[%s0 + $0x38] sm:$0xf]
    %v61 = vld [vmem:[%s0 + $0x3c] sm:$0xf]
    %v62 = vld [vmem:[%s0 + $0x40] sm:$0xf]
    %v63 = vld [vmem:[%s0 + $0x44] sm:$0xf]
    %v64 = vld [vmem:[%s0 + $0x48] sm:$0xf]
    %v65 = vld [vmem:[%s0 + $0x4c] sm:$0xf]
    %v66 = vld [vmem:[%s0 + $0x50] sm:$0xf]
    %v67 = vld [vmem:[%s0 + $0x54] sm:$0xf]
    %v68 = vld [vmem:[%s0 + $0x58] sm:$0xf]
    %v69 = vld [vmem:[%s0 + $0x5c] sm:$0xf]
    %v70 = vld [vmem:[%s0 + $0x60] sm:$0xf]
    %v71 = vld [vmem:[%s0 + $0x64] sm:$0xf]
    %v72 = vld [vmem:[%s0 + $0x68] sm:$0xf]
    %v73 = vld [vmem:[%s0 + $0x6c] sm:$0xf]
    %v74 = vld [vmem:[%s0 + $0x70] sm:$0xf]
    %v75 = vld [vmem:[%s0 + $0x74] sm:$0xf]
    %v76 = vld [vmem:[%s0 + $0x78] sm:$0xf]
    %v77 = vld [vmem:[%s0 + $0x7c] sm:$0xf]
    %v78 = vld [vmem:[%s0 + $0x80] sm:$0xf]
    %v79 = vld [vmem:[%s0 + $0x84] sm:$0xf]
    %v80 = vld [vmem:[%s0 + $0x88] sm:$0xf]
    %v81 = vld [vmem:[%s0 + $0x8c] sm:$0xf]
    %v82 = vld [vmem:[%s0 + $0x90] sm:$0xf]
    %v83 = vld [vmem:[%s0 + $0x94] sm:$0xf]
    %v84 = vld [vmem:[%s0 + $0x98] sm:$0xf]
    %v85 = vld [vmem:[%s0 + $0x9c] sm:$0xf]
    %v86 = vld [vmem:[%s0 + $0xa0] sm:$0xf]
    %v87 = vld [vmem:[%s0 + $0xa4] sm:$0xf]
    %v88 = vld [vmem:[%s0 + $0xa8] sm:$0xf]
    %v89 = vld [vmem:[%s0 + $0xac] sm:$0xf]
    %v90 = vld [vmem:[%s0 + $0xb0] sm:$0xf]
    %v91 = vld [vmem:[%s0 + $0xb4] sm:$0xf]
    %v92 = vld [vmem:[%s0 + $0xb8] sm:$0xf]
    %v93 = vld [vmem:[%s0 + $0xbc] sm:$0xf]
    %v94 = vld [vmem:[%s0 + $0xc0] sm:$0xf]
    %v95 = vld [vmem:[%s0 + $0xc4] sm:$0xf]
    %v96 = vld [vmem:[%s0 + $0xc8] sm:$0xf]
    %v97 = vld [vmem:[%s0 + $0xcc] sm:$0xf]
    %v98 = vld [vmem:[%s0 + $0xd0] sm:$0xf]
    %v99 = vld [vmem:[%s0 + $0xd4] sm:$0xf]
    %v100 = vld [vmem:[%s0 + $0xd8] sm:$0xf]
    %v101 = vld [vmem:[%s0 + $0xdc] sm:$0xf]
    %v102 = vld [vmem:[%s0 + $0xe0] sm:$0xf]
    %v103 = vld [vmem:[%s0 + $0xe4] sm:$0xf]
    %v104 = vld [vmem:[%s0 + $0xe8] sm:$0xf]
    %v105 = vld [vmem:[%s0 + $0xec] sm:$0xf]
    %v106 = vld [vmem:[%s0 + $0xf0] sm:$0xf]
    %v107 = vld [vmem:[%s0 + $0xf4] sm:$0xf]
    %v108 = vld [vmem:[%s0 + $0xf8] sm:$0xf]
    %v109 = vld [vmem:[%s0 + $0xfc] sm:$0xf]
    %v110 = vld [vmem:[%s0 + $0x100] sm:$0xf]
    %v111 = vld [vmem:[%s0 + $0x104] sm:$0xf]
    %v112 = vld [vmem:[%s0 + $0x108] sm:$0xf]
    %v113 = vld [vmem:[%s0 + $0x10c] sm:$0xf]
    %v114 = vld [vmem:[%s0 + $0x110] sm:$0xf]
    %v115 = vld [vmem:[%s0 + $0x114] sm:$0xf]
    %v116 = vld [vmem:[%s0 + $0x118] sm:$0xf]
    %v117 = vld [vmem:[%s0 + $0x11c] sm:$0xf]
    %v118 = vld [vmem:[%s0 + $0x120] sm:$0xf]
    %v119 = vld [vmem:[%s0 + $0x124] sm:$0xf]
    %v120 = vld [vmem:[%s0 + $0x128] sm:$0xf]
    %v121 = vld [vmem:[%s0 + $0x12c] sm:$0xf]
    %v122 = vld [vmem:[%s0 + $0x130] sm:$0xf]
    %v123 = vld [vmem:[%s0 + $0x134] sm:$0xf]
    %v124 = vld [vmem:[%s0 + $0x138] sm:$0xf]
    %v125 = vld [vmem:[%s0 + $0x13c] sm:$0xf]
    %v126 = vld [vmem:[%s0 + $0x140] sm:$0xf]
    %v127 = vld [vmem:[%s0 + $0x144] sm:$0xf]
    %v128 = vld [vmem:[%s0 + $0x148] sm:$0xf]
    %v129 = vld [vmem:[%s0 + $0x14c] sm:$0xf]
    %v130 = vld [vmem:[%s0 + $0x150] sm:$0xf]
    %v131 = vld [vmem:[%s0 + $0x154] sm:$0xf]
    %v132 = vld [vmem:[%s0 + $0x158] sm:$0xf]
    %v133 = vld [vmem:[%s0 + $0x15c] sm:$0xf]
    %v134 = vld [vmem:[%s0 + $0x160] sm:$0xf]
    %v135 = vld [vmem:[%s0 + $0x164] sm:$0xf]
    %v136 = vld [vmem:[%s0 + $0x168] sm:$0xf]
    %v137 = vld [vmem:[%s0 + $0x16c] sm:$0xf]
    %v138 = vld [vmem:[%s0 + $0x170] sm:$0xf]
    %v139 = vld [vmem:[%s0 + $0x174] sm:$0xf]
    %v140 = vld [vmem:[%s0 + $0x178] sm:$0xf]
    %v141 = vld [vmem:[%s0 + $0x17c] sm:$0xf]
    %v142 = vld [vmem:[%s0 + $0x180] sm:$0xf]
    %v143 = vld [vmem:[%s0 + $0x184] sm:$0xf]
    %v144 = vld [vmem:[%s0 + $0x188] sm:$0xf]
    %v145 = vld [vmem:[%s0 + $0x18c] sm:$0xf]
    %v146 = vld [vmem:[%s0 + $0x190] sm:$0xf]
    %v147 = vld [vmem:[%s0 + $0x194] sm:$0xf]
    %v148 = vld [vmem:[%s0 + $0x198] sm:$0xf]
    %v149 = vld [vmem:[%s0 + $0x19c] sm:$0xf]
    %v150 = vld [vmem:[%s0 + $0x1a0] sm:$0xf]
    %v151 = vld [vmem:[%s0 + $0x1a4] sm:$0xf]
    %v152 = vld [vmem:[%s0 + $0x1a8] sm:$0xf]
    %v153 = vld [vmem:[%s0 + $0x1ac] sm:$0xf]
    %v154 = vld [vmem:[%s0 + $0x1b0] sm:$0xf]
    %v155 = vld [vmem:[%s0 + $0x1b4] sm:$0xf]
    %v156 = vld [vmem:[%s0 + $0x1b8] sm:$0xf]
    %v157 = vld [vmem:[%s0 + $0x1bc] sm:$0xf]
    %v158 = vld [vmem:[%s0 + $0x1c0] sm:$0xf]
    %v159 = vld [vmem:[%s0 + $0x1c4] sm:$0xf]
    %v160 = vld [vmem:[%s0 + $0x1c8] sm:$0xf]
    %v161 = vld [vmem:[%s0 + $0x1cc] sm:$0xf]
    %v162 = vld [vmem:[%s0 + $0x1d0] sm:$0xf]
    %v163 = vld [vmem:[%s0 + $0x1d4] sm:$0xf]
    %v164 = vld [vmem:[%s0 + $0x1d8] sm:$0xf]
    %v165 = vld [vmem:[%s0 + $0x1dc] sm:$0xf]
    %v166 = vld [vmem:[%s0 + $0x1e0] sm:$0xf]
    %v167 = vld [vmem:[%s0 + $0x1e4] sm:$0xf]
    %v168 = vld [vmem:[%s0 + $0x1e8] sm:$0xf]
    %v169 = vld [vmem:[%s0 + $0x1ec] sm:$0xf]
    %v170 = vld [vmem:[%s0 + $0x1f0] sm:$0xf]
    %v171 = vld [vmem:[%s0 + $0x1f4] sm:$0xf]
    %v172 = vld [vmem:[%s0 + $0x1f8] sm:$0xf]
    %v173 = vld [vmem:[%s0 + $0x1fc] sm:$0xf]
    %v174 = vld [vmem:[%s0 + $0x200] sm:$0xf]
    %v175 = vld [vmem:[%s0 + $0x204] sm:$0xf]
    %v176 = vld [vmem:[%s0 + $0x208] sm:$0xf]
    %v177 = vld [vmem:[%s0 + $0x20c] sm:$0xf]
    %v178 = vld [vmem:[%s0 + $0x210] sm:$0xf]
    %v179 = vld [vmem:[%s0 + $0x214] sm:$0xf]
    %v180 = vld [vmem:[%s0 + $0x218] sm:$0xf]
    %v181 = vld [vmem:[%s0 + $0x21c] sm:$0xf]
    %v182 = vld [vmem:[%s0 + $0x220] sm:$0xf]
    %v183 = vld [vmem:[%s0 + $0x224] sm:$0xf]
    %v184 = vld [vmem:[%s0 + $0x228] sm:$0xf]
    %v185 = vld [vmem:[%s0 + $0x22c] sm:$0xf]
    %v186 = vld [vmem:[%s0 + $0x230] sm:$0xf]
    %v187 = vld [vmem:[%s0 + $0x234] sm:$0xf]
    %v188 = vld [vmem:[%s0 + $0x238] sm:$0xf]
    %v189 = vld [vmem:[%s0 + $0x23c] sm:$0xf]
    %v190 = vld [vmem:[%s0 + $0x240] sm:$0xf]
    %v191 = vld [vmem:[%s0 + $0x244] sm:$0xf]
    %v192 = vld [vmem:[%s0 + $0x248] sm:$0xf]
    %v193 = vld [vmem:[%s0 + $0x24c] sm:$0xf]
    %v194 = vld [vmem:[%s0 + $0x250] sm:$0xf]
    %v195 = vld [vmem:[%s0 + $0x254] sm:$0xf]
    %v196 = vld [vmem:[%s0 + $0x258] sm:$0xf]
    %v197 = vld [vmem:[%s0 + $0x25c] sm:$0xf]
    %v198 = vld [vmem:[%s0 + $0x260] sm:$0xf]
    %v199 = vld [vmem:[%s0 + $0x264] sm:$0xf]
    %v200 = vld [vmem:[%s0 + $0x268] sm:$0xf]
    %v201 = vld [vmem:[%s0 + $0x26c] sm:$0xf]
    %v202 = vld [vmem:[%s0 + $0x270] sm:$0xf]
    %v203 = vld [vmem:[%s0 + $0x274] sm:$0xf]
    %v204 = vld [vmem:[%s0 + $0x278] sm:$0xf]
    %v205 = vld [vmem:[%s0 + $0x27c] sm:$0xf]
    %v206 = vld [vmem:[%s0 + $0x280] sm:$0xf]
    %v207 = vld [vmem:[%s0 + $0x284] sm:$0xf]
    %v208 = vld [vmem:[%s0 + $0x288] sm:$0xf]
    %v209 = vld [vmem:[%s0 + $0x28c] sm:$0xf]
    %v210 = vld [vmem:[%s0 + $0x290] sm:$0xf]
    %v211 = vld [vmem:[%s0 + $0x294] sm:$0xf]
    %v212 = vld [vmem:[%s0 + $0x298] sm:$0xf]
    %v213 = vld [vmem:[%s0 + $0x29c] sm:$0xf]
    %v214 = vld [vmem:[%s0 + $0x2a0] sm:$0xf]
    %v215 = vld [vmem:[%s0 + $0x2a4] sm:$0xf]
    %v216 = vld [vmem:[%s0 + $0x2a8] sm:$0xf]
    %v217 = vld [vmem:[%s0 + $0x2ac] sm:$0xf]
    %v218 = vld [vmem:[%s0 + $0x2b0] sm:$0xf]
    %v219 = vld [vmem:[%s0 + $0x2b4] sm:$0xf]
    %v220 = vld [vmem:[%s0 + $0x2b8] sm:$0xf]
    %v221 = vld [vmem:[%s0 + $0x2bc] sm:$0xf]
    %v222 = vld [vmem:[%s0 + $0x2c0] sm:$0xf]
    %v223 = vld [vmem:[%s0 + $0x2c4] sm:$0xf]
    %v224 = vld [vmem:[%s0 + $0x2c8] sm:$0xf]
    %v225 = vld [vmem:[%s0 + $0x2cc] sm:$0xf]
    %v226 = vld [vmem:[%s0 + $0x2d0] sm:$0xf]
    %v227 = vld [vmem:[%s0 + $0x2d4] sm:$0xf]
    %v228 = vld [vmem:[%s0 + $0x2d8] sm:$0xf]
    %v229 = vld [vmem:[%s0 + $0x2dc] sm:$0xf]
    %v230 = vld [vmem:[%s0 + $0x2e0] sm:$0xf]
    %v231 = vld [vmem:[%s0 + $0x2e4] sm:$0xf]
    %v232 = vld [vmem:[%s0 + $0x2e8] sm:$0xf]
    %v233 = vld [vmem:[%s0 + $0x2ec] sm:$0xf]
    %v234 = vld [vmem:[%s0 + $0x2f0] sm:$0xf]
    %v235 = vld [vmem:[%s0 + $0x2f4] sm:$0xf]
    %v236 = vld [vmem:[%s0 + $0x2f8] sm:$0xf]
    %v237 = vld [vmem:[%s0 + $0x2fc] sm:$0xf]
    %v238 = vld [vmem:[%s0 + $0x300] sm:$0xf]
    %v239 = vld [vmem:[%s0 + $0x304] sm:$0xf]
    %v240 = vld [vmem:[%s0 + $0x308] sm:$0xf]
    %v241 = vld [vmem:[%s0 + $0x30c] sm:$0xf]
    %v242 = vld [vmem:[%s2] sm:$0xf]
    %v243 = vld [vmem:[%s2 + $0x4] sm:$0xf]
    %v244 = vld [vmem:[%s2 + $0x8] sm:$0xf]
    %v245 = vld [vmem:[%s2 + $0xc] sm:$0xf]
    %v442 = vunpack.c.l.b16 %v46
    %v443 = vunpack.c.l.b16 %v47
    %v444 = vunpack.c.l.b16 %v48
    %v445 = vunpack.c.l.b16 %v49
    %v446 = vunpack.c.l.b16 %v50
    %v447 = vunpack.c.l.b16 %v51
    %v448 = vunpack.c.l.b16 %v52
    %v449 = vunpack.c.l.b16 %v53
    %v450 = vunpack.c.l.b16 %v54
    %v451 = vunpack.c.l.b16 %v55
    %v452 = vunpack.c.l.b16 %v56
    %v453 = vunpack.c.l.b16 %v57
    %v454 = vunpack.c.l.b16 %v58
    %v455 = vunpack.c.l.b16 %v59
    %v456 = vunpack.c.l.b16 %v60
    %v457 = vunpack.c.l.b16 %v61
    %v458 = vunpack.c.l.b16 %v62
    %v459 = vunpack.c.l.b16 %v63
    %v460 = vunpack.c.l.b16 %v64
    %v461 = vunpack.c.l.b16 %v65
    %v462 = vunpack.c.l.b16 %v66
    %v463 = vunpack.c.l.b16 %v67
    %v464 = vunpack.c.l.b16 %v68
    %v465 = vunpack.c.l.b16 %v69
    %v466 = vunpack.c.l.b16 %v70
    %v467 = vunpack.c.l.b16 %v71
    %v468 = vunpack.c.l.b16 %v72
    %v469 = vunpack.c.l.b16 %v73
    %v470 = vunpack.c.l.b16 %v74
    %v471 = vunpack.c.l.b16 %v75
    %v472 = vunpack.c.l.b16 %v76
    %v473 = vunpack.c.l.b16 %v77
    %v474 = vunpack.c.l.b16 %v78
    %v475 = vunpack.c.l.b16 %v79
    %v476 = vunpack.c.l.b16 %v80
    %v477 = vunpack.c.l.b16 %v81
    %v478 = vunpack.c.l.b16 %v82
    %v479 = vunpack.c.l.b16 %v83
    %v480 = vunpack.c.l.b16 %v84
    %v481 = vunpack.c.l.b16 %v85
    %v482 = vunpack.c.l.b16 %v86
    %v483 = vunpack.c.l.b16 %v87
    %v484 = vunpack.c.l.b16 %v88
    %v485 = vunpack.c.l.b16 %v89
    %v486 = vunpack.c.l.b16 %v90
    %v487 = vunpack.c.l.b16 %v91
    %v488 = vunpack.c.l.b16 %v92
    %v489 = vunpack.c.l.b16 %v93
    %v490 = vunpack.c.l.b16 %v94
    %v491 = vunpack.c.l.b16 %v95
    %v492 = vunpack.c.l.b16 %v96
    %v493 = vunpack.c.l.b16 %v97
    %v494 = vunpack.c.l.b16 %v98
    %v495 = vunpack.c.l.b16 %v99
    %v496 = vunpack.c.l.b16 %v100
    %v497 = vunpack.c.l.b16 %v101
    %v498 = vunpack.c.l.b16 %v102
    %v499 = vunpack.c.l.b16 %v103
    %v500 = vunpack.c.l.b16 %v104
    %v501 = vunpack.c.l.b16 %v105
    %v502 = vunpack.c.l.b16 %v106
    %v503 = vunpack.c.l.b16 %v107
    %v504 = vunpack.c.l.b16 %v108
    %v505 = vunpack.c.l.b16 %v109
    %v506 = vunpack.c.l.b16 %v110
    %v507 = vunpack.c.l.b16 %v111
    %v508 = vunpack.c.l.b16 %v112
    %v509 = vunpack.c.l.b16 %v113
    %v510 = vunpack.c.l.b16 %v114
    %v511 = vunpack.c.l.b16 %v115
    %v512 = vunpack.c.l.b16 %v116
    %v513 = vunpack.c.l.b16 %v117
    %v514 = vunpack.c.l.b16 %v118
    %v515 = vunpack.c.l.b16 %v119
    %v516 = vunpack.c.l.b16 %v120
    %v517 = vunpack.c.l.b16 %v121
    %v518 = vunpack.c.l.b16 %v122
    %v519 = vunpack.c.l.b16 %v123
    %v520 = vunpack.c.l.b16 %v124
    %v521 = vunpack.c.l.b16 %v125
    %v522 = vunpack.c.l.b16 %v126
    %v523 = vunpack.c.l.b16 %v127
    %v524 = vunpack.c.l.b16 %v128
    %v525 = vunpack.c.l.b16 %v129
    %v526 = vunpack.c.l.b16 %v130
    %v527 = vunpack.c.l.b16 %v131
    %v528 = vunpack.c.l.b16 %v132
    %v529 = vunpack.c.l.b16 %v133
    %v530 = vunpack.c.l.b16 %v134
    %v531 = vunpack.c.l.b16 %v135
    %v532 = vunpack.c.l.b16 %v136
    %v533 = vunpack.c.l.b16 %v137
    %v534 = vunpack.c.l.b16 %v138
    %v535 = vunpack.c.l.b16 %v139
    %v536 = vunpack.c.l.b16 %v140
    %v537 = vunpack.c.l.b16 %v141
    %v538 = vunpack.c.l.b16 %v142
    %v539 = vunpack.c.l.b16 %v143
    %v540 = vunpack.c.l.b16 %v144
    %v541 = vunpack.c.l.b16 %v145
    %v542 = vunpack.c.l.b16 %v146
    %v543 = vunpack.c.l.b16 %v147
    %v544 = vunpack.c.l.b16 %v148
    %v545 = vunpack.c.l.b16 %v149
    %v546 = vunpack.c.l.b16 %v150
    %v547 = vunpack.c.l.b16 %v151
    %v548 = vunpack.c.l.b16 %v152
    %v549 = vunpack.c.l.b16 %v153
    %v550 = vunpack.c.l.b16 %v154
    %v551 = vunpack.c.l.b16 %v155
    %v552 = vunpack.c.l.b16 %v156
    %v553 = vunpack.c.l.b16 %v157
    %v554 = vunpack.c.l.b16 %v158
    %v555 = vunpack.c.l.b16 %v159
    %v556 = vunpack.c.l.b16 %v160
    %v557 = vunpack.c.l.b16 %v161
    %v558 = vunpack.c.l.b16 %v162
    %v559 = vunpack.c.l.b16 %v163
    %v560 = vunpack.c.l.b16 %v164
    %v561 = vunpack.c.l.b16 %v165
    %v562 = vunpack.c.l.b16 %v166
    %v563 = vunpack.c.l.b16 %v167
    %v564 = vunpack.c.l.b16 %v168
    %v565 = vunpack.c.l.b16 %v169
    %v566 = vunpack.c.l.b16 %v170
    %v567 = vunpack.c.l.b16 %v171
    %v568 = vunpack.c.l.b16 %v172
    %v569 = vunpack.c.l.b16 %v173
    %v570 = vunpack.c.l.b16 %v174
    %v571 = vunpack.c.l.b16 %v175
    %v572 = vunpack.c.l.b16 %v176
    %v573 = vunpack.c.l.b16 %v177
    %v574 = vunpack.c.l.b16 %v178
    %v575 = vunpack.c.l.b16 %v179
    %v576 = vunpack.c.l.b16 %v180
    %v577 = vunpack.c.l.b16 %v181
    %v578 = vunpack.c.l.b16 %v182
    %v579 = vunpack.c.l.b16 %v183
    %v580 = vunpack.c.l.b16 %v184
    %v581 = vunpack.c.l.b16 %v185
    %v582 = vunpack.c.l.b16 %v186
    %v583 = vunpack.c.l.b16 %v187
    %v584 = vunpack.c.l.b16 %v188
    %v585 = vunpack.c.l.b16 %v189
    %v586 = vunpack.c.l.b16 %v190
    %v587 = vunpack.c.l.b16 %v191
    %v588 = vunpack.c.l.b16 %v192
    %v589 = vunpack.c.l.b16 %v193
    %v590 = vunpack.c.l.b16 %v194
    %v591 = vunpack.c.l.b16 %v195
    %v592 = vunpack.c.l.b16 %v196
    %v593 = vunpack.c.l.b16 %v197
    %v594 = vunpack.c.l.b16 %v198
    %v595 = vunpack.c.l.b16 %v199
    %v596 = vunpack.c.l.b16 %v200
    %v597 = vunpack.c.l.b16 %v201
    %v598 = vunpack.c.l.b16 %v202
    %v599 = vunpack.c.l.b16 %v203
    %v600 = vunpack.c.l.b16 %v204
    %v601 = vunpack.c.l.b16 %v205
    %v602 = vunpack.c.l.b16 %v206
    %v603 = vunpack.c.l.b16 %v207
    %v604 = vunpack.c.l.b16 %v208
    %v605 = vunpack.c.l.b16 %v209
    %v606 = vunpack.c.l.b16 %v210
    %v607 = vunpack.c.l.b16 %v211
    %v608 = vunpack.c.l.b16 %v212
    %v609 = vunpack.c.l.b16 %v213
    %v610 = vunpack.c.l.b16 %v214
    %v611 = vunpack.c.l.b16 %v215
    %v612 = vunpack.c.l.b16 %v216
    %v613 = vunpack.c.l.b16 %v217
    %v614 = vunpack.c.l.b16 %v218
    %v615 = vunpack.c.l.b16 %v219
    %v616 = vunpack.c.l.b16 %v220
    %v617 = vunpack.c.l.b16 %v221
    %v618 = vunpack.c.l.b16 %v222
    %v619 = vunpack.c.l.b16 %v223
    %v620 = vunpack.c.l.b16 %v224
    %v621 = vunpack.c.l.b16 %v225
    %v622 = vunpack.c.l.b16 %v226
    %v623 = vunpack.c.l.b16 %v227
    %v624 = vunpack.c.l.b16 %v228
    %v625 = vunpack.c.l.b16 %v229
    %v626 = vunpack.c.l.b16 %v230
    %v627 = vunpack.c.l.b16 %v231
    %v628 = vunpack.c.l.b16 %v232
    %v629 = vunpack.c.l.b16 %v233
    %v630 = vunpack.c.l.b16 %v234
    %v631 = vunpack.c.l.b16 %v235
    %v632 = vunpack.c.l.b16 %v236
    %v633 = vunpack.c.l.b16 %v237
    %v634 = vunpack.c.l.b16 %v238
    %v635 = vunpack.c.l.b16 %v239
    %v636 = vunpack.c.l.b16 %v240
    %v637 = vunpack.c.l.b16 %v241
    %v638 = vpack.c.b16 %v443, %v442
    %v639 = vpack.c.b16 %v445, %v444
    %v640 = vpack.c.b16 %v447, %v446
    %v641 = vpack.c.b16 %v449, %v448
    %v642 = vpack.c.b16 %v451, %v450
    %v643 = vpack.c.b16 %v453, %v452
    %v644 = vpack.c.b16 %v455, %v454
    %v645 = vpack.c.b16 %v457, %v456
    %v646 = vpack.c.b16 %v459, %v458
    %v647 = vpack.c.b16 %v461, %v460
    %v648 = vpack.c.b16 %v463, %v462
    %v649 = vpack.c.b16 %v465, %v464
    %v650 = vpack.c.b16 %v467, %v466
    %v651 = vpack.c.b16 %v469, %v468
    %v652 = vpack.c.b16 %v471, %v470
    %v653 = vpack.c.b16 %v473, %v472
    %v654 = vpack.c.b16 %v475, %v474
    %v655 = vpack.c.b16 %v477, %v476
    %v656 = vpack.c.b16 %v479, %v478
    %v657 = vpack.c.b16 %v481, %v480
    %v658 = vpack.c.b16 %v483, %v482
    %v659 = vpack.c.b16 %v485, %v484
    %v660 = vpack.c.b16 %v487, %v486
    %v661 = vpack.c.b16 %v489, %v488
    %v662 = vpack.c.b16 %v491, %v490
    %v663 = vpack.c.b16 %v493, %v492
    %v664 = vpack.c.b16 %v495, %v494
    %v665 = vpack.c.b16 %v497, %v496
    %v666 = vpack.c.b16 %v499, %v498
    %v667 = vpack.c.b16 %v501, %v500
    %v668 = vpack.c.b16 %v503, %v502
    %v669 = vpack.c.b16 %v505, %v504
    %v670 = vpack.c.b16 %v507, %v506
    %v671 = vpack.c.b16 %v509, %v508
    %v672 = vpack.c.b16 %v511, %v510
    %v673 = vpack.c.b16 %v513, %v512
    %v674 = vpack.c.b16 %v515, %v514
    %v675 = vpack.c.b16 %v517, %v516
    %v676 = vpack.c.b16 %v519, %v518
    %v677 = vpack.c.b16 %v521, %v520
    %v678 = vpack.c.b16 %v523, %v522
    %v679 = vpack.c.b16 %v525, %v524
    %v680 = vpack.c.b16 %v527, %v526
    %v681 = vpack.c.b16 %v529, %v528
    %v682 = vpack.c.b16 %v531, %v530
    %v683 = vpack.c.b16 %v533, %v532
    %v684 = vpack.c.b16 %v535, %v534
    %v685 = vpack.c.b16 %v537, %v536
    %v686 = vpack.c.b16 %v539, %v538
    %v687 = vpack.c.b16 %v541, %v540
    %v688 = vpack.c.b16 %v543, %v542
    %v689 = vpack.c.b16 %v545, %v544
    %v690 = vpack.c.b16 %v547, %v546
    %v691 = vpack.c.b16 %v549, %v548
    %v692 = vpack.c.b16 %v551, %v550
    %v693 = vpack.c.b16 %v553, %v552
    %v694 = vpack.c.b16 %v555, %v554
    %v695 = vpack.c.b16 %v557, %v556
    %v696 = vpack.c.b16 %v559, %v558
    %v697 = vpack.c.b16 %v561, %v560
    %v698 = vpack.c.b16 %v563, %v562
    %v699 = vpack.c.b16 %v565, %v564
    %v700 = vpack.c.b16 %v567, %v566
    %v701 = vpack.c.b16 %v569, %v568
    %v702 = vpack.c.b16 %v571, %v570
    %v703 = vpack.c.b16 %v573, %v572
    %v704 = vpack.c.b16 %v575, %v574
    %v705 = vpack.c.b16 %v577, %v576
    %v706 = vpack.c.b16 %v579, %v578
    %v707 = vpack.c.b16 %v581, %v580
    %v708 = vpack.c.b16 %v583, %v582
    %v709 = vpack.c.b16 %v585, %v584
    %v710 = vpack.c.b16 %v587, %v586
    %v711 = vpack.c.b16 %v589, %v588
    %v712 = vpack.c.b16 %v591, %v590
    %v713 = vpack.c.b16 %v593, %v592
    %v714 = vpack.c.b16 %v595, %v594
    %v715 = vpack.c.b16 %v597, %v596
    %v716 = vpack.c.b16 %v599, %v598
    %v717 = vpack.c.b16 %v601, %v600
    %v718 = vpack.c.b16 %v603, %v602
    %v719 = vpack.c.b16 %v605, %v604
    %v720 = vpack.c.b16 %v607, %v606
    %v721 = vpack.c.b16 %v609, %v608
    %v722 = vpack.c.b16 %v611, %v610
    %v723 = vpack.c.b16 %v613, %v612
    %v724 = vpack.c.b16 %v615, %v614
    %v725 = vpack.c.b16 %v617, %v616
    %v726 = vpack.c.b16 %v619, %v618
    %v727 = vpack.c.b16 %v621, %v620
    %v728 = vpack.c.b16 %v623, %v622
    %v729 = vpack.c.b16 %v625, %v624
    %v730 = vpack.c.b16 %v627, %v626
    %v731 = vpack.c.b16 %v629, %v628
    %v732 = vpack.c.b16 %v631, %v630
    %v733 = vpack.c.b16 %v633, %v632
    %v734 = vpack.c.b16 %v635, %v634
    %v735 = vpack.c.b16 %v637, %v636
    %v740 = vunpack.c.l.b16 %v242
    %v741 = vunpack.c.l.b16 %v243
    %v742 = vunpack.c.l.b16 %v244
    %v743 = vunpack.c.l.b16 %v245
    %v744 = vpack.c.b16 %v741, %v740
    %v745 = vpack.c.b16 %v743, %v742
    %vm748 = vcmask 261120
    %v750 = vsel %vm748, %v638, 0
    %v753 = vsel %vm748, %v639, 0
    %v756 = vsel %vm748, %v640, 0
    %v759 = vsel %vm748, %v641, 0
    %v762 = vsel %vm748, %v642, 0
    %v765 = vsel %vm748, %v643, 0
    %v768 = vsel %vm748, %v644, 0
    %v771 = vsel %vm748, %v645, 0
    %v774 = vsel %vm748, %v646, 0
    %v777 = vsel %vm748, %v647, 0
    %v780 = vsel %vm748, %v648, 0
    %v783 = vsel %vm748, %v649, 0
    %v786 = vsel %vm748, %v650, 0
    %v789 = vsel %vm748, %v651, 0
    %v792 = vsel %vm748, %v652, 0
    %v795 = vsel %vm748, %v653, 0
    %v798 = vsel %vm748, %v654, 0
    %v801 = vsel %vm748, %v655, 0
    %v804 = vsel %vm748, %v656, 0
    %v807 = vsel %vm748, %v657, 0
    %v810 = vsel %vm748, %v658, 0
    %v813 = vsel %vm748, %v659, 0
    %v816 = vsel %vm748, %v660, 0
    %v819 = vsel %vm748, %v661, 0
    %v822 = vsel %vm748, %v662, 0
    %v825 = vsel %vm748, %v663, 0
    %v828 = vsel %vm748, %v664, 0
    %v831 = vsel %vm748, %v665, 0
    %v834 = vsel %vm748, %v666, 0
    %v837 = vsel %vm748, %v667, 0
    %v840 = vsel %vm748, %v668, 0
    %v843 = vsel %vm748, %v669, 0
    %v846 = vsel %vm748, %v670, 0
    %v849 = vsel %vm748, %v671, 0
    %v852 = vsel %vm748, %v672, 0
    %v855 = vsel %vm748, %v673, 0
    %v858 = vsel %vm748, %v674, 0
    %v861 = vsel %vm748, %v675, 0
    %v864 = vsel %vm748, %v676, 0
    %v867 = vsel %vm748, %v677, 0
    %v870 = vsel %vm748, %v678, 0
    %v873 = vsel %vm748, %v679, 0
    %v876 = vsel %vm748, %v680, 0
    %v879 = vsel %vm748, %v681, 0
    %v882 = vsel %vm748, %v682, 0
    %v885 = vsel %vm748, %v683, 0
    %v888 = vsel %vm748, %v684, 0
    %v891 = vsel %vm748, %v685, 0
    %v894 = vsel %vm748, %v686, 0
    %v897 = vsel %vm748, %v687, 0
    %v900 = vsel %vm748, %v688, 0
    %v903 = vsel %vm748, %v689, 0
    %v906 = vsel %vm748, %v690, 0
    %v909 = vsel %vm748, %v691, 0
    %v912 = vsel %vm748, %v692, 0
    %v915 = vsel %vm748, %v693, 0
    %v918 = vsel %vm748, %v694, 0
    %v921 = vsel %vm748, %v695, 0
    %v924 = vsel %vm748, %v696, 0
    %v927 = vsel %vm748, %v697, 0
    %v930 = vsel %vm748, %v698, 0
    %v933 = vsel %vm748, %v699, 0
    %v936 = vsel %vm748, %v700, 0
    %v939 = vsel %vm748, %v701, 0
    %v942 = vsel %vm748, %v702, 0
    %v945 = vsel %vm748, %v703, 0
    %v948 = vsel %vm748, %v704, 0
    %v951 = vsel %vm748, %v705, 0
    %v954 = vsel %vm748, %v706, 0
    %v957 = vsel %vm748, %v707, 0
    %v960 = vsel %vm748, %v708, 0
    %v963 = vsel %vm748, %v709, 0
    %v966 = vsel %vm748, %v710, 0
    %v969 = vsel %vm748, %v711, 0
    %v972 = vsel %vm748, %v712, 0
    %v975 = vsel %vm748, %v713, 0
    %v978 = vsel %vm748, %v714, 0
    %v981 = vsel %vm748, %v715, 0
    %v984 = vsel %vm748, %v716, 0
    %v987 = vsel %vm748, %v717, 0
    %v990 = vsel %vm748, %v718, 0
    %v993 = vsel %vm748, %v719, 0
    %v996 = vsel %vm748, %v720, 0
    %v999 = vsel %vm748, %v721, 0
    %v1002 = vsel %vm748, %v722, 0
    %v1005 = vsel %vm748, %v723, 0
    %v1008 = vsel %vm748, %v724, 0
    %v1011 = vsel %vm748, %v725, 0
    %v1014 = vsel %vm748, %v726, 0
    %v1017 = vsel %vm748, %v727, 0
    %v1020 = vsel %vm748, %v728, 0
    %v1023 = vsel %vm748, %v729, 0
    %v1026 = vsel %vm748, %v730, 0
    %v1029 = vsel %vm748, %v731, 0
    %v1032 = vsel %vm748, %v732, 0
    %v1035 = vsel %vm748, %v733, 0
    %v1038 = vsel %vm748, %v734, 0
    %v1041 = vsel %vm748, %v735, 0
    %1043 = vmatprep.subr.bf16.mxu0 0
    %1044 = vmatpush1.bf16.msra.mxu0 %v744
    %1045 = vmatprep.subr.bf16.mxu0 0
    %1046 = vmatpush1.bf16.msra.mxu0 %v745
    %1047 = vmatprep.subr.bf16.mxu0 0
    %1048 = vmatpush1.bf16.msra.mxu0 0
    %1049 = vmatprep.subr.bf16.mxu0 0
    %1050 = vmatpush1.bf16.msra.mxu0 0
    %1051 = vmatprep.subr.bf16.mxu0 0
    %1052 = vmatpush1.bf16.msra.mxu0 0
    %1053 = vmatprep.subr.bf16.mxu0 0
    %1054 = vmatpush1.bf16.msra.mxu0 0
    %1055 = vmatprep.subr.bf16.mxu0 0
    %1056 = vmatpush1.bf16.msra.mxu0 0
    %1057 = vmatprep.subr.bf16.mxu0 0
    %1058 = vmatpush1.bf16.msra.mxu0 0
    %1059 = vmatprep.subr.bf16.mxu0 0
    %1060 = vmatpush1.bf16.msra.mxu0 0
    %1061 = vmatprep.subr.bf16.mxu0 0
    %1062 = vmatpush1.bf16.msra.mxu0 0
    %1063 = vmatprep.subr.bf16.mxu0 0
    %1064 = vmatpush1.bf16.msra.mxu0 0
    %1065 = vmatprep.subr.bf16.mxu0 0
    %1066 = vmatpush1.bf16.msra.mxu0 0
    %1067 = vmatprep.subr.bf16.mxu0 0
    %1068 = vmatpush1.bf16.msra.mxu0 0
    %1069 = vmatprep.subr.bf16.mxu0 0
    %1070 = vmatpush1.bf16.msra.mxu0 0
    %1071 = vmatprep.subr.bf16.mxu0 0
    %1072 = vmatpush1.bf16.msra.mxu0 0
    %1073 = vmatprep.subr.bf16.mxu0 0
    %1074 = vmatpush1.bf16.msra.mxu0 0
    %1075 = vmatprep.mubr.bf16.mxu0 0
    %1076 = vmatmul.mubr.bf16.gmra.mrb[0].mxu0 %v750
    %v1077 = vpop.f32.mrb[0].mxu0
    %v1078 = vadd.f32 0.0, %v1077
    %v1079 = vpop.f32.mrb[0].mxu0
    %v1080 = vpop.f32.mrb[0].mxu0
    %v1081 = vadd.f32 0.0, %v1080
    %v1082 = vpop.f32.mrb[0].mxu0
    %1083 = vmatprep.mubr.bf16.mxu0 0
    %1084 = vmatmul.mubr.bf16.gmra.mrb[0].mxu0 %v753
    %v1085 = vpop.f32.mrb[0].mxu0
    %v1086 = vadd.f32 0.0, %v1085
    %v1087 = vpop.f32.mrb[0].mxu0
    %v1088 = vpop.f32.mrb[0].mxu0
    %v1089 = vadd.f32 0.0, %v1088
    %v1090 = vpop.f32.mrb[0].mxu0
    %1091 = vmatprep.mubr.bf16.mxu0 0
    %1092 = vmatmul.mubr.bf16.gmra.mrb[0].mxu0 %v756
    %v1093 = vpop.f32.mrb[0].mxu0
    %v1094 = vadd.f32 0.0, %v1093
    %v1095 = vpop.f32.mrb[0].mxu0
    %v1096 = vpop.f32.mrb[0].mxu0
    %v1097 = vadd.f32 0.0, %v1096
    %v1098 = vpop.f32.mrb[0].mxu0
    %1099 = vmatprep.mubr.bf16.mxu0 0
    %1100 = vmatmul.mubr.bf16.gmra.mrb[0].mxu0 %v759
    %v1101 = vpop.f32.mrb[0].mxu0
    %v1102 = vadd.f32 0.0, %v1101
    %v1103 = vpop.f32.mrb[0].mxu0
    %v1104 = vpop.f32.mrb[0].mxu0
    %v1105 = vadd.f32 0.0, %v1104
    %v1106 = vpop.f32.mrb[0].mxu0
    %1107 = vmatprep.mubr.bf16.mxu0 0
    %1108 = vmatmul.mubr.bf16.gmra.mrb[0].mxu0 %v762
    %v1109 = vpop.f32.mrb[0].mxu0
    %v1110 = vadd.f32 0.0, %v1109
    %v1111 = vpop.f32.mrb[0].mxu0
    %v1112 = vpop.f32.mrb[0].mxu0
    %v1113 = vadd.f32 0.0, %v1112
    %v1114 = vpop.f32.mrb[0].mxu0
    %1115 = vmatprep.mubr.bf16.mxu0 0
    %1116 = vmatmul.mubr.bf16.gmra.mrb[0].mxu0 %v765
    %v1117 = vpop.f32.mrb[0].mxu0
    %v1118 = vadd.f32 0.0, %v1117
    %v1119 = vpop.f32.mrb[0].mxu0
    %v1120 = vpop.f32.mrb[0].mxu0
    %v1121 = vadd.f32 0.0, %v1120
    %v1122 = vpop.f32.mrb[0].mxu0
    %1123 = vmatprep.mubr.bf16.mxu0 0
    %1124 = vmatmul.mubr.bf16.gmra.mrb[0].mxu0 %v768
    %v1125 = vpop.f32.mrb[0].mxu0
    %v1126 = vadd.f32 0.0, %v1125
    %v1127 = vpop.f32.mrb[0].mxu0
    %v1128 = vpop.f32.mrb[0].mxu0
    %v1129 = vadd.f32 0.0, %v1128
    %v1130 = vpop.f32.mrb[0].mxu0
    %1131 = vmatprep.mubr.bf16.mxu0 0
    %1132 = vmatmul.mubr.bf16.gmra.mrb[0].mxu0 %v771
    %v1133 = vpop.f32.mrb[0].mxu0
    %v1134 = vadd.f32 0.0, %v1133
    %v1135 = vpop.f32.mrb[0].mxu0
    %v1136 = vpop.f32.mrb[0].mxu0
    %v1137 = vadd.f32 0.0, %v1136
    %v1138 = vpop.f32.mrb[0].mxu0
    %1139 = vmatprep.mubr.bf16.mxu0 0
    %1140 = vmatmul.mubr.bf16.gmra.mrb[0].mxu0 %v774
    %v1141 = vpop.f32.mrb[0].mxu0
    %v1142 = vadd.f32 0.0, %v1141
    %v1143 = vpop.f32.mrb[0].mxu0
    %v1144 = vpop.f32.mrb[0].mxu0
    %v1145 = vadd.f32 0.0, %v1144
    %v1146 = vpop.f32.mrb[0].mxu0
    %1147 = vmatprep.mubr.bf16.mxu0 0
    %1148 = vmatmul.mubr.bf16.gmra.mrb[0].mxu0 %v777
    %v1149 = vpop.f32.mrb[0].mxu0
    %v1150 = vadd.f32 0.0, %v1149
    %v1151 = vpop.f32.mrb[0].mxu0
    %v1152 = vpop.f32.mrb[0].mxu0
    %v1153 = vadd.f32 0.0, %v1152
    %v1154 = vpop.f32.mrb[0].mxu0
    %1155 = vmatprep.mubr.bf16.mxu0 0
    %1156 = vmatmul.mubr.bf16.gmra.mrb[0].mxu0 %v780
    %v1157 = vpop.f32.mrb[0].mxu0
    %v1158 = vadd.f32 0.0, %v1157
    %v1159 = vpop.f32.mrb[0].mxu0
    %v1160 = vpop.f32.mrb[0].mxu0
    %v1161 = vadd.f32 0.0, %v1160
    %v1162 = vpop.f32.mrb[0].mxu0
    %1163 = vmatprep.mubr.bf16.mxu0 0
    %1164 = vmatmul.mubr.bf16.gmra.mrb[0].mxu0 %v783
    %v1165 = vpop.f32.mrb[0].mxu0
    %v1166 = vadd.f32 0.0, %v1165
    %v1167 = vpop.f32.mrb[0].mxu0
    %v1168 = vpop.f32.mrb[0].mxu0
    %v1169 = vadd.f32 0.0, %v1168
    %v1170 = vpop.f32.mrb[0].mxu0
    %1171 = vmatprep.mubr.bf16.mxu0 0
    %1172 = vmatmul.mubr.bf16.gmra.mrb[0].mxu0 %v786
    %v1173 = vpop.f32.mrb[0].mxu0
    %v1174 = vadd.f32 0.0, %v1173
    %v1175 = vpop.f32.mrb[0].mxu0
    %v1176 = vpop.f32.mrb[0].mxu0
    %v1177 = vadd.f32 0.0, %v1176
    %v1178 = vpop.f32.mrb[0].mxu0
    %1179 = vmatprep.mubr.bf16.mxu0 0
    %1180 = vmatmul.mubr.bf16.gmra.mrb[0].mxu0 %v789
    %v1181 = vpop.f32.mrb[0].mxu0
    %v1182 = vadd.f32 0.0, %v1181
    %v1183 = vpop.f32.mrb[0].mxu0
    %v1184 = vpop.f32.mrb[0].mxu0
    %v1185 = vadd.f32 0.0, %v1184
    %v1186 = vpop.f32.mrb[0].mxu0
    %1187 = vmatprep.mubr.bf16.mxu0 0
    %1188 = vmatmul.mubr.bf16.gmra.mrb[0].mxu0 %v792
    %v1189 = vpop.f32.mrb[0].mxu0
    %v1190 = vadd.f32 0.0, %v1189
    %v1191 = vpop.f32.mrb[0].mxu0
    %v1192 = vpop.f32.mrb[0].mxu0
    %v1193 = vadd.f32 0.0, %v1192
    %v1194 = vpop.f32.mrb[0].mxu0
    %1195 = vmatprep.mubr.bf16.mxu0 0
    %1196 = vmatmul.mubr.bf16.gmra.mrb[0].mxu0 %v795
    %v1197 = vpop.f32.mrb[0].mxu0
    %v1198 = vadd.f32 0.0, %v1197
    %v1199 = vpop.f32.mrb[0].mxu0
    %v1200 = vpop.f32.mrb[0].mxu0
    %v1201 = vadd.f32 0.0, %v1200
    %v1202 = vpop.f32.mrb[0].mxu0
    %1203 = vmatprep.mubr.bf16.mxu0 0
    %1204 = vmatmul.mubr.bf16.gmra.mrb[0].mxu0 %v798
    %v1205 = vpop.f32.mrb[0].mxu0
    %v1206 = vadd.f32 0.0, %v1205
    %v1207 = vpop.f32.mrb[0].mxu0
    %v1208 = vpop.f32.mrb[0].mxu0
    %v1209 = vadd.f32 0.0, %v1208
    %v1210 = vpop.f32.mrb[0].mxu0
    %1211 = vmatprep.mubr.bf16.mxu0 0
    %1212 = vmatmul.mubr.bf16.gmra.mrb[0].mxu0 %v801
    %v1213 = vpop.f32.mrb[0].mxu0
    %v1214 = vadd.f32 0.0, %v1213
    %v1215 = vpop.f32.mrb[0].mxu0
    %v1216 = vpop.f32.mrb[0].mxu0
    %v1217 = vadd.f32 0.0, %v1216
    %v1218 = vpop.f32.mrb[0].mxu0
    %1219 = vmatprep.mubr.bf16.mxu0 0
    %1220 = vmatmul.mubr.bf16.gmra.mrb[0].mxu0 %v804
    %v1221 = vpop.f32.mrb[0].mxu0
    %v1222 = vadd.f32 0.0, %v1221
    %v1223 = vpop.f32.mrb[0].mxu0
    %v1224 = vpop.f32.mrb[0].mxu0
    %v1225 = vadd.f32 0.0, %v1224
    %v1226 = vpop.f32.mrb[0].mxu0
    %1227 = vmatprep.mubr.bf16.mxu0 0
    %1228 = vmatmul.mubr.bf16.gmra.mrb[0].mxu0 %v807
    %v1229 = vpop.f32.mrb[0].mxu0
    %v1230 = vadd.f32 0.0, %v1229
    %v1231 = vpop.f32.mrb[0].mxu0
    %v1232 = vpop.f32.mrb[0].mxu0
    %v1233 = vadd.f32 0.0, %v1232
    %v1234 = vpop.f32.mrb[0].mxu0
    %1235 = vmatprep.mubr.bf16.mxu0 0
    %1236 = vmatmul.mubr.bf16.gmra.mrb[0].mxu0 %v810
    %v1237 = vpop.f32.mrb[0].mxu0
    %v1238 = vadd.f32 0.0, %v1237
    %v1239 = vpop.f32.mrb[0].mxu0
    %v1240 = vpop.f32.mrb[0].mxu0
    %v1241 = vadd.f32 0.0, %v1240
    %v1242 = vpop.f32.mrb[0].mxu0
    %1243 = vmatprep.mubr.bf16.mxu0 0
    %1244 = vmatmul.mubr.bf16.gmra.mrb[0].mxu0 %v813
    %v1245 = vpop.f32.mrb[0].mxu0
    %v1246 = vadd.f32 0.0, %v1245
    %v1247 = vpop.f32.mrb[0].mxu0
    %v1248 = vpop.f32.mrb[0].mxu0
    %v1249 = vadd.f32 0.0, %v1248
    %v1250 = vpop.f32.mrb[0].mxu0
    %1251 = vmatprep.mubr.bf16.mxu0 0
    %1252 = vmatmul.mubr.bf16.gmra.mrb[0].mxu0 %v816
    %v1253 = vpop.f32.mrb[0].mxu0
    %v1254 = vadd.f32 0.0, %v1253
    %v1255 = vpop.f32.mrb[0].mxu0
    %v1256 = vpop.f32.mrb[0].mxu0
    %v1257 = vadd.f32 0.0, %v1256
    %v1258 = vpop.f32.mrb[0].mxu0
    %1259 = vmatprep.mubr.bf16.mxu0 0
    %1260 = vmatmul.mubr.bf16.gmra.mrb[0].mxu0 %v819
    %v1261 = vpop.f32.mrb[0].mxu0
    %v1262 = vadd.f32 0.0, %v1261
    %v1263 = vpop.f32.mrb[0].mxu0
    %v1264 = vpop.f32.mrb[0].mxu0
    %v1265 = vadd.f32 0.0, %v1264
    %v1266 = vpop.f32.mrb[0].mxu0
    %1267 = vmatprep.mubr.bf16.mxu0 0
    %1268 = vmatmul.mubr.bf16.gmra.mrb[0].mxu0 %v822
    %v1269 = vpop.f32.mrb[0].mxu0
    %v1270 = vadd.f32 0.0, %v1269
    %v1271 = vpop.f32.mrb[0].mxu0
    %v1272 = vpop.f32.mrb[0].mxu0
    %v1273 = vadd.f32 0.0, %v1272
    %v1274 = vpop.f32.mrb[0].mxu0
    %1275 = vmatprep.mubr.bf16.mxu0 0
    %1276 = vmatmul.mubr.bf16.gmra.mrb[0].mxu0 %v825
    %v1277 = vpop.f32.mrb[0].mxu0
    %v1278 = vadd.f32 0.0, %v1277
    %v1279 = vpop.f32.mrb[0].mxu0
    %v1280 = vpop.f32.mrb[0].mxu0
    %v1281 = vadd.f32 0.0, %v1280
    %v1282 = vpop.f32.mrb[0].mxu0
    %1283 = vmatprep.mubr.bf16.mxu0 0
    %1284 = vmatmul.mubr.bf16.gmra.mrb[0].mxu0 %v828
    %v1285 = vpop.f32.mrb[0].mxu0
    %v1286 = vadd.f32 0.0, %v1285
    %v1287 = vpop.f32.mrb[0].mxu0
    %v1288 = vpop.f32.mrb[0].mxu0
    %v1289 = vadd.f32 0.0, %v1288
    %v1290 = vpop.f32.mrb[0].mxu0
    %1291 = vmatprep.mubr.bf16.mxu0 0
    %1292 = vmatmul.mubr.bf16.gmra.mrb[0].mxu0 %v831
    %v1293 = vpop.f32.mrb[0].mxu0
    %v1294 = vadd.f32 0.0, %v1293
    %v1295 = vpop.f32.mrb[0].mxu0
    %v1296 = vpop.f32.mrb[0].mxu0
    %v1297 = vadd.f32 0.0, %v1296
    %v1298 = vpop.f32.mrb[0].mxu0
    %1299 = vmatprep.mubr.bf16.mxu0 0
    %1300 = vmatmul.mubr.bf16.gmra.mrb[0].mxu0 %v834
    %v1301 = vpop.f32.mrb[0].mxu0
    %v1302 = vadd.f32 0.0, %v1301
    %v1303 = vpop.f32.mrb[0].mxu0
    %v1304 = vpop.f32.mrb[0].mxu0
    %v1305 = vadd.f32 0.0, %v1304
    %v1306 = vpop.f32.mrb[0].mxu0
    %1307 = vmatprep.mubr.bf16.mxu0 0
    %1308 = vmatmul.mubr.bf16.gmra.mrb[0].mxu0 %v837
    %v1309 = vpop.f32.mrb[0].mxu0
    %v1310 = vadd.f32 0.0, %v1309
    %v1311 = vpop.f32.mrb[0].mxu0
    %v1312 = vpop.f32.mrb[0].mxu0
    %v1313 = vadd.f32 0.0, %v1312
    %v1314 = vpop.f32.mrb[0].mxu0
    %1315 = vmatprep.mubr.bf16.mxu0 0
    %1316 = vmatmul.mubr.bf16.gmra.mrb[0].mxu0 %v840
    %v1317 = vpop.f32.mrb[0].mxu0
    %v1318 = vadd.f32 0.0, %v1317
    %v1319 = vpop.f32.mrb[0].mxu0
    %v1320 = vpop.f32.mrb[0].mxu0
    %v1321 = vadd.f32 0.0, %v1320
    %v1322 = vpop.f32.mrb[0].mxu0
    %1323 = vmatprep.mubr.bf16.mxu0 0
    %1324 = vmatmul.mubr.bf16.gmra.mrb[0].mxu0 %v843
    %v1325 = vpop.f32.mrb[0].mxu0
    %v1326 = vadd.f32 0.0, %v1325
    %v1327 = vpop.f32.mrb[0].mxu0
    %v1328 = vpop.f32.mrb[0].mxu0
    %v1329 = vadd.f32 0.0, %v1328
    %v1330 = vpop.f32.mrb[0].mxu0
    %1331 = vmatprep.mubr.bf16.mxu0 0
    %1332 = vmatmul.mubr.bf16.gmra.mrb[0].mxu0 %v846
    %v1333 = vpop.f32.mrb[0].mxu0
    %v1334 = vadd.f32 0.0, %v1333
    %v1335 = vpop.f32.mrb[0].mxu0
    %v1336 = vpop.f32.mrb[0].mxu0
    %v1337 = vadd.f32 0.0, %v1336
    %v1338 = vpop.f32.mrb[0].mxu0
    %1339 = vmatprep.mubr.bf16.mxu0 0
    %1340 = vmatmul.mubr.bf16.gmra.mrb[0].mxu0 %v849
    %v1341 = vpop.f32.mrb[0].mxu0
    %v1342 = vadd.f32 0.0, %v1341
    %v1343 = vpop.f32.mrb[0].mxu0
    %v1344 = vpop.f32.mrb[0].mxu0
    %v1345 = vadd.f32 0.0, %v1344
    %v1346 = vpop.f32.mrb[0].mxu0
    %1347 = vmatprep.mubr.bf16.mxu0 0
    %1348 = vmatmul.mubr.bf16.gmra.mrb[0].mxu0 %v852
    %v1349 = vpop.f32.mrb[0].mxu0
    %v1350 = vadd.f32 0.0, %v1349
    %v1351 = vpop.f32.mrb[0].mxu0
    %v1352 = vpop.f32.mrb[0].mxu0
    %v1353 = vadd.f32 0.0, %v1352
    %v1354 = vpop.f32.mrb[0].mxu0
    %1355 = vmatprep.mubr.bf16.mxu0 0
    %1356 = vmatmul.mubr.bf16.gmra.mrb[0].mxu0 %v855
    %v1357 = vpop.f32.mrb[0].mxu0
    %v1358 = vadd.f32 0.0, %v1357
    %v1359 = vpop.f32.mrb[0].mxu0
    %v1360 = vpop.f32.mrb[0].mxu0
    %v1361 = vadd.f32 0.0, %v1360
    %v1362 = vpop.f32.mrb[0].mxu0
    %1363 = vmatprep.mubr.bf16.mxu0 0
    %1364 = vmatmul.mubr.bf16.gmra.mrb[0].mxu0 %v858
    %v1365 = vpop.f32.mrb[0].mxu0
    %v1366 = vadd.f32 0.0, %v1365
    %v1367 = vpop.f32.mrb[0].mxu0
    %v1368 = vpop.f32.mrb[0].mxu0
    %v1369 = vadd.f32 0.0, %v1368
    %v1370 = vpop.f32.mrb[0].mxu0
    %1371 = vmatprep.mubr.bf16.mxu0 0
    %1372 = vmatmul.mubr.bf16.gmra.mrb[0].mxu0 %v861
    %v1373 = vpop.f32.mrb[0].mxu0
    %v1374 = vadd.f32 0.0, %v1373
    %v1375 = vpop.f32.mrb[0].mxu0
    %v1376 = vpop.f32.mrb[0].mxu0
    %v1377 = vadd.f32 0.0, %v1376
    %v1378 = vpop.f32.mrb[0].mxu0
    %1379 = vmatprep.mubr.bf16.mxu0 0
    %1380 = vmatmul.mubr.bf16.gmra.mrb[0].mxu0 %v864
    %v1381 = vpop.f32.mrb[0].mxu0
    %v1382 = vadd.f32 0.0, %v1381
    %v1383 = vpop.f32.mrb[0].mxu0
    %v1384 = vpop.f32.mrb[0].mxu0
    %v1385 = vadd.f32 0.0, %v1384
    %v1386 = vpop.f32.mrb[0].mxu0
    %1387 = vmatprep.mubr.bf16.mxu0 0
    %1388 = vmatmul.mubr.bf16.gmra.mrb[0].mxu0 %v867
    %v1389 = vpop.f32.mrb[0].mxu0
    %v1390 = vadd.f32 0.0, %v1389
    %v1391 = vpop.f32.mrb[0].mxu0
    %v1392 = vpop.f32.mrb[0].mxu0
    %v1393 = vadd.f32 0.0, %v1392
    %v1394 = vpop.f32.mrb[0].mxu0
    %1395 = vmatprep.mubr.bf16.mxu0 0
    %1396 = vmatmul.mubr.bf16.gmra.mrb[0].mxu0 %v870
    %v1397 = vpop.f32.mrb[0].mxu0
    %v1398 = vadd.f32 0.0, %v1397
    %v1399 = vpop.f32.mrb[0].mxu0
    %v1400 = vpop.f32.mrb[0].mxu0
    %v1401 = vadd.f32 0.0, %v1400
    %v1402 = vpop.f32.mrb[0].mxu0
    %1403 = vmatprep.mubr.bf16.mxu0 0
    %1404 = vmatmul.mubr.bf16.gmra.mrb[0].mxu0 %v873
    %v1405 = vpop.f32.mrb[0].mxu0
    %v1406 = vadd.f32 0.0, %v1405
    %v1407 = vpop.f32.mrb[0].mxu0
    %v1408 = vpop.f32.mrb[0].mxu0
    %v1409 = vadd.f32 0.0, %v1408
    %v1410 = vpop.f32.mrb[0].mxu0
    %1411 = vmatprep.mubr.bf16.mxu0 0
    %1412 = vmatmul.mubr.bf16.gmra.mrb[0].mxu0 %v876
    %v1413 = vpop.f32.mrb[0].mxu0
    %v1414 = vadd.f32 0.0, %v1413
    %v1415 = vpop.f32.mrb[0].mxu0
    %v1416 = vpop.f32.mrb[0].mxu0
    %v1417 = vadd.f32 0.0, %v1416
    %v1418 = vpop.f32.mrb[0].mxu0
    %1419 = vmatprep.mubr.bf16.mxu0 0
    %1420 = vmatmul.mubr.bf16.gmra.mrb[0].mxu0 %v879
    %v1421 = vpop.f32.mrb[0].mxu0
    %v1422 = vadd.f32 0.0, %v1421
    %v1423 = vpop.f32.mrb[0].mxu0
    %v1424 = vpop.f32.mrb[0].mxu0
    %v1425 = vadd.f32 0.0, %v1424
    %v1426 = vpop.f32.mrb[0].mxu0
    %1427 = vmatprep.mubr.bf16.mxu0 0
    %1428 = vmatmul.mubr.bf16.gmra.mrb[0].mxu0 %v882
    %v1429 = vpop.f32.mrb[0].mxu0
    %v1430 = vadd.f32 0.0, %v1429
    %v1431 = vpop.f32.mrb[0].mxu0
    %v1432 = vpop.f32.mrb[0].mxu0
    %v1433 = vadd.f32 0.0, %v1432
    %v1434 = vpop.f32.mrb[0].mxu0
    %1435 = vmatprep.mubr.bf16.mxu0 0
    %1436 = vmatmul.mubr.bf16.gmra.mrb[0].mxu0 %v885
    %v1437 = vpop.f32.mrb[0].mxu0
    %v1438 = vadd.f32 0.0, %v1437
    %v1439 = vpop.f32.mrb[0].mxu0
    %v1440 = vpop.f32.mrb[0].mxu0
    %v1441 = vadd.f32 0.0, %v1440
    %v1442 = vpop.f32.mrb[0].mxu0
    %1443 = vmatprep.mubr.bf16.mxu0 0
    %1444 = vmatmul.mubr.bf16.gmra.mrb[0].mxu0 %v888
    %v1445 = vpop.f32.mrb[0].mxu0
    %v1446 = vadd.f32 0.0, %v1445
    %v1447 = vpop.f32.mrb[0].mxu0
    %v1448 = vpop.f32.mrb[0].mxu0
    %v1449 = vadd.f32 0.0, %v1448
    %v1450 = vpop.f32.mrb[0].mxu0
    %1451 = vmatprep.mubr.bf16.mxu0 0
    %1452 = vmatmul.mubr.bf16.gmra.mrb[0].mxu0 %v891
    %v1453 = vpop.f32.mrb[0].mxu0
    %v1454 = vadd.f32 0.0, %v1453
    %v1455 = vpop.f32.mrb[0].mxu0
    %v1456 = vpop.f32.mrb[0].mxu0
    %v1457 = vadd.f32 0.0, %v1456
    %v1458 = vpop.f32.mrb[0].mxu0
    %1459 = vmatprep.mubr.bf16.mxu0 0
    %1460 = vmatmul.mubr.bf16.gmra.mrb[0].mxu0 %v894
    %v1461 = vpop.f32.mrb[0].mxu0
    %v1462 = vadd.f32 0.0, %v1461
    %v1463 = vpop.f32.mrb[0].mxu0
    %v1464 = vpop.f32.mrb[0].mxu0
    %v1465 = vadd.f32 0.0, %v1464
    %v1466 = vpop.f32.mrb[0].mxu0
    %1467 = vmatprep.mubr.bf16.mxu0 0
    %1468 = vmatmul.mubr.bf16.gmra.mrb[0].mxu0 %v897
    %v1469 = vpop.f32.mrb[0].mxu0
    %v1470 = vadd.f32 0.0, %v1469
    %v1471 = vpop.f32.mrb[0].mxu0
    %v1472 = vpop.f32.mrb[0].mxu0
    %v1473 = vadd.f32 0.0, %v1472
    %v1474 = vpop.f32.mrb[0].mxu0
    %1475 = vmatprep.mubr.bf16.mxu0 0
    %1476 = vmatmul.mubr.bf16.gmra.mrb[0].mxu0 %v900
    %v1477 = vpop.f32.mrb[0].mxu0
    %v1478 = vadd.f32 0.0, %v1477
    %v1479 = vpop.f32.mrb[0].mxu0
    %v1480 = vpop.f32.mrb[0].mxu0
    %v1481 = vadd.f32 0.0, %v1480
    %v1482 = vpop.f32.mrb[0].mxu0
    %1483 = vmatprep.mubr.bf16.mxu0 0
    %1484 = vmatmul.mubr.bf16.gmra.mrb[0].mxu0 %v903
    %v1485 = vpop.f32.mrb[0].mxu0
    %v1486 = vadd.f32 0.0, %v1485
    %v1487 = vpop.f32.mrb[0].mxu0
    %v1488 = vpop.f32.mrb[0].mxu0
    %v1489 = vadd.f32 0.0, %v1488
    %v1490 = vpop.f32.mrb[0].mxu0
    %1491 = vmatprep.mubr.bf16.mxu0 0
    %1492 = vmatmul.mubr.bf16.gmra.mrb[0].mxu0 %v906
    %v1493 = vpop.f32.mrb[0].mxu0
    %v1494 = vadd.f32 0.0, %v1493
    %v1495 = vpop.f32.mrb[0].mxu0
    %v1496 = vpop.f32.mrb[0].mxu0
    %v1497 = vadd.f32 0.0, %v1496
    %v1498 = vpop.f32.mrb[0].mxu0
    %1499 = vmatprep.mubr.bf16.mxu0 0
    %1500 = vmatmul.mubr.bf16.gmra.mrb[0].mxu0 %v909
    %v1501 = vpop.f32.mrb[0].mxu0
    %v1502 = vadd.f32 0.0, %v1501
    %v1503 = vpop.f32.mrb[0].mxu0
    %v1504 = vpop.f32.mrb[0].mxu0
    %v1505 = vadd.f32 0.0, %v1504
    %v1506 = vpop.f32.mrb[0].mxu0
    %1507 = vmatprep.mubr.bf16.mxu0 0
    %1508 = vmatmul.mubr.bf16.gmra.mrb[0].mxu0 %v912
    %v1509 = vpop.f32.mrb[0].mxu0
    %v1510 = vadd.f32 0.0, %v1509
    %v1511 = vpop.f32.mrb[0].mxu0
    %v1512 = vpop.f32.mrb[0].mxu0
    %v1513 = vadd.f32 0.0, %v1512
    %v1514 = vpop.f32.mrb[0].mxu0
    %1515 = vmatprep.mubr.bf16.mxu0 0
    %1516 = vmatmul.mubr.bf16.gmra.mrb[0].mxu0 %v915
    %v1517 = vpop.f32.mrb[0].mxu0
    %v1518 = vadd.f32 0.0, %v1517
    %v1519 = vpop.f32.mrb[0].mxu0
    %v1520 = vpop.f32.mrb[0].mxu0
    %v1521 = vadd.f32 0.0, %v1520
    %v1522 = vpop.f32.mrb[0].mxu0
    %1523 = vmatprep.mubr.bf16.mxu0 0
    %1524 = vmatmul.mubr.bf16.gmra.mrb[0].mxu0 %v918
    %v1525 = vpop.f32.mrb[0].mxu0
    %v1526 = vadd.f32 0.0, %v1525
    %v1527 = vpop.f32.mrb[0].mxu0
    %v1528 = vpop.f32.mrb[0].mxu0
    %v1529 = vadd.f32 0.0, %v1528
    %v1530 = vpop.f32.mrb[0].mxu0
    %1531 = vmatprep.mubr.bf16.mxu0 0
    %1532 = vmatmul.mubr.bf16.gmra.mrb[0].mxu0 %v921
    %v1533 = vpop.f32.mrb[0].mxu0
    %v1534 = vadd.f32 0.0, %v1533
    %v1535 = vpop.f32.mrb[0].mxu0
    %v1536 = vpop.f32.mrb[0].mxu0
    %v1537 = vadd.f32 0.0, %v1536
    %v1538 = vpop.f32.mrb[0].mxu0
    %1539 = vmatprep.mubr.bf16.mxu0 0
    %1540 = vmatmul.mubr.bf16.gmra.mrb[0].mxu0 %v924
    %v1541 = vpop.f32.mrb[0].mxu0
    %v1542 = vadd.f32 0.0, %v1541
    %v1543 = vpop.f32.mrb[0].mxu0
    %v1544 = vpop.f32.mrb[0].mxu0
    %v1545 = vadd.f32 0.0, %v1544
    %v1546 = vpop.f32.mrb[0].mxu0
    %1547 = vmatprep.mubr.bf16.mxu0 0
    %1548 = vmatmul.mubr.bf16.gmra.mrb[0].mxu0 %v927
    %v1549 = vpop.f32.mrb[0].mxu0
    %v1550 = vadd.f32 0.0, %v1549
    %v1551 = vpop.f32.mrb[0].mxu0
    %v1552 = vpop.f32.mrb[0].mxu0
    %v1553 = vadd.f32 0.0, %v1552
    %v1554 = vpop.f32.mrb[0].mxu0
    %1555 = vmatprep.mubr.bf16.mxu0 0
    %1556 = vmatmul.mubr.bf16.gmra.mrb[0].mxu0 %v930
    %v1557 = vpop.f32.mrb[0].mxu0
    %v1558 = vadd.f32 0.0, %v1557
    %v1559 = vpop.f32.mrb[0].mxu0
    %v1560 = vpop.f32.mrb[0].mxu0
    %v1561 = vadd.f32 0.0, %v1560
    %v1562 = vpop.f32.mrb[0].mxu0
    %1563 = vmatprep.mubr.bf16.mxu0 0
    %1564 = vmatmul.mubr.bf16.gmra.mrb[0].mxu0 %v933
    %v1565 = vpop.f32.mrb[0].mxu0
    %v1566 = vadd.f32 0.0, %v1565
    %v1567 = vpop.f32.mrb[0].mxu0
    %v1568 = vpop.f32.mrb[0].mxu0
    %v1569 = vadd.f32 0.0, %v1568
    %v1570 = vpop.f32.mrb[0].mxu0
    %1571 = vmatprep.mubr.bf16.mxu0 0
    %1572 = vmatmul.mubr.bf16.gmra.mrb[0].mxu0 %v936
    %v1573 = vpop.f32.mrb[0].mxu0
    %v1574 = vadd.f32 0.0, %v1573
    %v1575 = vpop.f32.mrb[0].mxu0
    %v1576 = vpop.f32.mrb[0].mxu0
    %v1577 = vadd.f32 0.0, %v1576
    %v1578 = vpop.f32.mrb[0].mxu0
    %1579 = vmatprep.mubr.bf16.mxu0 0
    %1580 = vmatmul.mubr.bf16.gmra.mrb[0].mxu0 %v939
    %v1581 = vpop.f32.mrb[0].mxu0
    %v1582 = vadd.f32 0.0, %v1581
    %v1583 = vpop.f32.mrb[0].mxu0
    %v1584 = vpop.f32.mrb[0].mxu0
    %v1585 = vadd.f32 0.0, %v1584
    %v1586 = vpop.f32.mrb[0].mxu0
    %1587 = vmatprep.mubr.bf16.mxu0 0
    %1588 = vmatmul.mubr.bf16.gmra.mrb[0].mxu0 %v942
    %v1589 = vpop.f32.mrb[0].mxu0
    %v1590 = vadd.f32 0.0, %v1589
    %v1591 = vpop.f32.mrb[0].mxu0
    %v1592 = vpop.f32.mrb[0].mxu0
    %v1593 = vadd.f32 0.0, %v1592
    %v1594 = vpop.f32.mrb[0].mxu0
    %1595 = vmatprep.mubr.bf16.mxu0 0
    %1596 = vmatmul.mubr.bf16.gmra.mrb[0].mxu0 %v945
    %v1597 = vpop.f32.mrb[0].mxu0
    %v1598 = vadd.f32 0.0, %v1597
    %v1599 = vpop.f32.mrb[0].mxu0
    %v1600 = vpop.f32.mrb[0].mxu0
    %v1601 = vadd.f32 0.0, %v1600
    %v1602 = vpop.f32.mrb[0].mxu0
    %1603 = vmatprep.mubr.bf16.mxu0 0
    %1604 = vmatmul.mubr.bf16.gmra.mrb[0].mxu0 %v948
    %v1605 = vpop.f32.mrb[0].mxu0
    %v1606 = vadd.f32 0.0, %v1605
    %v1607 = vpop.f32.mrb[0].mxu0
    %v1608 = vpop.f32.mrb[0].mxu0
    %v1609 = vadd.f32 0.0, %v1608
    %v1610 = vpop.f32.mrb[0].mxu0
    %1611 = vmatprep.mubr.bf16.mxu0 0
    %1612 = vmatmul.mubr.bf16.gmra.mrb[0].mxu0 %v951
    %v1613 = vpop.f32.mrb[0].mxu0
    %v1614 = vadd.f32 0.0, %v1613
    %v1615 = vpop.f32.mrb[0].mxu0
    %v1616 = vpop.f32.mrb[0].mxu0
    %v1617 = vadd.f32 0.0, %v1616
    %v1618 = vpop.f32.mrb[0].mxu0
    %1619 = vmatprep.mubr.bf16.mxu0 0
    %1620 = vmatmul.mubr.bf16.gmra.mrb[0].mxu0 %v954
    %v1621 = vpop.f32.mrb[0].mxu0
    %v1622 = vadd.f32 0.0, %v1621
    %v1623 = vpop.f32.mrb[0].mxu0
    %v1624 = vpop.f32.mrb[0].mxu0
    %v1625 = vadd.f32 0.0, %v1624
    %v1626 = vpop.f32.mrb[0].mxu0
    %1627 = vmatprep.mubr.bf16.mxu0 0
    %1628 = vmatmul.mubr.bf16.gmra.mrb[0].mxu0 %v957
    %v1629 = vpop.f32.mrb[0].mxu0
    %v1630 = vadd.f32 0.0, %v1629
    %v1631 = vpop.f32.mrb[0].mxu0
    %v1632 = vpop.f32.mrb[0].mxu0
    %v1633 = vadd.f32 0.0, %v1632
    %v1634 = vpop.f32.mrb[0].mxu0
    %1635 = vmatprep.mubr.bf16.mxu0 0
    %1636 = vmatmul.mubr.bf16.gmra.mrb[0].mxu0 %v960
    %v1637 = vpop.f32.mrb[0].mxu0
    %v1638 = vadd.f32 0.0, %v1637
    %v1639 = vpop.f32.mrb[0].mxu0
    %v1640 = vpop.f32.mrb[0].mxu0
    %v1641 = vadd.f32 0.0, %v1640
    %v1642 = vpop.f32.mrb[0].mxu0
    %1643 = vmatprep.mubr.bf16.mxu0 0
    %1644 = vmatmul.mubr.bf16.gmra.mrb[0].mxu0 %v963
    %v1645 = vpop.f32.mrb[0].mxu0
    %v1646 = vadd.f32 0.0, %v1645
    %v1647 = vpop.f32.mrb[0].mxu0
    %v1648 = vpop.f32.mrb[0].mxu0
    %v1649 = vadd.f32 0.0, %v1648
    %v1650 = vpop.f32.mrb[0].mxu0
    %1651 = vmatprep.mubr.bf16.mxu0 0
    %1652 = vmatmul.mubr.bf16.gmra.mrb[0].mxu0 %v966
    %v1653 = vpop.f32.mrb[0].mxu0
    %v1654 = vadd.f32 0.0, %v1653
    %v1655 = vpop.f32.mrb[0].mxu0
    %v1656 = vpop.f32.mrb[0].mxu0
    %v1657 = vadd.f32 0.0, %v1656
    %v1658 = vpop.f32.mrb[0].mxu0
    %1659 = vmatprep.mubr.bf16.mxu0 0
    %1660 = vmatmul.mubr.bf16.gmra.mrb[0].mxu0 %v969
    %v1661 = vpop.f32.mrb[0].mxu0
    %v1662 = vadd.f32 0.0, %v1661
    %v1663 = vpop.f32.mrb[0].mxu0
    %v1664 = vpop.f32.mrb[0].mxu0
    %v1665 = vadd.f32 0.0, %v1664
    %v1666 = vpop.f32.mrb[0].mxu0
    %1667 = vmatprep.mubr.bf16.mxu0 0
    %1668 = vmatmul.mubr.bf16.gmra.mrb[0].mxu0 %v972
    %v1669 = vpop.f32.mrb[0].mxu0
    %v1670 = vadd.f32 0.0, %v1669
    %v1671 = vpop.f32.mrb[0].mxu0
    %v1672 = vpop.f32.mrb[0].mxu0
    %v1673 = vadd.f32 0.0, %v1672
    %v1674 = vpop.f32.mrb[0].mxu0
    %1675 = vmatprep.mubr.bf16.mxu0 0
    %1676 = vmatmul.mubr.bf16.gmra.mrb[0].mxu0 %v975
    %v1677 = vpop.f32.mrb[0].mxu0
    %v1678 = vadd.f32 0.0, %v1677
    %v1679 = vpop.f32.mrb[0].mxu0
    %v1680 = vpop.f32.mrb[0].mxu0
    %v1681 = vadd.f32 0.0, %v1680
    %v1682 = vpop.f32.mrb[0].mxu0
    %1683 = vmatprep.mubr.bf16.mxu0 0
    %1684 = vmatmul.mubr.bf16.gmra.mrb[0].mxu0 %v978
    %v1685 = vpop.f32.mrb[0].mxu0
    %v1686 = vadd.f32 0.0, %v1685
    %v1687 = vpop.f32.mrb[0].mxu0
    %v1688 = vpop.f32.mrb[0].mxu0
    %v1689 = vadd.f32 0.0, %v1688
    %v1690 = vpop.f32.mrb[0].mxu0
    %1691 = vmatprep.mubr.bf16.mxu0 0
    %1692 = vmatmul.mubr.bf16.gmra.mrb[0].mxu0 %v981
    %v1693 = vpop.f32.mrb[0].mxu0
    %v1694 = vadd.f32 0.0, %v1693
    %v1695 = vpop.f32.mrb[0].mxu0
    %v1696 = vpop.f32.mrb[0].mxu0
    %v1697 = vadd.f32 0.0, %v1696
    %v1698 = vpop.f32.mrb[0].mxu0
    %1699 = vmatprep.mubr.bf16.mxu0 0
    %1700 = vmatmul.mubr.bf16.gmra.mrb[0].mxu0 %v984
    %v1701 = vpop.f32.mrb[0].mxu0
    %v1702 = vadd.f32 0.0, %v1701
    %v1703 = vpop.f32.mrb[0].mxu0
    %v1704 = vpop.f32.mrb[0].mxu0
    %v1705 = vadd.f32 0.0, %v1704
    %v1706 = vpop.f32.mrb[0].mxu0
    %1707 = vmatprep.mubr.bf16.mxu0 0
    %1708 = vmatmul.mubr.bf16.gmra.mrb[0].mxu0 %v987
    %v1709 = vpop.f32.mrb[0].mxu0
    %v1710 = vadd.f32 0.0, %v1709
    %v1711 = vpop.f32.mrb[0].mxu0
    %v1712 = vpop.f32.mrb[0].mxu0
    %v1713 = vadd.f32 0.0, %v1712
    %v1714 = vpop.f32.mrb[0].mxu0
    %1715 = vmatprep.mubr.bf16.mxu0 0
    %1716 = vmatmul.mubr.bf16.gmra.mrb[0].mxu0 %v990
    %v1717 = vpop.f32.mrb[0].mxu0
    %v1718 = vadd.f32 0.0, %v1717
    %v1719 = vpop.f32.mrb[0].mxu0
    %v1720 = vpop.f32.mrb[0].mxu0
    %v1721 = vadd.f32 0.0, %v1720
    %v1722 = vpop.f32.mrb[0].mxu0
    %1723 = vmatprep.mubr.bf16.mxu0 0
    %1724 = vmatmul.mubr.bf16.gmra.mrb[0].mxu0 %v993
    %v1725 = vpop.f32.mrb[0].mxu0
    %v1726 = vadd.f32 0.0, %v1725
    %v1727 = vpop.f32.mrb[0].mxu0
    %v1728 = vpop.f32.mrb[0].mxu0
    %v1729 = vadd.f32 0.0, %v1728
    %v1730 = vpop.f32.mrb[0].mxu0
    %1731 = vmatprep.mubr.bf16.mxu0 0
    %1732 = vmatmul.mubr.bf16.gmra.mrb[0].mxu0 %v996
    %v1733 = vpop.f32.mrb[0].mxu0
    %v1734 = vadd.f32 0.0, %v1733
    %v1735 = vpop.f32.mrb[0].mxu0
    %v1736 = vpop.f32.mrb[0].mxu0
    %v1737 = vadd.f32 0.0, %v1736
    %v1738 = vpop.f32.mrb[0].mxu0
    %1739 = vmatprep.mubr.bf16.mxu0 0
    %1740 = vmatmul.mubr.bf16.gmra.mrb[0].mxu0 %v999
    %v1741 = vpop.f32.mrb[0].mxu0
    %v1742 = vadd.f32 0.0, %v1741
    %v1743 = vpop.f32.mrb[0].mxu0
    %v1744 = vpop.f32.mrb[0].mxu0
    %v1745 = vadd.f32 0.0, %v1744
    %v1746 = vpop.f32.mrb[0].mxu0
    %1747 = vmatprep.mubr.bf16.mxu0 0
    %1748 = vmatmul.mubr.bf16.gmra.mrb[0].mxu0 %v1002
    %v1749 = vpop.f32.mrb[0].mxu0
    %v1750 = vadd.f32 0.0, %v1749
    %v1751 = vpop.f32.mrb[0].mxu0
    %v1752 = vpop.f32.mrb[0].mxu0
    %v1753 = vadd.f32 0.0, %v1752
    %v1754 = vpop.f32.mrb[0].mxu0
    %1755 = vmatprep.mubr.bf16.mxu0 0
    %1756 = vmatmul.mubr.bf16.gmra.mrb[0].mxu0 %v1005
    %v1757 = vpop.f32.mrb[0].mxu0
    %v1758 = vadd.f32 0.0, %v1757
    %v1759 = vpop.f32.mrb[0].mxu0
    %v1760 = vpop.f32.mrb[0].mxu0
    %v1761 = vadd.f32 0.0, %v1760
    %v1762 = vpop.f32.mrb[0].mxu0
    %1763 = vmatprep.mubr.bf16.mxu0 0
    %1764 = vmatmul.mubr.bf16.gmra.mrb[0].mxu0 %v1008
    %v1765 = vpop.f32.mrb[0].mxu0
    %v1766 = vadd.f32 0.0, %v1765
    %v1767 = vpop.f32.mrb[0].mxu0
    %v1768 = vpop.f32.mrb[0].mxu0
    %v1769 = vadd.f32 0.0, %v1768
    %v1770 = vpop.f32.mrb[0].mxu0
    %1771 = vmatprep.mubr.bf16.mxu0 0
    %1772 = vmatmul.mubr.bf16.gmra.mrb[0].mxu0 %v1011
    %v1773 = vpop.f32.mrb[0].mxu0
    %v1774 = vadd.f32 0.0, %v1773
    %v1775 = vpop.f32.mrb[0].mxu0
    %v1776 = vpop.f32.mrb[0].mxu0
    %v1777 = vadd.f32 0.0, %v1776
    %v1778 = vpop.f32.mrb[0].mxu0
    %1779 = vmatprep.mubr.bf16.mxu0 0
    %1780 = vmatmul.mubr.bf16.gmra.mrb[0].mxu0 %v1014
    %v1781 = vpop.f32.mrb[0].mxu0
    %v1782 = vadd.f32 0.0, %v1781
    %v1783 = vpop.f32.mrb[0].mxu0
    %v1784 = vpop.f32.mrb[0].mxu0
    %v1785 = vadd.f32 0.0, %v1784
    %v1786 = vpop.f32.mrb[0].mxu0
    %1787 = vmatprep.mubr.bf16.mxu0 0
    %1788 = vmatmul.mubr.bf16.gmra.mrb[0].mxu0 %v1017
    %v1789 = vpop.f32.mrb[0].mxu0
    %v1790 = vadd.f32 0.0, %v1789
    %v1791 = vpop.f32.mrb[0].mxu0
    %v1792 = vpop.f32.mrb[0].mxu0
    %v1793 = vadd.f32 0.0, %v1792
    %v1794 = vpop.f32.mrb[0].mxu0
    %1795 = vmatprep.mubr.bf16.mxu0 0
    %1796 = vmatmul.mubr.bf16.gmra.mrb[0].mxu0 %v1020
    %v1797 = vpop.f32.mrb[0].mxu0
    %v1798 = vadd.f32 0.0, %v1797
    %v1799 = vpop.f32.mrb[0].mxu0
    %v1800 = vpop.f32.mrb[0].mxu0
    %v1801 = vadd.f32 0.0, %v1800
    %v1802 = vpop.f32.mrb[0].mxu0
    %1803 = vmatprep.mubr.bf16.mxu0 0
    %1804 = vmatmul.mubr.bf16.gmra.mrb[0].mxu0 %v1023
    %v1805 = vpop.f32.mrb[0].mxu0
    %v1806 = vadd.f32 0.0, %v1805
    %v1807 = vpop.f32.mrb[0].mxu0
    %v1808 = vpop.f32.mrb[0].mxu0
    %v1809 = vadd.f32 0.0, %v1808
    %v1810 = vpop.f32.mrb[0].mxu0
    %1811 = vmatprep.mubr.bf16.mxu0 0
    %1812 = vmatmul.mubr.bf16.gmra.mrb[0].mxu0 %v1026
    %v1813 = vpop.f32.mrb[0].mxu0
    %v1814 = vadd.f32 0.0, %v1813
    %v1815 = vpop.f32.mrb[0].mxu0
    %v1816 = vpop.f32.mrb[0].mxu0
    %v1817 = vadd.f32 0.0, %v1816
    %v1818 = vpop.f32.mrb[0].mxu0
    %1819 = vmatprep.mubr.bf16.mxu0 0
    %1820 = vmatmul.mubr.bf16.gmra.mrb[0].mxu0 %v1029
    %v1821 = vpop.f32.mrb[0].mxu0
    %v1822 = vadd.f32 0.0, %v1821
    %v1823 = vpop.f32.mrb[0].mxu0
    %v1824 = vpop.f32.mrb[0].mxu0
    %v1825 = vadd.f32 0.0, %v1824
    %v1826 = vpop.f32.mrb[0].mxu0
    %1827 = vmatprep.mubr.bf16.mxu0 0
    %1828 = vmatmul.mubr.bf16.gmra.mrb[0].mxu0 %v1032
    %v1829 = vpop.f32.mrb[0].mxu0
    %v1830 = vadd.f32 0.0, %v1829
    %v1831 = vpop.f32.mrb[0].mxu0
    %v1832 = vpop.f32.mrb[0].mxu0
    %v1833 = vadd.f32 0.0, %v1832
    %v1834 = vpop.f32.mrb[0].mxu0
    %1835 = vmatprep.mubr.bf16.mxu0 0
    %1836 = vmatmul.mubr.bf16.gmra.mrb[0].mxu0 %v1035
    %v1837 = vpop.f32.mrb[0].mxu0
    %v1838 = vadd.f32 0.0, %v1837
    %v1839 = vpop.f32.mrb[0].mxu0
    %v1840 = vpop.f32.mrb[0].mxu0
    %v1841 = vadd.f32 0.0, %v1840
    %v1842 = vpop.f32.mrb[0].mxu0
    %1843 = vmatprep.mubr.bf16.mxu0 0
    %1844 = vmatmul.mubr.bf16.gmra.mrb[0].mxu0 %v1038
    %v1845 = vpop.f32.mrb[0].mxu0
    %v1846 = vadd.f32 0.0, %v1845
    %v1847 = vpop.f32.mrb[0].mxu0
    %v1848 = vpop.f32.mrb[0].mxu0
    %v1849 = vadd.f32 0.0, %v1848
    %v1850 = vpop.f32.mrb[0].mxu0
    %1851 = vmatprep.mubr.bf16.mxu0 0
    %1852 = vmatmul.mubr.bf16.gmra.mrb[0].mxu0 %v1041
    %v1853 = vpop.f32.mrb[0].mxu0
    %v1854 = vadd.f32 0.0, %v1853
    %v1855 = vpop.f32.mrb[0].mxu0
    %v1856 = vpop.f32.mrb[0].mxu0
    %v1857 = vadd.f32 0.0, %v1856
    %v1858 = vpop.f32.mrb[0].mxu0
    %1859 = vdwg.mxu0
    %v1860 = vmax.f32 %v1078, 0.0
    %v1861 = vmax.f32 %v1081, 0.0
    %v1862 = vmax.f32 %v1086, 0.0
    %v1863 = vmax.f32 %v1089, 0.0
    %v1864 = vmax.f32 %v1094, 0.0
    %v1865 = vmax.f32 %v1097, 0.0
    %v1866 = vmax.f32 %v1102, 0.0
    %v1867 = vmax.f32 %v1105, 0.0
    %v1868 = vmax.f32 %v1110, 0.0
    %v1869 = vmax.f32 %v1113, 0.0
    %v1870 = vmax.f32 %v1118, 0.0
    %v1871 = vmax.f32 %v1121, 0.0
    %v1872 = vmax.f32 %v1126, 0.0
    %v1873 = vmax.f32 %v1129, 0.0
    %v1874 = vmax.f32 %v1134, 0.0
    %v1875 = vmax.f32 %v1137, 0.0
    %v1876 = vmax.f32 %v1142, 0.0
    %v1877 = vmax.f32 %v1145, 0.0
    %v1878 = vmax.f32 %v1150, 0.0
    %v1879 = vmax.f32 %v1153, 0.0
    %v1880 = vmax.f32 %v1158, 0.0
    %v1881 = vmax.f32 %v1161, 0.0
    %v1882 = vmax.f32 %v1166, 0.0
    %v1883 = vmax.f32 %v1169, 0.0
    %v1884 = vmax.f32 %v1174, 0.0
    %v1885 = vmax.f32 %v1177, 0.0
    %v1886 = vmax.f32 %v1182, 0.0
    %v1887 = vmax.f32 %v1185, 0.0
    %v1888 = vmax.f32 %v1190, 0.0
    %v1889 = vmax.f32 %v1193, 0.0
    %v1890 = vmax.f32 %v1198, 0.0
    %v1891 = vmax.f32 %v1201, 0.0
    %v1892 = vmax.f32 %v1206, 0.0
    %v1893 = vmax.f32 %v1209, 0.0
    %v1894 = vmax.f32 %v1214, 0.0
    %v1895 = vmax.f32 %v1217, 0.0
    %v1896 = vmax.f32 %v1222, 0.0
    %v1897 = vmax.f32 %v1225, 0.0
    %v1898 = vmax.f32 %v1230, 0.0
    %v1899 = vmax.f32 %v1233, 0.0
    %v1900 = vmax.f32 %v1238, 0.0
    %v1901 = vmax.f32 %v1241, 0.0
    %v1902 = vmax.f32 %v1246, 0.0
    %v1903 = vmax.f32 %v1249, 0.0
    %v1904 = vmax.f32 %v1254, 0.0
    %v1905 = vmax.f32 %v1257, 0.0
    %v1906 = vmax.f32 %v1262, 0.0
    %v1907 = vmax.f32 %v1265, 0.0
    %v1908 = vmax.f32 %v1270, 0.0
    %v1909 = vmax.f32 %v1273, 0.0
    %v1910 = vmax.f32 %v1278, 0.0
    %v1911 = vmax.f32 %v1281, 0.0
    %v1912 = vmax.f32 %v1286, 0.0
    %v1913 = vmax.f32 %v1289, 0.0
    %v1914 = vmax.f32 %v1294, 0.0
    %v1915 = vmax.f32 %v1297, 0.0
    %v1916 = vmax.f32 %v1302, 0.0
    %v1917 = vmax.f32 %v1305, 0.0
    %v1918 = vmax.f32 %v1310, 0.0
    %v1919 = vmax.f32 %v1313, 0.0
    %v1920 = vmax.f32 %v1318, 0.0
    %v1921 = vmax.f32 %v1321, 0.0
    %v1922 = vmax.f32 %v1326, 0.0
    %v1923 = vmax.f32 %v1329, 0.0
    %v1924 = vmax.f32 %v1334, 0.0
    %v1925 = vmax.f32 %v1337, 0.0
    %v1926 = vmax.f32 %v1342, 0.0
    %v1927 = vmax.f32 %v1345, 0.0
    %v1928 = vmax.f32 %v1350, 0.0
    %v1929 = vmax.f32 %v1353, 0.0
    %v1930 = vmax.f32 %v1358, 0.0
    %v1931 = vmax.f32 %v1361, 0.0
    %v1932 = vmax.f32 %v1366, 0.0
    %v1933 = vmax.f32 %v1369, 0.0
    %v1934 = vmax.f32 %v1374, 0.0
    %v1935 = vmax.f32 %v1377, 0.0
    %v1936 = vmax.f32 %v1382, 0.0
    %v1937 = vmax.f32 %v1385, 0.0
    %v1938 = vmax.f32 %v1390, 0.0
    %v1939 = vmax.f32 %v1393, 0.0
    %v1940 = vmax.f32 %v1398, 0.0
    %v1941 = vmax.f32 %v1401, 0.0
    %v1942 = vmax.f32 %v1406, 0.0
    %v1943 = vmax.f32 %v1409, 0.0
    %v1944 = vmax.f32 %v1414, 0.0
    %v1945 = vmax.f32 %v1417, 0.0
    %v1946 = vmax.f32 %v1422, 0.0
    %v1947 = vmax.f32 %v1425, 0.0
    %v1948 = vmax.f32 %v1430, 0.0
    %v1949 = vmax.f32 %v1433, 0.0
    %v1950 = vmax.f32 %v1438, 0.0
    %v1951 = vmax.f32 %v1441, 0.0
    %v1952 = vmax.f32 %v1446, 0.0
    %v1953 = vmax.f32 %v1449, 0.0
    %v1954 = vmax.f32 %v1454, 0.0
    %v1955 = vmax.f32 %v1457, 0.0
    %v1956 = vmax.f32 %v1462, 0.0
    %v1957 = vmax.f32 %v1465, 0.0
    %v1958 = vmax.f32 %v1470, 0.0
    %v1959 = vmax.f32 %v1473, 0.0
    %v1960 = vmax.f32 %v1478, 0.0
    %v1961 = vmax.f32 %v1481, 0.0
    %v1962 = vmax.f32 %v1486, 0.0
    %v1963 = vmax.f32 %v1489, 0.0
    %v1964 = vmax.f32 %v1494, 0.0
    %v1965 = vmax.f32 %v1497, 0.0
    %v1966 = vmax.f32 %v1502, 0.0
    %v1967 = vmax.f32 %v1505, 0.0
    %v1968 = vmax.f32 %v1510, 0.0
    %v1969 = vmax.f32 %v1513, 0.0
    %v1970 = vmax.f32 %v1518, 0.0
    %v1971 = vmax.f32 %v1521, 0.0
    %v1972 = vmax.f32 %v1526, 0.0
    %v1973 = vmax.f32 %v1529, 0.0
    %v1974 = vmax.f32 %v1534, 0.0
    %v1975 = vmax.f32 %v1537, 0.0
    %v1976 = vmax.f32 %v1542, 0.0
    %v1977 = vmax.f32 %v1545, 0.0
    %v1978 = vmax.f32 %v1550, 0.0
    %v1979 = vmax.f32 %v1553, 0.0
    %v1980 = vmax.f32 %v1558, 0.0
    %v1981 = vmax.f32 %v1561, 0.0
    %v1982 = vmax.f32 %v1566, 0.0
    %v1983 = vmax.f32 %v1569, 0.0
    %v1984 = vmax.f32 %v1574, 0.0
    %v1985 = vmax.f32 %v1577, 0.0
    %v1986 = vmax.f32 %v1582, 0.0
    %v1987 = vmax.f32 %v1585, 0.0
    %v1988 = vmax.f32 %v1590, 0.0
    %v1989 = vmax.f32 %v1593, 0.0
    %v1990 = vmax.f32 %v1598, 0.0
    %v1991 = vmax.f32 %v1601, 0.0
    %v1992 = vmax.f32 %v1606, 0.0
    %v1993 = vmax.f32 %v1609, 0.0
    %v1994 = vmax.f32 %v1614, 0.0
    %v1995 = vmax.f32 %v1617, 0.0
    %v1996 = vmax.f32 %v1622, 0.0
    %v1997 = vmax.f32 %v1625, 0.0
    %v1998 = vmax.f32 %v1630, 0.0
    %v1999 = vmax.f32 %v1633, 0.0
    %v2000 = vmax.f32 %v1638, 0.0
    %v2001 = vmax.f32 %v1641, 0.0
    %v2002 = vmax.f32 %v1646, 0.0
    %v2003 = vmax.f32 %v1649, 0.0
    %v2004 = vmax.f32 %v1654, 0.0
    %v2005 = vmax.f32 %v1657, 0.0
    %v2006 = vmax.f32 %v1662, 0.0
    %v2007 = vmax.f32 %v1665, 0.0
    %v2008 = vmax.f32 %v1670, 0.0
    %v2009 = vmax.f32 %v1673, 0.0
    %v2010 = vmax.f32 %v1678, 0.0
    %v2011 = vmax.f32 %v1681, 0.0
    %v2012 = vmax.f32 %v1686, 0.0
    %v2013 = vmax.f32 %v1689, 0.0
    %v2014 = vmax.f32 %v1694, 0.0
    %v2015 = vmax.f32 %v1697, 0.0
    %v2016 = vmax.f32 %v1702, 0.0
    %v2017 = vmax.f32 %v1705, 0.0
    %v2018 = vmax.f32 %v1710, 0.0
    %v2019 = vmax.f32 %v1713, 0.0
    %v2020 = vmax.f32 %v1718, 0.0
    %v2021 = vmax.f32 %v1721, 0.0
    %v2022 = vmax.f32 %v1726, 0.0
    %v2023 = vmax.f32 %v1729, 0.0
    %v2024 = vmax.f32 %v1734, 0.0
    %v2025 = vmax.f32 %v1737, 0.0
    %v2026 = vmax.f32 %v1742, 0.0
    %v2027 = vmax.f32 %v1745, 0.0
    %v2028 = vmax.f32 %v1750, 0.0
    %v2029 = vmax.f32 %v1753, 0.0
    %v2030 = vmax.f32 %v1758, 0.0
    %v2031 = vmax.f32 %v1761, 0.0
    %v2032 = vmax.f32 %v1766, 0.0
    %v2033 = vmax.f32 %v1769, 0.0
    %v2034 = vmax.f32 %v1774, 0.0
    %v2035 = vmax.f32 %v1777, 0.0
    %v2036 = vmax.f32 %v1782, 0.0
    %v2037 = vmax.f32 %v1785, 0.0
    %v2038 = vmax.f32 %v1790, 0.0
    %v2039 = vmax.f32 %v1793, 0.0
    %v2040 = vmax.f32 %v1798, 0.0
    %v2041 = vmax.f32 %v1801, 0.0
    %v2042 = vmax.f32 %v1806, 0.0
    %v2043 = vmax.f32 %v1809, 0.0
    %v2044 = vmax.f32 %v1814, 0.0
    %v2045 = vmax.f32 %v1817, 0.0
    %v2046 = vmax.f32 %v1822, 0.0
    %v2047 = vmax.f32 %v1825, 0.0
    %v2048 = vmax.f32 %v1830, 0.0
    %v2049 = vmax.f32 %v1833, 0.0
    %v2050 = vmax.f32 %v1838, 0.0
    %v2051 = vmax.f32 %v1841, 0.0
    %v2052 = vmax.f32 %v1846, 0.0
    %v2053 = vmax.f32 %v1849, 0.0
    %v2054 = vmax.f32 %v1854, 0.0
    %v2055 = vmax.f32 %v1857, 0.0
    %v2056 = vld [vmem:[%s1] sm:$0xff]
    %v2057 = vld [vmem:[%s1 + $0x8] sm:$0xff]
    %v2058 = vld [vmem:[%s1 + $0x10] sm:$0xff]
    %v2059 = vld [vmem:[%s1 + $0x18] sm:$0xff]
    %v2060 = vld [vmem:[%s1 + $0x20] sm:$0xff]
    %v2061 = vld [vmem:[%s1 + $0x28] sm:$0xff]
    %v2062 = vld [vmem:[%s1 + $0x30] sm:$0xf]
    %v2063 = vpack.c.bf16 %v1861, %v1860
    %v2064 = vpack.c.bf16 %v1863, %v1862
    %v2065 = vpack.c.bf16 %v1865, %v1864
    %v2066 = vpack.c.bf16 %v1867, %v1866
    %v2067 = vpack.c.bf16 %v1869, %v1868
    %v2068 = vpack.c.bf16 %v1871, %v1870
    %v2069 = vpack.c.bf16 %v1873, %v1872
    %v2070 = vpack.c.bf16 %v1875, %v1874
    %v2071 = vpack.c.bf16 %v1877, %v1876
    %v2072 = vpack.c.bf16 %v1879, %v1878
    %v2073 = vpack.c.bf16 %v1881, %v1880
    %v2074 = vpack.c.bf16 %v1883, %v1882
    %v2075 = vpack.c.bf16 %v1885, %v1884
    %v2076 = vpack.c.bf16 %v1887, %v1886
    %v2077 = vpack.c.bf16 %v1889, %v1888
    %v2078 = vpack.c.bf16 %v1891, %v1890
    %v2079 = vpack.c.bf16 %v1893, %v1892
    %v2080 = vpack.c.bf16 %v1895, %v1894
    %v2081 = vpack.c.bf16 %v1897, %v1896
    %v2082 = vpack.c.bf16 %v1899, %v1898
    %v2083 = vpack.c.bf16 %v1901, %v1900
    %v2084 = vpack.c.bf16 %v1903, %v1902
    %v2085 = vpack.c.bf16 %v1905, %v1904
    %v2086 = vpack.c.bf16 %v1907, %v1906
    %v2087 = vpack.c.bf16 %v1909, %v1908
    %v2088 = vpack.c.bf16 %v1911, %v1910
    %v2089 = vpack.c.bf16 %v1913, %v1912
    %v2090 = vpack.c.bf16 %v1915, %v1914
    %v2091 = vpack.c.bf16 %v1917, %v1916
    %v2092 = vpack.c.bf16 %v1919, %v1918
    %v2093 = vpack.c.bf16 %v1921, %v1920
    %v2094 = vpack.c.bf16 %v1923, %v1922
    %v2095 = vpack.c.bf16 %v1925, %v1924
    %v2096 = vpack.c.bf16 %v1927, %v1926
    %v2097 = vpack.c.bf16 %v1929, %v1928
    %v2098 = vpack.c.bf16 %v1931, %v1930
    %v2099 = vpack.c.bf16 %v1933, %v1932
    %v2100 = vpack.c.bf16 %v1935, %v1934
    %v2101 = vpack.c.bf16 %v1937, %v1936
    %v2102 = vpack.c.bf16 %v1939, %v1938
    %v2103 = vpack.c.bf16 %v1941, %v1940
    %v2104 = vpack.c.bf16 %v1943, %v1942
    %v2105 = vpack.c.bf16 %v1945, %v1944
    %v2106 = vpack.c.bf16 %v1947, %v1946
    %v2107 = vpack.c.bf16 %v1949, %v1948
    %v2108 = vpack.c.bf16 %v1951, %v1950
    %v2109 = vpack.c.bf16 %v1953, %v1952
    %v2110 = vpack.c.bf16 %v1955, %v1954
    %v2111 = vpack.c.bf16 %v1957, %v1956
    %v2112 = vpack.c.bf16 %v1959, %v1958
    %v2113 = vpack.c.bf16 %v1961, %v1960
    %v2114 = vpack.c.bf16 %v1963, %v1962
    %v2115 = vpack.c.bf16 %v1965, %v1964
    %v2116 = vpack.c.bf16 %v1967, %v1966
    %v2117 = vpack.c.bf16 %v1969, %v1968
    %v2118 = vpack.c.bf16 %v1971, %v1970
    %v2119 = vpack.c.bf16 %v1973, %v1972
    %v2120 = vpack.c.bf16 %v1975, %v1974
    %v2121 = vpack.c.bf16 %v1977, %v1976
    %v2122 = vpack.c.bf16 %v1979, %v1978
    %v2123 = vpack.c.bf16 %v1981, %v1980
    %v2124 = vpack.c.bf16 %v1983, %v1982
    %v2125 = vpack.c.bf16 %v1985, %v1984
    %v2126 = vpack.c.bf16 %v1987, %v1986
    %v2127 = vpack.c.bf16 %v1989, %v1988
    %v2128 = vpack.c.bf16 %v1991, %v1990
    %v2129 = vpack.c.bf16 %v1993, %v1992
    %v2130 = vpack.c.bf16 %v1995, %v1994
    %v2131 = vpack.c.bf16 %v1997, %v1996
    %v2132 = vpack.c.bf16 %v1999, %v1998
    %v2133 = vpack.c.bf16 %v2001, %v2000
    %v2134 = vpack.c.bf16 %v2003, %v2002
    %v2135 = vpack.c.bf16 %v2005, %v2004
    %v2136 = vpack.c.bf16 %v2007, %v2006
    %v2137 = vpack.c.bf16 %v2009, %v2008
    %v2138 = vpack.c.bf16 %v2011, %v2010
    %v2139 = vpack.c.bf16 %v2013, %v2012
    %v2140 = vpack.c.bf16 %v2015, %v2014
    %v2141 = vpack.c.bf16 %v2017, %v2016
    %v2142 = vpack.c.bf16 %v2019, %v2018
    %v2143 = vpack.c.bf16 %v2021, %v2020
    %v2144 = vpack.c.bf16 %v2023, %v2022
    %v2145 = vpack.c.bf16 %v2025, %v2024
    %v2146 = vpack.c.bf16 %v2027, %v2026
    %v2147 = vpack.c.bf16 %v2029, %v2028
    %v2148 = vpack.c.bf16 %v2031, %v2030
    %v2149 = vpack.c.bf16 %v2033, %v2032
    %v2150 = vpack.c.bf16 %v2035, %v2034
    %v2151 = vpack.c.bf16 %v2037, %v2036
    %v2152 = vpack.c.bf16 %v2039, %v2038
    %v2153 = vpack.c.bf16 %v2041, %v2040
    %v2154 = vpack.c.bf16 %v2043, %v2042
    %v2155 = vpack.c.bf16 %v2045, %v2044
    %v2156 = vpack.c.bf16 %v2047, %v2046
    %v2157 = vpack.c.bf16 %v2049, %v2048
    %v2158 = vpack.c.bf16 %v2051, %v2050
    %v2159 = vpack.c.bf16 %v2053, %v2052
    %v2160 = vpack.c.bf16 %v2055, %v2054
    %v2168 = vunpack.c.l.b16 %v2056
    %v2169 = vunpack.c.h.b16 %v2056
    %v2170 = vunpack.c.l.b16 %v2057
    %v2171 = vunpack.c.h.b16 %v2057
    %v2172 = vunpack.c.l.b16 %v2058
    %v2173 = vunpack.c.h.b16 %v2058
    %v2174 = vunpack.c.l.b16 %v2059
    %v2175 = vunpack.c.h.b16 %v2059
    %v2176 = vunpack.c.l.b16 %v2060
    %v2177 = vunpack.c.h.b16 %v2060
    %v2178 = vunpack.c.l.b16 %v2061
    %v2179 = vunpack.c.h.b16 %v2061
    %v2180 = vunpack.c.l.b16 %v2062
    %v2181 = vpack.c.b16 %v2168, %v2168
    %v2182 = vpack.c.b16 %v2169, %v2169
    %v2183 = vpack.c.b16 %v2170, %v2170
    %v2184 = vpack.c.b16 %v2171, %v2171
    %v2185 = vpack.c.b16 %v2172, %v2172
    %v2186 = vpack.c.b16 %v2173, %v2173
    %v2187 = vpack.c.b16 %v2174, %v2174
    %v2188 = vpack.c.b16 %v2175, %v2175
    %v2189 = vpack.c.b16 %v2176, %v2176
    %v2190 = vpack.c.b16 %v2177, %v2177
    %v2191 = vpack.c.b16 %v2178, %v2178
    %v2192 = vpack.c.b16 %v2179, %v2179
    %v2193 = vpack.c.b16 %v2180, %v2180
    %v2207 = vsel %vm748, %v2193, 0
    %2209 = vmatprep.subr.bf16.mxu0 0
    %2210 = vmatpush1.bf16.msra.mxu0 %v2063
    %2211 = vmatprep.subr.bf16.mxu0 0
    %2212 = vmatpush1.bf16.msra.mxu0 %v2064
    %2213 = vmatprep.subr.bf16.mxu0 0
    %2214 = vmatpush1.bf16.msra.mxu0 %v2065
    %2215 = vmatprep.subr.bf16.mxu0 0
    %2216 = vmatpush1.bf16.msra.mxu0 %v2066
    %2217 = vmatprep.subr.bf16.mxu0 0
    %2218 = vmatpush1.bf16.msra.mxu0 %v2067
    %2219 = vmatprep.subr.bf16.mxu0 0
    %2220 = vmatpush1.bf16.msra.mxu0 %v2068
    %2221 = vmatprep.subr.bf16.mxu0 0
    %2222 = vmatpush1.bf16.msra.mxu0 %v2069
    %2223 = vmatprep.subr.bf16.mxu0 0
    %2224 = vmatpush1.bf16.msra.mxu0 %v2070
    %2225 = vmatprep.subr.bf16.mxu0 0
    %2226 = vmatpush1.bf16.msra.mxu0 %v2071
    %2227 = vmatprep.subr.bf16.mxu0 0
    %2228 = vmatpush1.bf16.msra.mxu0 %v2072
    %2229 = vmatprep.subr.bf16.mxu0 0
    %2230 = vmatpush1.bf16.msra.mxu0 %v2073
    %2231 = vmatprep.subr.bf16.mxu0 0
    %2232 = vmatpush1.bf16.msra.mxu0 %v2074
    %2233 = vmatprep.subr.bf16.mxu0 0
    %2234 = vmatpush1.bf16.msra.mxu0 %v2075
    %2235 = vmatprep.subr.bf16.mxu0 0
    %2236 = vmatpush1.bf16.msra.mxu0 %v2076
    %2237 = vmatprep.subr.bf16.mxu0 0
    %2238 = vmatpush1.bf16.msra.mxu0 %v2077
    %2239 = vmatprep.subr.bf16.mxu0 0
    %2240 = vmatpush1.bf16.msra.mxu0 %v2078
    %2241 = vmatprep.mubr.bf16.mxu0 %v2182
    %2242 = vmatmul.mubr.bf16.gmra.mrb[0].mxu0 %v2181
    %v2243 = vpop.f32.mrb[0].mxu0
    %v2244 = vadd.f32 0.0, %v2243
    %v2245 = vpop.f32.mrb[0].mxu0
    %v2246 = vpop.f32.mrb[0].mxu0
    %v2247 = vpop.f32.mrb[0].mxu0
    %2248 = vdwg.mxu0
    %2249 = vmatprep.subr.bf16.mxu0 0
    %2250 = vmatpush1.bf16.msra.mxu0 %v2079
    %2251 = vmatprep.subr.bf16.mxu0 0
    %2252 = vmatpush1.bf16.msra.mxu0 %v2080
    %2253 = vmatprep.subr.bf16.mxu0 0
    %2254 = vmatpush1.bf16.msra.mxu0 %v2081
    %2255 = vmatprep.subr.bf16.mxu0 0
    %2256 = vmatpush1.bf16.msra.mxu0 %v2082
    %2257 = vmatprep.subr.bf16.mxu0 0
    %2258 = vmatpush1.bf16.msra.mxu0 %v2083
    %2259 = vmatprep.subr.bf16.mxu0 0
    %2260 = vmatpush1.bf16.msra.mxu0 %v2084
    %2261 = vmatprep.subr.bf16.mxu0 0
    %2262 = vmatpush1.bf16.msra.mxu0 %v2085
    %2263 = vmatprep.subr.bf16.mxu0 0
    %2264 = vmatpush1.bf16.msra.mxu0 %v2086
    %2265 = vmatprep.subr.bf16.mxu0 0
    %2266 = vmatpush1.bf16.msra.mxu0 %v2087
    %2267 = vmatprep.subr.bf16.mxu0 0
    %2268 = vmatpush1.bf16.msra.mxu0 %v2088
    %2269 = vmatprep.subr.bf16.mxu0 0
    %2270 = vmatpush1.bf16.msra.mxu0 %v2089
    %2271 = vmatprep.subr.bf16.mxu0 0
    %2272 = vmatpush1.bf16.msra.mxu0 %v2090
    %2273 = vmatprep.subr.bf16.mxu0 0
    %2274 = vmatpush1.bf16.msra.mxu0 %v2091
    %2275 = vmatprep.subr.bf16.mxu0 0
    %2276 = vmatpush1.bf16.msra.mxu0 %v2092
    %2277 = vmatprep.subr.bf16.mxu0 0
    %2278 = vmatpush1.bf16.msra.mxu0 %v2093
    %2279 = vmatprep.subr.bf16.mxu0 0
    %2280 = vmatpush1.bf16.msra.mxu0 %v2094
    %2281 = vmatprep.mubr.bf16.mxu0 %v2184
    %2282 = vmatmul.mubr.bf16.gmra.mrb[0].mxu0 %v2183
    %v2283 = vpop.f32.mrb[0].mxu0
    %v2284 = vadd.f32 %v2244, %v2283
    %v2285 = vpop.f32.mrb[0].mxu0
    %v2286 = vpop.f32.mrb[0].mxu0
    %v2287 = vpop.f32.mrb[0].mxu0
    %2288 = vdwg.mxu0
    %2289 = vmatprep.subr.bf16.mxu0 0
    %2290 = vmatpush1.bf16.msra.mxu0 %v2095
    %2291 = vmatprep.subr.bf16.mxu0 0
    %2292 = vmatpush1.bf16.msra.mxu0 %v2096
    %2293 = vmatprep.subr.bf16.mxu0 0
    %2294 = vmatpush1.bf16.msra.mxu0 %v2097
    %2295 = vmatprep.subr.bf16.mxu0 0
    %2296 = vmatpush1.bf16.msra.mxu0 %v2098
    %2297 = vmatprep.subr.bf16.mxu0 0
    %2298 = vmatpush1.bf16.msra.mxu0 %v2099
    %2299 = vmatprep.subr.bf16.mxu0 0
    %2300 = vmatpush1.bf16.msra.mxu0 %v2100
    %2301 = vmatprep.subr.bf16.mxu0 0
    %2302 = vmatpush1.bf16.msra.mxu0 %v2101
    %2303 = vmatprep.subr.bf16.mxu0 0
    %2304 = vmatpush1.bf16.msra.mxu0 %v2102
    %2305 = vmatprep.subr.bf16.mxu0 0
    %2306 = vmatpush1.bf16.msra.mxu0 %v2103
    %2307 = vmatprep.subr.bf16.mxu0 0
    %2308 = vmatpush1.bf16.msra.mxu0 %v2104
    %2309 = vmatprep.subr.bf16.mxu0 0
    %2310 = vmatpush1.bf16.msra.mxu0 %v2105
    %2311 = vmatprep.subr.bf16.mxu0 0
    %2312 = vmatpush1.bf16.msra.mxu0 %v2106
    %2313 = vmatprep.subr.bf16.mxu0 0
    %2314 = vmatpush1.bf16.msra.mxu0 %v2107
    %2315 = vmatprep.subr.bf16.mxu0 0
    %2316 = vmatpush1.bf16.msra.mxu0 %v2108
    %2317 = vmatprep.subr.bf16.mxu0 0
    %2318 = vmatpush1.bf16.msra.mxu0 %v2109
    %2319 = vmatprep.subr.bf16.mxu0 0
    %2320 = vmatpush1.bf16.msra.mxu0 %v2110
    %2321 = vmatprep.mubr.bf16.mxu0 %v2186
    %2322 = vmatmul.mubr.bf16.gmra.mrb[0].mxu0 %v2185
    %v2323 = vpop.f32.mrb[0].mxu0
    %v2324 = vadd.f32 %v2284, %v2323
    %v2325 = vpop.f32.mrb[0].mxu0
    %v2326 = vpop.f32.mrb[0].mxu0
    %v2327 = vpop.f32.mrb[0].mxu0
    %2328 = vdwg.mxu0
    %2329 = vmatprep.subr.bf16.mxu0 0
    %2330 = vmatpush1.bf16.msra.mxu0 %v2111
    %2331 = vmatprep.subr.bf16.mxu0 0
    %2332 = vmatpush1.bf16.msra.mxu0 %v2112
    %2333 = vmatprep.subr.bf16.mxu0 0
    %2334 = vmatpush1.bf16.msra.mxu0 %v2113
    %2335 = vmatprep.subr.bf16.mxu0 0
    %2336 = vmatpush1.bf16.msra.mxu0 %v2114
    %2337 = vmatprep.subr.bf16.mxu0 0
    %2338 = vmatpush1.bf16.msra.mxu0 %v2115
    %2339 = vmatprep.subr.bf16.mxu0 0
    %2340 = vmatpush1.bf16.msra.mxu0 %v2116
    %2341 = vmatprep.subr.bf16.mxu0 0
    %2342 = vmatpush1.bf16.msra.mxu0 %v2117
    %2343 = vmatprep.subr.bf16.mxu0 0
    %2344 = vmatpush1.bf16.msra.mxu0 %v2118
    %2345 = vmatprep.subr.bf16.mxu0 0
    %2346 = vmatpush1.bf16.msra.mxu0 %v2119
    %2347 = vmatprep.subr.bf16.mxu0 0
    %2348 = vmatpush1.bf16.msra.mxu0 %v2120
    %2349 = vmatprep.subr.bf16.mxu0 0
    %2350 = vmatpush1.bf16.msra.mxu0 %v2121
    %2351 = vmatprep.subr.bf16.mxu0 0
    %2352 = vmatpush1.bf16.msra.mxu0 %v2122
    %2353 = vmatprep.subr.bf16.mxu0 0
    %2354 = vmatpush1.bf16.msra.mxu0 %v2123
    %2355 = vmatprep.subr.bf16.mxu0 0
    %2356 = vmatpush1.bf16.msra.mxu0 %v2124
    %2357 = vmatprep.subr.bf16.mxu0 0
    %2358 = vmatpush1.bf16.msra.mxu0 %v2125
    %2359 = vmatprep.subr.bf16.mxu0 0
    %2360 = vmatpush1.bf16.msra.mxu0 %v2126
    %2361 = vmatprep.mubr.bf16.mxu0 %v2188
    %2362 = vmatmul.mubr.bf16.gmra.mrb[0].mxu0 %v2187
    %v2363 = vpop.f32.mrb[0].mxu0
    %v2364 = vadd.f32 %v2324, %v2363
    %v2365 = vpop.f32.mrb[0].mxu0
    %v2366 = vpop.f32.mrb[0].mxu0
    %v2367 = vpop.f32.mrb[0].mxu0
    %2368 = vdwg.mxu0
    %2369 = vmatprep.subr.bf16.mxu0 0
    %2370 = vmatpush1.bf16.msra.mxu0 %v2127
    %2371 = vmatprep.subr.bf16.mxu0 0
    %2372 = vmatpush1.bf16.msra.mxu0 %v2128
    %2373 = vmatprep.subr.bf16.mxu0 0
    %2374 = vmatpush1.bf16.msra.mxu0 %v2129
    %2375 = vmatprep.subr.bf16.mxu0 0
    %2376 = vmatpush1.bf16.msra.mxu0 %v2130
    %2377 = vmatprep.subr.bf16.mxu0 0
    %2378 = vmatpush1.bf16.msra.mxu0 %v2131
    %2379 = vmatprep.subr.bf16.mxu0 0
    %2380 = vmatpush1.bf16.msra.mxu0 %v2132
    %2381 = vmatprep.subr.bf16.mxu0 0
    %2382 = vmatpush1.bf16.msra.mxu0 %v2133
    %2383 = vmatprep.subr.bf16.mxu0 0
    %2384 = vmatpush1.bf16.msra.mxu0 %v2134
    %2385 = vmatprep.subr.bf16.mxu0 0
    %2386 = vmatpush1.bf16.msra.mxu0 %v2135
    %2387 = vmatprep.subr.bf16.mxu0 0
    %2388 = vmatpush1.bf16.msra.mxu0 %v2136
    %2389 = vmatprep.subr.bf16.mxu0 0
    %2390 = vmatpush1.bf16.msra.mxu0 %v2137
    %2391 = vmatprep.subr.bf16.mxu0 0
    %2392 = vmatpush1.bf16.msra.mxu0 %v2138
    %2393 = vmatprep.subr.bf16.mxu0 0
    %2394 = vmatpush1.bf16.msra.mxu0 %v2139
    %2395 = vmatprep.subr.bf16.mxu0 0
    %2396 = vmatpush1.bf16.msra.mxu0 %v2140
    %2397 = vmatprep.subr.bf16.mxu0 0
    %2398 = vmatpush1.bf16.msra.mxu0 %v2141
    %2399 = vmatprep.subr.bf16.mxu0 0
    %2400 = vmatpush1.bf16.msra.mxu0 %v2142
    %2401 = vmatprep.mubr.bf16.mxu0 %v2190
    %2402 = vmatmul.mubr.bf16.gmra.mrb[0].mxu0 %v2189
    %v2403 = vpop.f32.mrb[0].mxu0
    %v2404 = vadd.f32 %v2364, %v2403
    %v2405 = vpop.f32.mrb[0].mxu0
    %v2406 = vpop.f32.mrb[0].mxu0
    %v2407 = vpop.f32.mrb[0].mxu0
    %2408 = vdwg.mxu0
    %2409 = vmatprep.subr.bf16.mxu0 0
    %2410 = vmatpush1.bf16.msra.mxu0 %v2143
    %2411 = vmatprep.subr.bf16.mxu0 0
    %2412 = vmatpush1.bf16.msra.mxu0 %v2144
    %2413 = vmatprep.subr.bf16.mxu0 0
    %2414 = vmatpush1.bf16.msra.mxu0 %v2145
    %2415 = vmatprep.subr.bf16.mxu0 0
    %2416 = vmatpush1.bf16.msra.mxu0 %v2146
    %2417 = vmatprep.subr.bf16.mxu0 0
    %2418 = vmatpush1.bf16.msra.mxu0 %v2147
    %2419 = vmatprep.subr.bf16.mxu0 0
    %2420 = vmatpush1.bf16.msra.mxu0 %v2148
    %2421 = vmatprep.subr.bf16.mxu0 0
    %2422 = vmatpush1.bf16.msra.mxu0 %v2149
    %2423 = vmatprep.subr.bf16.mxu0 0
    %2424 = vmatpush1.bf16.msra.mxu0 %v2150
    %2425 = vmatprep.subr.bf16.mxu0 0
    %2426 = vmatpush1.bf16.msra.mxu0 %v2151
    %2427 = vmatprep.subr.bf16.mxu0 0
    %2428 = vmatpush1.bf16.msra.mxu0 %v2152
    %2429 = vmatprep.subr.bf16.mxu0 0
    %2430 = vmatpush1.bf16.msra.mxu0 %v2153
    %2431 = vmatprep.subr.bf16.mxu0 0
    %2432 = vmatpush1.bf16.msra.mxu0 %v2154
    %2433 = vmatprep.subr.bf16.mxu0 0
    %2434 = vmatpush1.bf16.msra.mxu0 %v2155
    %2435 = vmatprep.subr.bf16.mxu0 0
    %2436 = vmatpush1.bf16.msra.mxu0 %v2156
    %2437 = vmatprep.subr.bf16.mxu0 0
    %2438 = vmatpush1.bf16.msra.mxu0 %v2157
    %2439 = vmatprep.subr.bf16.mxu0 0
    %2440 = vmatpush1.bf16.msra.mxu0 %v2158
    %2441 = vmatprep.mubr.bf16.mxu0 %v2192
    %2442 = vmatmul.mubr.bf16.gmra.mrb[0].mxu0 %v2191
    %v2443 = vpop.f32.mrb[0].mxu0
    %v2444 = vadd.f32 %v2404, %v2443
    %v2445 = vpop.f32.mrb[0].mxu0
    %v2446 = vpop.f32.mrb[0].mxu0
    %v2447 = vpop.f32.mrb[0].mxu0
    %2448 = vdwg.mxu0
    %2449 = vmatprep.subr.bf16.mxu0 0
    %2450 = vmatpush1.bf16.msra.mxu0 %v2159
    %2451 = vmatprep.subr.bf16.mxu0 0
    %2452 = vmatpush1.bf16.msra.mxu0 %v2160
    %2453 = vmatprep.subr.bf16.mxu0 0
    %2454 = vmatpush1.bf16.msra.mxu0 0
    %2455 = vmatprep.subr.bf16.mxu0 0
    %2456 = vmatpush1.bf16.msra.mxu0 0
    %2457 = vmatprep.subr.bf16.mxu0 0
    %2458 = vmatpush1.bf16.msra.mxu0 0
    %2459 = vmatprep.subr.bf16.mxu0 0
    %2460 = vmatpush1.bf16.msra.mxu0 0
    %2461 = vmatprep.subr.bf16.mxu0 0
    %2462 = vmatpush1.bf16.msra.mxu0 0
    %2463 = vmatprep.subr.bf16.mxu0 0
    %2464 = vmatpush1.bf16.msra.mxu0 0
    %2465 = vmatprep.subr.bf16.mxu0 0
    %2466 = vmatpush1.bf16.msra.mxu0 0
    %2467 = vmatprep.subr.bf16.mxu0 0
    %2468 = vmatpush1.bf16.msra.mxu0 0
    %2469 = vmatprep.subr.bf16.mxu0 0
    %2470 = vmatpush1.bf16.msra.mxu0 0
    %2471 = vmatprep.subr.bf16.mxu0 0
    %2472 = vmatpush1.bf16.msra.mxu0 0
    %2473 = vmatprep.subr.bf16.mxu0 0
    %2474 = vmatpush1.bf16.msra.mxu0 0
    %2475 = vmatprep.subr.bf16.mxu0 0
    %2476 = vmatpush1.bf16.msra.mxu0 0
    %2477 = vmatprep.subr.bf16.mxu0 0
    %2478 = vmatpush1.bf16.msra.mxu0 0
    %2479 = vmatprep.subr.bf16.mxu0 0
    %2480 = vmatpush1.bf16.msra.mxu0 0
    %2481 = vmatprep.mubr.bf16.mxu0 0
    %2482 = vmatmul.mubr.bf16.gmra.mrb[0].mxu0 %v2207
    %v2483 = vpop.f32.mrb[0].mxu0
    %v2484 = vadd.f32 %v2444, %v2483
    %v2485 = vpop.f32.mrb[0].mxu0
    %v2486 = vpop.f32.mrb[0].mxu0
    %v2487 = vpop.f32.mrb[0].mxu0
    %2488 = vdwg.mxu0
    %v2489 = vmul.f32 %v2484, 0.0051020407
    %v2490 = vpack.c.bf16 %v2489, %v2489
    %v2491 = vld [vmem:[%s3] sm:$0xf]
    %v2492 = vld [vmem:[%s3 + $0x4] sm:$0xf]
    %v2493 = vld [vmem:[%s3 + $0x8] sm:$0xf]
    %v2494 = vld [vmem:[%s3 + $0xc] sm:$0xf]
    %v2495 = vld [vmem:[%s3 + $0x10] sm:$0xf]
    %v2496 = vld [vmem:[%s3 + $0x14] sm:$0xf]
    %v2497 = vld [vmem:[%s3 + $0x18] sm:$0xf]
    %v2498 = vld [vmem:[%s3 + $0x1c] sm:$0xf]
    %v2499 = vld [vmem:[%s3 + $0x20] sm:$0xf]
    %v2500 = vld [vmem:[%s3 + $0x24] sm:$0xf]
    %v2501 = vld [vmem:[%s3 + $0x28] sm:$0xf]
    %v2502 = vld [vmem:[%s3 + $0x2c] sm:$0xf]
    %v2503 = vld [vmem:[%s3 + $0x30] sm:$0xf]
    %v2504 = vld [vmem:[%s3 + $0x34] sm:$0xf]
    %v2505 = vld [vmem:[%s3 + $0x38] sm:$0xf]
    %v2506 = vld [vmem:[%s3 + $0x3c] sm:$0xf]
    %v2507 = vld [vmem:[%s4] sm:$0x1]
    %v2509 = vlaneseq
    %v2510 = vshrl.u32 %v2509, 7
    %v2511 = vsub.s32 0, %v2510
    %v2512 = vrot.slane %v2507, %v2511
    %v2530 = vunpack.c.l.b16 %v2491
    %v2531 = vunpack.c.l.b16 %v2492
    %v2532 = vunpack.c.l.b16 %v2493
    %v2533 = vunpack.c.l.b16 %v2494
    %v2534 = vunpack.c.l.b16 %v2495
    %v2535 = vunpack.c.l.b16 %v2496
    %v2536 = vunpack.c.l.b16 %v2497
    %v2537 = vunpack.c.l.b16 %v2498
    %v2538 = vunpack.c.l.b16 %v2499
    %v2539 = vunpack.c.l.b16 %v2500
    %v2540 = vunpack.c.l.b16 %v2501
    %v2541 = vunpack.c.l.b16 %v2502
    %v2542 = vunpack.c.l.b16 %v2503
    %v2543 = vunpack.c.l.b16 %v2504
    %v2544 = vunpack.c.l.b16 %v2505
    %v2545 = vunpack.c.l.b16 %v2506
    %v2546 = vpack.c.b16 %v2531, %v2530
    %v2547 = vpack.c.b16 %v2533, %v2532
    %v2548 = vpack.c.b16 %v2535, %v2534
    %v2549 = vpack.c.b16 %v2537, %v2536
    %v2550 = vpack.c.b16 %v2539, %v2538
    %v2551 = vpack.c.b16 %v2541, %v2540
    %v2552 = vpack.c.b16 %v2543, %v2542
    %v2553 = vpack.c.b16 %v2545, %v2544
    %2562 = vmatprep.subr.bf16.mxu0 0
    %2563 = vmatpush1.bf16.msra.mxu0 %v2546
    %2564 = vmatprep.subr.bf16.mxu0 0
    %2565 = vmatpush1.bf16.msra.mxu0 %v2547
    %2566 = vmatprep.subr.bf16.mxu0 0
    %2567 = vmatpush1.bf16.msra.mxu0 %v2548
    %2568 = vmatprep.subr.bf16.mxu0 0
    %2569 = vmatpush1.bf16.msra.mxu0 %v2549
    %2570 = vmatprep.subr.bf16.mxu0 0
    %2571 = vmatpush1.bf16.msra.mxu0 %v2550
    %2572 = vmatprep.subr.bf16.mxu0 0
    %2573 = vmatpush1.bf16.msra.mxu0 %v2551
    %2574 = vmatprep.subr.bf16.mxu0 0
    %2575 = vmatpush1.bf16.msra.mxu0 %v2552
    %2576 = vmatprep.subr.bf16.mxu0 0
    %2577 = vmatpush1.bf16.msra.mxu0 %v2553
    %2578 = vmatprep.subr.bf16.mxu0 0
    %2579 = vmatpush1.bf16.msra.mxu0 0
    %2580 = vmatprep.subr.bf16.mxu0 0
    %2581 = vmatpush1.bf16.msra.mxu0 0
    %2582 = vmatprep.subr.bf16.mxu0 0
    %2583 = vmatpush1.bf16.msra.mxu0 0
    %2584 = vmatprep.subr.bf16.mxu0 0
    %2585 = vmatpush1.bf16.msra.mxu0 0
    %2586 = vmatprep.subr.bf16.mxu0 0
    %2587 = vmatpush1.bf16.msra.mxu0 0
    %2588 = vmatprep.subr.bf16.mxu0 0
    %2589 = vmatpush1.bf16.msra.mxu0 0
    %2590 = vmatprep.subr.bf16.mxu0 0
    %2591 = vmatpush1.bf16.msra.mxu0 0
    %2592 = vmatprep.subr.bf16.mxu0 0
    %2593 = vmatpush1.bf16.msra.mxu0 0
    %2594 = vmatprep.mubr.bf16.mxu0 0
    %2595 = vmatmul.mubr.bf16.gmra.mrb[0].mxu0 %v2490
    %v2596 = vpop.f32.mrb[0].mxu0
    %v2597 = vadd.f32 %v2512, %v2596
    %v2598 = vpop.f32.mrb[0].mxu0
    %v2599 = vpop.f32.mrb[0].mxu0
    %v2600 = vpop.f32.mrb[0].mxu0
    %2601 = vdwg.mxu0
    %v2602 = vpack.c.bf16 %v2597, %v2597
    %v2603 = vld [vmem:[%s5] sm:$0xff]
    %v2604 = vld [vmem:[%s5 + $0x8] sm:$0xf]
    %v2605 = vld [vmem:[%s5 + $0xc] sm:$0xff]
    %v2606 = vld [vmem:[%s5 + $0x14] sm:$0xf]
    %v2607 = vld [vmem:[%s5 + $0x18] sm:$0xff]
    %v2608 = vld [vmem:[%s5 + $0x20] sm:$0xf]
    %v2609 = vld [vmem:[%s5 + $0x24] sm:$0xff]
    %v2610 = vld [vmem:[%s5 + $0x2c] sm:$0xf]
    %v2611 = vld [vmem:[%s5 + $0x30] sm:$0xff]
    %v2612 = vld [vmem:[%s5 + $0x38] sm:$0xf]
    %v2613 = vld [vmem:[%s5 + $0x3c] sm:$0xff]
    %v2614 = vld [vmem:[%s5 + $0x44] sm:$0xf]
    %v2615 = vld [vmem:[%s5 + $0x48] sm:$0xff]
    %v2616 = vld [vmem:[%s5 + $0x50] sm:$0xf]
    %v2617 = vld [vmem:[%s5 + $0x54] sm:$0xff]
    %v2618 = vld [vmem:[%s5 + $0x5c] sm:$0xf]
    %v2619 = vld [vmem:[%s5 + $0x60] sm:$0xff]
    %v2620 = vld [vmem:[%s5 + $0x68] sm:$0xf]
    %v2621 = vld [vmem:[%s5 + $0x6c] sm:$0xff]
    %v2622 = vld [vmem:[%s5 + $0x74] sm:$0xf]
    %v2623 = vld [vmem:[%s5 + $0x78] sm:$0xff]
    %v2624 = vld [vmem:[%s5 + $0x80] sm:$0xf]
    %v2625 = vld [vmem:[%s5 + $0x84] sm:$0xff]
    %v2626 = vld [vmem:[%s5 + $0x8c] sm:$0xf]
    %v2627 = vld [vmem:[%s5 + $0x90] sm:$0xff]
    %v2628 = vld [vmem:[%s5 + $0x98] sm:$0xf]
    %v2629 = vld [vmem:[%s5 + $0x9c] sm:$0xff]
    %v2630 = vld [vmem:[%s5 + $0xa4] sm:$0xf]
    %v2631 = vld [vmem:[%s5 + $0xa8] sm:$0xff]
    %v2632 = vld [vmem:[%s5 + $0xb0] sm:$0xf]
    %v2633 = vld [vmem:[%s5 + $0xb4] sm:$0xff]
    %v2634 = vld [vmem:[%s5 + $0xbc] sm:$0xf]
    %v2635 = vld [vmem:[%s7] sm:$0x7]
    %v2637 = vlaneseq
    %v2638 = vshrl.u32 %v2637, 7
    %v2639 = vsub.s32 0, %v2638
    %v2640 = vrot.slane %v2635, %v2639
    %v2641 = vlaneseq
    %v2642 = vshrl.u32 %v2641, 7
    %v2643 = vsub.s32 1, %v2642
    %v2644 = vrot.slane %v2635, %v2643
    %v2645 = vlaneseq
    %v2646 = vshrl.u32 %v2645, 7
    %v2647 = vsub.s32 2, %v2646
    %v2648 = vrot.slane %v2635, %v2647
    %v2684 = vunpack.c.l.b16 %v2603
    %v2685 = vunpack.c.h.b16 %v2603
    %v2686 = vunpack.c.l.b16 %v2604
    %v2687 = vunpack.c.l.b16 %v2605
    %v2688 = vunpack.c.h.b16 %v2605
    %v2689 = vunpack.c.l.b16 %v2606
    %v2690 = vunpack.c.l.b16 %v2607
    %v2691 = vunpack.c.h.b16 %v2607
    %v2692 = vunpack.c.l.b16 %v2608
    %v2693 = vunpack.c.l.b16 %v2609
    %v2694 = vunpack.c.h.b16 %v2609
    %v2695 = vunpack.c.l.b16 %v2610
    %v2696 = vunpack.c.l.b16 %v2611
    %v2697 = vunpack.c.h.b16 %v2611
    %v2698 = vunpack.c.l.b16 %v2612
    %v2699 = vunpack.c.l.b16 %v2613
    %v2700 = vunpack.c.h.b16 %v2613
    %v2701 = vunpack.c.l.b16 %v2614
    %v2702 = vunpack.c.l.b16 %v2615
    %v2703 = vunpack.c.h.b16 %v2615
    %v2704 = vunpack.c.l.b16 %v2616
    %v2705 = vunpack.c.l.b16 %v2617
    %v2706 = vunpack.c.h.b16 %v2617
    %v2707 = vunpack.c.l.b16 %v2618
    %v2708 = vunpack.c.l.b16 %v2619
    %v2709 = vunpack.c.h.b16 %v2619
    %v2710 = vunpack.c.l.b16 %v2620
    %v2711 = vunpack.c.l.b16 %v2621
    %v2712 = vunpack.c.h.b16 %v2621
    %v2713 = vunpack.c.l.b16 %v2622
    %v2714 = vunpack.c.l.b16 %v2623
    %v2715 = vunpack.c.h.b16 %v2623
    %v2716 = vunpack.c.l.b16 %v2624
    %v2717 = vunpack.c.l.b16 %v2625
    %v2718 = vunpack.c.h.b16 %v2625
    %v2719 = vunpack.c.l.b16 %v2626
    %v2720 = vunpack.c.l.b16 %v2627
    %v2721 = vunpack.c.h.b16 %v2627
    %v2722 = vunpack.c.l.b16 %v2628
    %v2723 = vunpack.c.l.b16 %v2629
    %v2724 = vunpack.c.h.b16 %v2629
    %v2725 = vunpack.c.l.b16 %v2630
    %v2726 = vunpack.c.l.b16 %v2631
    %v2727 = vunpack.c.h.b16 %v2631
    %v2728 = vunpack.c.l.b16 %v2632
    %v2729 = vunpack.c.l.b16 %v2633
    %v2730 = vunpack.c.h.b16 %v2633
    %v2731 = vunpack.c.l.b16 %v2634
    %v2732 = vpack.c.b16 %v2687, %v2684
    %v2733 = vpack.c.b16 %v2688, %v2685
    %v2734 = vpack.c.b16 %v2689, %v2686
    %v2735 = vpack.c.b16 %v2693, %v2690
    %v2736 = vpack.c.b16 %v2694, %v2691
    %v2737 = vpack.c.b16 %v2695, %v2692
    %v2738 = vpack.c.b16 %v2699, %v2696
    %v2739 = vpack.c.b16 %v2700, %v2697
    %v2740 = vpack.c.b16 %v2701, %v2698
    %v2741 = vpack.c.b16 %v2705, %v2702
    %v2742 = vpack.c.b16 %v2706, %v2703
    %v2743 = vpack.c.b16 %v2707, %v2704
    %v2744 = vpack.c.b16 %v2711, %v2708
    %v2745 = vpack.c.b16 %v2712, %v2709
    %v2746 = vpack.c.b16 %v2713, %v2710
    %v2747 = vpack.c.b16 %v2717, %v2714
    %v2748 = vpack.c.b16 %v2718, %v2715
    %v2749 = vpack.c.b16 %v2719, %v2716
    %v2750 = vpack.c.b16 %v2723, %v2720
    %v2751 = vpack.c.b16 %v2724, %v2721
    %v2752 = vpack.c.b16 %v2725, %v2722
    %v2753 = vpack.c.b16 %v2729, %v2726
    %v2754 = vpack.c.b16 %v2730, %v2727
    %v2755 = vpack.c.b16 %v2731, %v2728
    %2780 = vmatprep.subr.bf16.mxu0 %v2733
    %2781 = vmatpush1.bf16.msra.mxu0 %v2732
    %2782 = vmatprep.subr.bf16.mxu0 %v2736
    %2783 = vmatpush1.bf16.msra.mxu0 %v2735
    %2784 = vmatprep.subr.bf16.mxu0 %v2739
    %2785 = vmatpush1.bf16.msra.mxu0 %v2738
    %2786 = vmatprep.subr.bf16.mxu0 %v2742
    %2787 = vmatpush1.bf16.msra.mxu0 %v2741
    %2788 = vmatprep.subr.bf16.mxu0 %v2745
    %2789 = vmatpush1.bf16.msra.mxu0 %v2744
    %2790 = vmatprep.subr.bf16.mxu0 %v2748
    %2791 = vmatpush1.bf16.msra.mxu0 %v2747
    %2792 = vmatprep.subr.bf16.mxu0 %v2751
    %2793 = vmatpush1.bf16.msra.mxu0 %v2750
    %2794 = vmatprep.subr.bf16.mxu0 %v2754
    %2795 = vmatpush1.bf16.msra.mxu0 %v2753
    %2796 = vmatprep.subr.bf16.mxu0 0
    %2797 = vmatpush1.bf16.msra.mxu0 0
    %2798 = vmatprep.subr.bf16.mxu0 0
    %2799 = vmatpush1.bf16.msra.mxu0 0
    %2800 = vmatprep.subr.bf16.mxu0 0
    %2801 = vmatpush1.bf16.msra.mxu0 0
    %2802 = vmatprep.subr.bf16.mxu0 0
    %2803 = vmatpush1.bf16.msra.mxu0 0
    %2804 = vmatprep.subr.bf16.mxu0 0
    %2805 = vmatpush1.bf16.msra.mxu0 0
    %2806 = vmatprep.subr.bf16.mxu0 0
    %2807 = vmatpush1.bf16.msra.mxu0 0
    %2808 = vmatprep.subr.bf16.mxu0 0
    %2809 = vmatpush1.bf16.msra.mxu0 0
    %2810 = vmatprep.subr.bf16.mxu0 0
    %2811 = vmatpush1.bf16.msra.mxu0 0
    %2812 = vmatprep.mubr.bf16.mxu0 0
    %2813 = vmatmul.mubr.bf16.gmra.mrb[0].mxu0 %v2602
    %v2814 = vpop.f32.mrb[0].mxu0
    %v2815 = vadd.f32 %v2640, %v2814
    %v2816 = vpop.f32.mrb[0].mxu0
    %v2817 = vadd.f32 %v2644, %v2816
    %v2818 = vpop.f32.mrb[0].mxu0
    %v2819 = vpop.f32.mrb[0].mxu0
    %2820 = vdwg.mxu0
    %2821 = vmatprep.subr.bf16.mxu0 0
    %2822 = vmatpush1.bf16.msra.mxu0 %v2734
    %2823 = vmatprep.subr.bf16.mxu0 0
    %2824 = vmatpush1.bf16.msra.mxu0 %v2737
    %2825 = vmatprep.subr.bf16.mxu0 0
    %2826 = vmatpush1.bf16.msra.mxu0 %v2740
    %2827 = vmatprep.subr.bf16.mxu0 0
    %2828 = vmatpush1.bf16.msra.mxu0 %v2743
    %2829 = vmatprep.subr.bf16.mxu0 0
    %2830 = vmatpush1.bf16.msra.mxu0 %v2746
    %2831 = vmatprep.subr.bf16.mxu0 0
    %2832 = vmatpush1.bf16.msra.mxu0 %v2749
    %2833 = vmatprep.subr.bf16.mxu0 0
    %2834 = vmatpush1.bf16.msra.mxu0 %v2752
    %2835 = vmatprep.subr.bf16.mxu0 0
    %2836 = vmatpush1.bf16.msra.mxu0 %v2755
    %2837 = vmatprep.subr.bf16.mxu0 0
    %2838 = vmatpush1.bf16.msra.mxu0 0
    %2839 = vmatprep.subr.bf16.mxu0 0
    %2840 = vmatpush1.bf16.msra.mxu0 0
    %2841 = vmatprep.subr.bf16.mxu0 0
    %2842 = vmatpush1.bf16.msra.mxu0 0
    %2843 = vmatprep.subr.bf16.mxu0 0
    %2844 = vmatpush1.bf16.msra.mxu0 0
    %2845 = vmatprep.subr.bf16.mxu0 0
    %2846 = vmatpush1.bf16.msra.mxu0 0
    %2847 = vmatprep.subr.bf16.mxu0 0
    %2848 = vmatpush1.bf16.msra.mxu0 0
    %2849 = vmatprep.subr.bf16.mxu0 0
    %2850 = vmatpush1.bf16.msra.mxu0 0
    %2851 = vmatprep.subr.bf16.mxu0 0
    %2852 = vmatpush1.bf16.msra.mxu0 0
    %2853 = vmatprep.mubr.bf16.mxu0 0
    %2854 = vmatmul.mubr.bf16.gmra.mrb[0].mxu0 %v2602
    %v2855 = vpop.f32.mrb[0].mxu0
    %v2856 = vadd.f32 %v2648, %v2855
    %v2857 = vpop.f32.mrb[0].mxu0
    %v2858 = vpop.f32.mrb[0].mxu0
    %v2859 = vpop.f32.mrb[0].mxu0
    %2860 = vdwg.mxu0
    %v2861 = vld [vmem:[%s6] sm:$0xff]
    %v2862 = vld [vmem:[%s6 + $0x8] sm:$0xf]
    %v2863 = vld [vmem:[%s6 + $0xc] sm:$0xff]
    %v2864 = vld [vmem:[%s6 + $0x14] sm:$0xf]
    %v2865 = vld [vmem:[%s6 + $0x18] sm:$0xff]
    %v2866 = vld [vmem:[%s6 + $0x20] sm:$0xf]
    %v2867 = vld [vmem:[%s6 + $0x24] sm:$0xff]
    %v2868 = vld [vmem:[%s6 + $0x2c] sm:$0xf]
    %v2869 = vld [vmem:[%s6 + $0x30] sm:$0xff]
    %v2870 = vld [vmem:[%s6 + $0x38] sm:$0xf]
    %v2871 = vld [vmem:[%s6 + $0x3c] sm:$0xff]
    %v2872 = vld [vmem:[%s6 + $0x44] sm:$0xf]
    %v2873 = vld [vmem:[%s6 + $0x48] sm:$0xff]
    %v2874 = vld [vmem:[%s6 + $0x50] sm:$0xf]
    %v2875 = vld [vmem:[%s6 + $0x54] sm:$0xff]
    %v2876 = vld [vmem:[%s6 + $0x5c] sm:$0xf]
    %v2877 = vld [vmem:[%s6 + $0x60] sm:$0xff]
    %v2878 = vld [vmem:[%s6 + $0x68] sm:$0xf]
    %v2879 = vld [vmem:[%s6 + $0x6c] sm:$0xff]
    %v2880 = vld [vmem:[%s6 + $0x74] sm:$0xf]
    %v2881 = vld [vmem:[%s6 + $0x78] sm:$0xff]
    %v2882 = vld [vmem:[%s6 + $0x80] sm:$0xf]
    %v2883 = vld [vmem:[%s6 + $0x84] sm:$0xff]
    %v2884 = vld [vmem:[%s6 + $0x8c] sm:$0xf]
    %v2885 = vld [vmem:[%s6 + $0x90] sm:$0xff]
    %v2886 = vld [vmem:[%s6 + $0x98] sm:$0xf]
    %v2887 = vld [vmem:[%s6 + $0x9c] sm:$0xff]
    %v2888 = vld [vmem:[%s6 + $0xa4] sm:$0xf]
    %v2889 = vld [vmem:[%s6 + $0xa8] sm:$0xff]
    %v2890 = vld [vmem:[%s6 + $0xb0] sm:$0xf]
    %v2891 = vld [vmem:[%s6 + $0xb4] sm:$0xff]
    %v2892 = vld [vmem:[%s6 + $0xbc] sm:$0xf]
    %v2893 = vld [vmem:[%s8] sm:$0x7]
    %v2895 = vlaneseq
    %v2896 = vshrl.u32 %v2895, 7
    %v2897 = vsub.s32 0, %v2896
    %v2898 = vrot.slane %v2893, %v2897
    %v2899 = vlaneseq
    %v2900 = vshrl.u32 %v2899, 7
    %v2901 = vsub.s32 1, %v2900
    %v2902 = vrot.slane %v2893, %v2901
    %v2903 = vlaneseq
    %v2904 = vshrl.u32 %v2903, 7
    %v2905 = vsub.s32 2, %v2904
    %v2906 = vrot.slane %v2893, %v2905
    %v2942 = vunpack.c.l.b16 %v2861
    %v2943 = vunpack.c.h.b16 %v2861
    %v2944 = vunpack.c.l.b16 %v2862
    %v2945 = vunpack.c.l.b16 %v2863
    %v2946 = vunpack.c.h.b16 %v2863
    %v2947 = vunpack.c.l.b16 %v2864
    %v2948 = vunpack.c.l.b16 %v2865
    %v2949 = vunpack.c.h.b16 %v2865
    %v2950 = vunpack.c.l.b16 %v2866
    %v2951 = vunpack.c.l.b16 %v2867
    %v2952 = vunpack.c.h.b16 %v2867
    %v2953 = vunpack.c.l.b16 %v2868
    %v2954 = vunpack.c.l.b16 %v2869
    %v2955 = vunpack.c.h.b16 %v2869
    %v2956 = vunpack.c.l.b16 %v2870
    %v2957 = vunpack.c.l.b16 %v2871
    %v2958 = vunpack.c.h.b16 %v2871
    %v2959 = vunpack.c.l.b16 %v2872
    %v2960 = vunpack.c.l.b16 %v2873
    %v2961 = vunpack.c.h.b16 %v2873
    %v2962 = vunpack.c.l.b16 %v2874
    %v2963 = vunpack.c.l.b16 %v2875
    %v2964 = vunpack.c.h.b16 %v2875
    %v2965 = vunpack.c.l.b16 %v2876
    %v2966 = vunpack.c.l.b16 %v2877
    %v2967 = vunpack.c.h.b16 %v2877
    %v2968 = vunpack.c.l.b16 %v2878
    %v2969 = vunpack.c.l.b16 %v2879
    %v2970 = vunpack.c.h.b16 %v2879
    %v2971 = vunpack.c.l.b16 %v2880
    %v2972 = vunpack.c.l.b16 %v2881
    %v2973 = vunpack.c.h.b16 %v2881
    %v2974 = vunpack.c.l.b16 %v2882
    %v2975 = vunpack.c.l.b16 %v2883
    %v2976 = vunpack.c.h.b16 %v2883
    %v2977 = vunpack.c.l.b16 %v2884
    %v2978 = vunpack.c.l.b16 %v2885
    %v2979 = vunpack.c.h.b16 %v2885
    %v2980 = vunpack.c.l.b16 %v2886
    %v2981 = vunpack.c.l.b16 %v2887
    %v2982 = vunpack.c.h.b16 %v2887
    %v2983 = vunpack.c.l.b16 %v2888
    %v2984 = vunpack.c.l.b16 %v2889
    %v2985 = vunpack.c.h.b16 %v2889
    %v2986 = vunpack.c.l.b16 %v2890
    %v2987 = vunpack.c.l.b16 %v2891
    %v2988 = vunpack.c.h.b16 %v2891
    %v2989 = vunpack.c.l.b16 %v2892
    %v2990 = vpack.c.b16 %v2945, %v2942
    %v2991 = vpack.c.b16 %v2946, %v2943
    %v2992 = vpack.c.b16 %v2947, %v2944
    %v2993 = vpack.c.b16 %v2951, %v2948
    %v2994 = vpack.c.b16 %v2952, %v2949
    %v2995 = vpack.c.b16 %v2953, %v2950
    %v2996 = vpack.c.b16 %v2957, %v2954
    %v2997 = vpack.c.b16 %v2958, %v2955
    %v2998 = vpack.c.b16 %v2959, %v2956
    %v2999 = vpack.c.b16 %v2963, %v2960
    %v3000 = vpack.c.b16 %v2964, %v2961
    %v3001 = vpack.c.b16 %v2965, %v2962
    %v3002 = vpack.c.b16 %v2969, %v2966
    %v3003 = vpack.c.b16 %v2970, %v2967
    %v3004 = vpack.c.b16 %v2971, %v2968
    %v3005 = vpack.c.b16 %v2975, %v2972
    %v3006 = vpack.c.b16 %v2976, %v2973
    %v3007 = vpack.c.b16 %v2977, %v2974
    %v3008 = vpack.c.b16 %v2981, %v2978
    %v3009 = vpack.c.b16 %v2982, %v2979
    %v3010 = vpack.c.b16 %v2983, %v2980
    %v3011 = vpack.c.b16 %v2987, %v2984
    %v3012 = vpack.c.b16 %v2988, %v2985
    %v3013 = vpack.c.b16 %v2989, %v2986
    %3038 = vmatprep.subr.bf16.mxu0 %v2991
    %3039 = vmatpush1.bf16.msra.mxu0 %v2990
    %3040 = vmatprep.subr.bf16.mxu0 %v2994
    %3041 = vmatpush1.bf16.msra.mxu0 %v2993
    %3042 = vmatprep.subr.bf16.mxu0 %v2997
    %3043 = vmatpush1.bf16.msra.mxu0 %v2996
    %3044 = vmatprep.subr.bf16.mxu0 %v3000
    %3045 = vmatpush1.bf16.msra.mxu0 %v2999
    %3046 = vmatprep.subr.bf16.mxu0 %v3003
    %3047 = vmatpush1.bf16.msra.mxu0 %v3002
    %3048 = vmatprep.subr.bf16.mxu0 %v3006
    %3049 = vmatpush1.bf16.msra.mxu0 %v3005
    %3050 = vmatprep.subr.bf16.mxu0 %v3009
    %3051 = vmatpush1.bf16.msra.mxu0 %v3008
    %3052 = vmatprep.subr.bf16.mxu0 %v3012
    %3053 = vmatpush1.bf16.msra.mxu0 %v3011
    %3054 = vmatprep.subr.bf16.mxu0 0
    %3055 = vmatpush1.bf16.msra.mxu0 0
    %3056 = vmatprep.subr.bf16.mxu0 0
    %3057 = vmatpush1.bf16.msra.mxu0 0
    %3058 = vmatprep.subr.bf16.mxu0 0
    %3059 = vmatpush1.bf16.msra.mxu0 0
    %3060 = vmatprep.subr.bf16.mxu0 0
    %3061 = vmatpush1.bf16.msra.mxu0 0
    %3062 = vmatprep.subr.bf16.mxu0 0
    %3063 = vmatpush1.bf16.msra.mxu0 0
    %3064 = vmatprep.subr.bf16.mxu0 0
    %3065 = vmatpush1.bf16.msra.mxu0 0
    %3066 = vmatprep.subr.bf16.mxu0 0
    %3067 = vmatpush1.bf16.msra.mxu0 0
    %3068 = vmatprep.subr.bf16.mxu0 0
    %3069 = vmatpush1.bf16.msra.mxu0 0
    %3070 = vmatprep.mubr.bf16.mxu0 0
    %3071 = vmatmul.mubr.bf16.gmra.mrb[0].mxu0 0
    %v3072 = vpop.f32.mrb[0].mxu0
    %v3073 = vadd.f32 %v2898, %v3072
    %v3074 = vpop.f32.mrb[0].mxu0
    %v3075 = vadd.f32 %v2902, %v3074
    %v3076 = vpop.f32.mrb[0].mxu0
    %v3077 = vpop.f32.mrb[0].mxu0
    %3078 = vdwg.mxu0
    %3079 = vmatprep.subr.bf16.mxu0 0
    %3080 = vmatpush1.bf16.msra.mxu0 %v2992
    %3081 = vmatprep.subr.bf16.mxu0 0
    %3082 = vmatpush1.bf16.msra.mxu0 %v2995
    %3083 = vmatprep.subr.bf16.mxu0 0
    %3084 = vmatpush1.bf16.msra.mxu0 %v2998
    %3085 = vmatprep.subr.bf16.mxu0 0
    %3086 = vmatpush1.bf16.msra.mxu0 %v3001
    %3087 = vmatprep.subr.bf16.mxu0 0
    %3088 = vmatpush1.bf16.msra.mxu0 %v3004
    %3089 = vmatprep.subr.bf16.mxu0 0
    %3090 = vmatpush1.bf16.msra.mxu0 %v3007
    %3091 = vmatprep.subr.bf16.mxu0 0
    %3092 = vmatpush1.bf16.msra.mxu0 %v3010
    %3093 = vmatprep.subr.bf16.mxu0 0
    %3094 = vmatpush1.bf16.msra.mxu0 %v3013
    %3095 = vmatprep.subr.bf16.mxu0 0
    %3096 = vmatpush1.bf16.msra.mxu0 0
    %3097 = vmatprep.subr.bf16.mxu0 0
    %3098 = vmatpush1.bf16.msra.mxu0 0
    %3099 = vmatprep.subr.bf16.mxu0 0
    %3100 = vmatpush1.bf16.msra.mxu0 0
    %3101 = vmatprep.subr.bf16.mxu0 0
    %3102 = vmatpush1.bf16.msra.mxu0 0
    %3103 = vmatprep.subr.bf16.mxu0 0
    %3104 = vmatpush1.bf16.msra.mxu0 0
    %3105 = vmatprep.subr.bf16.mxu0 0
    %3106 = vmatpush1.bf16.msra.mxu0 0
    %3107 = vmatprep.subr.bf16.mxu0 0
    %3108 = vmatpush1.bf16.msra.mxu0 0
    %3109 = vmatprep.subr.bf16.mxu0 0
    %3110 = vmatpush1.bf16.msra.mxu0 0
    %3111 = vmatprep.mubr.bf16.mxu0 0
    %3112 = vmatmul.mubr.bf16.gmra.mrb[0].mxu0 0
    %v3113 = vpop.f32.mrb[0].mxu0
    %v3114 = vadd.f32 %v2906, %v3113
    %v3115 = vpop.f32.mrb[0].mxu0
    %v3116 = vpop.f32.mrb[0].mxu0
    %v3117 = vpop.f32.mrb[0].mxu0
    %3118 = vdwg.mxu0
    %v3119 = vadd.f32 %v2815, %v3073
    %v3120 = vxor.u32 %v3119, 2147483648
    %v3121 = vmul.f32 %v3120, 1.442695
    %v3122 = vpow.pop %v3121
    %v3123 = vadd.f32 %v3122, 1.0
    %v3124 = vrcp.pop %v3123
    %v3125 = vmul.f32 1.0, %v3124
    %v3126 = vadd.f32 %v2817, %v3075
    %v3127 = vxor.u32 %v3126, 2147483648
    %v3128 = vmul.f32 %v3127, 1.442695
    %v3129 = vpow.pop %v3128
    %v3130 = vadd.f32 %v3129, 1.0
    %v3131 = vrcp.pop %v3130
    %v3132 = vmul.f32 1.0, %v3131
    %v3133 = vmul.f32 %v3125, %v3114
    %v3134 = vadd.f32 %v2856, %v3133
    %v3135 = vtanh.pop %v3134
    %v3136 = vsub.f32 1.0, %v3132
    %v3137 = vmul.f32 %v3136, %v3135
    %v3138 = vmul.f32 %v3132, 0.0
    %v3139 = vadd.f32 %v3137, %v3138
    %v3140 = vpack.c.bf16 %v3139, %v3139
    %3141 = vmatprep.subr.bf16.mxu0 %v2991
    %3142 = vmatpush1.bf16.msra.mxu0 %v2990
    %3143 = vmatprep.subr.bf16.mxu0 %v2994
    %3144 = vmatpush1.bf16.msra.mxu0 %v2993
    %3145 = vmatprep.subr.bf16.mxu0 %v2997
    %3146 = vmatpush1.bf16.msra.mxu0 %v2996
    %3147 = vmatprep.subr.bf16.mxu0 %v3000
    %3148 = vmatpush1.bf16.msra.mxu0 %v2999
    %3149 = vmatprep.subr.bf16.mxu0 %v3003
    %3150 = vmatpush1.bf16.msra.mxu0 %v3002
    %3151 = vmatprep.subr.bf16.mxu0 %v3006
    %3152 = vmatpush1.bf16.msra.mxu0 %v3005
    %3153 = vmatprep.subr.bf16.mxu0 %v3009
    %3154 = vmatpush1.bf16.msra.mxu0 %v3008
    %3155 = vmatprep.subr.bf16.mxu0 %v3012
    %3156 = vmatpush1.bf16.msra.mxu0 %v3011
    %3157 = vmatprep.subr.bf16.mxu0 0
    %3158 = vmatpush1.bf16.msra.mxu0 0
    %3159 = vmatprep.subr.bf16.mxu0 0
    %3160 = vmatpush1.bf16.msra.mxu0 0
    %3161 = vmatprep.subr.bf16.mxu0 0
    %3162 = vmatpush1.bf16.msra.mxu0 0
    %3163 = vmatprep.subr.bf16.mxu0 0
    %3164 = vmatpush1.bf16.msra.mxu0 0
    %3165 = vmatprep.subr.bf16.mxu0 0
    %3166 = vmatpush1.bf16.msra.mxu0 0
    %3167 = vmatprep.subr.bf16.mxu0 0
    %3168 = vmatpush1.bf16.msra.mxu0 0
    %3169 = vmatprep.subr.bf16.mxu0 0
    %3170 = vmatpush1.bf16.msra.mxu0 0
    %3171 = vmatprep.subr.bf16.mxu0 0
    %3172 = vmatpush1.bf16.msra.mxu0 0
    %3173 = vmatprep.mubr.bf16.mxu0 0
    %3174 = vmatmul.mubr.bf16.gmra.mrb[0].mxu0 %v3140
    %v3175 = vpop.f32.mrb[0].mxu0
    %v3176 = vadd.f32 %v2898, %v3175
    %v3177 = vpop.f32.mrb[0].mxu0
    %v3178 = vadd.f32 %v2902, %v3177
    %v3179 = vpop.f32.mrb[0].mxu0
    %v3180 = vpop.f32.mrb[0].mxu0
    %3181 = vdwg.mxu0
    %3182 = vmatprep.subr.bf16.mxu0 0
    %3183 = vmatpush1.bf16.msra.mxu0 %v2992
    %3184 = vmatprep.subr.bf16.mxu0 0
    %3185 = vmatpush1.bf16.msra.mxu0 %v2995
    %3186 = vmatprep.subr.bf16.mxu0 0
    %3187 = vmatpush1.bf16.msra.mxu0 %v2998
    %3188 = vmatprep.subr.bf16.mxu0 0
    %3189 = vmatpush1.bf16.msra.mxu0 %v3001
    %3190 = vmatprep.subr.bf16.mxu0 0
    %3191 = vmatpush1.bf16.msra.mxu0 %v3004
    %3192 = vmatprep.subr.bf16.mxu0 0
    %3193 = vmatpush1.bf16.msra.mxu0 %v3007
    %3194 = vmatprep.subr.bf16.mxu0 0
    %3195 = vmatpush1.bf16.msra.mxu0 %v3010
    %3196 = vmatprep.subr.bf16.mxu0 0
    %3197 = vmatpush1.bf16.msra.mxu0 %v3013
    %3198 = vmatprep.subr.bf16.mxu0 0
    %3199 = vmatpush1.bf16.msra.mxu0 0
    %3200 = vmatprep.subr.bf16.mxu0 0
    %3201 = vmatpush1.bf16.msra.mxu0 0
    %3202 = vmatprep.subr.bf16.mxu0 0
    %3203 = vmatpush1.bf16.msra.mxu0 0
    %3204 = vmatprep.subr.bf16.mxu0 0
    %3205 = vmatpush1.bf16.msra.mxu0 0
    %3206 = vmatprep.subr.bf16.mxu0 0
    %3207 = vmatpush1.bf16.msra.mxu0 0
    %3208 = vmatprep.subr.bf16.mxu0 0
    %3209 = vmatpush1.bf16.msra.mxu0 0
    %3210 = vmatprep.subr.bf16.mxu0 0
    %3211 = vmatpush1.bf16.msra.mxu0 0
    %3212 = vmatprep.subr.bf16.mxu0 0
    %3213 = vmatpush1.bf16.msra.mxu0 0
    %3214 = vmatprep.mubr.bf16.mxu0 0
    %3215 = vmatmul.mubr.bf16.gmra.mrb[0].mxu0 %v3140
    %v3216 = vpop.f32.mrb[0].mxu0
    %v3217 = vadd.f32 %v2906, %v3216
    %v3218 = vpop.f32.mrb[0].mxu0
    %v3219 = vpop.f32.mrb[0].mxu0
    %v3220 = vpop.f32.mrb[0].mxu0
    %3221 = vdwg.mxu0
    %v3223 = vrot.slane %v3176, 6
    %v3225 = vadd.f32 %v2815, %v3223
    %v3226 = vxor.u32 %v3225, 2147483648
    %v3227 = vmul.f32 %v3226, 1.442695
    %v3228 = vpow.pop %v3227
    %v3229 = vadd.f32 %v3228, 1.0
    %v3230 = vrcp.pop %v3229
    %v3231 = vmul.f32 1.0, %v3230
    %v3233 = vrot.slane %v3178, 6
    %v3235 = vadd.f32 %v2817, %v3233
    %v3236 = vxor.u32 %v3235, 2147483648
    %v3237 = vmul.f32 %v3236, 1.442695
    %v3238 = vpow.pop %v3237
    %v3239 = vadd.f32 %v3238, 1.0
    %v3240 = vrcp.pop %v3239
    %v3241 = vmul.f32 1.0, %v3240
    %v3243 = vrot.slane %v3217, 6
    %v3245 = vmul.f32 %v3231, %v3243
    %v3246 = vadd.f32 %v2856, %v3245
    %v3247 = vtanh.pop %v3246
    %v3248 = vsub.f32 1.0, %v3241
    %v3249 = vmul.f32 %v3248, %v3247
    %v3251 = vrot.slane %v3139, 6
    %v3253 = vmul.f32 %v3241, %v3251
    %v3254 = vadd.f32 %v3249, %v3253
    %v3255 = vpack.c.bf16 %v3254, %v3254
    %v3257 = vrot.slane %v3255, 1
    %3259 = vmatprep.subr.bf16.mxu0 %v2991
    %3260 = vmatpush1.bf16.msra.mxu0 %v2990
    %3261 = vmatprep.subr.bf16.mxu0 %v2994
    %3262 = vmatpush1.bf16.msra.mxu0 %v2993
    %3263 = vmatprep.subr.bf16.mxu0 %v2997
    %3264 = vmatpush1.bf16.msra.mxu0 %v2996
    %3265 = vmatprep.subr.bf16.mxu0 %v3000
    %3266 = vmatpush1.bf16.msra.mxu0 %v2999
    %3267 = vmatprep.subr.bf16.mxu0 %v3003
    %3268 = vmatpush1.bf16.msra.mxu0 %v3002
    %3269 = vmatprep.subr.bf16.mxu0 %v3006
    %3270 = vmatpush1.bf16.msra.mxu0 %v3005
    %3271 = vmatprep.subr.bf16.mxu0 %v3009
    %3272 = vmatpush1.bf16.msra.mxu0 %v3008
    %3273 = vmatprep.subr.bf16.mxu0 %v3012
    %3274 = vmatpush1.bf16.msra.mxu0 %v3011
    %3275 = vmatprep.subr.bf16.mxu0 0
    %3276 = vmatpush1.bf16.msra.mxu0 0
    %3277 = vmatprep.subr.bf16.mxu0 0
    %3278 = vmatpush1.bf16.msra.mxu0 0
    %3279 = vmatprep.subr.bf16.mxu0 0
    %3280 = vmatpush1.bf16.msra.mxu0 0
    %3281 = vmatprep.subr.bf16.mxu0 0
    %3282 = vmatpush1.bf16.msra.mxu0 0
    %3283 = vmatprep.subr.bf16.mxu0 0
    %3284 = vmatpush1.bf16.msra.mxu0 0
    %3285 = vmatprep.subr.bf16.mxu0 0
    %3286 = vmatpush1.bf16.msra.mxu0 0
    %3287 = vmatprep.subr.bf16.mxu0 0
    %3288 = vmatpush1.bf16.msra.mxu0 0
    %3289 = vmatprep.subr.bf16.mxu0 0
    %3290 = vmatpush1.bf16.msra.mxu0 0
    %3291 = vmatprep.mubr.bf16.mxu0 0
    %3292 = vmatmul.mubr.bf16.gmra.mrb[0].mxu0 %v3257
    %v3293 = vpop.f32.mrb[0].mxu0
    %v3294 = vadd.f32 %v2898, %v3293
    %v3295 = vpop.f32.mrb[0].mxu0
    %v3296 = vadd.f32 %v2902, %v3295
    %v3297 = vpop.f32.mrb[0].mxu0
    %v3298 = vpop.f32.mrb[0].mxu0
    %3299 = vdwg.mxu0
    %3300 = vmatprep.subr.bf16.mxu0 0
    %3301 = vmatpush1.bf16.msra.mxu0 %v2992
    %3302 = vmatprep.subr.bf16.mxu0 0
    %3303 = vmatpush1.bf16.msra.mxu0 %v2995
    %3304 = vmatprep.subr.bf16.mxu0 0
    %3305 = vmatpush1.bf16.msra.mxu0 %v2998
    %3306 = vmatprep.subr.bf16.mxu0 0
    %3307 = vmatpush1.bf16.msra.mxu0 %v3001
    %3308 = vmatprep.subr.bf16.mxu0 0
    %3309 = vmatpush1.bf16.msra.mxu0 %v3004
    %3310 = vmatprep.subr.bf16.mxu0 0
    %3311 = vmatpush1.bf16.msra.mxu0 %v3007
    %3312 = vmatprep.subr.bf16.mxu0 0
    %3313 = vmatpush1.bf16.msra.mxu0 %v3010
    %3314 = vmatprep.subr.bf16.mxu0 0
    %3315 = vmatpush1.bf16.msra.mxu0 %v3013
    %3316 = vmatprep.subr.bf16.mxu0 0
    %3317 = vmatpush1.bf16.msra.mxu0 0
    %3318 = vmatprep.subr.bf16.mxu0 0
    %3319 = vmatpush1.bf16.msra.mxu0 0
    %3320 = vmatprep.subr.bf16.mxu0 0
    %3321 = vmatpush1.bf16.msra.mxu0 0
    %3322 = vmatprep.subr.bf16.mxu0 0
    %3323 = vmatpush1.bf16.msra.mxu0 0
    %3324 = vmatprep.subr.bf16.mxu0 0
    %3325 = vmatpush1.bf16.msra.mxu0 0
    %3326 = vmatprep.subr.bf16.mxu0 0
    %3327 = vmatpush1.bf16.msra.mxu0 0
    %3328 = vmatprep.subr.bf16.mxu0 0
    %3329 = vmatpush1.bf16.msra.mxu0 0
    %3330 = vmatprep.subr.bf16.mxu0 0
    %3331 = vmatpush1.bf16.msra.mxu0 0
    %3332 = vmatprep.mubr.bf16.mxu0 0
    %3333 = vmatmul.mubr.bf16.gmra.mrb[0].mxu0 %v3257
    %v3334 = vpop.f32.mrb[0].mxu0
    %v3335 = vadd.f32 %v2906, %v3334
    %v3336 = vpop.f32.mrb[0].mxu0
    %v3337 = vpop.f32.mrb[0].mxu0
    %v3338 = vpop.f32.mrb[0].mxu0
    %3339 = vdwg.mxu0
    %v3341 = vrot.slane %v3294, 4
    %v3343 = vadd.f32 %v2815, %v3341
    %v3344 = vxor.u32 %v3343, 2147483648
    %v3345 = vmul.f32 %v3344, 1.442695
    %v3346 = vpow.pop %v3345
    %v3347 = vadd.f32 %v3346, 1.0
    %v3348 = vrcp.pop %v3347
    %v3349 = vmul.f32 1.0, %v3348
    %v3351 = vrot.slane %v3296, 4
    %v3353 = vadd.f32 %v2817, %v3351
    %v3354 = vxor.u32 %v3353, 2147483648
    %v3355 = vmul.f32 %v3354, 1.442695
    %v3356 = vpow.pop %v3355
    %v3357 = vadd.f32 %v3356, 1.0
    %v3358 = vrcp.pop %v3357
    %v3359 = vmul.f32 1.0, %v3358
    %v3361 = vrot.slane %v3335, 4
    %v3363 = vmul.f32 %v3349, %v3361
    %v3364 = vadd.f32 %v2856, %v3363
    %v3365 = vtanh.pop %v3364
    %v3366 = vsub.f32 1.0, %v3359
    %v3367 = vmul.f32 %v3366, %v3365
    %v3369 = vrot.slane %v3254, 6
    %v3371 = vmul.f32 %v3359, %v3369
    %v3372 = vadd.f32 %v3367, %v3371
    %v3373 = vpack.c.bf16 %v3372, %v3372
    %v3375 = vrot.slane %v3373, 2
    %3377 = vmatprep.subr.bf16.mxu0 %v2991
    %3378 = vmatpush1.bf16.msra.mxu0 %v2990
    %3379 = vmatprep.subr.bf16.mxu0 %v2994
    %3380 = vmatpush1.bf16.msra.mxu0 %v2993
    %3381 = vmatprep.subr.bf16.mxu0 %v2997
    %3382 = vmatpush1.bf16.msra.mxu0 %v2996
    %3383 = vmatprep.subr.bf16.mxu0 %v3000
    %3384 = vmatpush1.bf16.msra.mxu0 %v2999
    %3385 = vmatprep.subr.bf16.mxu0 %v3003
    %3386 = vmatpush1.bf16.msra.mxu0 %v3002
    %3387 = vmatprep.subr.bf16.mxu0 %v3006
    %3388 = vmatpush1.bf16.msra.mxu0 %v3005
    %3389 = vmatprep.subr.bf16.mxu0 %v3009
    %3390 = vmatpush1.bf16.msra.mxu0 %v3008
    %3391 = vmatprep.subr.bf16.mxu0 %v3012
    %3392 = vmatpush1.bf16.msra.mxu0 %v3011
    %3393 = vmatprep.subr.bf16.mxu0 0
    %3394 = vmatpush1.bf16.msra.mxu0 0
    %3395 = vmatprep.subr.bf16.mxu0 0
    %3396 = vmatpush1.bf16.msra.mxu0 0
    %3397 = vmatprep.subr.bf16.mxu0 0
    %3398 = vmatpush1.bf16.msra.mxu0 0
    %3399 = vmatprep.subr.bf16.mxu0 0
    %3400 = vmatpush1.bf16.msra.mxu0 0
    %3401 = vmatprep.subr.bf16.mxu0 0
    %3402 = vmatpush1.bf16.msra.mxu0 0
    %3403 = vmatprep.subr.bf16.mxu0 0
    %3404 = vmatpush1.bf16.msra.mxu0 0
    %3405 = vmatprep.subr.bf16.mxu0 0
    %3406 = vmatpush1.bf16.msra.mxu0 0
    %3407 = vmatprep.subr.bf16.mxu0 0
    %3408 = vmatpush1.bf16.msra.mxu0 0
    %3409 = vmatprep.mubr.bf16.mxu0 0
    %3410 = vmatmul.mubr.bf16.gmra.mrb[0].mxu0 %v3375
    %v3411 = vpop.f32.mrb[0].mxu0
    %v3412 = vadd.f32 %v2898, %v3411
    %v3413 = vpop.f32.mrb[0].mxu0
    %v3414 = vadd.f32 %v2902, %v3413
    %v3415 = vpop.f32.mrb[0].mxu0
    %v3416 = vpop.f32.mrb[0].mxu0
    %3417 = vdwg.mxu0
    %3418 = vmatprep.subr.bf16.mxu0 0
    %3419 = vmatpush1.bf16.msra.mxu0 %v2992
    %3420 = vmatprep.subr.bf16.mxu0 0
    %3421 = vmatpush1.bf16.msra.mxu0 %v2995
    %3422 = vmatprep.subr.bf16.mxu0 0
    %3423 = vmatpush1.bf16.msra.mxu0 %v2998
    %3424 = vmatprep.subr.bf16.mxu0 0
    %3425 = vmatpush1.bf16.msra.mxu0 %v3001
    %3426 = vmatprep.subr.bf16.mxu0 0
    %3427 = vmatpush1.bf16.msra.mxu0 %v3004
    %3428 = vmatprep.subr.bf16.mxu0 0
    %3429 = vmatpush1.bf16.msra.mxu0 %v3007
    %3430 = vmatprep.subr.bf16.mxu0 0
    %3431 = vmatpush1.bf16.msra.mxu0 %v3010
    %3432 = vmatprep.subr.bf16.mxu0 0
    %3433 = vmatpush1.bf16.msra.mxu0 %v3013
    %3434 = vmatprep.subr.bf16.mxu0 0
    %3435 = vmatpush1.bf16.msra.mxu0 0
    %3436 = vmatprep.subr.bf16.mxu0 0
    %3437 = vmatpush1.bf16.msra.mxu0 0
    %3438 = vmatprep.subr.bf16.mxu0 0
    %3439 = vmatpush1.bf16.msra.mxu0 0
    %3440 = vmatprep.subr.bf16.mxu0 0
    %3441 = vmatpush1.bf16.msra.mxu0 0
    %3442 = vmatprep.subr.bf16.mxu0 0
    %3443 = vmatpush1.bf16.msra.mxu0 0
    %3444 = vmatprep.subr.bf16.mxu0 0
    %3445 = vmatpush1.bf16.msra.mxu0 0
    %3446 = vmatprep.subr.bf16.mxu0 0
    %3447 = vmatpush1.bf16.msra.mxu0 0
    %3448 = vmatprep.subr.bf16.mxu0 0
    %3449 = vmatpush1.bf16.msra.mxu0 0
    %3450 = vmatprep.mubr.bf16.mxu0 0
    %3451 = vmatmul.mubr.bf16.gmra.mrb[0].mxu0 %v3375
    %v3452 = vpop.f32.mrb[0].mxu0
    %v3453 = vadd.f32 %v2906, %v3452
    %v3454 = vpop.f32.mrb[0].mxu0
    %v3455 = vpop.f32.mrb[0].mxu0
    %v3456 = vpop.f32.mrb[0].mxu0
    %3457 = vdwg.mxu0
    %v3459 = vrot.slane %v3412, 2
    %v3461 = vadd.f32 %v2815, %v3459
    %v3462 = vxor.u32 %v3461, 2147483648
    %v3463 = vmul.f32 %v3462, 1.442695
    %v3464 = vpow.pop %v3463
    %v3465 = vadd.f32 %v3464, 1.0
    %v3466 = vrcp.pop %v3465
    %v3467 = vmul.f32 1.0, %v3466
    %v3469 = vrot.slane %v3414, 2
    %v3471 = vadd.f32 %v2817, %v3469
    %v3472 = vxor.u32 %v3471, 2147483648
    %v3473 = vmul.f32 %v3472, 1.442695
    %v3474 = vpow.pop %v3473
    %v3475 = vadd.f32 %v3474, 1.0
    %v3476 = vrcp.pop %v3475
    %v3477 = vmul.f32 1.0, %v3476
    %v3479 = vrot.slane %v3453, 2
    %v3481 = vmul.f32 %v3467, %v3479
    %v3482 = vadd.f32 %v2856, %v3481
    %v3483 = vtanh.pop %v3482
    %v3484 = vsub.f32 1.0, %v3477
    %v3485 = vmul.f32 %v3484, %v3483
    %v3487 = vrot.slane %v3372, 6
    %v3489 = vmul.f32 %v3477, %v3487
    %v3490 = vadd.f32 %v3485, %v3489
    %v3491 = vrot.slane %v3254, 1
    %v3493 = vrot.slane %v3372, 2
    %v3496 = vrot.slane %v3490, 3
    %v3498 = vrot.slane %v3139, 5
    %v3500 = vrot.slane %v3372, 7
    %vm3502 = vcmask 1040384
    %v3503 = vsel %vm3502, %v3139, %v3491
    %vm3504 = vcmask 1041408
    %v3505 = vsel %vm3504, %v3503, %v3493
    %vm3506 = vcmask 1042432
    %v3507 = vsel %vm3506, %v3505, %v3496
    %vm3508 = vcmask 1043456
    %v3509 = vsel %vm3508, %v3507, %v3498
    %vm3510 = vcmask 1044480
    %v3511 = vsel %vm3510, %v3509, %v3369
    %vm3512 = vcmask 1045504
    %v3513 = vsel %vm3512, %v3511, %v3500
    %vm3514 = vcmask 1046528
    %v3515 = vsel %vm3514, %v3513, %v3490
    %v3516 = vpack.c.bf16 %v3515, %v3515
    %v3517 = vld [vmem:[%s9] sm:$0xff]
    %v3518 = vld [vmem:[%s9 + $0x8] sm:$0xf]
    %v3519 = vld [vmem:[%s9 + $0xc] sm:$0xff]
    %v3520 = vld [vmem:[%s9 + $0x14] sm:$0xf]
    %v3521 = vld [vmem:[%s9 + $0x18] sm:$0xff]
    %v3522 = vld [vmem:[%s9 + $0x20] sm:$0xf]
    %v3523 = vld [vmem:[%s9 + $0x24] sm:$0xff]
    %v3524 = vld [vmem:[%s9 + $0x2c] sm:$0xf]
    %v3525 = vld [vmem:[%s9 + $0x30] sm:$0xff]
    %v3526 = vld [vmem:[%s9 + $0x38] sm:$0xf]
    %v3527 = vld [vmem:[%s9 + $0x3c] sm:$0xff]
    %v3528 = vld [vmem:[%s9 + $0x44] sm:$0xf]
    %v3529 = vld [vmem:[%s9 + $0x48] sm:$0xff]
    %v3530 = vld [vmem:[%s9 + $0x50] sm:$0xf]
    %v3531 = vld [vmem:[%s9 + $0x54] sm:$0xff]
    %v3532 = vld [vmem:[%s9 + $0x5c] sm:$0xf]
    %v3533 = vld [vmem:[%s9 + $0x60] sm:$0xff]
    %v3534 = vld [vmem:[%s9 + $0x68] sm:$0xf]
    %v3535 = vld [vmem:[%s9 + $0x6c] sm:$0xff]
    %v3536 = vld [vmem:[%s9 + $0x74] sm:$0xf]
    %v3537 = vld [vmem:[%s9 + $0x78] sm:$0xff]
    %v3538 = vld [vmem:[%s9 + $0x80] sm:$0xf]
    %v3539 = vld [vmem:[%s9 + $0x84] sm:$0xff]
    %v3540 = vld [vmem:[%s9 + $0x8c] sm:$0xf]
    %v3541 = vld [vmem:[%s9 + $0x90] sm:$0xff]
    %v3542 = vld [vmem:[%s9 + $0x98] sm:$0xf]
    %v3543 = vld [vmem:[%s9 + $0x9c] sm:$0xff]
    %v3544 = vld [vmem:[%s9 + $0xa4] sm:$0xf]
    %v3545 = vld [vmem:[%s9 + $0xa8] sm:$0xff]
    %v3546 = vld [vmem:[%s9 + $0xb0] sm:$0xf]
    %v3547 = vld [vmem:[%s9 + $0xb4] sm:$0xff]
    %v3548 = vld [vmem:[%s9 + $0xbc] sm:$0xf]
    %v3549 = vld [vmem:[%s10] sm:$0x7]
    %v3551 = vlaneseq
    %v3552 = vshrl.u32 %v3551, 7
    %v3553 = vsub.s32 0, %v3552
    %v3554 = vrot.slane %v3549, %v3553
    %v3555 = vlaneseq
    %v3556 = vshrl.u32 %v3555, 7
    %v3557 = vsub.s32 1, %v3556
    %v3558 = vrot.slane %v3549, %v3557
    %v3559 = vlaneseq
    %v3560 = vshrl.u32 %v3559, 7
    %v3561 = vsub.s32 2, %v3560
    %v3562 = vrot.slane %v3549, %v3561
    %v3598 = vunpack.c.l.b16 %v3517
    %v3599 = vunpack.c.h.b16 %v3517
    %v3600 = vunpack.c.l.b16 %v3518
    %v3601 = vunpack.c.l.b16 %v3519
    %v3602 = vunpack.c.h.b16 %v3519
    %v3603 = vunpack.c.l.b16 %v3520
    %v3604 = vunpack.c.l.b16 %v3521
    %v3605 = vunpack.c.h.b16 %v3521
    %v3606 = vunpack.c.l.b16 %v3522
    %v3607 = vunpack.c.l.b16 %v3523
    %v3608 = vunpack.c.h.b16 %v3523
    %v3609 = vunpack.c.l.b16 %v3524
    %v3610 = vunpack.c.l.b16 %v3525
    %v3611 = vunpack.c.h.b16 %v3525
    %v3612 = vunpack.c.l.b16 %v3526
    %v3613 = vunpack.c.l.b16 %v3527
    %v3614 = vunpack.c.h.b16 %v3527
    %v3615 = vunpack.c.l.b16 %v3528
    %v3616 = vunpack.c.l.b16 %v3529
    %v3617 = vunpack.c.h.b16 %v3529
    %v3618 = vunpack.c.l.b16 %v3530
    %v3619 = vunpack.c.l.b16 %v3531
    %v3620 = vunpack.c.h.b16 %v3531
    %v3621 = vunpack.c.l.b16 %v3532
    %v3622 = vunpack.c.l.b16 %v3533
    %v3623 = vunpack.c.h.b16 %v3533
    %v3624 = vunpack.c.l.b16 %v3534
    %v3625 = vunpack.c.l.b16 %v3535
    %v3626 = vunpack.c.h.b16 %v3535
    %v3627 = vunpack.c.l.b16 %v3536
    %v3628 = vunpack.c.l.b16 %v3537
    %v3629 = vunpack.c.h.b16 %v3537
    %v3630 = vunpack.c.l.b16 %v3538
    %v3631 = vunpack.c.l.b16 %v3539
    %v3632 = vunpack.c.h.b16 %v3539
    %v3633 = vunpack.c.l.b16 %v3540
    %v3634 = vunpack.c.l.b16 %v3541
    %v3635 = vunpack.c.h.b16 %v3541
    %v3636 = vunpack.c.l.b16 %v3542
    %v3637 = vunpack.c.l.b16 %v3543
    %v3638 = vunpack.c.h.b16 %v3543
    %v3639 = vunpack.c.l.b16 %v3544
    %v3640 = vunpack.c.l.b16 %v3545
    %v3641 = vunpack.c.h.b16 %v3545
    %v3642 = vunpack.c.l.b16 %v3546
    %v3643 = vunpack.c.l.b16 %v3547
    %v3644 = vunpack.c.h.b16 %v3547
    %v3645 = vunpack.c.l.b16 %v3548
    %v3646 = vpack.c.b16 %v3601, %v3598
    %v3647 = vpack.c.b16 %v3602, %v3599
    %v3648 = vpack.c.b16 %v3603, %v3600
    %v3649 = vpack.c.b16 %v3607, %v3604
    %v3650 = vpack.c.b16 %v3608, %v3605
    %v3651 = vpack.c.b16 %v3609, %v3606
    %v3652 = vpack.c.b16 %v3613, %v3610
    %v3653 = vpack.c.b16 %v3614, %v3611
    %v3654 = vpack.c.b16 %v3615, %v3612
    %v3655 = vpack.c.b16 %v3619, %v3616
    %v3656 = vpack.c.b16 %v3620, %v3617
    %v3657 = vpack.c.b16 %v3621, %v3618
    %v3658 = vpack.c.b16 %v3625, %v3622
    %v3659 = vpack.c.b16 %v3626, %v3623
    %v3660 = vpack.c.b16 %v3627, %v3624
    %v3661 = vpack.c.b16 %v3631, %v3628
    %v3662 = vpack.c.b16 %v3632, %v3629
    %v3663 = vpack.c.b16 %v3633, %v3630
    %v3664 = vpack.c.b16 %v3637, %v3634
    %v3665 = vpack.c.b16 %v3638, %v3635
    %v3666 = vpack.c.b16 %v3639, %v3636
    %v3667 = vpack.c.b16 %v3643, %v3640
    %v3668 = vpack.c.b16 %v3644, %v3641
    %v3669 = vpack.c.b16 %v3645, %v3642
    %3694 = vmatprep.subr.bf16.mxu0 %v3647
    %3695 = vmatpush1.bf16.msra.mxu0 %v3646
    %3696 = vmatprep.subr.bf16.mxu0 %v3650
    %3697 = vmatpush1.bf16.msra.mxu0 %v3649
    %3698 = vmatprep.subr.bf16.mxu0 %v3653
    %3699 = vmatpush1.bf16.msra.mxu0 %v3652
    %3700 = vmatprep.subr.bf16.mxu0 %v3656
    %3701 = vmatpush1.bf16.msra.mxu0 %v3655
    %3702 = vmatprep.subr.bf16.mxu0 %v3659
    %3703 = vmatpush1.bf16.msra.mxu0 %v3658
    %3704 = vmatprep.subr.bf16.mxu0 %v3662
    %3705 = vmatpush1.bf16.msra.mxu0 %v3661
    %3706 = vmatprep.subr.bf16.mxu0 %v3665
    %3707 = vmatpush1.bf16.msra.mxu0 %v3664
    %3708 = vmatprep.subr.bf16.mxu0 %v3668
    %3709 = vmatpush1.bf16.msra.mxu0 %v3667
    %3710 = vmatprep.subr.bf16.mxu0 0
    %3711 = vmatpush1.bf16.msra.mxu0 0
    %3712 = vmatprep.subr.bf16.mxu0 0
    %3713 = vmatpush1.bf16.msra.mxu0 0
    %3714 = vmatprep.subr.bf16.mxu0 0
    %3715 = vmatpush1.bf16.msra.mxu0 0
    %3716 = vmatprep.subr.bf16.mxu0 0
    %3717 = vmatpush1.bf16.msra.mxu0 0
    %3718 = vmatprep.subr.bf16.mxu0 0
    %3719 = vmatpush1.bf16.msra.mxu0 0
    %3720 = vmatprep.subr.bf16.mxu0 0
    %3721 = vmatpush1.bf16.msra.mxu0 0
    %3722 = vmatprep.subr.bf16.mxu0 0
    %3723 = vmatpush1.bf16.msra.mxu0 0
    %3724 = vmatprep.subr.bf16.mxu0 0
    %3725 = vmatpush1.bf16.msra.mxu0 0
    %3726 = vmatprep.mubr.bf16.mxu0 0
    %3727 = vmatmul.mubr.bf16.gmra.mrb[0].mxu0 %v3516
    %v3728 = vpop.f32.mrb[0].mxu0
    %v3729 = vadd.f32 %v3554, %v3728
    %v3730 = vpop.f32.mrb[0].mxu0
    %v3731 = vadd.f32 %v3558, %v3730
    %v3732 = vpop.f32.mrb[0].mxu0
    %v3733 = vpop.f32.mrb[0].mxu0
    %3734 = vdwg.mxu0
    %3735 = vmatprep.subr.bf16.mxu0 0
    %3736 = vmatpush1.bf16.msra.mxu0 %v3648
    %3737 = vmatprep.subr.bf16.mxu0 0
    %3738 = vmatpush1.bf16.msra.mxu0 %v3651
    %3739 = vmatprep.subr.bf16.mxu0 0
    %3740 = vmatpush1.bf16.msra.mxu0 %v3654
    %3741 = vmatprep.subr.bf16.mxu0 0
    %3742 = vmatpush1.bf16.msra.mxu0 %v3657
    %3743 = vmatprep.subr.bf16.mxu0 0
    %3744 = vmatpush1.bf16.msra.mxu0 %v3660
    %3745 = vmatprep.subr.bf16.mxu0 0
    %3746 = vmatpush1.bf16.msra.mxu0 %v3663
    %3747 = vmatprep.subr.bf16.mxu0 0
    %3748 = vmatpush1.bf16.msra.mxu0 %v3666
    %3749 = vmatprep.subr.bf16.mxu0 0
    %3750 = vmatpush1.bf16.msra.mxu0 %v3669
    %3751 = vmatprep.subr.bf16.mxu0 0
    %3752 = vmatpush1.bf16.msra.mxu0 0
    %3753 = vmatprep.subr.bf16.mxu0 0
    %3754 = vmatpush1.bf16.msra.mxu0 0
    %3755 = vmatprep.subr.bf16.mxu0 0
    %3756 = vmatpush1.bf16.msra.mxu0 0
    %3757 = vmatprep.subr.bf16.mxu0 0
    %3758 = vmatpush1.bf16.msra.mxu0 0
    %3759 = vmatprep.subr.bf16.mxu0 0
    %3760 = vmatpush1.bf16.msra.mxu0 0
    %3761 = vmatprep.subr.bf16.mxu0 0
    %3762 = vmatpush1.bf16.msra.mxu0 0
    %3763 = vmatprep.subr.bf16.mxu0 0
    %3764 = vmatpush1.bf16.msra.mxu0 0
    %3765 = vmatprep.subr.bf16.mxu0 0
    %3766 = vmatpush1.bf16.msra.mxu0 0
    %3767 = vmatprep.mubr.bf16.mxu0 0
    %3768 = vmatmul.mubr.bf16.gmra.mrb[0].mxu0 %v3516
    %v3769 = vpop.f32.mrb[0].mxu0
    %v3770 = vadd.f32 %v3562, %v3769
    %v3771 = vpop.f32.mrb[0].mxu0
    %v3772 = vpop.f32.mrb[0].mxu0
    %v3773 = vpop.f32.mrb[0].mxu0
    %3774 = vdwg.mxu0
    %v3775 = vpack.c.bf16 %v3729, %v3729
    %v3776 = vpack.c.bf16 %v3731, %v3731
    %v3777 = vpack.c.bf16 %v3770, %v3770
    %vm3778 = vcmask 130048
    %v3780 = vsel %vm3778, %v3775, 0
    %v3783 = vsel %vm3778, %v3776, 0
    %3785 = vmatprep.subr.bf16.mxu0 0
    %3786 = vmatpush1.bf16.xpose.msra.mxu0 %v3783
    %3787 = vmatprep.subr.bf16.mxu0 0
    %3788 = vmatpush1.bf16.xpose.msra.mxu0 0
    %3789 = vmatprep.subr.bf16.mxu0 0
    %3790 = vmatpush1.bf16.xpose.msra.mxu0 0
    %3791 = vmatprep.subr.bf16.mxu0 0
    %3792 = vmatpush1.bf16.xpose.msra.mxu0 0
    %3793 = vmatprep.subr.bf16.mxu0 0
    %3794 = vmatpush1.bf16.xpose.msra.mxu0 0
    %3795 = vmatprep.subr.bf16.mxu0 0
    %3796 = vmatpush1.bf16.xpose.msra.mxu0 0
    %3797 = vmatprep.subr.bf16.mxu0 0
    %3798 = vmatpush1.bf16.xpose.msra.mxu0 0
    %3799 = vmatprep.subr.bf16.mxu0 0
    %3800 = vmatpush1.bf16.xpose.msra.mxu0 0
    %3801 = vmatprep.subr.bf16.mxu0 0
    %3802 = vmatpush1.bf16.xpose.msra.mxu0 0
    %3803 = vmatprep.subr.bf16.mxu0 0
    %3804 = vmatpush1.bf16.xpose.msra.mxu0 0
    %3805 = vmatprep.subr.bf16.mxu0 0
    %3806 = vmatpush1.bf16.xpose.msra.mxu0 0
    %3807 = vmatprep.subr.bf16.mxu0 0
    %3808 = vmatpush1.bf16.xpose.msra.mxu0 0
    %3809 = vmatprep.subr.bf16.mxu0 0
    %3810 = vmatpush1.bf16.xpose.msra.mxu0 0
    %3811 = vmatprep.subr.bf16.mxu0 0
    %3812 = vmatpush1.bf16.xpose.msra.mxu0 0
    %3813 = vmatprep.subr.bf16.mxu0 0
    %3814 = vmatpush1.bf16.xpose.msra.mxu0 0
    %3815 = vmatprep.subr.bf16.mxu0 0
    %3816 = vmatpush1.bf16.xpose.msra.mxu0 0
    %3817 = vmatprep.mubr.bf16.mxu0 0
    %3818 = vmatmul.mubr.bf16.gmra.mrb[0].mxu0 %v3780
    %v3819 = vpop.f32.mrb[0].mxu0
    %v3820 = vadd.f32 0.0, %v3819
    %v3821 = vpop.f32.mrb[0].mxu0
    %v3822 = vpop.f32.mrb[0].mxu0
    %v3823 = vpop.f32.mrb[0].mxu0
    %3824 = vdwg.mxu0
    %vm3825 = vcmask 27648
    %v3826 = vsel %vm3825, %v3820, -inf
    %3827 = vmax.xlane.f32.xlu0 %v3826
    %v3828 = vpop.xlane.xlu0 %3827
    %v3829 = vsub.f32 %v3820, %v3828
    %v3830 = vmul.f32 %v3829, 1.442695
    %v3831 = vpow.pop %v3830
    %v3832 = vsel %vm3825, %v3831, 0.0
    %3833 = vadd.xlane.f32.xlu0 %v3832
    %v3834 = vpop.xlane.xlu0 %3833
    %v3835 = vrcp.pop %v3834
    %v3836 = vmul.f32 %v3831, %v3835
    %v3837 = vpack.c.bf16 %v3836, %v3836
    %vm3838 = vcmask 31744
    %v3840 = vsel %vm3838, %v3837, 0
    %v3843 = vsel %vm3504, %v3777, 0
    %3845 = vmatprep.subr.bf16.mxu0 0
    %3846 = vmatpush1.bf16.msra.mxu0 %v3843
    %3847 = vmatprep.subr.bf16.mxu0 0
    %3848 = vmatpush1.bf16.msra.mxu0 0
    %3849 = vmatprep.subr.bf16.mxu0 0
    %3850 = vmatpush1.bf16.msra.mxu0 0
    %3851 = vmatprep.subr.bf16.mxu0 0
    %3852 = vmatpush1.bf16.msra.mxu0 0
    %3853 = vmatprep.subr.bf16.mxu0 0
    %3854 = vmatpush1.bf16.msra.mxu0 0
    %3855 = vmatprep.subr.bf16.mxu0 0
    %3856 = vmatpush1.bf16.msra.mxu0 0
    %3857 = vmatprep.subr.bf16.mxu0 0
    %3858 = vmatpush1.bf16.msra.mxu0 0
    %3859 = vmatprep.subr.bf16.mxu0 0
    %3860 = vmatpush1.bf16.msra.mxu0 0
    %3861 = vmatprep.subr.bf16.mxu0 0
    %3862 = vmatpush1.bf16.msra.mxu0 0
    %3863 = vmatprep.subr.bf16.mxu0 0
    %3864 = vmatpush1.bf16.msra.mxu0 0
    %3865 = vmatprep.subr.bf16.mxu0 0
    %3866 = vmatpush1.bf16.msra.mxu0 0
    %3867 = vmatprep.subr.bf16.mxu0 0
    %3868 = vmatpush1.bf16.msra.mxu0 0
    %3869 = vmatprep.subr.bf16.mxu0 0
    %3870 = vmatpush1.bf16.msra.mxu0 0
    %3871 = vmatprep.subr.bf16.mxu0 0
    %3872 = vmatpush1.bf16.msra.mxu0 0
    %3873 = vmatprep.subr.bf16.mxu0 0
    %3874 = vmatpush1.bf16.msra.mxu0 0
    %3875 = vmatprep.subr.bf16.mxu0 0
    %3876 = vmatpush1.bf16.msra.mxu0 0
    %3877 = vmatprep.mubr.bf16.mxu0 0
    %3878 = vmatmul.mubr.bf16.gmra.mrb[0].mxu0 %v3840
    %v3879 = vpop.f32.mrb[0].mxu0
    %v3880 = vadd.f32 0.0, %v3879
    %v3881 = vpop.f32.mrb[0].mxu0
    %v3882 = vpop.f32.mrb[0].mxu0
    %v3883 = vpop.f32.mrb[0].mxu0
    %3884 = vdwg.mxu0
    %v3885 = vpack.c.bf16 %v3880, %v3880
    %v3886 = vld [vmem:[%s11] sm:$0xf]
    %v3887 = vld [vmem:[%s11 + $0x4] sm:$0xf]
    %3889 = vrot.lane.b32.xlu0 %v3775, 112
    %v3890 = vpop.permute.xlu0 %3889
    %3892 = vrot.lane.b32.xlu0 %v3776, 112
    %v3893 = vpop.permute.xlu0 %3892
    %v3895 = vsel %vm3778, %v3890, 0
    %v3898 = vsel %vm3778, %v3893, 0
    %3900 = vmatprep.subr.bf16.mxu0 0
    %3901 = vmatpush1.bf16.xpose.msra.mxu0 %v3898
    %3902 = vmatprep.subr.bf16.mxu0 0
    %3903 = vmatpush1.bf16.xpose.msra.mxu0 0
    %3904 = vmatprep.subr.bf16.mxu0 0
    %3905 = vmatpush1.bf16.xpose.msra.mxu0 0
    %3906 = vmatprep.subr.bf16.mxu0 0
    %3907 = vmatpush1.bf16.xpose.msra.mxu0 0
    %3908 = vmatprep.subr.bf16.mxu0 0
    %3909 = vmatpush1.bf16.xpose.msra.mxu0 0
    %3910 = vmatprep.subr.bf16.mxu0 0
    %3911 = vmatpush1.bf16.xpose.msra.mxu0 0
    %3912 = vmatprep.subr.bf16.mxu0 0
    %3913 = vmatpush1.bf16.xpose.msra.mxu0 0
    %3914 = vmatprep.subr.bf16.mxu0 0
    %3915 = vmatpush1.bf16.xpose.msra.mxu0 0
    %3916 = vmatprep.subr.bf16.mxu0 0
    %3917 = vmatpush1.bf16.xpose.msra.mxu0 0
    %3918 = vmatprep.subr.bf16.mxu0 0
    %3919 = vmatpush1.bf16.xpose.msra.mxu0 0
    %3920 = vmatprep.subr.bf16.mxu0 0
    %3921 = vmatpush1.bf16.xpose.msra.mxu0 0
    %3922 = vmatprep.subr.bf16.mxu0 0
    %3923 = vmatpush1.bf16.xpose.msra.mxu0 0
    %3924 = vmatprep.subr.bf16.mxu0 0
    %3925 = vmatpush1.bf16.xpose.msra.mxu0 0
    %3926 = vmatprep.subr.bf16.mxu0 0
    %3927 = vmatpush1.bf16.xpose.msra.mxu0 0
    %3928 = vmatprep.subr.bf16.mxu0 0
    %3929 = vmatpush1.bf16.xpose.msra.mxu0 0
    %3930 = vmatprep.subr.bf16.mxu0 0
    %3931 = vmatpush1.bf16.xpose.msra.mxu0 0
    %3932 = vmatprep.mubr.bf16.mxu0 0
    %3933 = vmatmul.mubr.bf16.gmra.mrb[0].mxu0 %v3895
    %v3934 = vpop.f32.mrb[0].mxu0
    %v3935 = vadd.f32 0.0, %v3934
    %v3936 = vpop.f32.mrb[0].mxu0
    %v3937 = vpop.f32.mrb[0].mxu0
    %v3938 = vpop.f32.mrb[0].mxu0
    %3939 = vdwg.mxu0
    %v3940 = vsel %vm3825, %v3935, -inf
    %3941 = vmax.xlane.f32.xlu0 %v3940
    %v3942 = vpop.xlane.xlu0 %3941
    %v3943 = vsub.f32 %v3935, %v3942
    %v3944 = vmul.f32 %v3943, 1.442695
    %v3945 = vpow.pop %v3944
    %v3946 = vsel %vm3825, %v3945, 0.0
    %3947 = vadd.xlane.f32.xlu0 %v3946
    %v3948 = vpop.xlane.xlu0 %3947
    %v3949 = vrcp.pop %v3948
    %v3950 = vmul.f32 %v3945, %v3949
    %v3951 = vpack.c.bf16 %v3950, %v3950
    %3953 = vrot.lane.b32.xlu0 %v3777, 112
    %v3954 = vpop.permute.xlu0 %3953
    %v3956 = vsel %vm3838, %v3951, 0
    %v3959 = vsel %vm3504, %v3954, 0
    %3961 = vmatprep.subr.bf16.mxu0 0
    %3962 = vmatpush1.bf16.msra.mxu0 %v3959
    %3963 = vmatprep.subr.bf16.mxu0 0
    %3964 = vmatpush1.bf16.msra.mxu0 0
    %3965 = vmatprep.subr.bf16.mxu0 0
    %3966 = vmatpush1.bf16.msra.mxu0 0
    %3967 = vmatprep.subr.bf16.mxu0 0
    %3968 = vmatpush1.bf16.msra.mxu0 0
    %3969 = vmatprep.subr.bf16.mxu0 0
    %3970 = vmatpush1.bf16.msra.mxu0 0
    %3971 = vmatprep.subr.bf16.mxu0 0
    %3972 = vmatpush1.bf16.msra.mxu0 0
    %3973 = vmatprep.subr.bf16.mxu0 0
    %3974 = vmatpush1.bf16.msra.mxu0 0
    %3975 = vmatprep.subr.bf16.mxu0 0
    %3976 = vmatpush1.bf16.msra.mxu0 0
    %3977 = vmatprep.subr.bf16.mxu0 0
    %3978 = vmatpush1.bf16.msra.mxu0 0
    %3979 = vmatprep.subr.bf16.mxu0 0
    %3980 = vmatpush1.bf16.msra.mxu0 0
    %3981 = vmatprep.subr.bf16.mxu0 0
    %3982 = vmatpush1.bf16.msra.mxu0 0
    %3983 = vmatprep.subr.bf16.mxu0 0
    %3984 = vmatpush1.bf16.msra.mxu0 0
    %3985 = vmatprep.subr.bf16.mxu0 0
    %3986 = vmatpush1.bf16.msra.mxu0 0
    %3987 = vmatprep.subr.bf16.mxu0 0
    %3988 = vmatpush1.bf16.msra.mxu0 0
    %3989 = vmatprep.subr.bf16.mxu0 0
    %3990 = vmatpush1.bf16.msra.mxu0 0
    %3991 = vmatprep.subr.bf16.mxu0 0
    %3992 = vmatpush1.bf16.msra.mxu0 0
    %3993 = vmatprep.mubr.bf16.mxu0 0
    %3994 = vmatmul.mubr.bf16.gmra.mrb[0].mxu0 %v3956
    %v3995 = vpop.f32.mrb[0].mxu0
    %v3996 = vadd.f32 0.0, %v3995
    %v3997 = vpop.f32.mrb[0].mxu0
    %v3998 = vpop.f32.mrb[0].mxu0
    %v3999 = vpop.f32.mrb[0].mxu0
    %4000 = vdwg.mxu0
    %v4001 = vpack.c.bf16 %v3996, %v3996
    %v4002 = vld [vmem:[%s11 + $0x8] sm:$0xf]
    %v4003 = vld [vmem:[%s11 + $0xc] sm:$0xf]
    %v4006 = vunpack.c.l.b16 %v4002
    %v4007 = vunpack.c.l.b16 %v4003
    %v4008 = vpack.c.b16 %v4007, %v4006
    %v4011 = vsel %vm3778, %v4001, 0
    %4013 = vmatprep.subr.bf16.mxu0 0
    %4014 = vmatpush1.bf16.msra.mxu0 %v4008
    %4015 = vmatprep.subr.bf16.mxu0 0
    %4016 = vmatpush1.bf16.msra.mxu0 0
    %4017 = vmatprep.subr.bf16.mxu0 0
    %4018 = vmatpush1.bf16.msra.mxu0 0
    %4019 = vmatprep.subr.bf16.mxu0 0
    %4020 = vmatpush1.bf16.msra.mxu0 0
    %4021 = vmatprep.subr.bf16.mxu0 0
    %4022 = vmatpush1.bf16.msra.mxu0 0
    %4023 = vmatprep.subr.bf16.mxu0 0
    %4024 = vmatpush1.bf16.msra.mxu0 0
    %4025 = vmatprep.subr.bf16.mxu0 0
    %4026 = vmatpush1.bf16.msra.mxu0 0
    %4027 = vmatprep.subr.bf16.mxu0 0
    %4028 = vmatpush1.bf16.msra.mxu0 0
    %4029 = vmatprep.subr.bf16.mxu0 0
    %4030 = vmatpush1.bf16.msra.mxu0 0
    %4031 = vmatprep.subr.bf16.mxu0 0
    %4032 = vmatpush1.bf16.msra.mxu0 0
    %4033 = vmatprep.subr.bf16.mxu0 0
    %4034 = vmatpush1.bf16.msra.mxu0 0
    %4035 = vmatprep.subr.bf16.mxu0 0
    %4036 = vmatpush1.bf16.msra.mxu0 0
    %4037 = vmatprep.subr.bf16.mxu0 0
    %4038 = vmatpush1.bf16.msra.mxu0 0
    %4039 = vmatprep.subr.bf16.mxu0 0
    %4040 = vmatpush1.bf16.msra.mxu0 0
    %4041 = vmatprep.subr.bf16.mxu0 0
    %4042 = vmatpush1.bf16.msra.mxu0 0
    %4043 = vmatprep.subr.bf16.mxu0 0
    %4044 = vmatpush1.bf16.msra.mxu0 0
    %4045 = vmatprep.mubr.bf16.mxu0 0
    %4046 = vmatmul.mubr.bf16.gmra.mrb[0].mxu0 %v4011
    %v4047 = vpop.f32.mrb[0].mxu0
    %v4048 = vadd.f32 0.0, %v4047
    %v4049 = vpop.f32.mrb[0].mxu0
    %v4050 = vpop.f32.mrb[0].mxu0
    %v4051 = vpop.f32.mrb[0].mxu0
    %4052 = vdwg.mxu0
    %v4055 = vunpack.c.l.b16 %v3886
    %v4056 = vunpack.c.l.b16 %v3887
    %v4057 = vpack.c.b16 %v4056, %v4055
    %v4060 = vsel %vm3778, %v3885, 0
    %4062 = vmatprep.subr.bf16.mxu0 0
    %4063 = vmatpush1.bf16.msra.mxu0 %v4057
    %4064 = vmatprep.subr.bf16.mxu0 0
    %4065 = vmatpush1.bf16.msra.mxu0 0
    %4066 = vmatprep.subr.bf16.mxu0 0
    %4067 = vmatpush1.bf16.msra.mxu0 0
    %4068 = vmatprep.subr.bf16.mxu0 0
    %4069 = vmatpush1.bf16.msra.mxu0 0
    %4070 = vmatprep.subr.bf16.mxu0 0
    %4071 = vmatpush1.bf16.msra.mxu0 0
    %4072 = vmatprep.subr.bf16.mxu0 0
    %4073 = vmatpush1.bf16.msra.mxu0 0
    %4074 = vmatprep.subr.bf16.mxu0 0
    %4075 = vmatpush1.bf16.msra.mxu0 0
    %4076 = vmatprep.subr.bf16.mxu0 0
    %4077 = vmatpush1.bf16.msra.mxu0 0
    %4078 = vmatprep.subr.bf16.mxu0 0
    %4079 = vmatpush1.bf16.msra.mxu0 0
    %4080 = vmatprep.subr.bf16.mxu0 0
    %4081 = vmatpush1.bf16.msra.mxu0 0
    %4082 = vmatprep.subr.bf16.mxu0 0
    %4083 = vmatpush1.bf16.msra.mxu0 0
    %4084 = vmatprep.subr.bf16.mxu0 0
    %4085 = vmatpush1.bf16.msra.mxu0 0
    %4086 = vmatprep.subr.bf16.mxu0 0
    %4087 = vmatpush1.bf16.msra.mxu0 0
    %4088 = vmatprep.subr.bf16.mxu0 0
    %4089 = vmatpush1.bf16.msra.mxu0 0
    %4090 = vmatprep.subr.bf16.mxu0 0
    %4091 = vmatpush1.bf16.msra.mxu0 0
    %4092 = vmatprep.subr.bf16.mxu0 0
    %4093 = vmatpush1.bf16.msra.mxu0 0
    %4094 = vmatprep.mubr.bf16.mxu0 0
    %4095 = vmatmul.mubr.bf16.gmra.mrb[0].mxu0 %v4060
    %v4096 = vpop.f32.mrb[0].mxu0
    %v4097 = vadd.f32 %v4048, %v4096
    %v4098 = vpop.f32.mrb[0].mxu0
    %v4099 = vpop.f32.mrb[0].mxu0
    %v4100 = vpop.f32.mrb[0].mxu0
    %4101 = vdwg.mxu0
    %4102 = vrot.lane.b32.xlu0 %v3775, 96
    %v4103 = vpop.permute.xlu0 %4102
    %4104 = vrot.lane.b32.xlu0 %v3776, 96
    %v4105 = vpop.permute.xlu0 %4104
    %v4107 = vsel %vm3778, %v4103, 0
    %v4110 = vsel %vm3778, %v4105, 0
    %4112 = vmatprep.subr.bf16.mxu0 0
    %4113 = vmatpush1.bf16.xpose.msra.mxu0 %v4110
    %4114 = vmatprep.subr.bf16.mxu0 0
    %4115 = vmatpush1.bf16.xpose.msra.mxu0 0
    %4116 = vmatprep.subr.bf16.mxu0 0
    %4117 = vmatpush1.bf16.xpose.msra.mxu0 0
    %4118 = vmatprep.subr.bf16.mxu0 0
    %4119 = vmatpush1.bf16.xpose.msra.mxu0 0
    %4120 = vmatprep.subr.bf16.mxu0 0
    %4121 = vmatpush1.bf16.xpose.msra.mxu0 0
    %4122 = vmatprep.subr.bf16.mxu0 0
    %4123 = vmatpush1.bf16.xpose.msra.mxu0 0
    %4124 = vmatprep.subr.bf16.mxu0 0
    %4125 = vmatpush1.bf16.xpose.msra.mxu0 0
    %4126 = vmatprep.subr.bf16.mxu0 0
    %4127 = vmatpush1.bf16.xpose.msra.mxu0 0
    %4128 = vmatprep.subr.bf16.mxu0 0
    %4129 = vmatpush1.bf16.xpose.msra.mxu0 0
    %4130 = vmatprep.subr.bf16.mxu0 0
    %4131 = vmatpush1.bf16.xpose.msra.mxu0 0
    %4132 = vmatprep.subr.bf16.mxu0 0
    %4133 = vmatpush1.bf16.xpose.msra.mxu0 0
    %4134 = vmatprep.subr.bf16.mxu0 0
    %4135 = vmatpush1.bf16.xpose.msra.mxu0 0
    %4136 = vmatprep.subr.bf16.mxu0 0
    %4137 = vmatpush1.bf16.xpose.msra.mxu0 0
    %4138 = vmatprep.subr.bf16.mxu0 0
    %4139 = vmatpush1.bf16.xpose.msra.mxu0 0
    %4140 = vmatprep.subr.bf16.mxu0 0
    %4141 = vmatpush1.bf16.xpose.msra.mxu0 0
    %4142 = vmatprep.subr.bf16.mxu0 0
    %4143 = vmatpush1.bf16.xpose.msra.mxu0 0
    %4144 = vmatprep.mubr.bf16.mxu0 0
    %4145 = vmatmul.mubr.bf16.gmra.mrb[0].mxu0 %v4107
    %v4146 = vpop.f32.mrb[0].mxu0
    %v4147 = vadd.f32 0.0, %v4146
    %v4148 = vpop.f32.mrb[0].mxu0
    %v4149 = vpop.f32.mrb[0].mxu0
    %v4150 = vpop.f32.mrb[0].mxu0
    %4151 = vdwg.mxu0
    %v4152 = vsel %vm3825, %v4147, -inf
    %4153 = vmax.xlane.f32.xlu0 %v4152
    %v4154 = vpop.xlane.xlu0 %4153
    %v4155 = vsub.f32 %v4147, %v4154
    %v4156 = vmul.f32 %v4155, 1.442695
    %v4157 = vpow.pop %v4156
    %v4158 = vsel %vm3825, %v4157, 0.0
    %4159 = vadd.xlane.f32.xlu0 %v4158
    %v4160 = vpop.xlane.xlu0 %4159
    %v4161 = vrcp.pop %v4160
    %v4162 = vmul.f32 %v4157, %v4161
    %v4163 = vpack.c.bf16 %v4162, %v4162
    %4164 = vrot.lane.b32.xlu0 %v3777, 96
    %v4165 = vpop.permute.xlu0 %4164
    %v4167 = vsel %vm3838, %v4163, 0
    %v4170 = vsel %vm3504, %v4165, 0
    %4172 = vmatprep.subr.bf16.mxu0 0
    %4173 = vmatpush1.bf16.msra.mxu0 %v4170
    %4174 = vmatprep.subr.bf16.mxu0 0
    %4175 = vmatpush1.bf16.msra.mxu0 0
    %4176 = vmatprep.subr.bf16.mxu0 0
    %4177 = vmatpush1.bf16.msra.mxu0 0
    %4178 = vmatprep.subr.bf16.mxu0 0
    %4179 = vmatpush1.bf16.msra.mxu0 0
    %4180 = vmatprep.subr.bf16.mxu0 0
    %4181 = vmatpush1.bf16.msra.mxu0 0
    %4182 = vmatprep.subr.bf16.mxu0 0
    %4183 = vmatpush1.bf16.msra.mxu0 0
    %4184 = vmatprep.subr.bf16.mxu0 0
    %4185 = vmatpush1.bf16.msra.mxu0 0
    %4186 = vmatprep.subr.bf16.mxu0 0
    %4187 = vmatpush1.bf16.msra.mxu0 0
    %4188 = vmatprep.subr.bf16.mxu0 0
    %4189 = vmatpush1.bf16.msra.mxu0 0
    %4190 = vmatprep.subr.bf16.mxu0 0
    %4191 = vmatpush1.bf16.msra.mxu0 0
    %4192 = vmatprep.subr.bf16.mxu0 0
    %4193 = vmatpush1.bf16.msra.mxu0 0
    %4194 = vmatprep.subr.bf16.mxu0 0
    %4195 = vmatpush1.bf16.msra.mxu0 0
    %4196 = vmatprep.subr.bf16.mxu0 0
    %4197 = vmatpush1.bf16.msra.mxu0 0
    %4198 = vmatprep.subr.bf16.mxu0 0
    %4199 = vmatpush1.bf16.msra.mxu0 0
    %4200 = vmatprep.subr.bf16.mxu0 0
    %4201 = vmatpush1.bf16.msra.mxu0 0
    %4202 = vmatprep.subr.bf16.mxu0 0
    %4203 = vmatpush1.bf16.msra.mxu0 0
    %4204 = vmatprep.mubr.bf16.mxu0 0
    %4205 = vmatmul.mubr.bf16.gmra.mrb[0].mxu0 %v4167
    %v4206 = vpop.f32.mrb[0].mxu0
    %v4207 = vadd.f32 0.0, %v4206
    %v4208 = vpop.f32.mrb[0].mxu0
    %v4209 = vpop.f32.mrb[0].mxu0
    %v4210 = vpop.f32.mrb[0].mxu0
    %4211 = vdwg.mxu0
    %v4212 = vpack.c.bf16 %v4207, %v4207
    %v4213 = vld [vmem:[%s11 + $0x10] sm:$0xf]
    %v4214 = vld [vmem:[%s11 + $0x14] sm:$0xf]
    %v4217 = vunpack.c.l.b16 %v4213
    %v4218 = vunpack.c.l.b16 %v4214
    %v4219 = vpack.c.b16 %v4218, %v4217
    %v4222 = vsel %vm3778, %v4212, 0
    %4224 = vmatprep.subr.bf16.mxu0 0
    %4225 = vmatpush1.bf16.msra.mxu0 %v4219
    %4226 = vmatprep.subr.bf16.mxu0 0
    %4227 = vmatpush1.bf16.msra.mxu0 0
    %4228 = vmatprep.subr.bf16.mxu0 0
    %4229 = vmatpush1.bf16.msra.mxu0 0
    %4230 = vmatprep.subr.bf16.mxu0 0
    %4231 = vmatpush1.bf16.msra.mxu0 0
    %4232 = vmatprep.subr.bf16.mxu0 0
    %4233 = vmatpush1.bf16.msra.mxu0 0
    %4234 = vmatprep.subr.bf16.mxu0 0
    %4235 = vmatpush1.bf16.msra.mxu0 0
    %4236 = vmatprep.subr.bf16.mxu0 0
    %4237 = vmatpush1.bf16.msra.mxu0 0
    %4238 = vmatprep.subr.bf16.mxu0 0
    %4239 = vmatpush1.bf16.msra.mxu0 0
    %4240 = vmatprep.subr.bf16.mxu0 0
    %4241 = vmatpush1.bf16.msra.mxu0 0
    %4242 = vmatprep.subr.bf16.mxu0 0
    %4243 = vmatpush1.bf16.msra.mxu0 0
    %4244 = vmatprep.subr.bf16.mxu0 0
    %4245 = vmatpush1.bf16.msra.mxu0 0
    %4246 = vmatprep.subr.bf16.mxu0 0
    %4247 = vmatpush1.bf16.msra.mxu0 0
    %4248 = vmatprep.subr.bf16.mxu0 0
    %4249 = vmatpush1.bf16.msra.mxu0 0
    %4250 = vmatprep.subr.bf16.mxu0 0
    %4251 = vmatpush1.bf16.msra.mxu0 0
    %4252 = vmatprep.subr.bf16.mxu0 0
    %4253 = vmatpush1.bf16.msra.mxu0 0
    %4254 = vmatprep.subr.bf16.mxu0 0
    %4255 = vmatpush1.bf16.msra.mxu0 0
    %4256 = vmatprep.mubr.bf16.mxu0 0
    %4257 = vmatmul.mubr.bf16.gmra.mrb[0].mxu0 %v4222
    %v4258 = vpop.f32.mrb[0].mxu0
    %v4259 = vadd.f32 0.0, %v4258
    %v4260 = vpop.f32.mrb[0].mxu0
    %v4261 = vpop.f32.mrb[0].mxu0
    %v4262 = vpop.f32.mrb[0].mxu0
    %4263 = vdwg.mxu0
    %v4264 = vadd.f32 %v4097, %v4259
    %4265 = vrot.lane.b32.xlu0 %v3775, 80
    %v4266 = vpop.permute.xlu0 %4265
    %4267 = vrot.lane.b32.xlu0 %v3776, 80
    %v4268 = vpop.permute.xlu0 %4267
    %v4270 = vsel %vm3778, %v4266, 0
    %v4273 = vsel %vm3778, %v4268, 0
    %4275 = vmatprep.subr.bf16.mxu0 0
    %4276 = vmatpush1.bf16.xpose.msra.mxu0 %v4273
    %4277 = vmatprep.subr.bf16.mxu0 0
    %4278 = vmatpush1.bf16.xpose.msra.mxu0 0
    %4279 = vmatprep.subr.bf16.mxu0 0
    %4280 = vmatpush1.bf16.xpose.msra.mxu0 0
    %4281 = vmatprep.subr.bf16.mxu0 0
    %4282 = vmatpush1.bf16.xpose.msra.mxu0 0
    %4283 = vmatprep.subr.bf16.mxu0 0
    %4284 = vmatpush1.bf16.xpose.msra.mxu0 0
    %4285 = vmatprep.subr.bf16.mxu0 0
    %4286 = vmatpush1.bf16.xpose.msra.mxu0 0
    %4287 = vmatprep.subr.bf16.mxu0 0
    %4288 = vmatpush1.bf16.xpose.msra.mxu0 0
    %4289 = vmatprep.subr.bf16.mxu0 0
    %4290 = vmatpush1.bf16.xpose.msra.mxu0 0
    %4291 = vmatprep.subr.bf16.mxu0 0
    %4292 = vmatpush1.bf16.xpose.msra.mxu0 0
    %4293 = vmatprep.subr.bf16.mxu0 0
    %4294 = vmatpush1.bf16.xpose.msra.mxu0 0
    %4295 = vmatprep.subr.bf16.mxu0 0
    %4296 = vmatpush1.bf16.xpose.msra.mxu0 0
    %4297 = vmatprep.subr.bf16.mxu0 0
    %4298 = vmatpush1.bf16.xpose.msra.mxu0 0
    %4299 = vmatprep.subr.bf16.mxu0 0
    %4300 = vmatpush1.bf16.xpose.msra.mxu0 0
    %4301 = vmatprep.subr.bf16.mxu0 0
    %4302 = vmatpush1.bf16.xpose.msra.mxu0 0
    %4303 = vmatprep.subr.bf16.mxu0 0
    %4304 = vmatpush1.bf16.xpose.msra.mxu0 0
    %4305 = vmatprep.subr.bf16.mxu0 0
    %4306 = vmatpush1.bf16.xpose.msra.mxu0 0
    %4307 = vmatprep.mubr.bf16.mxu0 0
    %4308 = vmatmul.mubr.bf16.gmra.mrb[0].mxu0 %v4270
    %v4309 = vpop.f32.mrb[0].mxu0
    %v4310 = vadd.f32 0.0, %v4309
    %v4311 = vpop.f32.mrb[0].mxu0
    %v4312 = vpop.f32.mrb[0].mxu0
    %v4313 = vpop.f32.mrb[0].mxu0
    %4314 = vdwg.mxu0
    %v4315 = vsel %vm3825, %v4310, -inf
    %4316 = vmax.xlane.f32.xlu0 %v4315
    %v4317 = vpop.xlane.xlu0 %4316
    %v4318 = vsub.f32 %v4310, %v4317
    %v4319 = vmul.f32 %v4318, 1.442695
    %v4320 = vpow.pop %v4319
    %v4321 = vsel %vm3825, %v4320, 0.0
    %4322 = vadd.xlane.f32.xlu0 %v4321
    %v4323 = vpop.xlane.xlu0 %4322
    %v4324 = vrcp.pop %v4323
    %v4325 = vmul.f32 %v4320, %v4324
    %v4326 = vpack.c.bf16 %v4325, %v4325
    %4327 = vrot.lane.b32.xlu0 %v3777, 80
    %v4328 = vpop.permute.xlu0 %4327
    %v4330 = vsel %vm3838, %v4326, 0
    %v4333 = vsel %vm3504, %v4328, 0
    %4335 = vmatprep.subr.bf16.mxu0 0
    %4336 = vmatpush1.bf16.msra.mxu0 %v4333
    %4337 = vmatprep.subr.bf16.mxu0 0
    %4338 = vmatpush1.bf16.msra.mxu0 0
    %4339 = vmatprep.subr.bf16.mxu0 0
    %4340 = vmatpush1.bf16.msra.mxu0 0
    %4341 = vmatprep.subr.bf16.mxu0 0
    %4342 = vmatpush1.bf16.msra.mxu0 0
    %4343 = vmatprep.subr.bf16.mxu0 0
    %4344 = vmatpush1.bf16.msra.mxu0 0
    %4345 = vmatprep.subr.bf16.mxu0 0
    %4346 = vmatpush1.bf16.msra.mxu0 0
    %4347 = vmatprep.subr.bf16.mxu0 0
    %4348 = vmatpush1.bf16.msra.mxu0 0
    %4349 = vmatprep.subr.bf16.mxu0 0
    %4350 = vmatpush1.bf16.msra.mxu0 0
    %4351 = vmatprep.subr.bf16.mxu0 0
    %4352 = vmatpush1.bf16.msra.mxu0 0
    %4353 = vmatprep.subr.bf16.mxu0 0
    %4354 = vmatpush1.bf16.msra.mxu0 0
    %4355 = vmatprep.subr.bf16.mxu0 0
    %4356 = vmatpush1.bf16.msra.mxu0 0
    %4357 = vmatprep.subr.bf16.mxu0 0
    %4358 = vmatpush1.bf16.msra.mxu0 0
    %4359 = vmatprep.subr.bf16.mxu0 0
    %4360 = vmatpush1.bf16.msra.mxu0 0
    %4361 = vmatprep.subr.bf16.mxu0 0
    %4362 = vmatpush1.bf16.msra.mxu0 0
    %4363 = vmatprep.subr.bf16.mxu0 0
    %4364 = vmatpush1.bf16.msra.mxu0 0
    %4365 = vmatprep.subr.bf16.mxu0 0
    %4366 = vmatpush1.bf16.msra.mxu0 0
    %4367 = vmatprep.mubr.bf16.mxu0 0
    %4368 = vmatmul.mubr.bf16.gmra.mrb[0].mxu0 %v4330
    %v4369 = vpop.f32.mrb[0].mxu0
    %v4370 = vadd.f32 0.0, %v4369
    %v4371 = vpop.f32.mrb[0].mxu0
    %v4372 = vpop.f32.mrb[0].mxu0
    %v4373 = vpop.f32.mrb[0].mxu0
    %4374 = vdwg.mxu0
    %v4375 = vpack.c.bf16 %v4370, %v4370
    %v4376 = vld [vmem:[%s11 + $0x18] sm:$0xf]
    %v4377 = vld [vmem:[%s11 + $0x1c] sm:$0xf]
    %v4380 = vunpack.c.l.b16 %v4376
    %v4381 = vunpack.c.l.b16 %v4377
    %v4382 = vpack.c.b16 %v4381, %v4380
    %v4385 = vsel %vm3778, %v4375, 0
    %4387 = vmatprep.subr.bf16.mxu0 0
    %4388 = vmatpush1.bf16.msra.mxu0 %v4382
    %4389 = vmatprep.subr.bf16.mxu0 0
    %4390 = vmatpush1.bf16.msra.mxu0 0
    %4391 = vmatprep.subr.bf16.mxu0 0
    %4392 = vmatpush1.bf16.msra.mxu0 0
    %4393 = vmatprep.subr.bf16.mxu0 0
    %4394 = vmatpush1.bf16.msra.mxu0 0
    %4395 = vmatprep.subr.bf16.mxu0 0
    %4396 = vmatpush1.bf16.msra.mxu0 0
    %4397 = vmatprep.subr.bf16.mxu0 0
    %4398 = vmatpush1.bf16.msra.mxu0 0
    %4399 = vmatprep.subr.bf16.mxu0 0
    %4400 = vmatpush1.bf16.msra.mxu0 0
    %4401 = vmatprep.subr.bf16.mxu0 0
    %4402 = vmatpush1.bf16.msra.mxu0 0
    %4403 = vmatprep.subr.bf16.mxu0 0
    %4404 = vmatpush1.bf16.msra.mxu0 0
    %4405 = vmatprep.subr.bf16.mxu0 0
    %4406 = vmatpush1.bf16.msra.mxu0 0
    %4407 = vmatprep.subr.bf16.mxu0 0
    %4408 = vmatpush1.bf16.msra.mxu0 0
    %4409 = vmatprep.subr.bf16.mxu0 0
    %4410 = vmatpush1.bf16.msra.mxu0 0
    %4411 = vmatprep.subr.bf16.mxu0 0
    %4412 = vmatpush1.bf16.msra.mxu0 0
    %4413 = vmatprep.subr.bf16.mxu0 0
    %4414 = vmatpush1.bf16.msra.mxu0 0
    %4415 = vmatprep.subr.bf16.mxu0 0
    %4416 = vmatpush1.bf16.msra.mxu0 0
    %4417 = vmatprep.subr.bf16.mxu0 0
    %4418 = vmatpush1.bf16.msra.mxu0 0
    %4419 = vmatprep.mubr.bf16.mxu0 0
    %4420 = vmatmul.mubr.bf16.gmra.mrb[0].mxu0 %v4385
    %v4421 = vpop.f32.mrb[0].mxu0
    %v4422 = vadd.f32 0.0, %v4421
    %v4423 = vpop.f32.mrb[0].mxu0
    %v4424 = vpop.f32.mrb[0].mxu0
    %v4425 = vpop.f32.mrb[0].mxu0
    %4426 = vdwg.mxu0
    %v4427 = vadd.f32 %v4264, %v4422
    %4428 = vrot.lane.b32.xlu0 %v3775, 64
    %v4429 = vpop.permute.xlu0 %4428
    %4430 = vrot.lane.b32.xlu0 %v3776, 64
    %v4431 = vpop.permute.xlu0 %4430
    %v4433 = vsel %vm3778, %v4429, 0
    %v4436 = vsel %vm3778, %v4431, 0
    %4438 = vmatprep.subr.bf16.mxu0 0
    %4439 = vmatpush1.bf16.xpose.msra.mxu0 %v4436
    %4440 = vmatprep.subr.bf16.mxu0 0
    %4441 = vmatpush1.bf16.xpose.msra.mxu0 0
    %4442 = vmatprep.subr.bf16.mxu0 0
    %4443 = vmatpush1.bf16.xpose.msra.mxu0 0
    %4444 = vmatprep.subr.bf16.mxu0 0
    %4445 = vmatpush1.bf16.xpose.msra.mxu0 0
    %4446 = vmatprep.subr.bf16.mxu0 0
    %4447 = vmatpush1.bf16.xpose.msra.mxu0 0
    %4448 = vmatprep.subr.bf16.mxu0 0
    %4449 = vmatpush1.bf16.xpose.msra.mxu0 0
    %4450 = vmatprep.subr.bf16.mxu0 0
    %4451 = vmatpush1.bf16.xpose.msra.mxu0 0
    %4452 = vmatprep.subr.bf16.mxu0 0
    %4453 = vmatpush1.bf16.xpose.msra.mxu0 0
    %4454 = vmatprep.subr.bf16.mxu0 0
    %4455 = vmatpush1.bf16.xpose.msra.mxu0 0
    %4456 = vmatprep.subr.bf16.mxu0 0
    %4457 = vmatpush1.bf16.xpose.msra.mxu0 0
    %4458 = vmatprep.subr.bf16.mxu0 0
    %4459 = vmatpush1.bf16.xpose.msra.mxu0 0
    %4460 = vmatprep.subr.bf16.mxu0 0
    %4461 = vmatpush1.bf16.xpose.msra.mxu0 0
    %4462 = vmatprep.subr.bf16.mxu0 0
    %4463 = vmatpush1.bf16.xpose.msra.mxu0 0
    %4464 = vmatprep.subr.bf16.mxu0 0
    %4465 = vmatpush1.bf16.xpose.msra.mxu0 0
    %4466 = vmatprep.subr.bf16.mxu0 0
    %4467 = vmatpush1.bf16.xpose.msra.mxu0 0
    %4468 = vmatprep.subr.bf16.mxu0 0
    %4469 = vmatpush1.bf16.xpose.msra.mxu0 0
    %4470 = vmatprep.mubr.bf16.mxu0 0
    %4471 = vmatmul.mubr.bf16.gmra.mrb[0].mxu0 %v4433
    %v4472 = vpop.f32.mrb[0].mxu0
    %v4473 = vadd.f32 0.0, %v4472
    %v4474 = vpop.f32.mrb[0].mxu0
    %v4475 = vpop.f32.mrb[0].mxu0
    %v4476 = vpop.f32.mrb[0].mxu0
    %4477 = vdwg.mxu0
    %v4478 = vsel %vm3825, %v4473, -inf
    %4479 = vmax.xlane.f32.xlu0 %v4478
    %v4480 = vpop.xlane.xlu0 %4479
    %v4481 = vsub.f32 %v4473, %v4480
    %v4482 = vmul.f32 %v4481, 1.442695
    %v4483 = vpow.pop %v4482
    %v4484 = vsel %vm3825, %v4483, 0.0
    %4485 = vadd.xlane.f32.xlu0 %v4484
    %v4486 = vpop.xlane.xlu0 %4485
    %v4487 = vrcp.pop %v4486
    %v4488 = vmul.f32 %v4483, %v4487
    %v4489 = vpack.c.bf16 %v4488, %v4488
    %4490 = vrot.lane.b32.xlu0 %v3777, 64
    %v4491 = vpop.permute.xlu0 %4490
    %v4493 = vsel %vm3838, %v4489, 0
    %v4496 = vsel %vm3504, %v4491, 0
    %4498 = vmatprep.subr.bf16.mxu0 0
    %4499 = vmatpush1.bf16.msra.mxu0 %v4496
    %4500 = vmatprep.subr.bf16.mxu0 0
    %4501 = vmatpush1.bf16.msra.mxu0 0
    %4502 = vmatprep.subr.bf16.mxu0 0
    %4503 = vmatpush1.bf16.msra.mxu0 0
    %4504 = vmatprep.subr.bf16.mxu0 0
    %4505 = vmatpush1.bf16.msra.mxu0 0
    %4506 = vmatprep.subr.bf16.mxu0 0
    %4507 = vmatpush1.bf16.msra.mxu0 0
    %4508 = vmatprep.subr.bf16.mxu0 0
    %4509 = vmatpush1.bf16.msra.mxu0 0
    %4510 = vmatprep.subr.bf16.mxu0 0
    %4511 = vmatpush1.bf16.msra.mxu0 0
    %4512 = vmatprep.subr.bf16.mxu0 0
    %4513 = vmatpush1.bf16.msra.mxu0 0
    %4514 = vmatprep.subr.bf16.mxu0 0
    %4515 = vmatpush1.bf16.msra.mxu0 0
    %4516 = vmatprep.subr.bf16.mxu0 0
    %4517 = vmatpush1.bf16.msra.mxu0 0
    %4518 = vmatprep.subr.bf16.mxu0 0
    %4519 = vmatpush1.bf16.msra.mxu0 0
    %4520 = vmatprep.subr.bf16.mxu0 0
    %4521 = vmatpush1.bf16.msra.mxu0 0
    %4522 = vmatprep.subr.bf16.mxu0 0
    %4523 = vmatpush1.bf16.msra.mxu0 0
    %4524 = vmatprep.subr.bf16.mxu0 0
    %4525 = vmatpush1.bf16.msra.mxu0 0
    %4526 = vmatprep.subr.bf16.mxu0 0
    %4527 = vmatpush1.bf16.msra.mxu0 0
    %4528 = vmatprep.subr.bf16.mxu0 0
    %4529 = vmatpush1.bf16.msra.mxu0 0
    %4530 = vmatprep.mubr.bf16.mxu0 0
    %4531 = vmatmul.mubr.bf16.gmra.mrb[0].mxu0 %v4493
    %v4532 = vpop.f32.mrb[0].mxu0
    %v4533 = vadd.f32 0.0, %v4532
    %v4534 = vpop.f32.mrb[0].mxu0
    %v4535 = vpop.f32.mrb[0].mxu0
    %v4536 = vpop.f32.mrb[0].mxu0
    %4537 = vdwg.mxu0
    %v4538 = vpack.c.bf16 %v4533, %v4533
    %v4539 = vld [vmem:[%s11 + $0x20] sm:$0xf]
    %v4540 = vld [vmem:[%s11 + $0x24] sm:$0xf]
    %v4543 = vunpack.c.l.b16 %v4539
    %v4544 = vunpack.c.l.b16 %v4540
    %v4545 = vpack.c.b16 %v4544, %v4543
    %v4548 = vsel %vm3778, %v4538, 0
    %4550 = vmatprep.subr.bf16.mxu0 0
    %4551 = vmatpush1.bf16.msra.mxu0 %v4545
    %4552 = vmatprep.subr.bf16.mxu0 0
    %4553 = vmatpush1.bf16.msra.mxu0 0
    %4554 = vmatprep.subr.bf16.mxu0 0
    %4555 = vmatpush1.bf16.msra.mxu0 0
    %4556 = vmatprep.subr.bf16.mxu0 0
    %4557 = vmatpush1.bf16.msra.mxu0 0
    %4558 = vmatprep.subr.bf16.mxu0 0
    %4559 = vmatpush1.bf16.msra.mxu0 0
    %4560 = vmatprep.subr.bf16.mxu0 0
    %4561 = vmatpush1.bf16.msra.mxu0 0
    %4562 = vmatprep.subr.bf16.mxu0 0
    %4563 = vmatpush1.bf16.msra.mxu0 0
    %4564 = vmatprep.subr.bf16.mxu0 0
    %4565 = vmatpush1.bf16.msra.mxu0 0
    %4566 = vmatprep.subr.bf16.mxu0 0
    %4567 = vmatpush1.bf16.msra.mxu0 0
    %4568 = vmatprep.subr.bf16.mxu0 0
    %4569 = vmatpush1.bf16.msra.mxu0 0
    %4570 = vmatprep.subr.bf16.mxu0 0
    %4571 = vmatpush1.bf16.msra.mxu0 0
    %4572 = vmatprep.subr.bf16.mxu0 0
    %4573 = vmatpush1.bf16.msra.mxu0 0
    %4574 = vmatprep.subr.bf16.mxu0 0
    %4575 = vmatpush1.bf16.msra.mxu0 0
    %4576 = vmatprep.subr.bf16.mxu0 0
    %4577 = vmatpush1.bf16.msra.mxu0 0
    %4578 = vmatprep.subr.bf16.mxu0 0
    %4579 = vmatpush1.bf16.msra.mxu0 0
    %4580 = vmatprep.subr.bf16.mxu0 0
    %4581 = vmatpush1.bf16.msra.mxu0 0
    %4582 = vmatprep.mubr.bf16.mxu0 0
    %4583 = vmatmul.mubr.bf16.gmra.mrb[0].mxu0 %v4548
    %v4584 = vpop.f32.mrb[0].mxu0
    %v4585 = vadd.f32 0.0, %v4584
    %v4586 = vpop.f32.mrb[0].mxu0
    %v4587 = vpop.f32.mrb[0].mxu0
    %v4588 = vpop.f32.mrb[0].mxu0
    %4589 = vdwg.mxu0
    %v4590 = vadd.f32 %v4427, %v4585
    %4591 = vrot.lane.b32.xlu0 %v3775, 48
    %v4592 = vpop.permute.xlu0 %4591
    %4593 = vrot.lane.b32.xlu0 %v3776, 48
    %v4594 = vpop.permute.xlu0 %4593
    %v4596 = vsel %vm3778, %v4592, 0
    %v4599 = vsel %vm3778, %v4594, 0
    %4601 = vmatprep.subr.bf16.mxu0 0
    %4602 = vmatpush1.bf16.xpose.msra.mxu0 %v4599
    %4603 = vmatprep.subr.bf16.mxu0 0
    %4604 = vmatpush1.bf16.xpose.msra.mxu0 0
    %4605 = vmatprep.subr.bf16.mxu0 0
    %4606 = vmatpush1.bf16.xpose.msra.mxu0 0
    %4607 = vmatprep.subr.bf16.mxu0 0
    %4608 = vmatpush1.bf16.xpose.msra.mxu0 0
    %4609 = vmatprep.subr.bf16.mxu0 0
    %4610 = vmatpush1.bf16.xpose.msra.mxu0 0
    %4611 = vmatprep.subr.bf16.mxu0 0
    %4612 = vmatpush1.bf16.xpose.msra.mxu0 0
    %4613 = vmatprep.subr.bf16.mxu0 0
    %4614 = vmatpush1.bf16.xpose.msra.mxu0 0
    %4615 = vmatprep.subr.bf16.mxu0 0
    %4616 = vmatpush1.bf16.xpose.msra.mxu0 0
    %4617 = vmatprep.subr.bf16.mxu0 0
    %4618 = vmatpush1.bf16.xpose.msra.mxu0 0
    %4619 = vmatprep.subr.bf16.mxu0 0
    %4620 = vmatpush1.bf16.xpose.msra.mxu0 0
    %4621 = vmatprep.subr.bf16.mxu0 0
    %4622 = vmatpush1.bf16.xpose.msra.mxu0 0
    %4623 = vmatprep.subr.bf16.mxu0 0
    %4624 = vmatpush1.bf16.xpose.msra.mxu0 0
    %4625 = vmatprep.subr.bf16.mxu0 0
    %4626 = vmatpush1.bf16.xpose.msra.mxu0 0
    %4627 = vmatprep.subr.bf16.mxu0 0
    %4628 = vmatpush1.bf16.xpose.msra.mxu0 0
    %4629 = vmatprep.subr.bf16.mxu0 0
    %4630 = vmatpush1.bf16.xpose.msra.mxu0 0
    %4631 = vmatprep.subr.bf16.mxu0 0
    %4632 = vmatpush1.bf16.xpose.msra.mxu0 0
    %4633 = vmatprep.mubr.bf16.mxu0 0
    %4634 = vmatmul.mubr.bf16.gmra.mrb[0].mxu0 %v4596
    %v4635 = vpop.f32.mrb[0].mxu0
    %v4636 = vadd.f32 0.0, %v4635
    %v4637 = vpop.f32.mrb[0].mxu0
    %v4638 = vpop.f32.mrb[0].mxu0
    %v4639 = vpop.f32.mrb[0].mxu0
    %4640 = vdwg.mxu0
    %v4641 = vsel %vm3825, %v4636, -inf
    %4642 = vmax.xlane.f32.xlu0 %v4641
    %v4643 = vpop.xlane.xlu0 %4642
    %v4644 = vsub.f32 %v4636, %v4643
    %v4645 = vmul.f32 %v4644, 1.442695
    %v4646 = vpow.pop %v4645
    %v4647 = vsel %vm3825, %v4646, 0.0
    %4648 = vadd.xlane.f32.xlu0 %v4647
    %v4649 = vpop.xlane.xlu0 %4648
    %v4650 = vrcp.pop %v4649
    %v4651 = vmul.f32 %v4646, %v4650
    %v4652 = vpack.c.bf16 %v4651, %v4651
    %4653 = vrot.lane.b32.xlu0 %v3777, 48
    %v4654 = vpop.permute.xlu0 %4653
    %v4656 = vsel %vm3838, %v4652, 0
    %v4659 = vsel %vm3504, %v4654, 0
    %4661 = vmatprep.subr.bf16.mxu0 0
    %4662 = vmatpush1.bf16.msra.mxu0 %v4659
    %4663 = vmatprep.subr.bf16.mxu0 0
    %4664 = vmatpush1.bf16.msra.mxu0 0
    %4665 = vmatprep.subr.bf16.mxu0 0
    %4666 = vmatpush1.bf16.msra.mxu0 0
    %4667 = vmatprep.subr.bf16.mxu0 0
    %4668 = vmatpush1.bf16.msra.mxu0 0
    %4669 = vmatprep.subr.bf16.mxu0 0
    %4670 = vmatpush1.bf16.msra.mxu0 0
    %4671 = vmatprep.subr.bf16.mxu0 0
    %4672 = vmatpush1.bf16.msra.mxu0 0
    %4673 = vmatprep.subr.bf16.mxu0 0
    %4674 = vmatpush1.bf16.msra.mxu0 0
    %4675 = vmatprep.subr.bf16.mxu0 0
    %4676 = vmatpush1.bf16.msra.mxu0 0
    %4677 = vmatprep.subr.bf16.mxu0 0
    %4678 = vmatpush1.bf16.msra.mxu0 0
    %4679 = vmatprep.subr.bf16.mxu0 0
    %4680 = vmatpush1.bf16.msra.mxu0 0
    %4681 = vmatprep.subr.bf16.mxu0 0
    %4682 = vmatpush1.bf16.msra.mxu0 0
    %4683 = vmatprep.subr.bf16.mxu0 0
    %4684 = vmatpush1.bf16.msra.mxu0 0
    %4685 = vmatprep.subr.bf16.mxu0 0
    %4686 = vmatpush1.bf16.msra.mxu0 0
    %4687 = vmatprep.subr.bf16.mxu0 0
    %4688 = vmatpush1.bf16.msra.mxu0 0
    %4689 = vmatprep.subr.bf16.mxu0 0
    %4690 = vmatpush1.bf16.msra.mxu0 0
    %4691 = vmatprep.subr.bf16.mxu0 0
    %4692 = vmatpush1.bf16.msra.mxu0 0
    %4693 = vmatprep.mubr.bf16.mxu0 0
    %4694 = vmatmul.mubr.bf16.gmra.mrb[0].mxu0 %v4656
    %v4695 = vpop.f32.mrb[0].mxu0
    %v4696 = vadd.f32 0.0, %v4695
    %v4697 = vpop.f32.mrb[0].mxu0
    %v4698 = vpop.f32.mrb[0].mxu0
    %v4699 = vpop.f32.mrb[0].mxu0
    %4700 = vdwg.mxu0
    %v4701 = vpack.c.bf16 %v4696, %v4696
    %v4702 = vld [vmem:[%s11 + $0x28] sm:$0xf]
    %v4703 = vld [vmem:[%s11 + $0x2c] sm:$0xf]
    %v4706 = vunpack.c.l.b16 %v4702
    %v4707 = vunpack.c.l.b16 %v4703
    %v4708 = vpack.c.b16 %v4707, %v4706
    %v4711 = vsel %vm3778, %v4701, 0
    %4713 = vmatprep.subr.bf16.mxu0 0
    %4714 = vmatpush1.bf16.msra.mxu0 %v4708
    %4715 = vmatprep.subr.bf16.mxu0 0
    %4716 = vmatpush1.bf16.msra.mxu0 0
    %4717 = vmatprep.subr.bf16.mxu0 0
    %4718 = vmatpush1.bf16.msra.mxu0 0
    %4719 = vmatprep.subr.bf16.mxu0 0
    %4720 = vmatpush1.bf16.msra.mxu0 0
    %4721 = vmatprep.subr.bf16.mxu0 0
    %4722 = vmatpush1.bf16.msra.mxu0 0
    %4723 = vmatprep.subr.bf16.mxu0 0
    %4724 = vmatpush1.bf16.msra.mxu0 0
    %4725 = vmatprep.subr.bf16.mxu0 0
    %4726 = vmatpush1.bf16.msra.mxu0 0
    %4727 = vmatprep.subr.bf16.mxu0 0
    %4728 = vmatpush1.bf16.msra.mxu0 0
    %4729 = vmatprep.subr.bf16.mxu0 0
    %4730 = vmatpush1.bf16.msra.mxu0 0
    %4731 = vmatprep.subr.bf16.mxu0 0
    %4732 = vmatpush1.bf16.msra.mxu0 0
    %4733 = vmatprep.subr.bf16.mxu0 0
    %4734 = vmatpush1.bf16.msra.mxu0 0
    %4735 = vmatprep.subr.bf16.mxu0 0
    %4736 = vmatpush1.bf16.msra.mxu0 0
    %4737 = vmatprep.subr.bf16.mxu0 0
    %4738 = vmatpush1.bf16.msra.mxu0 0
    %4739 = vmatprep.subr.bf16.mxu0 0
    %4740 = vmatpush1.bf16.msra.mxu0 0
    %4741 = vmatprep.subr.bf16.mxu0 0
    %4742 = vmatpush1.bf16.msra.mxu0 0
    %4743 = vmatprep.subr.bf16.mxu0 0
    %4744 = vmatpush1.bf16.msra.mxu0 0
    %4745 = vmatprep.mubr.bf16.mxu0 0
    %4746 = vmatmul.mubr.bf16.gmra.mrb[0].mxu0 %v4711
    %v4747 = vpop.f32.mrb[0].mxu0
    %v4748 = vadd.f32 0.0, %v4747
    %v4749 = vpop.f32.mrb[0].mxu0
    %v4750 = vpop.f32.mrb[0].mxu0
    %v4751 = vpop.f32.mrb[0].mxu0
    %4752 = vdwg.mxu0
    %v4753 = vadd.f32 %v4590, %v4748
    %4754 = vrot.lane.b32.xlu0 %v3775, 32
    %v4755 = vpop.permute.xlu0 %4754
    %4756 = vrot.lane.b32.xlu0 %v3776, 32
    %v4757 = vpop.permute.xlu0 %4756
    %v4759 = vsel %vm3778, %v4755, 0
    %v4762 = vsel %vm3778, %v4757, 0
    %4764 = vmatprep.subr.bf16.mxu0 0
    %4765 = vmatpush1.bf16.xpose.msra.mxu0 %v4762
    %4766 = vmatprep.subr.bf16.mxu0 0
    %4767 = vmatpush1.bf16.xpose.msra.mxu0 0
    %4768 = vmatprep.subr.bf16.mxu0 0
    %4769 = vmatpush1.bf16.xpose.msra.mxu0 0
    %4770 = vmatprep.subr.bf16.mxu0 0
    %4771 = vmatpush1.bf16.xpose.msra.mxu0 0
    %4772 = vmatprep.subr.bf16.mxu0 0
    %4773 = vmatpush1.bf16.xpose.msra.mxu0 0
    %4774 = vmatprep.subr.bf16.mxu0 0
    %4775 = vmatpush1.bf16.xpose.msra.mxu0 0
    %4776 = vmatprep.subr.bf16.mxu0 0
    %4777 = vmatpush1.bf16.xpose.msra.mxu0 0
    %4778 = vmatprep.subr.bf16.mxu0 0
    %4779 = vmatpush1.bf16.xpose.msra.mxu0 0
    %4780 = vmatprep.subr.bf16.mxu0 0
    %4781 = vmatpush1.bf16.xpose.msra.mxu0 0
    %4782 = vmatprep.subr.bf16.mxu0 0
    %4783 = vmatpush1.bf16.xpose.msra.mxu0 0
    %4784 = vmatprep.subr.bf16.mxu0 0
    %4785 = vmatpush1.bf16.xpose.msra.mxu0 0
    %4786 = vmatprep.subr.bf16.mxu0 0
    %4787 = vmatpush1.bf16.xpose.msra.mxu0 0
    %4788 = vmatprep.subr.bf16.mxu0 0
    %4789 = vmatpush1.bf16.xpose.msra.mxu0 0
    %4790 = vmatprep.subr.bf16.mxu0 0
    %4791 = vmatpush1.bf16.xpose.msra.mxu0 0
    %4792 = vmatprep.subr.bf16.mxu0 0
    %4793 = vmatpush1.bf16.xpose.msra.mxu0 0
    %4794 = vmatprep.subr.bf16.mxu0 0
    %4795 = vmatpush1.bf16.xpose.msra.mxu0 0
    %4796 = vmatprep.mubr.bf16.mxu0 0
    %4797 = vmatmul.mubr.bf16.gmra.mrb[0].mxu0 %v4759
    %v4798 = vpop.f32.mrb[0].mxu0
    %v4799 = vadd.f32 0.0, %v4798
    %v4800 = vpop.f32.mrb[0].mxu0
    %v4801 = vpop.f32.mrb[0].mxu0
    %v4802 = vpop.f32.mrb[0].mxu0
    %4803 = vdwg.mxu0
    %v4804 = vsel %vm3825, %v4799, -inf
    %4805 = vmax.xlane.f32.xlu0 %v4804
    %v4806 = vpop.xlane.xlu0 %4805
    %v4807 = vsub.f32 %v4799, %v4806
    %v4808 = vmul.f32 %v4807, 1.442695
    %v4809 = vpow.pop %v4808
    %v4810 = vsel %vm3825, %v4809, 0.0
    %4811 = vadd.xlane.f32.xlu0 %v4810
    %v4812 = vpop.xlane.xlu0 %4811
    %v4813 = vrcp.pop %v4812
    %v4814 = vmul.f32 %v4809, %v4813
    %v4815 = vpack.c.bf16 %v4814, %v4814
    %4816 = vrot.lane.b32.xlu0 %v3777, 32
    %v4817 = vpop.permute.xlu0 %4816
    %v4819 = vsel %vm3838, %v4815, 0
    %v4822 = vsel %vm3504, %v4817, 0
    %4824 = vmatprep.subr.bf16.mxu0 0
    %4825 = vmatpush1.bf16.msra.mxu0 %v4822
    %4826 = vmatprep.subr.bf16.mxu0 0
    %4827 = vmatpush1.bf16.msra.mxu0 0
    %4828 = vmatprep.subr.bf16.mxu0 0
    %4829 = vmatpush1.bf16.msra.mxu0 0
    %4830 = vmatprep.subr.bf16.mxu0 0
    %4831 = vmatpush1.bf16.msra.mxu0 0
    %4832 = vmatprep.subr.bf16.mxu0 0
    %4833 = vmatpush1.bf16.msra.mxu0 0
    %4834 = vmatprep.subr.bf16.mxu0 0
    %4835 = vmatpush1.bf16.msra.mxu0 0
    %4836 = vmatprep.subr.bf16.mxu0 0
    %4837 = vmatpush1.bf16.msra.mxu0 0
    %4838 = vmatprep.subr.bf16.mxu0 0
    %4839 = vmatpush1.bf16.msra.mxu0 0
    %4840 = vmatprep.subr.bf16.mxu0 0
    %4841 = vmatpush1.bf16.msra.mxu0 0
    %4842 = vmatprep.subr.bf16.mxu0 0
    %4843 = vmatpush1.bf16.msra.mxu0 0
    %4844 = vmatprep.subr.bf16.mxu0 0
    %4845 = vmatpush1.bf16.msra.mxu0 0
    %4846 = vmatprep.subr.bf16.mxu0 0
    %4847 = vmatpush1.bf16.msra.mxu0 0
    %4848 = vmatprep.subr.bf16.mxu0 0
    %4849 = vmatpush1.bf16.msra.mxu0 0
    %4850 = vmatprep.subr.bf16.mxu0 0
    %4851 = vmatpush1.bf16.msra.mxu0 0
    %4852 = vmatprep.subr.bf16.mxu0 0
    %4853 = vmatpush1.bf16.msra.mxu0 0
    %4854 = vmatprep.subr.bf16.mxu0 0
    %4855 = vmatpush1.bf16.msra.mxu0 0
    %4856 = vmatprep.mubr.bf16.mxu0 0
    %4857 = vmatmul.mubr.bf16.gmra.mrb[0].mxu0 %v4819
    %v4858 = vpop.f32.mrb[0].mxu0
    %v4859 = vadd.f32 0.0, %v4858
    %v4860 = vpop.f32.mrb[0].mxu0
    %v4861 = vpop.f32.mrb[0].mxu0
    %v4862 = vpop.f32.mrb[0].mxu0
    %4863 = vdwg.mxu0
    %v4864 = vpack.c.bf16 %v4859, %v4859
    %v4865 = vld [vmem:[%s11 + $0x30] sm:$0xf]
    %v4866 = vld [vmem:[%s11 + $0x34] sm:$0xf]
    %v4869 = vunpack.c.l.b16 %v4865
    %v4870 = vunpack.c.l.b16 %v4866
    %v4871 = vpack.c.b16 %v4870, %v4869
    %v4874 = vsel %vm3778, %v4864, 0
    %4876 = vmatprep.subr.bf16.mxu0 0
    %4877 = vmatpush1.bf16.msra.mxu0 %v4871
    %4878 = vmatprep.subr.bf16.mxu0 0
    %4879 = vmatpush1.bf16.msra.mxu0 0
    %4880 = vmatprep.subr.bf16.mxu0 0
    %4881 = vmatpush1.bf16.msra.mxu0 0
    %4882 = vmatprep.subr.bf16.mxu0 0
    %4883 = vmatpush1.bf16.msra.mxu0 0
    %4884 = vmatprep.subr.bf16.mxu0 0
    %4885 = vmatpush1.bf16.msra.mxu0 0
    %4886 = vmatprep.subr.bf16.mxu0 0
    %4887 = vmatpush1.bf16.msra.mxu0 0
    %4888 = vmatprep.subr.bf16.mxu0 0
    %4889 = vmatpush1.bf16.msra.mxu0 0
    %4890 = vmatprep.subr.bf16.mxu0 0
    %4891 = vmatpush1.bf16.msra.mxu0 0
    %4892 = vmatprep.subr.bf16.mxu0 0
    %4893 = vmatpush1.bf16.msra.mxu0 0
    %4894 = vmatprep.subr.bf16.mxu0 0
    %4895 = vmatpush1.bf16.msra.mxu0 0
    %4896 = vmatprep.subr.bf16.mxu0 0
    %4897 = vmatpush1.bf16.msra.mxu0 0
    %4898 = vmatprep.subr.bf16.mxu0 0
    %4899 = vmatpush1.bf16.msra.mxu0 0
    %4900 = vmatprep.subr.bf16.mxu0 0
    %4901 = vmatpush1.bf16.msra.mxu0 0
    %4902 = vmatprep.subr.bf16.mxu0 0
    %4903 = vmatpush1.bf16.msra.mxu0 0
    %4904 = vmatprep.subr.bf16.mxu0 0
    %4905 = vmatpush1.bf16.msra.mxu0 0
    %4906 = vmatprep.subr.bf16.mxu0 0
    %4907 = vmatpush1.bf16.msra.mxu0 0
    %4908 = vmatprep.mubr.bf16.mxu0 0
    %4909 = vmatmul.mubr.bf16.gmra.mrb[0].mxu0 %v4874
    %v4910 = vpop.f32.mrb[0].mxu0
    %v4911 = vadd.f32 0.0, %v4910
    %v4912 = vpop.f32.mrb[0].mxu0
    %v4913 = vpop.f32.mrb[0].mxu0
    %v4914 = vpop.f32.mrb[0].mxu0
    %4915 = vdwg.mxu0
    %v4916 = vadd.f32 %v4753, %v4911
    %4917 = vrot.lane.b32.xlu0 %v3775, 16
    %v4918 = vpop.permute.xlu0 %4917
    %4919 = vrot.lane.b32.xlu0 %v3776, 16
    %v4920 = vpop.permute.xlu0 %4919
    %v4922 = vsel %vm3778, %v4918, 0
    %v4925 = vsel %vm3778, %v4920, 0
    %4927 = vmatprep.subr.bf16.mxu0 0
    %4928 = vmatpush1.bf16.xpose.msra.mxu0 %v4925
    %4929 = vmatprep.subr.bf16.mxu0 0
    %4930 = vmatpush1.bf16.xpose.msra.mxu0 0
    %4931 = vmatprep.subr.bf16.mxu0 0
    %4932 = vmatpush1.bf16.xpose.msra.mxu0 0
    %4933 = vmatprep.subr.bf16.mxu0 0
    %4934 = vmatpush1.bf16.xpose.msra.mxu0 0
    %4935 = vmatprep.subr.bf16.mxu0 0
    %4936 = vmatpush1.bf16.xpose.msra.mxu0 0
    %4937 = vmatprep.subr.bf16.mxu0 0
    %4938 = vmatpush1.bf16.xpose.msra.mxu0 0
    %4939 = vmatprep.subr.bf16.mxu0 0
    %4940 = vmatpush1.bf16.xpose.msra.mxu0 0
    %4941 = vmatprep.subr.bf16.mxu0 0
    %4942 = vmatpush1.bf16.xpose.msra.mxu0 0
    %4943 = vmatprep.subr.bf16.mxu0 0
    %4944 = vmatpush1.bf16.xpose.msra.mxu0 0
    %4945 = vmatprep.subr.bf16.mxu0 0
    %4946 = vmatpush1.bf16.xpose.msra.mxu0 0
    %4947 = vmatprep.subr.bf16.mxu0 0
    %4948 = vmatpush1.bf16.xpose.msra.mxu0 0
    %4949 = vmatprep.subr.bf16.mxu0 0
    %4950 = vmatpush1.bf16.xpose.msra.mxu0 0
    %4951 = vmatprep.subr.bf16.mxu0 0
    %4952 = vmatpush1.bf16.xpose.msra.mxu0 0
    %4953 = vmatprep.subr.bf16.mxu0 0
    %4954 = vmatpush1.bf16.xpose.msra.mxu0 0
    %4955 = vmatprep.subr.bf16.mxu0 0
    %4956 = vmatpush1.bf16.xpose.msra.mxu0 0
    %4957 = vmatprep.subr.bf16.mxu0 0
    %4958 = vmatpush1.bf16.xpose.msra.mxu0 0
    %4959 = vmatprep.mubr.bf16.mxu0 0
    %4960 = vmatmul.mubr.bf16.gmra.mrb[0].mxu0 %v4922
    %v4961 = vpop.f32.mrb[0].mxu0
    %v4962 = vadd.f32 0.0, %v4961
    %v4963 = vpop.f32.mrb[0].mxu0
    %v4964 = vpop.f32.mrb[0].mxu0
    %v4965 = vpop.f32.mrb[0].mxu0
    %4966 = vdwg.mxu0
    %v4967 = vsel %vm3825, %v4962, -inf
    %4968 = vmax.xlane.f32.xlu0 %v4967
    %v4969 = vpop.xlane.xlu0 %4968
    %v4970 = vsub.f32 %v4962, %v4969
    %v4971 = vmul.f32 %v4970, 1.442695
    %v4972 = vpow.pop %v4971
    %v4973 = vsel %vm3825, %v4972, 0.0
    %4974 = vadd.xlane.f32.xlu0 %v4973
    %v4975 = vpop.xlane.xlu0 %4974
    %v4976 = vrcp.pop %v4975
    %v4977 = vmul.f32 %v4972, %v4976
    %v4978 = vpack.c.bf16 %v4977, %v4977
    %4979 = vrot.lane.b32.xlu0 %v3777, 16
    %v4980 = vpop.permute.xlu0 %4979
    %v4982 = vsel %vm3838, %v4978, 0
    %v4985 = vsel %vm3504, %v4980, 0
    %4987 = vmatprep.subr.bf16.mxu0 0
    %4988 = vmatpush1.bf16.msra.mxu0 %v4985
    %4989 = vmatprep.subr.bf16.mxu0 0
    %4990 = vmatpush1.bf16.msra.mxu0 0
    %4991 = vmatprep.subr.bf16.mxu0 0
    %4992 = vmatpush1.bf16.msra.mxu0 0
    %4993 = vmatprep.subr.bf16.mxu0 0
    %4994 = vmatpush1.bf16.msra.mxu0 0
    %4995 = vmatprep.subr.bf16.mxu0 0
    %4996 = vmatpush1.bf16.msra.mxu0 0
    %4997 = vmatprep.subr.bf16.mxu0 0
    %4998 = vmatpush1.bf16.msra.mxu0 0
    %4999 = vmatprep.subr.bf16.mxu0 0
    %5000 = vmatpush1.bf16.msra.mxu0 0
    %5001 = vmatprep.subr.bf16.mxu0 0
    %5002 = vmatpush1.bf16.msra.mxu0 0
    %5003 = vmatprep.subr.bf16.mxu0 0
    %5004 = vmatpush1.bf16.msra.mxu0 0
    %5005 = vmatprep.subr.bf16.mxu0 0
    %5006 = vmatpush1.bf16.msra.mxu0 0
    %5007 = vmatprep.subr.bf16.mxu0 0
    %5008 = vmatpush1.bf16.msra.mxu0 0
    %5009 = vmatprep.subr.bf16.mxu0 0
    %5010 = vmatpush1.bf16.msra.mxu0 0
    %5011 = vmatprep.subr.bf16.mxu0 0
    %5012 = vmatpush1.bf16.msra.mxu0 0
    %5013 = vmatprep.subr.bf16.mxu0 0
    %5014 = vmatpush1.bf16.msra.mxu0 0
    %5015 = vmatprep.subr.bf16.mxu0 0
    %5016 = vmatpush1.bf16.msra.mxu0 0
    %5017 = vmatprep.subr.bf16.mxu0 0
    %5018 = vmatpush1.bf16.msra.mxu0 0
    %5019 = vmatprep.mubr.bf16.mxu0 0
    %5020 = vmatmul.mubr.bf16.gmra.mrb[0].mxu0 %v4982
    %v5021 = vpop.f32.mrb[0].mxu0
    %v5022 = vadd.f32 0.0, %v5021
    %v5023 = vpop.f32.mrb[0].mxu0
    %v5024 = vpop.f32.mrb[0].mxu0
    %v5025 = vpop.f32.mrb[0].mxu0
    %5026 = vdwg.mxu0
    %v5027 = vpack.c.bf16 %v5022, %v5022
    %v5028 = vld [vmem:[%s11 + $0x38] sm:$0xf]
    %v5029 = vld [vmem:[%s11 + $0x3c] sm:$0xf]
    %v5032 = vunpack.c.l.b16 %v5028
    %v5033 = vunpack.c.l.b16 %v5029
    %v5034 = vpack.c.b16 %v5033, %v5032
    %v5037 = vsel %vm3778, %v5027, 0
    %5039 = vmatprep.subr.bf16.mxu0 0
    %5040 = vmatpush1.bf16.msra.mxu0 %v5034
    %5041 = vmatprep.subr.bf16.mxu0 0
    %5042 = vmatpush1.bf16.msra.mxu0 0
    %5043 = vmatprep.subr.bf16.mxu0 0
    %5044 = vmatpush1.bf16.msra.mxu0 0
    %5045 = vmatprep.subr.bf16.mxu0 0
    %5046 = vmatpush1.bf16.msra.mxu0 0
    %5047 = vmatprep.subr.bf16.mxu0 0
    %5048 = vmatpush1.bf16.msra.mxu0 0
    %5049 = vmatprep.subr.bf16.mxu0 0
    %5050 = vmatpush1.bf16.msra.mxu0 0
    %5051 = vmatprep.subr.bf16.mxu0 0
    %5052 = vmatpush1.bf16.msra.mxu0 0
    %5053 = vmatprep.subr.bf16.mxu0 0
    %5054 = vmatpush1.bf16.msra.mxu0 0
    %5055 = vmatprep.subr.bf16.mxu0 0
    %5056 = vmatpush1.bf16.msra.mxu0 0
    %5057 = vmatprep.subr.bf16.mxu0 0
    %5058 = vmatpush1.bf16.msra.mxu0 0
    %5059 = vmatprep.subr.bf16.mxu0 0
    %5060 = vmatpush1.bf16.msra.mxu0 0
    %5061 = vmatprep.subr.bf16.mxu0 0
    %5062 = vmatpush1.bf16.msra.mxu0 0
    %5063 = vmatprep.subr.bf16.mxu0 0
    %5064 = vmatpush1.bf16.msra.mxu0 0
    %5065 = vmatprep.subr.bf16.mxu0 0
    %5066 = vmatpush1.bf16.msra.mxu0 0
    %5067 = vmatprep.subr.bf16.mxu0 0
    %5068 = vmatpush1.bf16.msra.mxu0 0
    %5069 = vmatprep.subr.bf16.mxu0 0
    %5070 = vmatpush1.bf16.msra.mxu0 0
    %5071 = vmatprep.mubr.bf16.mxu0 0
    %5072 = vmatmul.mubr.bf16.gmra.mrb[0].mxu0 %v5037
    %v5073 = vpop.f32.mrb[0].mxu0
    %v5074 = vadd.f32 0.0, %v5073
    %v5075 = vpop.f32.mrb[0].mxu0
    %v5076 = vpop.f32.mrb[0].mxu0
    %v5077 = vpop.f32.mrb[0].mxu0
    %5078 = vdwg.mxu0
    %v5079 = vadd.f32 %v4916, %v5074
    %v5080 = vld [vmem:[%s12] sm:$0x1]
    %v5082 = vlaneseq
    %v5083 = vshrl.u32 %v5082, 7
    %v5084 = vsub.s32 0, %v5083
    %v5085 = vrot.slane %v5080, %v5084
    %v5087 = vadd.f32 %v5079, %v5085
    %5088 = vst [vmem:[#allocation2] sm:$0xf] %v5087
    %v5089 = vrot.slane %v3775, 2
    %v5090 = vrot.slane %v3776, 2
    %v5092 = vsel %vm3778, %v5089, 0
    %v5095 = vsel %vm3778, %v5090, 0
    %5097 = vmatprep.subr.bf16.mxu0 0
    %5098 = vmatpush1.bf16.xpose.msra.mxu0 %v5095
    %5099 = vmatprep.subr.bf16.mxu0 0
    %5100 = vmatpush1.bf16.xpose.msra.mxu0 0
    %5101 = vmatprep.subr.bf16.mxu0 0
    %5102 = vmatpush1.bf16.xpose.msra.mxu0 0
    %5103 = vmatprep.subr.bf16.mxu0 0
    %5104 = vmatpush1.bf16.xpose.msra.mxu0 0
    %5105 = vmatprep.subr.bf16.mxu0 0
    %5106 = vmatpush1.bf16.xpose.msra.mxu0 0
    %5107 = vmatprep.subr.bf16.mxu0 0
    %5108 = vmatpush1.bf16.xpose.msra.mxu0 0
    %5109 = vmatprep.subr.bf16.mxu0 0
    %5110 = vmatpush1.bf16.xpose.msra.mxu0 0
    %5111 = vmatprep.subr.bf16.mxu0 0
    %5112 = vmatpush1.bf16.xpose.msra.mxu0 0
    %5113 = vmatprep.subr.bf16.mxu0 0
    %5114 = vmatpush1.bf16.xpose.msra.mxu0 0
    %5115 = vmatprep.subr.bf16.mxu0 0
    %5116 = vmatpush1.bf16.xpose.msra.mxu0 0
    %5117 = vmatprep.subr.bf16.mxu0 0
    %5118 = vmatpush1.bf16.xpose.msra.mxu0 0
    %5119 = vmatprep.subr.bf16.mxu0 0
    %5120 = vmatpush1.bf16.xpose.msra.mxu0 0
    %5121 = vmatprep.subr.bf16.mxu0 0
    %5122 = vmatpush1.bf16.xpose.msra.mxu0 0
    %5123 = vmatprep.subr.bf16.mxu0 0
    %5124 = vmatpush1.bf16.xpose.msra.mxu0 0
    %5125 = vmatprep.subr.bf16.mxu0 0
    %5126 = vmatpush1.bf16.xpose.msra.mxu0 0
    %5127 = vmatprep.subr.bf16.mxu0 0
    %5128 = vmatpush1.bf16.xpose.msra.mxu0 0
    %5129 = vmatprep.mubr.bf16.mxu0 0
    %5130 = vmatmul.mubr.bf16.gmra.mrb[0].mxu0 %v5092
    %v5131 = vpop.f32.mrb[0].mxu0
    %v5132 = vadd.f32 0.0, %v5131
    %v5133 = vpop.f32.mrb[0].mxu0
    %v5134 = vpop.f32.mrb[0].mxu0
    %v5135 = vpop.f32.mrb[0].mxu0
    %5136 = vdwg.mxu0
    %v5137 = vsel %vm3825, %v5132, -inf
    %5138 = vmax.xlane.f32.xlu0 %v5137
    %v5139 = vpop.xlane.xlu0 %5138
    %v5140 = vsub.f32 %v5132, %v5139
    %v5141 = vmul.f32 %v5140, 1.442695
    %v5142 = vpow.pop %v5141
    %v5143 = vsel %vm3825, %v5142, 0.0
    %5144 = vadd.xlane.f32.xlu0 %v5143
    %v5145 = vpop.xlane.xlu0 %5144
    %v5146 = vrcp.pop %v5145
    %v5147 = vmul.f32 %v5142, %v5146
    %v5148 = vpack.c.bf16 %v5147, %v5147
    %v5149 = vrot.slane %v3777, 2
    %v5151 = vsel %vm3838, %v5148, 0
    %v5154 = vsel %vm3504, %v5149, 0
    %5156 = vmatprep.subr.bf16.mxu0 0
    %5157 = vmatpush1.bf16.msra.mxu0 %v5154
    %5158 = vmatprep.subr.bf16.mxu0 0
    %5159 = vmatpush1.bf16.msra.mxu0 0
    %5160 = vmatprep.subr.bf16.mxu0 0
    %5161 = vmatpush1.bf16.msra.mxu0 0
    %5162 = vmatprep.subr.bf16.mxu0 0
    %5163 = vmatpush1.bf16.msra.mxu0 0
    %5164 = vmatprep.subr.bf16.mxu0 0
    %5165 = vmatpush1.bf16.msra.mxu0 0
    %5166 = vmatprep.subr.bf16.mxu0 0
    %5167 = vmatpush1.bf16.msra.mxu0 0
    %5168 = vmatprep.subr.bf16.mxu0 0
    %5169 = vmatpush1.bf16.msra.mxu0 0
    %5170 = vmatprep.subr.bf16.mxu0 0
    %5171 = vmatpush1.bf16.msra.mxu0 0
    %5172 = vmatprep.subr.bf16.mxu0 0
    %5173 = vmatpush1.bf16.msra.mxu0 0
    %5174 = vmatprep.subr.bf16.mxu0 0
    %5175 = vmatpush1.bf16.msra.mxu0 0
    %5176 = vmatprep.subr.bf16.mxu0 0
    %5177 = vmatpush1.bf16.msra.mxu0 0
    %5178 = vmatprep.subr.bf16.mxu0 0
    %5179 = vmatpush1.bf16.msra.mxu0 0
    %5180 = vmatprep.subr.bf16.mxu0 0
    %5181 = vmatpush1.bf16.msra.mxu0 0
    %5182 = vmatprep.subr.bf16.mxu0 0
    %5183 = vmatpush1.bf16.msra.mxu0 0
    %5184 = vmatprep.subr.bf16.mxu0 0
    %5185 = vmatpush1.bf16.msra.mxu0 0
    %5186 = vmatprep.subr.bf16.mxu0 0
    %5187 = vmatpush1.bf16.msra.mxu0 0
    %5188 = vmatprep.mubr.bf16.mxu0 0
    %5189 = vmatmul.mubr.bf16.gmra.mrb[0].mxu0 %v5151
    %v5190 = vpop.f32.mrb[0].mxu0
    %v5191 = vadd.f32 0.0, %v5190
    %v5192 = vpop.f32.mrb[0].mxu0
    %v5193 = vpop.f32.mrb[0].mxu0
    %v5194 = vpop.f32.mrb[0].mxu0
    %5195 = vdwg.mxu0
    %v5196 = vpack.c.bf16 %v5191, %v5191
    %v5197 = vld [vmem:[%s11] sm:$0xf]
    %v5198 = vld [vmem:[%s11 + $0x4] sm:$0xf]
    %5199 = vrot.lane.b32.xlu0 %v5089, 112
    %v5200 = vpop.permute.xlu0 %5199
    %5201 = vrot.lane.b32.xlu0 %v5090, 112
    %v5202 = vpop.permute.xlu0 %5201
    %v5204 = vsel %vm3778, %v5200, 0
    %v5207 = vsel %vm3778, %v5202, 0
    %5209 = vmatprep.subr.bf16.mxu0 0
    %5210 = vmatpush1.bf16.xpose.msra.mxu0 %v5207
    %5211 = vmatprep.subr.bf16.mxu0 0
    %5212 = vmatpush1.bf16.xpose.msra.mxu0 0
    %5213 = vmatprep.subr.bf16.mxu0 0
    %5214 = vmatpush1.bf16.xpose.msra.mxu0 0
    %5215 = vmatprep.subr.bf16.mxu0 0
    %5216 = vmatpush1.bf16.xpose.msra.mxu0 0
    %5217 = vmatprep.subr.bf16.mxu0 0
    %5218 = vmatpush1.bf16.xpose.msra.mxu0 0
    %5219 = vmatprep.subr.bf16.mxu0 0
    %5220 = vmatpush1.bf16.xpose.msra.mxu0 0
    %5221 = vmatprep.subr.bf16.mxu0 0
    %5222 = vmatpush1.bf16.xpose.msra.mxu0 0
    %5223 = vmatprep.subr.bf16.mxu0 0
    %5224 = vmatpush1.bf16.xpose.msra.mxu0 0
    %5225 = vmatprep.subr.bf16.mxu0 0
    %5226 = vmatpush1.bf16.xpose.msra.mxu0 0
    %5227 = vmatprep.subr.bf16.mxu0 0
    %5228 = vmatpush1.bf16.xpose.msra.mxu0 0
    %5229 = vmatprep.subr.bf16.mxu0 0
    %5230 = vmatpush1.bf16.xpose.msra.mxu0 0
    %5231 = vmatprep.subr.bf16.mxu0 0
    %5232 = vmatpush1.bf16.xpose.msra.mxu0 0
    %5233 = vmatprep.subr.bf16.mxu0 0
    %5234 = vmatpush1.bf16.xpose.msra.mxu0 0
    %5235 = vmatprep.subr.bf16.mxu0 0
    %5236 = vmatpush1.bf16.xpose.msra.mxu0 0
    %5237 = vmatprep.subr.bf16.mxu0 0
    %5238 = vmatpush1.bf16.xpose.msra.mxu0 0
    %5239 = vmatprep.subr.bf16.mxu0 0
    %5240 = vmatpush1.bf16.xpose.msra.mxu0 0
    %5241 = vmatprep.mubr.bf16.mxu0 0
    %5242 = vmatmul.mubr.bf16.gmra.mrb[0].mxu0 %v5204
    %v5243 = vpop.f32.mrb[0].mxu0
    %v5244 = vadd.f32 0.0, %v5243
    %v5245 = vpop.f32.mrb[0].mxu0
    %v5246 = vpop.f32.mrb[0].mxu0
    %v5247 = vpop.f32.mrb[0].mxu0
    %5248 = vdwg.mxu0
    %v5249 = vsel %vm3825, %v5244, -inf
    %5250 = vmax.xlane.f32.xlu0 %v5249
    %v5251 = vpop.xlane.xlu0 %5250
    %v5252 = vsub.f32 %v5244, %v5251
    %v5253 = vmul.f32 %v5252, 1.442695
    %v5254 = vpow.pop %v5253
    %v5255 = vsel %vm3825, %v5254, 0.0
    %5256 = vadd.xlane.f32.xlu0 %v5255
    %v5257 = vpop.xlane.xlu0 %5256
    %v5258 = vrcp.pop %v5257
    %v5259 = vmul.f32 %v5254, %v5258
    %v5260 = vpack.c.bf16 %v5259, %v5259
    %5261 = vrot.lane.b32.xlu0 %v5149, 112
    %v5262 = vpop.permute.xlu0 %5261
    %v5264 = vsel %vm3838, %v5260, 0
    %v5267 = vsel %vm3504, %v5262, 0
    %5269 = vmatprep.subr.bf16.mxu0 0
    %5270 = vmatpush1.bf16.msra.mxu0 %v5267
    %5271 = vmatprep.subr.bf16.mxu0 0
    %5272 = vmatpush1.bf16.msra.mxu0 0
    %5273 = vmatprep.subr.bf16.mxu0 0
    %5274 = vmatpush1.bf16.msra.mxu0 0
    %5275 = vmatprep.subr.bf16.mxu0 0
    %5276 = vmatpush1.bf16.msra.mxu0 0
    %5277 = vmatprep.subr.bf16.mxu0 0
    %5278 = vmatpush1.bf16.msra.mxu0 0
    %5279 = vmatprep.subr.bf16.mxu0 0
    %5280 = vmatpush1.bf16.msra.mxu0 0
    %5281 = vmatprep.subr.bf16.mxu0 0
    %5282 = vmatpush1.bf16.msra.mxu0 0
    %5283 = vmatprep.subr.bf16.mxu0 0
    %5284 = vmatpush1.bf16.msra.mxu0 0
    %5285 = vmatprep.subr.bf16.mxu0 0
    %5286 = vmatpush1.bf16.msra.mxu0 0
    %5287 = vmatprep.subr.bf16.mxu0 0
    %5288 = vmatpush1.bf16.msra.mxu0 0
    %5289 = vmatprep.subr.bf16.mxu0 0
    %5290 = vmatpush1.bf16.msra.mxu0 0
    %5291 = vmatprep.subr.bf16.mxu0 0
    %5292 = vmatpush1.bf16.msra.mxu0 0
    %5293 = vmatprep.subr.bf16.mxu0 0
    %5294 = vmatpush1.bf16.msra.mxu0 0
    %5295 = vmatprep.subr.bf16.mxu0 0
    %5296 = vmatpush1.bf16.msra.mxu0 0
    %5297 = vmatprep.subr.bf16.mxu0 0
    %5298 = vmatpush1.bf16.msra.mxu0 0
    %5299 = vmatprep.subr.bf16.mxu0 0
    %5300 = vmatpush1.bf16.msra.mxu0 0
    %5301 = vmatprep.mubr.bf16.mxu0 0
    %5302 = vmatmul.mubr.bf16.gmra.mrb[0].mxu0 %v5264
    %v5303 = vpop.f32.mrb[0].mxu0
    %v5304 = vadd.f32 0.0, %v5303
    %v5305 = vpop.f32.mrb[0].mxu0
    %v5306 = vpop.f32.mrb[0].mxu0
    %v5307 = vpop.f32.mrb[0].mxu0
    %5308 = vdwg.mxu0
    %v5309 = vpack.c.bf16 %v5304, %v5304
    %v5310 = vld [vmem:[%s11 + $0x8] sm:$0xf]
    %v5311 = vld [vmem:[%s11 + $0xc] sm:$0xf]
    %v5314 = vunpack.c.l.b16 %v5310
    %v5315 = vunpack.c.l.b16 %v5311
    %v5316 = vpack.c.b16 %v5315, %v5314
    %v5319 = vsel %vm3778, %v5309, 0
    %5321 = vmatprep.subr.bf16.mxu0 0
    %5322 = vmatpush1.bf16.msra.mxu0 %v5316
    %5323 = vmatprep.subr.bf16.mxu0 0
    %5324 = vmatpush1.bf16.msra.mxu0 0
    %5325 = vmatprep.subr.bf16.mxu0 0
    %5326 = vmatpush1.bf16.msra.mxu0 0
    %5327 = vmatprep.subr.bf16.mxu0 0
    %5328 = vmatpush1.bf16.msra.mxu0 0
    %5329 = vmatprep.subr.bf16.mxu0 0
    %5330 = vmatpush1.bf16.msra.mxu0 0
    %5331 = vmatprep.subr.bf16.mxu0 0
    %5332 = vmatpush1.bf16.msra.mxu0 0
    %5333 = vmatprep.subr.bf16.mxu0 0
    %5334 = vmatpush1.bf16.msra.mxu0 0
    %5335 = vmatprep.subr.bf16.mxu0 0
    %5336 = vmatpush1.bf16.msra.mxu0 0
    %5337 = vmatprep.subr.bf16.mxu0 0
    %5338 = vmatpush1.bf16.msra.mxu0 0
    %5339 = vmatprep.subr.bf16.mxu0 0
    %5340 = vmatpush1.bf16.msra.mxu0 0
    %5341 = vmatprep.subr.bf16.mxu0 0
    %5342 = vmatpush1.bf16.msra.mxu0 0
    %5343 = vmatprep.subr.bf16.mxu0 0
    %5344 = vmatpush1.bf16.msra.mxu0 0
    %5345 = vmatprep.subr.bf16.mxu0 0
    %5346 = vmatpush1.bf16.msra.mxu0 0
    %5347 = vmatprep.subr.bf16.mxu0 0
    %5348 = vmatpush1.bf16.msra.mxu0 0
    %5349 = vmatprep.subr.bf16.mxu0 0
    %5350 = vmatpush1.bf16.msra.mxu0 0
    %5351 = vmatprep.subr.bf16.mxu0 0
    %5352 = vmatpush1.bf16.msra.mxu0 0
    %5353 = vmatprep.mubr.bf16.mxu0 0
    %5354 = vmatmul.mubr.bf16.gmra.mrb[0].mxu0 %v5319
    %v5355 = vpop.f32.mrb[0].mxu0
    %v5356 = vadd.f32 0.0, %v5355
    %v5357 = vpop.f32.mrb[0].mxu0
    %v5358 = vpop.f32.mrb[0].mxu0
    %v5359 = vpop.f32.mrb[0].mxu0
    %5360 = vdwg.mxu0
    %v5363 = vunpack.c.l.b16 %v5197
    %v5364 = vunpack.c.l.b16 %v5198
    %v5365 = vpack.c.b16 %v5364, %v5363
    %v5368 = vsel %vm3778, %v5196, 0
    %5370 = vmatprep.subr.bf16.mxu0 0
    %5371 = vmatpush1.bf16.msra.mxu0 %v5365
    %5372 = vmatprep.subr.bf16.mxu0 0
    %5373 = vmatpush1.bf16.msra.mxu0 0
    %5374 = vmatprep.subr.bf16.mxu0 0
    %5375 = vmatpush1.bf16.msra.mxu0 0
    %5376 = vmatprep.subr.bf16.mxu0 0
    %5377 = vmatpush1.bf16.msra.mxu0 0
    %5378 = vmatprep.subr.bf16.mxu0 0
    %5379 = vmatpush1.bf16.msra.mxu0 0
    %5380 = vmatprep.subr.bf16.mxu0 0
    %5381 = vmatpush1.bf16.msra.mxu0 0
    %5382 = vmatprep.subr.bf16.mxu0 0
    %5383 = vmatpush1.bf16.msra.mxu0 0
    %5384 = vmatprep.subr.bf16.mxu0 0
    %5385 = vmatpush1.bf16.msra.mxu0 0
    %5386 = vmatprep.subr.bf16.mxu0 0
    %5387 = vmatpush1.bf16.msra.mxu0 0
    %5388 = vmatprep.subr.bf16.mxu0 0
    %5389 = vmatpush1.bf16.msra.mxu0 0
    %5390 = vmatprep.subr.bf16.mxu0 0
    %5391 = vmatpush1.bf16.msra.mxu0 0
    %5392 = vmatprep.subr.bf16.mxu0 0
    %5393 = vmatpush1.bf16.msra.mxu0 0
    %5394 = vmatprep.subr.bf16.mxu0 0
    %5395 = vmatpush1.bf16.msra.mxu0 0
    %5396 = vmatprep.subr.bf16.mxu0 0
    %5397 = vmatpush1.bf16.msra.mxu0 0
    %5398 = vmatprep.subr.bf16.mxu0 0
    %5399 = vmatpush1.bf16.msra.mxu0 0
    %5400 = vmatprep.subr.bf16.mxu0 0
    %5401 = vmatpush1.bf16.msra.mxu0 0
    %5402 = vmatprep.mubr.bf16.mxu0 0
    %5403 = vmatmul.mubr.bf16.gmra.mrb[0].mxu0 %v5368
    %v5404 = vpop.f32.mrb[0].mxu0
    %v5405 = vadd.f32 %v5356, %v5404
    %v5406 = vpop.f32.mrb[0].mxu0
    %v5407 = vpop.f32.mrb[0].mxu0
    %v5408 = vpop.f32.mrb[0].mxu0
    %5409 = vdwg.mxu0
    %5410 = vrot.lane.b32.xlu0 %v5089, 96
    %v5411 = vpop.permute.xlu0 %5410
    %5412 = vrot.lane.b32.xlu0 %v5090, 96
    %v5413 = vpop.permute.xlu0 %5412
    %v5415 = vsel %vm3778, %v5411, 0
    %v5418 = vsel %vm3778, %v5413, 0
    %5420 = vmatprep.subr.bf16.mxu0 0
    %5421 = vmatpush1.bf16.xpose.msra.mxu0 %v5418
    %5422 = vmatprep.subr.bf16.mxu0 0
    %5423 = vmatpush1.bf16.xpose.msra.mxu0 0
    %5424 = vmatprep.subr.bf16.mxu0 0
    %5425 = vmatpush1.bf16.xpose.msra.mxu0 0
    %5426 = vmatprep.subr.bf16.mxu0 0
    %5427 = vmatpush1.bf16.xpose.msra.mxu0 0
    %5428 = vmatprep.subr.bf16.mxu0 0
    %5429 = vmatpush1.bf16.xpose.msra.mxu0 0
    %5430 = vmatprep.subr.bf16.mxu0 0
    %5431 = vmatpush1.bf16.xpose.msra.mxu0 0
    %5432 = vmatprep.subr.bf16.mxu0 0
    %5433 = vmatpush1.bf16.xpose.msra.mxu0 0
    %5434 = vmatprep.subr.bf16.mxu0 0
    %5435 = vmatpush1.bf16.xpose.msra.mxu0 0
    %5436 = vmatprep.subr.bf16.mxu0 0
    %5437 = vmatpush1.bf16.xpose.msra.mxu0 0
    %5438 = vmatprep.subr.bf16.mxu0 0
    %5439 = vmatpush1.bf16.xpose.msra.mxu0 0
    %5440 = vmatprep.subr.bf16.mxu0 0
    %5441 = vmatpush1.bf16.xpose.msra.mxu0 0
    %5442 = vmatprep.subr.bf16.mxu0 0
    %5443 = vmatpush1.bf16.xpose.msra.mxu0 0
    %5444 = vmatprep.subr.bf16.mxu0 0
    %5445 = vmatpush1.bf16.xpose.msra.mxu0 0
    %5446 = vmatprep.subr.bf16.mxu0 0
    %5447 = vmatpush1.bf16.xpose.msra.mxu0 0
    %5448 = vmatprep.subr.bf16.mxu0 0
    %5449 = vmatpush1.bf16.xpose.msra.mxu0 0
    %5450 = vmatprep.subr.bf16.mxu0 0
    %5451 = vmatpush1.bf16.xpose.msra.mxu0 0
    %5452 = vmatprep.mubr.bf16.mxu0 0
    %5453 = vmatmul.mubr.bf16.gmra.mrb[0].mxu0 %v5415
    %v5454 = vpop.f32.mrb[0].mxu0
    %v5455 = vadd.f32 0.0, %v5454
    %v5456 = vpop.f32.mrb[0].mxu0
    %v5457 = vpop.f32.mrb[0].mxu0
    %v5458 = vpop.f32.mrb[0].mxu0
    %5459 = vdwg.mxu0
    %v5460 = vsel %vm3825, %v5455, -inf
    %5461 = vmax.xlane.f32.xlu0 %v5460
    %v5462 = vpop.xlane.xlu0 %5461
    %v5463 = vsub.f32 %v5455, %v5462
    %v5464 = vmul.f32 %v5463, 1.442695
    %v5465 = vpow.pop %v5464
    %v5466 = vsel %vm3825, %v5465, 0.0
    %5467 = vadd.xlane.f32.xlu0 %v5466
    %v5468 = vpop.xlane.xlu0 %5467
    %v5469 = vrcp.pop %v5468
    %v5470 = vmul.f32 %v5465, %v5469
    %v5471 = vpack.c.bf16 %v5470, %v5470
    %5472 = vrot.lane.b32.xlu0 %v5149, 96
    %v5473 = vpop.permute.xlu0 %5472
    %v5475 = vsel %vm3838, %v5471, 0
    %v5478 = vsel %vm3504, %v5473, 0
    %5480 = vmatprep.subr.bf16.mxu0 0
    %5481 = vmatpush1.bf16.msra.mxu0 %v5478
    %5482 = vmatprep.subr.bf16.mxu0 0
    %5483 = vmatpush1.bf16.msra.mxu0 0
    %5484 = vmatprep.subr.bf16.mxu0 0
    %5485 = vmatpush1.bf16.msra.mxu0 0
    %5486 = vmatprep.subr.bf16.mxu0 0
    %5487 = vmatpush1.bf16.msra.mxu0 0
    %5488 = vmatprep.subr.bf16.mxu0 0
    %5489 = vmatpush1.bf16.msra.mxu0 0
    %5490 = vmatprep.subr.bf16.mxu0 0
    %5491 = vmatpush1.bf16.msra.mxu0 0
    %5492 = vmatprep.subr.bf16.mxu0 0
    %5493 = vmatpush1.bf16.msra.mxu0 0
    %5494 = vmatprep.subr.bf16.mxu0 0
    %5495 = vmatpush1.bf16.msra.mxu0 0
    %5496 = vmatprep.subr.bf16.mxu0 0
    %5497 = vmatpush1.bf16.msra.mxu0 0
    %5498 = vmatprep.subr.bf16.mxu0 0
    %5499 = vmatpush1.bf16.msra.mxu0 0
    %5500 = vmatprep.subr.bf16.mxu0 0
    %5501 = vmatpush1.bf16.msra.mxu0 0
    %5502 = vmatprep.subr.bf16.mxu0 0
    %5503 = vmatpush1.bf16.msra.mxu0 0
    %5504 = vmatprep.subr.bf16.mxu0 0
    %5505 = vmatpush1.bf16.msra.mxu0 0
    %5506 = vmatprep.subr.bf16.mxu0 0
    %5507 = vmatpush1.bf16.msra.mxu0 0
    %5508 = vmatprep.subr.bf16.mxu0 0
    %5509 = vmatpush1.bf16.msra.mxu0 0
    %5510 = vmatprep.subr.bf16.mxu0 0
    %5511 = vmatpush1.bf16.msra.mxu0 0
    %5512 = vmatprep.mubr.bf16.mxu0 0
    %5513 = vmatmul.mubr.bf16.gmra.mrb[0].mxu0 %v5475
    %v5514 = vpop.f32.mrb[0].mxu0
    %v5515 = vadd.f32 0.0, %v5514
    %v5516 = vpop.f32.mrb[0].mxu0
    %v5517 = vpop.f32.mrb[0].mxu0
    %v5518 = vpop.f32.mrb[0].mxu0
    %5519 = vdwg.mxu0
    %v5520 = vpack.c.bf16 %v5515, %v5515
    %v5521 = vld [vmem:[%s11 + $0x10] sm:$0xf]
    %v5522 = vld [vmem:[%s11 + $0x14] sm:$0xf]
    %v5525 = vunpack.c.l.b16 %v5521
    %v5526 = vunpack.c.l.b16 %v5522
    %v5527 = vpack.c.b16 %v5526, %v5525
    %v5530 = vsel %vm3778, %v5520, 0
    %5532 = vmatprep.subr.bf16.mxu0 0
    %5533 = vmatpush1.bf16.msra.mxu0 %v5527
    %5534 = vmatprep.subr.bf16.mxu0 0
    %5535 = vmatpush1.bf16.msra.mxu0 0
    %5536 = vmatprep.subr.bf16.mxu0 0
    %5537 = vmatpush1.bf16.msra.mxu0 0
    %5538 = vmatprep.subr.bf16.mxu0 0
    %5539 = vmatpush1.bf16.msra.mxu0 0
    %5540 = vmatprep.subr.bf16.mxu0 0
    %5541 = vmatpush1.bf16.msra.mxu0 0
    %5542 = vmatprep.subr.bf16.mxu0 0
    %5543 = vmatpush1.bf16.msra.mxu0 0
    %5544 = vmatprep.subr.bf16.mxu0 0
    %5545 = vmatpush1.bf16.msra.mxu0 0
    %5546 = vmatprep.subr.bf16.mxu0 0
    %5547 = vmatpush1.bf16.msra.mxu0 0
    %5548 = vmatprep.subr.bf16.mxu0 0
    %5549 = vmatpush1.bf16.msra.mxu0 0
    %5550 = vmatprep.subr.bf16.mxu0 0
    %5551 = vmatpush1.bf16.msra.mxu0 0
    %5552 = vmatprep.subr.bf16.mxu0 0
    %5553 = vmatpush1.bf16.msra.mxu0 0
    %5554 = vmatprep.subr.bf16.mxu0 0
    %5555 = vmatpush1.bf16.msra.mxu0 0
    %5556 = vmatprep.subr.bf16.mxu0 0
    %5557 = vmatpush1.bf16.msra.mxu0 0
    %5558 = vmatprep.subr.bf16.mxu0 0
    %5559 = vmatpush1.bf16.msra.mxu0 0
    %5560 = vmatprep.subr.bf16.mxu0 0
    %5561 = vmatpush1.bf16.msra.mxu0 0
    %5562 = vmatprep.subr.bf16.mxu0 0
    %5563 = vmatpush1.bf16.msra.mxu0 0
    %5564 = vmatprep.mubr.bf16.mxu0 0
    %5565 = vmatmul.mubr.bf16.gmra.mrb[0].mxu0 %v5530
    %v5566 = vpop.f32.mrb[0].mxu0
    %v5567 = vadd.f32 0.0, %v5566
    %v5568 = vpop.f32.mrb[0].mxu0
    %v5569 = vpop.f32.mrb[0].mxu0
    %v5570 = vpop.f32.mrb[0].mxu0
    %5571 = vdwg.mxu0
    %v5572 = vadd.f32 %v5405, %v5567
    %5573 = vrot.lane.b32.xlu0 %v5089, 80
    %v5574 = vpop.permute.xlu0 %5573
    %5575 = vrot.lane.b32.xlu0 %v5090, 80
    %v5576 = vpop.permute.xlu0 %5575
    %v5578 = vsel %vm3778, %v5574, 0
    %v5581 = vsel %vm3778, %v5576, 0
    %5583 = vmatprep.subr.bf16.mxu0 0
    %5584 = vmatpush1.bf16.xpose.msra.mxu0 %v5581
    %5585 = vmatprep.subr.bf16.mxu0 0
    %5586 = vmatpush1.bf16.xpose.msra.mxu0 0
    %5587 = vmatprep.subr.bf16.mxu0 0
    %5588 = vmatpush1.bf16.xpose.msra.mxu0 0
    %5589 = vmatprep.subr.bf16.mxu0 0
    %5590 = vmatpush1.bf16.xpose.msra.mxu0 0
    %5591 = vmatprep.subr.bf16.mxu0 0
    %5592 = vmatpush1.bf16.xpose.msra.mxu0 0
    %5593 = vmatprep.subr.bf16.mxu0 0
    %5594 = vmatpush1.bf16.xpose.msra.mxu0 0
    %5595 = vmatprep.subr.bf16.mxu0 0
    %5596 = vmatpush1.bf16.xpose.msra.mxu0 0
    %5597 = vmatprep.subr.bf16.mxu0 0
    %5598 = vmatpush1.bf16.xpose.msra.mxu0 0
    %5599 = vmatprep.subr.bf16.mxu0 0
    %5600 = vmatpush1.bf16.xpose.msra.mxu0 0
    %5601 = vmatprep.subr.bf16.mxu0 0
    %5602 = vmatpush1.bf16.xpose.msra.mxu0 0
    %5603 = vmatprep.subr.bf16.mxu0 0
    %5604 = vmatpush1.bf16.xpose.msra.mxu0 0
    %5605 = vmatprep.subr.bf16.mxu0 0
    %5606 = vmatpush1.bf16.xpose.msra.mxu0 0
    %5607 = vmatprep.subr.bf16.mxu0 0
    %5608 = vmatpush1.bf16.xpose.msra.mxu0 0
    %5609 = vmatprep.subr.bf16.mxu0 0
    %5610 = vmatpush1.bf16.xpose.msra.mxu0 0
    %5611 = vmatprep.subr.bf16.mxu0 0
    %5612 = vmatpush1.bf16.xpose.msra.mxu0 0
    %5613 = vmatprep.subr.bf16.mxu0 0
    %5614 = vmatpush1.bf16.xpose.msra.mxu0 0
    %5615 = vmatprep.mubr.bf16.mxu0 0
    %5616 = vmatmul.mubr.bf16.gmra.mrb[0].mxu0 %v5578
    %v5617 = vpop.f32.mrb[0].mxu0
    %v5618 = vadd.f32 0.0, %v5617
    %v5619 = vpop.f32.mrb[0].mxu0
    %v5620 = vpop.f32.mrb[0].mxu0
    %v5621 = vpop.f32.mrb[0].mxu0
    %5622 = vdwg.mxu0
    %v5623 = vsel %vm3825, %v5618, -inf
    %5624 = vmax.xlane.f32.xlu0 %v5623
    %v5625 = vpop.xlane.xlu0 %5624
    %v5626 = vsub.f32 %v5618, %v5625
    %v5627 = vmul.f32 %v5626, 1.442695
    %v5628 = vpow.pop %v5627
    %v5629 = vsel %vm3825, %v5628, 0.0
    %5630 = vadd.xlane.f32.xlu0 %v5629
    %v5631 = vpop.xlane.xlu0 %5630
    %v5632 = vrcp.pop %v5631
    %v5633 = vmul.f32 %v5628, %v5632
    %v5634 = vpack.c.bf16 %v5633, %v5633
    %5635 = vrot.lane.b32.xlu0 %v5149, 80
    %v5636 = vpop.permute.xlu0 %5635
    %v5638 = vsel %vm3838, %v5634, 0
    %v5641 = vsel %vm3504, %v5636, 0
    %5643 = vmatprep.subr.bf16.mxu0 0
    %5644 = vmatpush1.bf16.msra.mxu0 %v5641
    %5645 = vmatprep.subr.bf16.mxu0 0
    %5646 = vmatpush1.bf16.msra.mxu0 0
    %5647 = vmatprep.subr.bf16.mxu0 0
    %5648 = vmatpush1.bf16.msra.mxu0 0
    %5649 = vmatprep.subr.bf16.mxu0 0
    %5650 = vmatpush1.bf16.msra.mxu0 0
    %5651 = vmatprep.subr.bf16.mxu0 0
    %5652 = vmatpush1.bf16.msra.mxu0 0
    %5653 = vmatprep.subr.bf16.mxu0 0
    %5654 = vmatpush1.bf16.msra.mxu0 0
    %5655 = vmatprep.subr.bf16.mxu0 0
    %5656 = vmatpush1.bf16.msra.mxu0 0
    %5657 = vmatprep.subr.bf16.mxu0 0
    %5658 = vmatpush1.bf16.msra.mxu0 0
    %5659 = vmatprep.subr.bf16.mxu0 0
    %5660 = vmatpush1.bf16.msra.mxu0 0
    %5661 = vmatprep.subr.bf16.mxu0 0
    %5662 = vmatpush1.bf16.msra.mxu0 0
    %5663 = vmatprep.subr.bf16.mxu0 0
    %5664 = vmatpush1.bf16.msra.mxu0 0
    %5665 = vmatprep.subr.bf16.mxu0 0
    %5666 = vmatpush1.bf16.msra.mxu0 0
    %5667 = vmatprep.subr.bf16.mxu0 0
    %5668 = vmatpush1.bf16.msra.mxu0 0
    %5669 = vmatprep.subr.bf16.mxu0 0
    %5670 = vmatpush1.bf16.msra.mxu0 0
    %5671 = vmatprep.subr.bf16.mxu0 0
    %5672 = vmatpush1.bf16.msra.mxu0 0
    %5673 = vmatprep.subr.bf16.mxu0 0
    %5674 = vmatpush1.bf16.msra.mxu0 0
    %5675 = vmatprep.mubr.bf16.mxu0 0
    %5676 = vmatmul.mubr.bf16.gmra.mrb[0].mxu0 %v5638
    %v5677 = vpop.f32.mrb[0].mxu0
    %v5678 = vadd.f32 0.0, %v5677
    %v5679 = vpop.f32.mrb[0].mxu0
    %v5680 = vpop.f32.mrb[0].mxu0
    %v5681 = vpop.f32.mrb[0].mxu0
    %5682 = vdwg.mxu0
    %v5683 = vpack.c.bf16 %v5678, %v5678
    %v5684 = vld [vmem:[%s11 + $0x18] sm:$0xf]
    %v5685 = vld [vmem:[%s11 + $0x1c] sm:$0xf]
    %v5688 = vunpack.c.l.b16 %v5684
    %v5689 = vunpack.c.l.b16 %v5685
    %v5690 = vpack.c.b16 %v5689, %v5688
    %v5693 = vsel %vm3778, %v5683, 0
    %5695 = vmatprep.subr.bf16.mxu0 0
    %5696 = vmatpush1.bf16.msra.mxu0 %v5690
    %5697 = vmatprep.subr.bf16.mxu0 0
    %5698 = vmatpush1.bf16.msra.mxu0 0
    %5699 = vmatprep.subr.bf16.mxu0 0
    %5700 = vmatpush1.bf16.msra.mxu0 0
    %5701 = vmatprep.subr.bf16.mxu0 0
    %5702 = vmatpush1.bf16.msra.mxu0 0
    %5703 = vmatprep.subr.bf16.mxu0 0
    %5704 = vmatpush1.bf16.msra.mxu0 0
    %5705 = vmatprep.subr.bf16.mxu0 0
    %5706 = vmatpush1.bf16.msra.mxu0 0
    %5707 = vmatprep.subr.bf16.mxu0 0
    %5708 = vmatpush1.bf16.msra.mxu0 0
    %5709 = vmatprep.subr.bf16.mxu0 0
    %5710 = vmatpush1.bf16.msra.mxu0 0
    %5711 = vmatprep.subr.bf16.mxu0 0
    %5712 = vmatpush1.bf16.msra.mxu0 0
    %5713 = vmatprep.subr.bf16.mxu0 0
    %5714 = vmatpush1.bf16.msra.mxu0 0
    %5715 = vmatprep.subr.bf16.mxu0 0
    %5716 = vmatpush1.bf16.msra.mxu0 0
    %5717 = vmatprep.subr.bf16.mxu0 0
    %5718 = vmatpush1.bf16.msra.mxu0 0
    %5719 = vmatprep.subr.bf16.mxu0 0
    %5720 = vmatpush1.bf16.msra.mxu0 0
    %5721 = vmatprep.subr.bf16.mxu0 0
    %5722 = vmatpush1.bf16.msra.mxu0 0
    %5723 = vmatprep.subr.bf16.mxu0 0
    %5724 = vmatpush1.bf16.msra.mxu0 0
    %5725 = vmatprep.subr.bf16.mxu0 0
    %5726 = vmatpush1.bf16.msra.mxu0 0
    %5727 = vmatprep.mubr.bf16.mxu0 0
    %5728 = vmatmul.mubr.bf16.gmra.mrb[0].mxu0 %v5693
    %v5729 = vpop.f32.mrb[0].mxu0
    %v5730 = vadd.f32 0.0, %v5729
    %v5731 = vpop.f32.mrb[0].mxu0
    %v5732 = vpop.f32.mrb[0].mxu0
    %v5733 = vpop.f32.mrb[0].mxu0
    %5734 = vdwg.mxu0
    %v5735 = vadd.f32 %v5572, %v5730
    %5736 = vrot.lane.b32.xlu0 %v5089, 64
    %v5737 = vpop.permute.xlu0 %5736
    %5738 = vrot.lane.b32.xlu0 %v5090, 64
    %v5739 = vpop.permute.xlu0 %5738
    %v5741 = vsel %vm3778, %v5737, 0
    %v5744 = vsel %vm3778, %v5739, 0
    %5746 = vmatprep.subr.bf16.mxu0 0
    %5747 = vmatpush1.bf16.xpose.msra.mxu0 %v5744
    %5748 = vmatprep.subr.bf16.mxu0 0
    %5749 = vmatpush1.bf16.xpose.msra.mxu0 0
    %5750 = vmatprep.subr.bf16.mxu0 0
    %5751 = vmatpush1.bf16.xpose.msra.mxu0 0
    %5752 = vmatprep.subr.bf16.mxu0 0
    %5753 = vmatpush1.bf16.xpose.msra.mxu0 0
    %5754 = vmatprep.subr.bf16.mxu0 0
    %5755 = vmatpush1.bf16.xpose.msra.mxu0 0
    %5756 = vmatprep.subr.bf16.mxu0 0
    %5757 = vmatpush1.bf16.xpose.msra.mxu0 0
    %5758 = vmatprep.subr.bf16.mxu0 0
    %5759 = vmatpush1.bf16.xpose.msra.mxu0 0
    %5760 = vmatprep.subr.bf16.mxu0 0
    %5761 = vmatpush1.bf16.xpose.msra.mxu0 0
    %5762 = vmatprep.subr.bf16.mxu0 0
    %5763 = vmatpush1.bf16.xpose.msra.mxu0 0
    %5764 = vmatprep.subr.bf16.mxu0 0
    %5765 = vmatpush1.bf16.xpose.msra.mxu0 0
    %5766 = vmatprep.subr.bf16.mxu0 0
    %5767 = vmatpush1.bf16.xpose.msra.mxu0 0
    %5768 = vmatprep.subr.bf16.mxu0 0
    %5769 = vmatpush1.bf16.xpose.msra.mxu0 0
    %5770 = vmatprep.subr.bf16.mxu0 0
    %5771 = vmatpush1.bf16.xpose.msra.mxu0 0
    %5772 = vmatprep.subr.bf16.mxu0 0
    %5773 = vmatpush1.bf16.xpose.msra.mxu0 0
    %5774 = vmatprep.subr.bf16.mxu0 0
    %5775 = vmatpush1.bf16.xpose.msra.mxu0 0
    %5776 = vmatprep.subr.bf16.mxu0 0
    %5777 = vmatpush1.bf16.xpose.msra.mxu0 0
    %5778 = vmatprep.mubr.bf16.mxu0 0
    %5779 = vmatmul.mubr.bf16.gmra.mrb[0].mxu0 %v5741
    %v5780 = vpop.f32.mrb[0].mxu0
    %v5781 = vadd.f32 0.0, %v5780
    %v5782 = vpop.f32.mrb[0].mxu0
    %v5783 = vpop.f32.mrb[0].mxu0
    %v5784 = vpop.f32.mrb[0].mxu0
    %5785 = vdwg.mxu0
    %v5786 = vsel %vm3825, %v5781, -inf
    %5787 = vmax.xlane.f32.xlu0 %v5786
    %v5788 = vpop.xlane.xlu0 %5787
    %v5789 = vsub.f32 %v5781, %v5788
    %v5790 = vmul.f32 %v5789, 1.442695
    %v5791 = vpow.pop %v5790
    %v5792 = vsel %vm3825, %v5791, 0.0
    %5793 = vadd.xlane.f32.xlu0 %v5792
    %v5794 = vpop.xlane.xlu0 %5793
    %v5795 = vrcp.pop %v5794
    %v5796 = vmul.f32 %v5791, %v5795
    %v5797 = vpack.c.bf16 %v5796, %v5796
    %5798 = vrot.lane.b32.xlu0 %v5149, 64
    %v5799 = vpop.permute.xlu0 %5798
    %v5801 = vsel %vm3838, %v5797, 0
    %v5804 = vsel %vm3504, %v5799, 0
    %5806 = vmatprep.subr.bf16.mxu0 0
    %5807 = vmatpush1.bf16.msra.mxu0 %v5804
    %5808 = vmatprep.subr.bf16.mxu0 0
    %5809 = vmatpush1.bf16.msra.mxu0 0
    %5810 = vmatprep.subr.bf16.mxu0 0
    %5811 = vmatpush1.bf16.msra.mxu0 0
    %5812 = vmatprep.subr.bf16.mxu0 0
    %5813 = vmatpush1.bf16.msra.mxu0 0
    %5814 = vmatprep.subr.bf16.mxu0 0
    %5815 = vmatpush1.bf16.msra.mxu0 0
    %5816 = vmatprep.subr.bf16.mxu0 0
    %5817 = vmatpush1.bf16.msra.mxu0 0
    %5818 = vmatprep.subr.bf16.mxu0 0
    %5819 = vmatpush1.bf16.msra.mxu0 0
    %5820 = vmatprep.subr.bf16.mxu0 0
    %5821 = vmatpush1.bf16.msra.mxu0 0
    %5822 = vmatprep.subr.bf16.mxu0 0
    %5823 = vmatpush1.bf16.msra.mxu0 0
    %5824 = vmatprep.subr.bf16.mxu0 0
    %5825 = vmatpush1.bf16.msra.mxu0 0
    %5826 = vmatprep.subr.bf16.mxu0 0
    %5827 = vmatpush1.bf16.msra.mxu0 0
    %5828 = vmatprep.subr.bf16.mxu0 0
    %5829 = vmatpush1.bf16.msra.mxu0 0
    %5830 = vmatprep.subr.bf16.mxu0 0
    %5831 = vmatpush1.bf16.msra.mxu0 0
    %5832 = vmatprep.subr.bf16.mxu0 0
    %5833 = vmatpush1.bf16.msra.mxu0 0
    %5834 = vmatprep.subr.bf16.mxu0 0
    %5835 = vmatpush1.bf16.msra.mxu0 0
    %5836 = vmatprep.subr.bf16.mxu0 0
    %5837 = vmatpush1.bf16.msra.mxu0 0
    %5838 = vmatprep.mubr.bf16.mxu0 0
    %5839 = vmatmul.mubr.bf16.gmra.mrb[0].mxu0 %v5801
    %v5840 = vpop.f32.mrb[0].mxu0
    %v5841 = vadd.f32 0.0, %v5840
    %v5842 = vpop.f32.mrb[0].mxu0
    %v5843 = vpop.f32.mrb[0].mxu0
    %v5844 = vpop.f32.mrb[0].mxu0
    %5845 = vdwg.mxu0
    %v5846 = vpack.c.bf16 %v5841, %v5841
    %v5847 = vld [vmem:[%s11 + $0x20] sm:$0xf]
    %v5848 = vld [vmem:[%s11 + $0x24] sm:$0xf]
    %v5851 = vunpack.c.l.b16 %v5847
    %v5852 = vunpack.c.l.b16 %v5848
    %v5853 = vpack.c.b16 %v5852, %v5851
    %v5856 = vsel %vm3778, %v5846, 0
    %5858 = vmatprep.subr.bf16.mxu0 0
    %5859 = vmatpush1.bf16.msra.mxu0 %v5853
    %5860 = vmatprep.subr.bf16.mxu0 0
    %5861 = vmatpush1.bf16.msra.mxu0 0
    %5862 = vmatprep.subr.bf16.mxu0 0
    %5863 = vmatpush1.bf16.msra.mxu0 0
    %5864 = vmatprep.subr.bf16.mxu0 0
    %5865 = vmatpush1.bf16.msra.mxu0 0
    %5866 = vmatprep.subr.bf16.mxu0 0
    %5867 = vmatpush1.bf16.msra.mxu0 0
    %5868 = vmatprep.subr.bf16.mxu0 0
    %5869 = vmatpush1.bf16.msra.mxu0 0
    %5870 = vmatprep.subr.bf16.mxu0 0
    %5871 = vmatpush1.bf16.msra.mxu0 0
    %5872 = vmatprep.subr.bf16.mxu0 0
    %5873 = vmatpush1.bf16.msra.mxu0 0
    %5874 = vmatprep.subr.bf16.mxu0 0
    %5875 = vmatpush1.bf16.msra.mxu0 0
    %5876 = vmatprep.subr.bf16.mxu0 0
    %5877 = vmatpush1.bf16.msra.mxu0 0
    %5878 = vmatprep.subr.bf16.mxu0 0
    %5879 = vmatpush1.bf16.msra.mxu0 0
    %5880 = vmatprep.subr.bf16.mxu0 0
    %5881 = vmatpush1.bf16.msra.mxu0 0
    %5882 = vmatprep.subr.bf16.mxu0 0
    %5883 = vmatpush1.bf16.msra.mxu0 0
    %5884 = vmatprep.subr.bf16.mxu0 0
    %5885 = vmatpush1.bf16.msra.mxu0 0
    %5886 = vmatprep.subr.bf16.mxu0 0
    %5887 = vmatpush1.bf16.msra.mxu0 0
    %5888 = vmatprep.subr.bf16.mxu0 0
    %5889 = vmatpush1.bf16.msra.mxu0 0
    %5890 = vmatprep.mubr.bf16.mxu0 0
    %5891 = vmatmul.mubr.bf16.gmra.mrb[0].mxu0 %v5856
    %v5892 = vpop.f32.mrb[0].mxu0
    %v5893 = vadd.f32 0.0, %v5892
    %v5894 = vpop.f32.mrb[0].mxu0
    %v5895 = vpop.f32.mrb[0].mxu0
    %v5896 = vpop.f32.mrb[0].mxu0
    %5897 = vdwg.mxu0
    %v5898 = vadd.f32 %v5735, %v5893
    %5899 = vrot.lane.b32.xlu0 %v5089, 48
    %v5900 = vpop.permute.xlu0 %5899
    %5901 = vrot.lane.b32.xlu0 %v5090, 48
    %v5902 = vpop.permute.xlu0 %5901
    %v5904 = vsel %vm3778, %v5900, 0
    %v5907 = vsel %vm3778, %v5902, 0
    %5909 = vmatprep.subr.bf16.mxu0 0
    %5910 = vmatpush1.bf16.xpose.msra.mxu0 %v5907
    %5911 = vmatprep.subr.bf16.mxu0 0
    %5912 = vmatpush1.bf16.xpose.msra.mxu0 0
    %5913 = vmatprep.subr.bf16.mxu0 0
    %5914 = vmatpush1.bf16.xpose.msra.mxu0 0
    %5915 = vmatprep.subr.bf16.mxu0 0
    %5916 = vmatpush1.bf16.xpose.msra.mxu0 0
    %5917 = vmatprep.subr.bf16.mxu0 0
    %5918 = vmatpush1.bf16.xpose.msra.mxu0 0
    %5919 = vmatprep.subr.bf16.mxu0 0
    %5920 = vmatpush1.bf16.xpose.msra.mxu0 0
    %5921 = vmatprep.subr.bf16.mxu0 0
    %5922 = vmatpush1.bf16.xpose.msra.mxu0 0
    %5923 = vmatprep.subr.bf16.mxu0 0
    %5924 = vmatpush1.bf16.xpose.msra.mxu0 0
    %5925 = vmatprep.subr.bf16.mxu0 0
    %5926 = vmatpush1.bf16.xpose.msra.mxu0 0
    %5927 = vmatprep.subr.bf16.mxu0 0
    %5928 = vmatpush1.bf16.xpose.msra.mxu0 0
    %5929 = vmatprep.subr.bf16.mxu0 0
    %5930 = vmatpush1.bf16.xpose.msra.mxu0 0
    %5931 = vmatprep.subr.bf16.mxu0 0
    %5932 = vmatpush1.bf16.xpose.msra.mxu0 0
    %5933 = vmatprep.subr.bf16.mxu0 0
    %5934 = vmatpush1.bf16.xpose.msra.mxu0 0
    %5935 = vmatprep.subr.bf16.mxu0 0
    %5936 = vmatpush1.bf16.xpose.msra.mxu0 0
    %5937 = vmatprep.subr.bf16.mxu0 0
    %5938 = vmatpush1.bf16.xpose.msra.mxu0 0
    %5939 = vmatprep.subr.bf16.mxu0 0
    %5940 = vmatpush1.bf16.xpose.msra.mxu0 0
    %5941 = vmatprep.mubr.bf16.mxu0 0
    %5942 = vmatmul.mubr.bf16.gmra.mrb[0].mxu0 %v5904
    %v5943 = vpop.f32.mrb[0].mxu0
    %v5944 = vadd.f32 0.0, %v5943
    %v5945 = vpop.f32.mrb[0].mxu0
    %v5946 = vpop.f32.mrb[0].mxu0
    %v5947 = vpop.f32.mrb[0].mxu0
    %5948 = vdwg.mxu0
    %v5949 = vsel %vm3825, %v5944, -inf
    %5950 = vmax.xlane.f32.xlu0 %v5949
    %v5951 = vpop.xlane.xlu0 %5950
    %v5952 = vsub.f32 %v5944, %v5951
    %v5953 = vmul.f32 %v5952, 1.442695
    %v5954 = vpow.pop %v5953
    %v5955 = vsel %vm3825, %v5954, 0.0
    %5956 = vadd.xlane.f32.xlu0 %v5955
    %v5957 = vpop.xlane.xlu0 %5956
    %v5958 = vrcp.pop %v5957
    %v5959 = vmul.f32 %v5954, %v5958
    %v5960 = vpack.c.bf16 %v5959, %v5959
    %5961 = vrot.lane.b32.xlu0 %v5149, 48
    %v5962 = vpop.permute.xlu0 %5961
    %v5964 = vsel %vm3838, %v5960, 0
    %v5967 = vsel %vm3504, %v5962, 0
    %5969 = vmatprep.subr.bf16.mxu0 0
    %5970 = vmatpush1.bf16.msra.mxu0 %v5967
    %5971 = vmatprep.subr.bf16.mxu0 0
    %5972 = vmatpush1.bf16.msra.mxu0 0
    %5973 = vmatprep.subr.bf16.mxu0 0
    %5974 = vmatpush1.bf16.msra.mxu0 0
    %5975 = vmatprep.subr.bf16.mxu0 0
    %5976 = vmatpush1.bf16.msra.mxu0 0
    %5977 = vmatprep.subr.bf16.mxu0 0
    %5978 = vmatpush1.bf16.msra.mxu0 0
    %5979 = vmatprep.subr.bf16.mxu0 0
    %5980 = vmatpush1.bf16.msra.mxu0 0
    %5981 = vmatprep.subr.bf16.mxu0 0
    %5982 = vmatpush1.bf16.msra.mxu0 0
    %5983 = vmatprep.subr.bf16.mxu0 0
    %5984 = vmatpush1.bf16.msra.mxu0 0
    %5985 = vmatprep.subr.bf16.mxu0 0
    %5986 = vmatpush1.bf16.msra.mxu0 0
    %5987 = vmatprep.subr.bf16.mxu0 0
    %5988 = vmatpush1.bf16.msra.mxu0 0
    %5989 = vmatprep.subr.bf16.mxu0 0
    %5990 = vmatpush1.bf16.msra.mxu0 0
    %5991 = vmatprep.subr.bf16.mxu0 0
    %5992 = vmatpush1.bf16.msra.mxu0 0
    %5993 = vmatprep.subr.bf16.mxu0 0
    %5994 = vmatpush1.bf16.msra.mxu0 0
    %5995 = vmatprep.subr.bf16.mxu0 0
    %5996 = vmatpush1.bf16.msra.mxu0 0
    %5997 = vmatprep.subr.bf16.mxu0 0
    %5998 = vmatpush1.bf16.msra.mxu0 0
    %5999 = vmatprep.subr.bf16.mxu0 0
    %6000 = vmatpush1.bf16.msra.mxu0 0
    %6001 = vmatprep.mubr.bf16.mxu0 0
    %6002 = vmatmul.mubr.bf16.gmra.mrb[0].mxu0 %v5964
    %v6003 = vpop.f32.mrb[0].mxu0
    %v6004 = vadd.f32 0.0, %v6003
    %v6005 = vpop.f32.mrb[0].mxu0
    %v6006 = vpop.f32.mrb[0].mxu0
    %v6007 = vpop.f32.mrb[0].mxu0
    %6008 = vdwg.mxu0
    %v6009 = vpack.c.bf16 %v6004, %v6004
    %v6010 = vld [vmem:[%s11 + $0x28] sm:$0xf]
    %v6011 = vld [vmem:[%s11 + $0x2c] sm:$0xf]
    %v6014 = vunpack.c.l.b16 %v6010
    %v6015 = vunpack.c.l.b16 %v6011
    %v6016 = vpack.c.b16 %v6015, %v6014
    %v6019 = vsel %vm3778, %v6009, 0
    %6021 = vmatprep.subr.bf16.mxu0 0
    %6022 = vmatpush1.bf16.msra.mxu0 %v6016
    %6023 = vmatprep.subr.bf16.mxu0 0
    %6024 = vmatpush1.bf16.msra.mxu0 0
    %6025 = vmatprep.subr.bf16.mxu0 0
    %6026 = vmatpush1.bf16.msra.mxu0 0
    %6027 = vmatprep.subr.bf16.mxu0 0
    %6028 = vmatpush1.bf16.msra.mxu0 0
    %6029 = vmatprep.subr.bf16.mxu0 0
    %6030 = vmatpush1.bf16.msra.mxu0 0
    %6031 = vmatprep.subr.bf16.mxu0 0
    %6032 = vmatpush1.bf16.msra.mxu0 0
    %6033 = vmatprep.subr.bf16.mxu0 0
    %6034 = vmatpush1.bf16.msra.mxu0 0
    %6035 = vmatprep.subr.bf16.mxu0 0
    %6036 = vmatpush1.bf16.msra.mxu0 0
    %6037 = vmatprep.subr.bf16.mxu0 0
    %6038 = vmatpush1.bf16.msra.mxu0 0
    %6039 = vmatprep.subr.bf16.mxu0 0
    %6040 = vmatpush1.bf16.msra.mxu0 0
    %6041 = vmatprep.subr.bf16.mxu0 0
    %6042 = vmatpush1.bf16.msra.mxu0 0
    %6043 = vmatprep.subr.bf16.mxu0 0
    %6044 = vmatpush1.bf16.msra.mxu0 0
    %6045 = vmatprep.subr.bf16.mxu0 0
    %6046 = vmatpush1.bf16.msra.mxu0 0
    %6047 = vmatprep.subr.bf16.mxu0 0
    %6048 = vmatpush1.bf16.msra.mxu0 0
    %6049 = vmatprep.subr.bf16.mxu0 0
    %6050 = vmatpush1.bf16.msra.mxu0 0
    %6051 = vmatprep.subr.bf16.mxu0 0
    %6052 = vmatpush1.bf16.msra.mxu0 0
    %6053 = vmatprep.mubr.bf16.mxu0 0
    %6054 = vmatmul.mubr.bf16.gmra.mrb[0].mxu0 %v6019
    %v6055 = vpop.f32.mrb[0].mxu0
    %v6056 = vadd.f32 0.0, %v6055
    %v6057 = vpop.f32.mrb[0].mxu0
    %v6058 = vpop.f32.mrb[0].mxu0
    %v6059 = vpop.f32.mrb[0].mxu0
    %6060 = vdwg.mxu0
    %v6061 = vadd.f32 %v5898, %v6056
    %6062 = vrot.lane.b32.xlu0 %v5089, 32
    %v6063 = vpop.permute.xlu0 %6062
    %6064 = vrot.lane.b32.xlu0 %v5090, 32
    %v6065 = vpop.permute.xlu0 %6064
    %v6067 = vsel %vm3778, %v6063, 0
    %v6070 = vsel %vm3778, %v6065, 0
    %6072 = vmatprep.subr.bf16.mxu0 0
    %6073 = vmatpush1.bf16.xpose.msra.mxu0 %v6070
    %6074 = vmatprep.subr.bf16.mxu0 0
    %6075 = vmatpush1.bf16.xpose.msra.mxu0 0
    %6076 = vmatprep.subr.bf16.mxu0 0
    %6077 = vmatpush1.bf16.xpose.msra.mxu0 0
    %6078 = vmatprep.subr.bf16.mxu0 0
    %6079 = vmatpush1.bf16.xpose.msra.mxu0 0
    %6080 = vmatprep.subr.bf16.mxu0 0
    %6081 = vmatpush1.bf16.xpose.msra.mxu0 0
    %6082 = vmatprep.subr.bf16.mxu0 0
    %6083 = vmatpush1.bf16.xpose.msra.mxu0 0
    %6084 = vmatprep.subr.bf16.mxu0 0
    %6085 = vmatpush1.bf16.xpose.msra.mxu0 0
    %6086 = vmatprep.subr.bf16.mxu0 0
    %6087 = vmatpush1.bf16.xpose.msra.mxu0 0
    %6088 = vmatprep.subr.bf16.mxu0 0
    %6089 = vmatpush1.bf16.xpose.msra.mxu0 0
    %6090 = vmatprep.subr.bf16.mxu0 0
    %6091 = vmatpush1.bf16.xpose.msra.mxu0 0
    %6092 = vmatprep.subr.bf16.mxu0 0
    %6093 = vmatpush1.bf16.xpose.msra.mxu0 0
    %6094 = vmatprep.subr.bf16.mxu0 0
    %6095 = vmatpush1.bf16.xpose.msra.mxu0 0
    %6096 = vmatprep.subr.bf16.mxu0 0
    %6097 = vmatpush1.bf16.xpose.msra.mxu0 0
    %6098 = vmatprep.subr.bf16.mxu0 0
    %6099 = vmatpush1.bf16.xpose.msra.mxu0 0
    %6100 = vmatprep.subr.bf16.mxu0 0
    %6101 = vmatpush1.bf16.xpose.msra.mxu0 0
    %6102 = vmatprep.subr.bf16.mxu0 0
    %6103 = vmatpush1.bf16.xpose.msra.mxu0 0
    %6104 = vmatprep.mubr.bf16.mxu0 0
    %6105 = vmatmul.mubr.bf16.gmra.mrb[0].mxu0 %v6067
    %v6106 = vpop.f32.mrb[0].mxu0
    %v6107 = vadd.f32 0.0, %v6106
    %v6108 = vpop.f32.mrb[0].mxu0
    %v6109 = vpop.f32.mrb[0].mxu0
    %v6110 = vpop.f32.mrb[0].mxu0
    %6111 = vdwg.mxu0
    %v6112 = vsel %vm3825, %v6107, -inf
    %6113 = vmax.xlane.f32.xlu0 %v6112
    %v6114 = vpop.xlane.xlu0 %6113
    %v6115 = vsub.f32 %v6107, %v6114
    %v6116 = vmul.f32 %v6115, 1.442695
    %v6117 = vpow.pop %v6116
    %v6118 = vsel %vm3825, %v6117, 0.0
    %6119 = vadd.xlane.f32.xlu0 %v6118
    %v6120 = vpop.xlane.xlu0 %6119
    %v6121 = vrcp.pop %v6120
    %v6122 = vmul.f32 %v6117, %v6121
    %v6123 = vpack.c.bf16 %v6122, %v6122
    %6124 = vrot.lane.b32.xlu0 %v5149, 32
    %v6125 = vpop.permute.xlu0 %6124
    %v6127 = vsel %vm3838, %v6123, 0
    %v6130 = vsel %vm3504, %v6125, 0
    %6132 = vmatprep.subr.bf16.mxu0 0
    %6133 = vmatpush1.bf16.msra.mxu0 %v6130
    %6134 = vmatprep.subr.bf16.mxu0 0
    %6135 = vmatpush1.bf16.msra.mxu0 0
    %6136 = vmatprep.subr.bf16.mxu0 0
    %6137 = vmatpush1.bf16.msra.mxu0 0
    %6138 = vmatprep.subr.bf16.mxu0 0
    %6139 = vmatpush1.bf16.msra.mxu0 0
    %6140 = vmatprep.subr.bf16.mxu0 0
    %6141 = vmatpush1.bf16.msra.mxu0 0
    %6142 = vmatprep.subr.bf16.mxu0 0
    %6143 = vmatpush1.bf16.msra.mxu0 0
    %6144 = vmatprep.subr.bf16.mxu0 0
    %6145 = vmatpush1.bf16.msra.mxu0 0
    %6146 = vmatprep.subr.bf16.mxu0 0
    %6147 = vmatpush1.bf16.msra.mxu0 0
    %6148 = vmatprep.subr.bf16.mxu0 0
    %6149 = vmatpush1.bf16.msra.mxu0 0
    %6150 = vmatprep.subr.bf16.mxu0 0
    %6151 = vmatpush1.bf16.msra.mxu0 0
    %6152 = vmatprep.subr.bf16.mxu0 0
    %6153 = vmatpush1.bf16.msra.mxu0 0
    %6154 = vmatprep.subr.bf16.mxu0 0
    %6155 = vmatpush1.bf16.msra.mxu0 0
    %6156 = vmatprep.subr.bf16.mxu0 0
    %6157 = vmatpush1.bf16.msra.mxu0 0
    %6158 = vmatprep.subr.bf16.mxu0 0
    %6159 = vmatpush1.bf16.msra.mxu0 0
    %6160 = vmatprep.subr.bf16.mxu0 0
    %6161 = vmatpush1.bf16.msra.mxu0 0
    %6162 = vmatprep.subr.bf16.mxu0 0
    %6163 = vmatpush1.bf16.msra.mxu0 0
    %6164 = vmatprep.mubr.bf16.mxu0 0
    %6165 = vmatmul.mubr.bf16.gmra.mrb[0].mxu0 %v6127
    %v6166 = vpop.f32.mrb[0].mxu0
    %v6167 = vadd.f32 0.0, %v6166
    %v6168 = vpop.f32.mrb[0].mxu0
    %v6169 = vpop.f32.mrb[0].mxu0
    %v6170 = vpop.f32.mrb[0].mxu0
    %6171 = vdwg.mxu0
    %v6172 = vpack.c.bf16 %v6167, %v6167
    %v6173 = vld [vmem:[%s11 + $0x30] sm:$0xf]
    %v6174 = vld [vmem:[%s11 + $0x34] sm:$0xf]
    %v6177 = vunpack.c.l.b16 %v6173
    %v6178 = vunpack.c.l.b16 %v6174
    %v6179 = vpack.c.b16 %v6178, %v6177
    %v6182 = vsel %vm3778, %v6172, 0
    %6184 = vmatprep.subr.bf16.mxu0 0
    %6185 = vmatpush1.bf16.msra.mxu0 %v6179
    %6186 = vmatprep.subr.bf16.mxu0 0
    %6187 = vmatpush1.bf16.msra.mxu0 0
    %6188 = vmatprep.subr.bf16.mxu0 0
    %6189 = vmatpush1.bf16.msra.mxu0 0
    %6190 = vmatprep.subr.bf16.mxu0 0
    %6191 = vmatpush1.bf16.msra.mxu0 0
    %6192 = vmatprep.subr.bf16.mxu0 0
    %6193 = vmatpush1.bf16.msra.mxu0 0
    %6194 = vmatprep.subr.bf16.mxu0 0
    %6195 = vmatpush1.bf16.msra.mxu0 0
    %6196 = vmatprep.subr.bf16.mxu0 0
    %6197 = vmatpush1.bf16.msra.mxu0 0
    %6198 = vmatprep.subr.bf16.mxu0 0
    %6199 = vmatpush1.bf16.msra.mxu0 0
    %6200 = vmatprep.subr.bf16.mxu0 0
    %6201 = vmatpush1.bf16.msra.mxu0 0
    %6202 = vmatprep.subr.bf16.mxu0 0
    %6203 = vmatpush1.bf16.msra.mxu0 0
    %6204 = vmatprep.subr.bf16.mxu0 0
    %6205 = vmatpush1.bf16.msra.mxu0 0
    %6206 = vmatprep.subr.bf16.mxu0 0
    %6207 = vmatpush1.bf16.msra.mxu0 0
    %6208 = vmatprep.subr.bf16.mxu0 0
    %6209 = vmatpush1.bf16.msra.mxu0 0
    %6210 = vmatprep.subr.bf16.mxu0 0
    %6211 = vmatpush1.bf16.msra.mxu0 0
    %6212 = vmatprep.subr.bf16.mxu0 0
    %6213 = vmatpush1.bf16.msra.mxu0 0
    %6214 = vmatprep.subr.bf16.mxu0 0
    %6215 = vmatpush1.bf16.msra.mxu0 0
    %6216 = vmatprep.mubr.bf16.mxu0 0
    %6217 = vmatmul.mubr.bf16.gmra.mrb[0].mxu0 %v6182
    %v6218 = vpop.f32.mrb[0].mxu0
    %v6219 = vadd.f32 0.0, %v6218
    %v6220 = vpop.f32.mrb[0].mxu0
    %v6221 = vpop.f32.mrb[0].mxu0
    %v6222 = vpop.f32.mrb[0].mxu0
    %6223 = vdwg.mxu0
    %v6224 = vadd.f32 %v6061, %v6219
    %6225 = vrot.lane.b32.xlu0 %v5089, 16
    %v6226 = vpop.permute.xlu0 %6225
    %6227 = vrot.lane.b32.xlu0 %v5090, 16
    %v6228 = vpop.permute.xlu0 %6227
    %v6230 = vsel %vm3778, %v6226, 0
    %v6233 = vsel %vm3778, %v6228, 0
    %6235 = vmatprep.subr.bf16.mxu0 0
    %6236 = vmatpush1.bf16.xpose.msra.mxu0 %v6233
    %6237 = vmatprep.subr.bf16.mxu0 0
    %6238 = vmatpush1.bf16.xpose.msra.mxu0 0
    %6239 = vmatprep.subr.bf16.mxu0 0
    %6240 = vmatpush1.bf16.xpose.msra.mxu0 0
    %6241 = vmatprep.subr.bf16.mxu0 0
    %6242 = vmatpush1.bf16.xpose.msra.mxu0 0
    %6243 = vmatprep.subr.bf16.mxu0 0
    %6244 = vmatpush1.bf16.xpose.msra.mxu0 0
    %6245 = vmatprep.subr.bf16.mxu0 0
    %6246 = vmatpush1.bf16.xpose.msra.mxu0 0
    %6247 = vmatprep.subr.bf16.mxu0 0
    %6248 = vmatpush1.bf16.xpose.msra.mxu0 0
    %6249 = vmatprep.subr.bf16.mxu0 0
    %6250 = vmatpush1.bf16.xpose.msra.mxu0 0
    %6251 = vmatprep.subr.bf16.mxu0 0
    %6252 = vmatpush1.bf16.xpose.msra.mxu0 0
    %6253 = vmatprep.subr.bf16.mxu0 0
    %6254 = vmatpush1.bf16.xpose.msra.mxu0 0
    %6255 = vmatprep.subr.bf16.mxu0 0
    %6256 = vmatpush1.bf16.xpose.msra.mxu0 0
    %6257 = vmatprep.subr.bf16.mxu0 0
    %6258 = vmatpush1.bf16.xpose.msra.mxu0 0
    %6259 = vmatprep.subr.bf16.mxu0 0
    %6260 = vmatpush1.bf16.xpose.msra.mxu0 0
    %6261 = vmatprep.subr.bf16.mxu0 0
    %6262 = vmatpush1.bf16.xpose.msra.mxu0 0
    %6263 = vmatprep.subr.bf16.mxu0 0
    %6264 = vmatpush1.bf16.xpose.msra.mxu0 0
    %6265 = vmatprep.subr.bf16.mxu0 0
    %6266 = vmatpush1.bf16.xpose.msra.mxu0 0
    %6267 = vmatprep.mubr.bf16.mxu0 0
    %6268 = vmatmul.mubr.bf16.gmra.mrb[0].mxu0 %v6230
    %v6269 = vpop.f32.mrb[0].mxu0
    %v6270 = vadd.f32 0.0, %v6269
    %v6271 = vpop.f32.mrb[0].mxu0
    %v6272 = vpop.f32.mrb[0].mxu0
    %v6273 = vpop.f32.mrb[0].mxu0
    %6274 = vdwg.mxu0
    %v6275 = vsel %vm3825, %v6270, -inf
    %6276 = vmax.xlane.f32.xlu0 %v6275
    %v6277 = vpop.xlane.xlu0 %6276
    %v6278 = vsub.f32 %v6270, %v6277
    %v6279 = vmul.f32 %v6278, 1.442695
    %v6280 = vpow.pop %v6279
    %v6281 = vsel %vm3825, %v6280, 0.0
    %6282 = vadd.xlane.f32.xlu0 %v6281
    %v6283 = vpop.xlane.xlu0 %6282
    %v6284 = vrcp.pop %v6283
    %v6285 = vmul.f32 %v6280, %v6284
    %v6286 = vpack.c.bf16 %v6285, %v6285
    %6287 = vrot.lane.b32.xlu0 %v5149, 16
    %v6288 = vpop.permute.xlu0 %6287
    %v6290 = vsel %vm3838, %v6286, 0
    %v6293 = vsel %vm3504, %v6288, 0
    %6295 = vmatprep.subr.bf16.mxu0 0
    %6296 = vmatpush1.bf16.msra.mxu0 %v6293
    %6297 = vmatprep.subr.bf16.mxu0 0
    %6298 = vmatpush1.bf16.msra.mxu0 0
    %6299 = vmatprep.subr.bf16.mxu0 0
    %6300 = vmatpush1.bf16.msra.mxu0 0
    %6301 = vmatprep.subr.bf16.mxu0 0
    %6302 = vmatpush1.bf16.msra.mxu0 0
    %6303 = vmatprep.subr.bf16.mxu0 0
    %6304 = vmatpush1.bf16.msra.mxu0 0
    %6305 = vmatprep.subr.bf16.mxu0 0
    %6306 = vmatpush1.bf16.msra.mxu0 0
    %6307 = vmatprep.subr.bf16.mxu0 0
    %6308 = vmatpush1.bf16.msra.mxu0 0
    %6309 = vmatprep.subr.bf16.mxu0 0
    %6310 = vmatpush1.bf16.msra.mxu0 0
    %6311 = vmatprep.subr.bf16.mxu0 0
    %6312 = vmatpush1.bf16.msra.mxu0 0
    %6313 = vmatprep.subr.bf16.mxu0 0
    %6314 = vmatpush1.bf16.msra.mxu0 0
    %6315 = vmatprep.subr.bf16.mxu0 0
    %6316 = vmatpush1.bf16.msra.mxu0 0
    %6317 = vmatprep.subr.bf16.mxu0 0
    %6318 = vmatpush1.bf16.msra.mxu0 0
    %6319 = vmatprep.subr.bf16.mxu0 0
    %6320 = vmatpush1.bf16.msra.mxu0 0
    %6321 = vmatprep.subr.bf16.mxu0 0
    %6322 = vmatpush1.bf16.msra.mxu0 0
    %6323 = vmatprep.subr.bf16.mxu0 0
    %6324 = vmatpush1.bf16.msra.mxu0 0
    %6325 = vmatprep.subr.bf16.mxu0 0
    %6326 = vmatpush1.bf16.msra.mxu0 0
    %6327 = vmatprep.mubr.bf16.mxu0 0
    %6328 = vmatmul.mubr.bf16.gmra.mrb[0].mxu0 %v6290
    %v6329 = vpop.f32.mrb[0].mxu0
    %v6330 = vadd.f32 0.0, %v6329
    %v6331 = vpop.f32.mrb[0].mxu0
    %v6332 = vpop.f32.mrb[0].mxu0
    %v6333 = vpop.f32.mrb[0].mxu0
    %6334 = vdwg.mxu0
    %v6335 = vpack.c.bf16 %v6330, %v6330
    %v6336 = vld [vmem:[%s11 + $0x38] sm:$0xf]
    %v6337 = vld [vmem:[%s11 + $0x3c] sm:$0xf]
    %v6340 = vunpack.c.l.b16 %v6336
    %v6341 = vunpack.c.l.b16 %v6337
    %v6342 = vpack.c.b16 %v6341, %v6340
    %v6345 = vsel %vm3778, %v6335, 0
    %6347 = vmatprep.subr.bf16.mxu0 0
    %6348 = vmatpush1.bf16.msra.mxu0 %v6342
    %6349 = vmatprep.subr.bf16.mxu0 0
    %6350 = vmatpush1.bf16.msra.mxu0 0
    %6351 = vmatprep.subr.bf16.mxu0 0
    %6352 = vmatpush1.bf16.msra.mxu0 0
    %6353 = vmatprep.subr.bf16.mxu0 0
    %6354 = vmatpush1.bf16.msra.mxu0 0
    %6355 = vmatprep.subr.bf16.mxu0 0
    %6356 = vmatpush1.bf16.msra.mxu0 0
    %6357 = vmatprep.subr.bf16.mxu0 0
    %6358 = vmatpush1.bf16.msra.mxu0 0
    %6359 = vmatprep.subr.bf16.mxu0 0
    %6360 = vmatpush1.bf16.msra.mxu0 0
    %6361 = vmatprep.subr.bf16.mxu0 0
    %6362 = vmatpush1.bf16.msra.mxu0 0
    %6363 = vmatprep.subr.bf16.mxu0 0
    %6364 = vmatpush1.bf16.msra.mxu0 0
    %6365 = vmatprep.subr.bf16.mxu0 0
    %6366 = vmatpush1.bf16.msra.mxu0 0
    %6367 = vmatprep.subr.bf16.mxu0 0
    %6368 = vmatpush1.bf16.msra.mxu0 0
    %6369 = vmatprep.subr.bf16.mxu0 0
    %6370 = vmatpush1.bf16.msra.mxu0 0
    %6371 = vmatprep.subr.bf16.mxu0 0
    %6372 = vmatpush1.bf16.msra.mxu0 0
    %6373 = vmatprep.subr.bf16.mxu0 0
    %6374 = vmatpush1.bf16.msra.mxu0 0
    %6375 = vmatprep.subr.bf16.mxu0 0
    %6376 = vmatpush1.bf16.msra.mxu0 0
    %6377 = vmatprep.subr.bf16.mxu0 0
    %6378 = vmatpush1.bf16.msra.mxu0 0
    %6379 = vmatprep.mubr.bf16.mxu0 0
    %6380 = vmatmul.mubr.bf16.gmra.mrb[0].mxu0 %v6345
    %v6381 = vpop.f32.mrb[0].mxu0
    %v6382 = vadd.f32 0.0, %v6381
    %v6383 = vpop.f32.mrb[0].mxu0
    %v6384 = vpop.f32.mrb[0].mxu0
    %v6385 = vpop.f32.mrb[0].mxu0
    %6386 = vdwg.mxu0
    %v6387 = vadd.f32 %v6224, %v6382
    %v6388 = vld [vmem:[%s12] sm:$0x1]
    %v6390 = vlaneseq
    %v6391 = vshrl.u32 %v6390, 7
    %v6392 = vsub.s32 0, %v6391
    %v6393 = vrot.slane %v6388, %v6392
    %v6395 = vadd.f32 %v6387, %v6393
    %s6396 = scalar_lea.vmem [#allocation2], 4
    %6397 = vst [vmem:[%s6396] sm:$0xf] %v6395
    // Predicated region
    $region54: #{encoder_forward.1} parent=1 // pred_check
      _
    $region55: #{encoder_forward.1} parent=1 // pred_check_branch
      %6399 = sbr.rel (0) target = $region57
    $region56: #{encoder_forward.1} parent=1 // pred_region
      %s6401 = ssub.s32 128, 128
      %6402 = vsyncadd [#allocation3], %s6401
      %s6403 = sshll.u32 [#allocation2], 4
      %s6404 = int_to_ptr.vmem [resolvable:$true] %s6403
      %6409 = dma.vmem_to_hbm [thread:$0]  %s6404, 128, %s13, [#allocation3], 64, 64, 4
    $region57: #{encoder_forward.1} parent=1 // pred_fallthru
      _
    // Predicated region
    $region58: #{encoder_forward.1} parent=1 // pred_check
      _
    $region59: #{encoder_forward.1} parent=1 // pred_check_branch
      %6411 = sbr.rel (0) target = $region61
    $region60: #{encoder_forward.1} parent=1 // pred_region
      %6412 = dma.done [#allocation3], 128
    $region61: #{encoder_forward.1} parent=1 // pred_fallthru
      _
    %6413 = vsyncpa [#allocation3], 1

</llo_original>
